<compile_context>
chip_gen: v7x
topology: tpu7x:2x2x1
jax: 0.10.0
libtpu: 0.0.40
codegen_flags: <defaults>
</compile_context>

<pallas_src>
import jax
import jax.numpy as jnp
from jax.experimental import pallas as pl
from jax.experimental.pallas import tpu as pltpu

G = 32                      # CIFAR spatial grid 32x32
KH = KW = 5
IC_P = 8                    # padded in-channels for both convs (3->8, 6->8)
C1_OUT_P = 8                # conv1 out-channels 6 -> 8
C2_OUT_P = 16
K_CONV = KH * KW * IC_P     # 200: contraction dim of the fused conv matmul
FC1 = 120
FC2_P = 88                  # 84 -> 88
FC3 = 32
FC4_P = 16                  # 10 -> 16
N_FEAT = 5 * 5 * C2_OUT_P   # 400 flattened pooled features


# ----------------------------------------------------------------------------
# Fused forward-pass kernel
# ----------------------------------------------------------------------------
def _net_kernel(x_ref, wconv_ref, bconv_ref,
                wf1_ref, wf2_ref, wf3_ref, wf4_ref, bfc_ref,
                o_ref,
                im_buf, c1_buf, p1_buf, c2_buf, p2_buf, z_buf):
    n = o_ref.shape[1]                    # batch
    S = n * G * G                         # valid lane extent
    pad = c1_buf.shape[1] - S             # zero-padded tail width

    # Zero the padding tails.  Only "wide" (out-of-image) output lanes read
    # them, and those lanes are never consumed by any valid result.
    for buf in (c1_buf, p1_buf, c2_buf):
        buf[:, S:S + pad] = jnp.zeros((buf.shape[0], pad), jnp.float32)

    def conv_relu(src_ref, w, b, dst_ref, stride):
        # im2col staging: 25 shifted copies stacked on sublanes -> (200, S).
        for i in range(KH):
            for j in range(KW):
                k = i * KW + j
                d = stride * (i * G + j) * n
                im_buf[k * IC_P:(k + 1) * IC_P, :] = src_ref[:, d:d + S]
        # ONE MXU matmul with K = 200 (f32 accumulate); bias + ReLU fused.
        acc = jnp.dot(w, im_buf[...], preferred_element_type=jnp.float32)
        dst_ref[:, :S] = jnp.maximum(acc + b, 0.0)

    def maxpool2x2(src_ref, dst_ref, stride):
        m = None
        for di in range(2):
            for dj in range(2):
                d = stride * (di * G + dj) * n
                v = src_ref[:, d:d + S]
                m = v if m is None else jnp.maximum(m, v)
        dst_ref[:, :S] = m

    conv_relu(x_ref, wconv_ref[0:C1_OUT_P, :], bconv_ref[0:C1_OUT_P, :],
              c1_buf, 1)                                      # stride-1 grid
    maxpool2x2(c1_buf, p1_buf, 1)                             # valid @ stride-2
    conv_relu(p1_buf, wconv_ref[C1_OUT_P:C1_OUT_P + C2_OUT_P, :],
              bconv_ref[C1_OUT_P:C1_OUT_P + C2_OUT_P, :],
              c2_buf, 2)                                      # stride-2 grid
    maxpool2x2(c2_buf, p2_buf, 2)                             # valid @ stride-4

    # Gather the 5x5x16 pooled features into (400, N), feature order (h,w,c).
    # Batch-innermost lanes => each tap's N samples are CONTIGUOUS lanes, so
    # this is 25 contiguous (16, N) copies (was 50 single-column extracts).
    for h in range(5):
        for w in range(5):
            k = h * 5 + w
            col = (4 * h * G + 4 * w) * n
            z_buf[k * C2_OUT_P:(k + 1) * C2_OUT_P, :] = p2_buf[:, col:col + n]

    # Fused FC chain, feature-major: y = W @ z + b with shapes (out_f, N).
    z = z_buf[...]
    y = jnp.maximum(
        jnp.dot(wf1_ref[...], z, preferred_element_type=jnp.float32)
        + bfc_ref[0:FC1, :], 0.0)
    y = jnp.maximum(
        jnp.dot(wf2_ref[...], y, preferred_element_type=jnp.float32)
        + bfc_ref[FC1:FC1 + FC2_P, :], 0.0)
    y = jnp.maximum(
        jnp.dot(wf3_ref[...], y, preferred_element_type=jnp.float32)
        + bfc_ref[FC1 + FC2_P:FC1 + FC2_P + FC3, :], 0.0)
    o_ref[...] = (
        jnp.dot(wf4_ref[...], y, preferred_element_type=jnp.float32)
        + bfc_ref[FC1 + FC2_P + FC3:FC1 + FC2_P + FC3 + FC4_P, :])


# ----------------------------------------------------------------------------
# One-time parameter layout prep (NOT in the per-call jitted path)
# ----------------------------------------------------------------------------
def _prep_conv_w(w, oc_p, ic_p):
    # torch (OC, IC, KH, KW) -> (OC_P, KH*KW*IC_P); column (i*KW + j)*IC_P + c
    # matches the im2col sublane order used in the kernel.
    oc, ic, kh, kw = w.shape
    wt = jnp.transpose(w, (0, 2, 3, 1))                      # (OC, KH, KW, IC)
    wt = jnp.pad(wt, ((0, oc_p - oc), (0, 0), (0, 0), (0, ic_p - ic)))
    return wt.reshape(oc_p, kh * kw * ic_p)


def _prep_bias(b, n_p):
    return jnp.pad(b, (0, n_p - b.shape[0])).reshape(n_p, 1)


def prepare_params(p):
    """Run once at load time; returns packed, kernel-layout weight arrays."""
    wconv = jnp.concatenate([
        _prep_conv_w(p["conv1_w"], C1_OUT_P, IC_P),          # (8, 200)
        _prep_conv_w(p["conv2_w"], C2_OUT_P, IC_P)], 0)      # -> (24, 200)
    bconv = jnp.concatenate([
        _prep_bias(p["conv1_b"], C1_OUT_P),
        _prep_bias(p["conv2_b"], C2_OUT_P)], 0)              # (24, 1)
    # fc1 consumes features in torch (c, h, w) order; the kernel gathers them
    # in (h, w, c) order -> permute the columns once here.
    wf1 = (p["fc1_w"].reshape(FC1, C2_OUT_P, 5, 5)
           .transpose(0, 2, 3, 1).reshape(FC1, N_FEAT))      # (120, 400)
    wf2 = jnp.pad(p["fc2_w"], ((0, FC2_P - 84), (0, 0)))     # (88, 120)
    wf3 = jnp.pad(p["fc3_w"], ((0, 0), (0, FC2_P - 84)))     # (32, 88)
    wf4 = jnp.pad(p["fc4_w"], ((0, FC4_P - 10), (0, 0)))     # (16, 32)
    bfc = jnp.concatenate([
        _prep_bias(p["fc1_b"], FC1), _prep_bias(p["fc2_b"], FC2_P),
        _prep_bias(p["fc3_b"], FC3), _prep_bias(p["fc4_b"], FC4_P)], 0)  # (256,1)
    return (wconv, bconv, wf1, wf2, wf3, wf4, bfc)


@jax.jit
def net_forward(prepped, x):
    """x: (N, 3, 32, 32) float32 NCHW -> logits (N, 10) float32."""
    wconv, bconv, wf1, wf2, wf3, wf4, bfc = prepped
    n, c, h, w = x.shape
    assert (c, h, w) == (3, G, G)
    S = n * G * G
    # Deepest shifted read: conv2 im2col tap (4,4) on the stride-2 grid.
    max_shift = 2 * ((KH - 1) * G + (KW - 1)) * n
    pad = pl.cdiv(max_shift, 128) * 128
    assert pad >= max_shift                        # tail covers deepest read
    assert (4 * 4 * G + 4 * 4) * n + n <= S        # last gathered col in-bounds
    # Layout: channels on sublanes; (h, w, sample) on lanes (batch innermost).
    x2 = jnp.transpose(x, (1, 2, 3, 0)).reshape(c, S)
    x2 = jnp.pad(x2, ((0, IC_P - c), (0, pad)))
    out = pl.pallas_call(
        _net_kernel,
        out_shape=jax.ShapeDtypeStruct((FC4_P, n), jnp.float32),
        scratch_shapes=[
            pltpu.VMEM((K_CONV, S), jnp.float32),            # im2col slab (reused)
            pltpu.VMEM((C1_OUT_P, S + pad), jnp.float32),    # conv1 out
            pltpu.VMEM((C1_OUT_P, S + pad), jnp.float32),    # pool1 out
            pltpu.VMEM((C2_OUT_P, S + pad), jnp.float32),    # conv2 out
            pltpu.VMEM((C2_OUT_P, S), jnp.float32),          # pool2 out
            pltpu.VMEM((N_FEAT, n), jnp.float32),            # fc1 input columns
        ],
        compiler_params=pltpu.CompilerParams(
            vmem_limit_bytes=32 * 1024 * 1024),
    )(x2, wconv, bconv, wf1, wf2, wf3, wf4, bfc)
    return out[:10, :].T                                     # (N, 10)


# ----------------------------------------------------------------------------
# Parameter init (PyTorch layout + PyTorch-style uniform init)
# ----------------------------------------------------------------------------
def _init_conv(key, oc, ic, kh, kw):
    k1, k2 = jax.random.split(key)
    bound = 1.0 / (ic * kh * kw) ** 0.5
    w = jax.random.uniform(k1, (oc, ic, kh, kw), jnp.float32, -bound, bound)
    b = jax.random.uniform(k2, (oc,), jnp.float32, -bound, bound)
    return w, b


def _init_linear(key, out_f, in_f):
    k1, k2 = jax.random.split(key)
    bound = 1.0 / in_f ** 0.5
    w = jax.random.uniform(k1, (out_f, in_f), jnp.float32, -bound, bound)
    b = jax.random.uniform(k2, (out_f,), jnp.float32, -bound, bound)
    return w, b


def init_params(key):
    ks = jax.random.split(key, 6)
    p = {}
    p["conv1_w"], p["conv1_b"] = _init_conv(ks[0], 6, 3, 5, 5)
    p["conv2_w"], p["conv2_b"] = _init_conv(ks[1], 16, 6, 5, 5)
    p["fc1_w"], p["fc1_b"] = _init_linear(ks[2], 120, 400)
    p["fc2_w"], p["fc2_b"] = _init_linear(ks[3], 84, 120)
    p["fc3_w"], p["fc3_b"] = _init_linear(ks[4], 32, 84)
    p["fc4_w"], p["fc4_b"] = _init_linear(ks[5], 10, 32)
    return p


# ----------------------------------------------------------------------------
# Plain-JAX reference (correctness self-check)
# ----------------------------------------------------------------------------
def reference_forward(params, x):
    def conv_relu(x, w, b):
        y = jax.lax.conv_general_dilated(
            x, w, window_strides=(1, 1), padding="VALID",
            dimension_numbers=("NCHW", "OIHW", "NCHW"))
        return jax.nn.relu(y + b[None, :, None, None])

    def pool(x):
        return jax.lax.reduce_window(x, -jnp.inf, jax.lax.max,
                                     (1, 1, 2, 2), (1, 1, 2, 2), "VALID")

    y = pool(conv_relu(x, params["conv1_w"], params["conv1_b"]))
    y = pool(conv_relu(y, params["conv2_w"], params["conv2_b"]))
    y = y.reshape(y.shape[0], -1)
    y = jax.nn.relu(y @ params["fc1_w"].T + params["fc1_b"])
    y = jax.nn.relu(y @ params["fc2_w"].T + params["fc2_b"])
    y = jax.nn.relu(y @ params["fc3_w"].T + params["fc3_b"])
    return y @ params["fc4_w"].T + params["fc4_b"]


if __name__ == "__main__":
    key = jax.random.PRNGKey(0)
    k_param, k_input = jax.random.split(key)
    params = init_params(k_param)
    prepped = prepare_params(params)          # one-time layout prep (hoisted)
    # CIFAR-sized input: batch=2, 3 channels, 32x32 (NCHW, like PyTorch).
    x = jax.random.normal(k_input, (2, 3, 32, 32), dtype=jnp.float32)

    out = jax.block_until_ready(net_forward(prepped, x))
    assert out.shape == (2, 10) and out.dtype == jnp.float32

    ref = reference_forward(params, x)
    assert jnp.allclose(out, ref, atol=2e-2, rtol=2e-2), (
        float(jnp.max(jnp.abs(out - ref))))

    print("KERNEL_OK")
</pallas_src>

<mosaic_0001>
module attributes {stable_mosaic.version = 11 : i64} {
  func.func @_net_kernel(%arg0: memref<8x2688xf32, #tpu.memory_space<vmem>>, %arg1: memref<24x200xf32, #tpu.memory_space<vmem>>, %arg2: memref<24x1xf32, #tpu.memory_space<vmem>>, %arg3: memref<120x400xf32, #tpu.memory_space<vmem>>, %arg4: memref<88x120xf32, #tpu.memory_space<vmem>>, %arg5: memref<32x88xf32, #tpu.memory_space<vmem>>, %arg6: memref<16x32xf32, #tpu.memory_space<vmem>>, %arg7: memref<256x1xf32, #tpu.memory_space<vmem>>, %arg8: memref<16x2xf32, #tpu.memory_space<vmem>>, %arg9: memref<200x2048xf32, #tpu.memory_space<vmem>>, %arg10: memref<8x2688xf32, #tpu.memory_space<vmem>>, %arg11: memref<8x2688xf32, #tpu.memory_space<vmem>>, %arg12: memref<16x2688xf32, #tpu.memory_space<vmem>>, %arg13: memref<16x2048xf32, #tpu.memory_space<vmem>>, %arg14: memref<400x2xf32, #tpu.memory_space<vmem>>) attributes {dimension_semantics = [], scalar_prefetch = 0 : i64, scratch_operands = 6 : i64, tpu.core_type = #tpu.core_type<tc>} {
    %cst = arith.constant 0.000000e+00 : f32
    %0 = vector.broadcast %cst : f32 to vector<8x640xf32>
    %c0 = arith.constant 0 : index
    %c2048 = arith.constant 2048 : index
    %1 = vector.load %arg10[%c0, %c2048] : memref<8x2688xf32, #tpu.memory_space<vmem>>, vector<8x640xf32>
    tpu.vector_store %arg10[%c0, %c2048], %0 {strides = array<i32>} : memref<8x2688xf32, #tpu.memory_space<vmem>>, vector<8x640xf32>,
    %cst_0 = arith.constant 0.000000e+00 : f32
    %2 = vector.broadcast %cst_0 : f32 to vector<8x640xf32>
    %c0_1 = arith.constant 0 : index
    %c2048_2 = arith.constant 2048 : index
    %3 = vector.load %arg11[%c0_1, %c2048_2] : memref<8x2688xf32, #tpu.memory_space<vmem>>, vector<8x640xf32>
    tpu.vector_store %arg11[%c0_1, %c2048_2], %2 {strides = array<i32>} : memref<8x2688xf32, #tpu.memory_space<vmem>>, vector<8x640xf32>,
    %cst_3 = arith.constant 0.000000e+00 : f32
    %4 = vector.broadcast %cst_3 : f32 to vector<16x640xf32>
    %c0_4 = arith.constant 0 : index
    %c2048_5 = arith.constant 2048 : index
    %5 = vector.load %arg12[%c0_4, %c2048_5] : memref<16x2688xf32, #tpu.memory_space<vmem>>, vector<16x640xf32>
    tpu.vector_store %arg12[%c0_4, %c2048_5], %4 {strides = array<i32>} : memref<16x2688xf32, #tpu.memory_space<vmem>>, vector<16x640xf32>,
    %c0_6 = arith.constant 0 : index
    %c0_7 = arith.constant 0 : index
    %6 = vector.load %arg1[%c0_6, %c0_7] : memref<24x200xf32, #tpu.memory_space<vmem>>, vector<8x200xf32>
    %c0_8 = arith.constant 0 : index
    %c0_9 = arith.constant 0 : index
    %7 = vector.load %arg2[%c0_8, %c0_9] : memref<24x1xf32, #tpu.memory_space<vmem>>, vector<8x1xf32>
    %c0_10 = arith.constant 0 : index
    %c0_11 = arith.constant 0 : index
    %8 = vector.load %arg0[%c0_10, %c0_11] : memref<8x2688xf32, #tpu.memory_space<vmem>>, vector<8x2048xf32>
    %c0_12 = arith.constant 0 : index
    %c0_13 = arith.constant 0 : index
    %9 = vector.load %arg9[%c0_12, %c0_13] : memref<200x2048xf32, #tpu.memory_space<vmem>>, vector<8x2048xf32>
    tpu.vector_store %arg9[%c0_12, %c0_13], %8 {strides = array<i32>} : memref<200x2048xf32, #tpu.memory_space<vmem>>, vector<8x2048xf32>,
    %c0_14 = arith.constant 0 : index
    %c2 = arith.constant 2 : index
    %10 = vector.load %arg0[%c0_14, %c2] : memref<8x2688xf32, #tpu.memory_space<vmem>>, vector<8x2048xf32>
    %c8 = arith.constant 8 : index
    %c0_15 = arith.constant 0 : index
    %11 = vector.load %arg9[%c8, %c0_15] : memref<200x2048xf32, #tpu.memory_space<vmem>>, vector<8x2048xf32>
    tpu.vector_store %arg9[%c8, %c0_15], %10 {strides = array<i32>} : memref<200x2048xf32, #tpu.memory_space<vmem>>, vector<8x2048xf32>,
    %c0_16 = arith.constant 0 : index
    %c4 = arith.constant 4 : index
    %12 = vector.load %arg0[%c0_16, %c4] : memref<8x2688xf32, #tpu.memory_space<vmem>>, vector<8x2048xf32>
    %c16 = arith.constant 16 : index
    %c0_17 = arith.constant 0 : index
    %13 = vector.load %arg9[%c16, %c0_17] : memref<200x2048xf32, #tpu.memory_space<vmem>>, vector<8x2048xf32>
    tpu.vector_store %arg9[%c16, %c0_17], %12 {strides = array<i32>} : memref<200x2048xf32, #tpu.memory_space<vmem>>, vector<8x2048xf32>,
    %c0_18 = arith.constant 0 : index
    %c6 = arith.constant 6 : index
    %14 = vector.load %arg0[%c0_18, %c6] : memref<8x2688xf32, #tpu.memory_space<vmem>>, vector<8x2048xf32>
    %c24 = arith.constant 24 : index
    %c0_19 = arith.constant 0 : index
    %15 = vector.load %arg9[%c24, %c0_19] : memref<200x2048xf32, #tpu.memory_space<vmem>>, vector<8x2048xf32>
    tpu.vector_store %arg9[%c24, %c0_19], %14 {strides = array<i32>} : memref<200x2048xf32, #tpu.memory_space<vmem>>, vector<8x2048xf32>,
    %c0_20 = arith.constant 0 : index
    %c8_21 = arith.constant 8 : index
    %16 = vector.load %arg0[%c0_20, %c8_21] : memref<8x2688xf32, #tpu.memory_space<vmem>>, vector<8x2048xf32>
    %c32 = arith.constant 32 : index
    %c0_22 = arith.constant 0 : index
    %17 = vector.load %arg9[%c32, %c0_22] : memref<200x2048xf32, #tpu.memory_space<vmem>>, vector<8x2048xf32>
    tpu.vector_store %arg9[%c32, %c0_22], %16 {strides = array<i32>} : memref<200x2048xf32, #tpu.memory_space<vmem>>, vector<8x2048xf32>,
    %c0_23 = arith.constant 0 : index
    %c64 = arith.constant 64 : index
    %18 = vector.load %arg0[%c0_23, %c64] : memref<8x2688xf32, #tpu.memory_space<vmem>>, vector<8x2048xf32>
    %c40 = arith.constant 40 : index
    %c0_24 = arith.constant 0 : index
    %19 = vector.load %arg9[%c40, %c0_24] : memref<200x2048xf32, #tpu.memory_space<vmem>>, vector<8x2048xf32>
    tpu.vector_store %arg9[%c40, %c0_24], %18 {strides = array<i32>} : memref<200x2048xf32, #tpu.memory_space<vmem>>, vector<8x2048xf32>,
    %c0_25 = arith.constant 0 : index
    %c66 = arith.constant 66 : index
    %20 = vector.load %arg0[%c0_25, %c66] : memref<8x2688xf32, #tpu.memory_space<vmem>>, vector<8x2048xf32>
    %c48 = arith.constant 48 : index
    %c0_26 = arith.constant 0 : index
    %21 = vector.load %arg9[%c48, %c0_26] : memref<200x2048xf32, #tpu.memory_space<vmem>>, vector<8x2048xf32>
    tpu.vector_store %arg9[%c48, %c0_26], %20 {strides = array<i32>} : memref<200x2048xf32, #tpu.memory_space<vmem>>, vector<8x2048xf32>,
    %c0_27 = arith.constant 0 : index
    %c68 = arith.constant 68 : index
    %22 = vector.load %arg0[%c0_27, %c68] : memref<8x2688xf32, #tpu.memory_space<vmem>>, vector<8x2048xf32>
    %c56 = arith.constant 56 : index
    %c0_28 = arith.constant 0 : index
    %23 = vector.load %arg9[%c56, %c0_28] : memref<200x2048xf32, #tpu.memory_space<vmem>>, vector<8x2048xf32>
    tpu.vector_store %arg9[%c56, %c0_28], %22 {strides = array<i32>} : memref<200x2048xf32, #tpu.memory_space<vmem>>, vector<8x2048xf32>,
    %c0_29 = arith.constant 0 : index
    %c70 = arith.constant 70 : index
    %24 = vector.load %arg0[%c0_29, %c70] : memref<8x2688xf32, #tpu.memory_space<vmem>>, vector<8x2048xf32>
    %c64_30 = arith.constant 64 : index
    %c0_31 = arith.constant 0 : index
    %25 = vector.load %arg9[%c64_30, %c0_31] : memref<200x2048xf32, #tpu.memory_space<vmem>>, vector<8x2048xf32>
    tpu.vector_store %arg9[%c64_30, %c0_31], %24 {strides = array<i32>} : memref<200x2048xf32, #tpu.memory_space<vmem>>, vector<8x2048xf32>,
    %c0_32 = arith.constant 0 : index
    %c72 = arith.constant 72 : index
    %26 = vector.load %arg0[%c0_32, %c72] : memref<8x2688xf32, #tpu.memory_space<vmem>>, vector<8x2048xf32>
    %c72_33 = arith.constant 72 : index
    %c0_34 = arith.constant 0 : index
    %27 = vector.load %arg9[%c72_33, %c0_34] : memref<200x2048xf32, #tpu.memory_space<vmem>>, vector<8x2048xf32>
    tpu.vector_store %arg9[%c72_33, %c0_34], %26 {strides = array<i32>} : memref<200x2048xf32, #tpu.memory_space<vmem>>, vector<8x2048xf32>,
    %c0_35 = arith.constant 0 : index
    %c128 = arith.constant 128 : index
    %28 = vector.load %arg0[%c0_35, %c128] : memref<8x2688xf32, #tpu.memory_space<vmem>>, vector<8x2048xf32>
    %c80 = arith.constant 80 : index
    %c0_36 = arith.constant 0 : index
    %29 = vector.load %arg9[%c80, %c0_36] : memref<200x2048xf32, #tpu.memory_space<vmem>>, vector<8x2048xf32>
    tpu.vector_store %arg9[%c80, %c0_36], %28 {strides = array<i32>} : memref<200x2048xf32, #tpu.memory_space<vmem>>, vector<8x2048xf32>,
    %c0_37 = arith.constant 0 : index
    %c130 = arith.constant 130 : index
    %30 = vector.load %arg0[%c0_37, %c130] : memref<8x2688xf32, #tpu.memory_space<vmem>>, vector<8x2048xf32>
    %c88 = arith.constant 88 : index
    %c0_38 = arith.constant 0 : index
    %31 = vector.load %arg9[%c88, %c0_38] : memref<200x2048xf32, #tpu.memory_space<vmem>>, vector<8x2048xf32>
    tpu.vector_store %arg9[%c88, %c0_38], %30 {strides = array<i32>} : memref<200x2048xf32, #tpu.memory_space<vmem>>, vector<8x2048xf32>,
    %c0_39 = arith.constant 0 : index
    %c132 = arith.constant 132 : index
    %32 = vector.load %arg0[%c0_39, %c132] : memref<8x2688xf32, #tpu.memory_space<vmem>>, vector<8x2048xf32>
    %c96 = arith.constant 96 : index
    %c0_40 = arith.constant 0 : index
    %33 = vector.load %arg9[%c96, %c0_40] : memref<200x2048xf32, #tpu.memory_space<vmem>>, vector<8x2048xf32>
    tpu.vector_store %arg9[%c96, %c0_40], %32 {strides = array<i32>} : memref<200x2048xf32, #tpu.memory_space<vmem>>, vector<8x2048xf32>,
    %c0_41 = arith.constant 0 : index
    %c134 = arith.constant 134 : index
    %34 = vector.load %arg0[%c0_41, %c134] : memref<8x2688xf32, #tpu.memory_space<vmem>>, vector<8x2048xf32>
    %c104 = arith.constant 104 : index
    %c0_42 = arith.constant 0 : index
    %35 = vector.load %arg9[%c104, %c0_42] : memref<200x2048xf32, #tpu.memory_space<vmem>>, vector<8x2048xf32>
    tpu.vector_store %arg9[%c104, %c0_42], %34 {strides = array<i32>} : memref<200x2048xf32, #tpu.memory_space<vmem>>, vector<8x2048xf32>,
    %c0_43 = arith.constant 0 : index
    %c136 = arith.constant 136 : index
    %36 = vector.load %arg0[%c0_43, %c136] : memref<8x2688xf32, #tpu.memory_space<vmem>>, vector<8x2048xf32>
    %c112 = arith.constant 112 : index
    %c0_44 = arith.constant 0 : index
    %37 = vector.load %arg9[%c112, %c0_44] : memref<200x2048xf32, #tpu.memory_space<vmem>>, vector<8x2048xf32>
    tpu.vector_store %arg9[%c112, %c0_44], %36 {strides = array<i32>} : memref<200x2048xf32, #tpu.memory_space<vmem>>, vector<8x2048xf32>,
    %c0_45 = arith.constant 0 : index
    %c192 = arith.constant 192 : index
    %38 = vector.load %arg0[%c0_45, %c192] : memref<8x2688xf32, #tpu.memory_space<vmem>>, vector<8x2048xf32>
    %c120 = arith.constant 120 : index
    %c0_46 = arith.constant 0 : index
    %39 = vector.load %arg9[%c120, %c0_46] : memref<200x2048xf32, #tpu.memory_space<vmem>>, vector<8x2048xf32>
    tpu.vector_store %arg9[%c120, %c0_46], %38 {strides = array<i32>} : memref<200x2048xf32, #tpu.memory_space<vmem>>, vector<8x2048xf32>,
    %c0_47 = arith.constant 0 : index
    %c194 = arith.constant 194 : index
    %40 = vector.load %arg0[%c0_47, %c194] : memref<8x2688xf32, #tpu.memory_space<vmem>>, vector<8x2048xf32>
    %c128_48 = arith.constant 128 : index
    %c0_49 = arith.constant 0 : index
    %41 = vector.load %arg9[%c128_48, %c0_49] : memref<200x2048xf32, #tpu.memory_space<vmem>>, vector<8x2048xf32>
    tpu.vector_store %arg9[%c128_48, %c0_49], %40 {strides = array<i32>} : memref<200x2048xf32, #tpu.memory_space<vmem>>, vector<8x2048xf32>,
    %c0_50 = arith.constant 0 : index
    %c196 = arith.constant 196 : index
    %42 = vector.load %arg0[%c0_50, %c196] : memref<8x2688xf32, #tpu.memory_space<vmem>>, vector<8x2048xf32>
    %c136_51 = arith.constant 136 : index
    %c0_52 = arith.constant 0 : index
    %43 = vector.load %arg9[%c136_51, %c0_52] : memref<200x2048xf32, #tpu.memory_space<vmem>>, vector<8x2048xf32>
    tpu.vector_store %arg9[%c136_51, %c0_52], %42 {strides = array<i32>} : memref<200x2048xf32, #tpu.memory_space<vmem>>, vector<8x2048xf32>,
    %c0_53 = arith.constant 0 : index
    %c198 = arith.constant 198 : index
    %44 = vector.load %arg0[%c0_53, %c198] : memref<8x2688xf32, #tpu.memory_space<vmem>>, vector<8x2048xf32>
    %c144 = arith.constant 144 : index
    %c0_54 = arith.constant 0 : index
    %45 = vector.load %arg9[%c144, %c0_54] : memref<200x2048xf32, #tpu.memory_space<vmem>>, vector<8x2048xf32>
    tpu.vector_store %arg9[%c144, %c0_54], %44 {strides = array<i32>} : memref<200x2048xf32, #tpu.memory_space<vmem>>, vector<8x2048xf32>,
    %c0_55 = arith.constant 0 : index
    %c200 = arith.constant 200 : index
    %46 = vector.load %arg0[%c0_55, %c200] : memref<8x2688xf32, #tpu.memory_space<vmem>>, vector<8x2048xf32>
    %c152 = arith.constant 152 : index
    %c0_56 = arith.constant 0 : index
    %47 = vector.load %arg9[%c152, %c0_56] : memref<200x2048xf32, #tpu.memory_space<vmem>>, vector<8x2048xf32>
    tpu.vector_store %arg9[%c152, %c0_56], %46 {strides = array<i32>} : memref<200x2048xf32, #tpu.memory_space<vmem>>, vector<8x2048xf32>,
    %c0_57 = arith.constant 0 : index
    %c256 = arith.constant 256 : index
    %48 = vector.load %arg0[%c0_57, %c256] : memref<8x2688xf32, #tpu.memory_space<vmem>>, vector<8x2048xf32>
    %c160 = arith.constant 160 : index
    %c0_58 = arith.constant 0 : index
    %49 = vector.load %arg9[%c160, %c0_58] : memref<200x2048xf32, #tpu.memory_space<vmem>>, vector<8x2048xf32>
    tpu.vector_store %arg9[%c160, %c0_58], %48 {strides = array<i32>} : memref<200x2048xf32, #tpu.memory_space<vmem>>, vector<8x2048xf32>,
    %c0_59 = arith.constant 0 : index
    %c258 = arith.constant 258 : index
    %50 = vector.load %arg0[%c0_59, %c258] : memref<8x2688xf32, #tpu.memory_space<vmem>>, vector<8x2048xf32>
    %c168 = arith.constant 168 : index
    %c0_60 = arith.constant 0 : index
    %51 = vector.load %arg9[%c168, %c0_60] : memref<200x2048xf32, #tpu.memory_space<vmem>>, vector<8x2048xf32>
    tpu.vector_store %arg9[%c168, %c0_60], %50 {strides = array<i32>} : memref<200x2048xf32, #tpu.memory_space<vmem>>, vector<8x2048xf32>,
    %c0_61 = arith.constant 0 : index
    %c260 = arith.constant 260 : index
    %52 = vector.load %arg0[%c0_61, %c260] : memref<8x2688xf32, #tpu.memory_space<vmem>>, vector<8x2048xf32>
    %c176 = arith.constant 176 : index
    %c0_62 = arith.constant 0 : index
    %53 = vector.load %arg9[%c176, %c0_62] : memref<200x2048xf32, #tpu.memory_space<vmem>>, vector<8x2048xf32>
    tpu.vector_store %arg9[%c176, %c0_62], %52 {strides = array<i32>} : memref<200x2048xf32, #tpu.memory_space<vmem>>, vector<8x2048xf32>,
    %c0_63 = arith.constant 0 : index
    %c262 = arith.constant 262 : index
    %54 = vector.load %arg0[%c0_63, %c262] : memref<8x2688xf32, #tpu.memory_space<vmem>>, vector<8x2048xf32>
    %c184 = arith.constant 184 : index
    %c0_64 = arith.constant 0 : index
    %55 = vector.load %arg9[%c184, %c0_64] : memref<200x2048xf32, #tpu.memory_space<vmem>>, vector<8x2048xf32>
    tpu.vector_store %arg9[%c184, %c0_64], %54 {strides = array<i32>} : memref<200x2048xf32, #tpu.memory_space<vmem>>, vector<8x2048xf32>,
    %c0_65 = arith.constant 0 : index
    %c264 = arith.constant 264 : index
    %56 = vector.load %arg0[%c0_65, %c264] : memref<8x2688xf32, #tpu.memory_space<vmem>>, vector<8x2048xf32>
    %c192_66 = arith.constant 192 : index
    %c0_67 = arith.constant 0 : index
    %57 = vector.load %arg9[%c192_66, %c0_67] : memref<200x2048xf32, #tpu.memory_space<vmem>>, vector<8x2048xf32>
    tpu.vector_store %arg9[%c192_66, %c0_67], %56 {strides = array<i32>} : memref<200x2048xf32, #tpu.memory_space<vmem>>, vector<8x2048xf32>,
    %c0_68 = arith.constant 0 : index
    %c0_69 = arith.constant 0 : index
    %58 = vector.load %arg9[%c0_68, %c0_69] : memref<200x2048xf32, #tpu.memory_space<vmem>>, vector<200x2048xf32>
    %cst_70 = arith.constant dense<0.000000e+00> : vector<8x2048xf32>
    %59 = tpu.matmul %6, %58, %cst_70 {dimension_numbers = #tpu.dot_dimension_numbers<[1], [0], [0], [1], [0, 0, 1, 1], [], []>} : vector<8x200xf32>, vector<200x2048xf32>, vector<8x2048xf32> -> vector<8x2048xf32>
    %60 = vector.broadcast %7 : vector<8x1xf32> to vector<8x2048xf32>
    %61 = arith.addf %59, %60 : vector<8x2048xf32>
    %cst_71 = arith.constant 0.000000e+00 : f32
    %62 = vector.broadcast %cst_71 : f32 to vector<8x2048xf32>
    %63 = arith.maximumf %61, %62 : vector<8x2048xf32>
    %c0_72 = arith.constant 0 : index
    %c0_73 = arith.constant 0 : index
    %64 = vector.load %arg10[%c0_72, %c0_73] : memref<8x2688xf32, #tpu.memory_space<vmem>>, vector<8x2048xf32>
    tpu.vector_store %arg10[%c0_72, %c0_73], %63 {strides = array<i32>} : memref<8x2688xf32, #tpu.memory_space<vmem>>, vector<8x2048xf32>,
    %c0_74 = arith.constant 0 : index
    %c0_75 = arith.constant 0 : index
    %65 = vector.load %arg10[%c0_74, %c0_75] : memref<8x2688xf32, #tpu.memory_space<vmem>>, vector<8x2048xf32>
    %c0_76 = arith.constant 0 : index
    %c2_77 = arith.constant 2 : index
    %66 = vector.load %arg10[%c0_76, %c2_77] : memref<8x2688xf32, #tpu.memory_space<vmem>>, vector<8x2048xf32>
    %67 = arith.maximumf %65, %66 : vector<8x2048xf32>
    %c0_78 = arith.constant 0 : index
    %c64_79 = arith.constant 64 : index
    %68 = vector.load %arg10[%c0_78, %c64_79] : memref<8x2688xf32, #tpu.memory_space<vmem>>, vector<8x2048xf32>
    %69 = arith.maximumf %67, %68 : vector<8x2048xf32>
    %c0_80 = arith.constant 0 : index
    %c66_81 = arith.constant 66 : index
    %70 = vector.load %arg10[%c0_80, %c66_81] : memref<8x2688xf32, #tpu.memory_space<vmem>>, vector<8x2048xf32>
    %71 = arith.maximumf %69, %70 : vector<8x2048xf32>
    %c0_82 = arith.constant 0 : index
    %c0_83 = arith.constant 0 : index
    %72 = vector.load %arg11[%c0_82, %c0_83] : memref<8x2688xf32, #tpu.memory_space<vmem>>, vector<8x2048xf32>
    tpu.vector_store %arg11[%c0_82, %c0_83], %71 {strides = array<i32>} : memref<8x2688xf32, #tpu.memory_space<vmem>>, vector<8x2048xf32>,
    %c8_84 = arith.constant 8 : index
    %c0_85 = arith.constant 0 : index
    %73 = vector.load %arg1[%c8_84, %c0_85] : memref<24x200xf32, #tpu.memory_space<vmem>>, vector<16x200xf32>
    %c8_86 = arith.constant 8 : index
    %c0_87 = arith.constant 0 : index
    %74 = vector.load %arg2[%c8_86, %c0_87] : memref<24x1xf32, #tpu.memory_space<vmem>>, vector<16x1xf32>
    %c0_88 = arith.constant 0 : index
    %c0_89 = arith.constant 0 : index
    %75 = vector.load %arg11[%c0_88, %c0_89] : memref<8x2688xf32, #tpu.memory_space<vmem>>, vector<8x2048xf32>
    %c0_90 = arith.constant 0 : index
    %c0_91 = arith.constant 0 : index
    %76 = vector.load %arg9[%c0_90, %c0_91] : memref<200x2048xf32, #tpu.memory_space<vmem>>, vector<8x2048xf32>
    tpu.vector_store %arg9[%c0_90, %c0_91], %75 {strides = array<i32>} : memref<200x2048xf32, #tpu.memory_space<vmem>>, vector<8x2048xf32>,
    %c0_92 = arith.constant 0 : index
    %c4_93 = arith.constant 4 : index
    %77 = vector.load %arg11[%c0_92, %c4_93] : memref<8x2688xf32, #tpu.memory_space<vmem>>, vector<8x2048xf32>
    %c8_94 = arith.constant 8 : index
    %c0_95 = arith.constant 0 : index
    %78 = vector.load %arg9[%c8_94, %c0_95] : memref<200x2048xf32, #tpu.memory_space<vmem>>, vector<8x2048xf32>
    tpu.vector_store %arg9[%c8_94, %c0_95], %77 {strides = array<i32>} : memref<200x2048xf32, #tpu.memory_space<vmem>>, vector<8x2048xf32>,
    %c0_96 = arith.constant 0 : index
    %c8_97 = arith.constant 8 : index
    %79 = vector.load %arg11[%c0_96, %c8_97] : memref<8x2688xf32, #tpu.memory_space<vmem>>, vector<8x2048xf32>
    %c16_98 = arith.constant 16 : index
    %c0_99 = arith.constant 0 : index
    %80 = vector.load %arg9[%c16_98, %c0_99] : memref<200x2048xf32, #tpu.memory_space<vmem>>, vector<8x2048xf32>
    tpu.vector_store %arg9[%c16_98, %c0_99], %79 {strides = array<i32>} : memref<200x2048xf32, #tpu.memory_space<vmem>>, vector<8x2048xf32>,
    %c0_100 = arith.constant 0 : index
    %c12 = arith.constant 12 : index
    %81 = vector.load %arg11[%c0_100, %c12] : memref<8x2688xf32, #tpu.memory_space<vmem>>, vector<8x2048xf32>
    %c24_101 = arith.constant 24 : index
    %c0_102 = arith.constant 0 : index
    %82 = vector.load %arg9[%c24_101, %c0_102] : memref<200x2048xf32, #tpu.memory_space<vmem>>, vector<8x2048xf32>
    tpu.vector_store %arg9[%c24_101, %c0_102], %81 {strides = array<i32>} : memref<200x2048xf32, #tpu.memory_space<vmem>>, vector<8x2048xf32>,
    %c0_103 = arith.constant 0 : index
    %c16_104 = arith.constant 16 : index
    %83 = vector.load %arg11[%c0_103, %c16_104] : memref<8x2688xf32, #tpu.memory_space<vmem>>, vector<8x2048xf32>
    %c32_105 = arith.constant 32 : index
    %c0_106 = arith.constant 0 : index
    %84 = vector.load %arg9[%c32_105, %c0_106] : memref<200x2048xf32, #tpu.memory_space<vmem>>, vector<8x2048xf32>
    tpu.vector_store %arg9[%c32_105, %c0_106], %83 {strides = array<i32>} : memref<200x2048xf32, #tpu.memory_space<vmem>>, vector<8x2048xf32>,
    %c0_107 = arith.constant 0 : index
    %c128_108 = arith.constant 128 : index
    %85 = vector.load %arg11[%c0_107, %c128_108] : memref<8x2688xf32, #tpu.memory_space<vmem>>, vector<8x2048xf32>
    %c40_109 = arith.constant 40 : index
    %c0_110 = arith.constant 0 : index
    %86 = vector.load %arg9[%c40_109, %c0_110] : memref<200x2048xf32, #tpu.memory_space<vmem>>, vector<8x2048xf32>
    tpu.vector_store %arg9[%c40_109, %c0_110], %85 {strides = array<i32>} : memref<200x2048xf32, #tpu.memory_space<vmem>>, vector<8x2048xf32>,
    %c0_111 = arith.constant 0 : index
    %c132_112 = arith.constant 132 : index
    %87 = vector.load %arg11[%c0_111, %c132_112] : memref<8x2688xf32, #tpu.memory_space<vmem>>, vector<8x2048xf32>
    %c48_113 = arith.constant 48 : index
    %c0_114 = arith.constant 0 : index
    %88 = vector.load %arg9[%c48_113, %c0_114] : memref<200x2048xf32, #tpu.memory_space<vmem>>, vector<8x2048xf32>
    tpu.vector_store %arg9[%c48_113, %c0_114], %87 {strides = array<i32>} : memref<200x2048xf32, #tpu.memory_space<vmem>>, vector<8x2048xf32>,
    %c0_115 = arith.constant 0 : index
    %c136_116 = arith.constant 136 : index
    %89 = vector.load %arg11[%c0_115, %c136_116] : memref<8x2688xf32, #tpu.memory_space<vmem>>, vector<8x2048xf32>
    %c56_117 = arith.constant 56 : index
    %c0_118 = arith.constant 0 : index
    %90 = vector.load %arg9[%c56_117, %c0_118] : memref<200x2048xf32, #tpu.memory_space<vmem>>, vector<8x2048xf32>
    tpu.vector_store %arg9[%c56_117, %c0_118], %89 {strides = array<i32>} : memref<200x2048xf32, #tpu.memory_space<vmem>>, vector<8x2048xf32>,
    %c0_119 = arith.constant 0 : index
    %c140 = arith.constant 140 : index
    %91 = vector.load %arg11[%c0_119, %c140] : memref<8x2688xf32, #tpu.memory_space<vmem>>, vector<8x2048xf32>
    %c64_120 = arith.constant 64 : index
    %c0_121 = arith.constant 0 : index
    %92 = vector.load %arg9[%c64_120, %c0_121] : memref<200x2048xf32, #tpu.memory_space<vmem>>, vector<8x2048xf32>
    tpu.vector_store %arg9[%c64_120, %c0_121], %91 {strides = array<i32>} : memref<200x2048xf32, #tpu.memory_space<vmem>>, vector<8x2048xf32>,
    %c0_122 = arith.constant 0 : index
    %c144_123 = arith.constant 144 : index
    %93 = vector.load %arg11[%c0_122, %c144_123] : memref<8x2688xf32, #tpu.memory_space<vmem>>, vector<8x2048xf32>
    %c72_124 = arith.constant 72 : index
    %c0_125 = arith.constant 0 : index
    %94 = vector.load %arg9[%c72_124, %c0_125] : memref<200x2048xf32, #tpu.memory_space<vmem>>, vector<8x2048xf32>
    tpu.vector_store %arg9[%c72_124, %c0_125], %93 {strides = array<i32>} : memref<200x2048xf32, #tpu.memory_space<vmem>>, vector<8x2048xf32>,
    %c0_126 = arith.constant 0 : index
    %c256_127 = arith.constant 256 : index
    %95 = vector.load %arg11[%c0_126, %c256_127] : memref<8x2688xf32, #tpu.memory_space<vmem>>, vector<8x2048xf32>
    %c80_128 = arith.constant 80 : index
    %c0_129 = arith.constant 0 : index
    %96 = vector.load %arg9[%c80_128, %c0_129] : memref<200x2048xf32, #tpu.memory_space<vmem>>, vector<8x2048xf32>
    tpu.vector_store %arg9[%c80_128, %c0_129], %95 {strides = array<i32>} : memref<200x2048xf32, #tpu.memory_space<vmem>>, vector<8x2048xf32>,
    %c0_130 = arith.constant 0 : index
    %c260_131 = arith.constant 260 : index
    %97 = vector.load %arg11[%c0_130, %c260_131] : memref<8x2688xf32, #tpu.memory_space<vmem>>, vector<8x2048xf32>
    %c88_132 = arith.constant 88 : index
    %c0_133 = arith.constant 0 : index
    %98 = vector.load %arg9[%c88_132, %c0_133] : memref<200x2048xf32, #tpu.memory_space<vmem>>, vector<8x2048xf32>
    tpu.vector_store %arg9[%c88_132, %c0_133], %97 {strides = array<i32>} : memref<200x2048xf32, #tpu.memory_space<vmem>>, vector<8x2048xf32>,
    %c0_134 = arith.constant 0 : index
    %c264_135 = arith.constant 264 : index
    %99 = vector.load %arg11[%c0_134, %c264_135] : memref<8x2688xf32, #tpu.memory_space<vmem>>, vector<8x2048xf32>
    %c96_136 = arith.constant 96 : index
    %c0_137 = arith.constant 0 : index
    %100 = vector.load %arg9[%c96_136, %c0_137] : memref<200x2048xf32, #tpu.memory_space<vmem>>, vector<8x2048xf32>
    tpu.vector_store %arg9[%c96_136, %c0_137], %99 {strides = array<i32>} : memref<200x2048xf32, #tpu.memory_space<vmem>>, vector<8x2048xf32>,
    %c0_138 = arith.constant 0 : index
    %c268 = arith.constant 268 : index
    %101 = vector.load %arg11[%c0_138, %c268] : memref<8x2688xf32, #tpu.memory_space<vmem>>, vector<8x2048xf32>
    %c104_139 = arith.constant 104 : index
    %c0_140 = arith.constant 0 : index
    %102 = vector.load %arg9[%c104_139, %c0_140] : memref<200x2048xf32, #tpu.memory_space<vmem>>, vector<8x2048xf32>
    tpu.vector_store %arg9[%c104_139, %c0_140], %101 {strides = array<i32>} : memref<200x2048xf32, #tpu.memory_space<vmem>>, vector<8x2048xf32>,
    %c0_141 = arith.constant 0 : index
    %c272 = arith.constant 272 : index
    %103 = vector.load %arg11[%c0_141, %c272] : memref<8x2688xf32, #tpu.memory_space<vmem>>, vector<8x2048xf32>
    %c112_142 = arith.constant 112 : index
    %c0_143 = arith.constant 0 : index
    %104 = vector.load %arg9[%c112_142, %c0_143] : memref<200x2048xf32, #tpu.memory_space<vmem>>, vector<8x2048xf32>
    tpu.vector_store %arg9[%c112_142, %c0_143], %103 {strides = array<i32>} : memref<200x2048xf32, #tpu.memory_space<vmem>>, vector<8x2048xf32>,
    %c0_144 = arith.constant 0 : index
    %c384 = arith.constant 384 : index
    %105 = vector.load %arg11[%c0_144, %c384] : memref<8x2688xf32, #tpu.memory_space<vmem>>, vector<8x2048xf32>
    %c120_145 = arith.constant 120 : index
    %c0_146 = arith.constant 0 : index
    %106 = vector.load %arg9[%c120_145, %c0_146] : memref<200x2048xf32, #tpu.memory_space<vmem>>, vector<8x2048xf32>
    tpu.vector_store %arg9[%c120_145, %c0_146], %105 {strides = array<i32>} : memref<200x2048xf32, #tpu.memory_space<vmem>>, vector<8x2048xf32>,
    %c0_147 = arith.constant 0 : index
    %c388 = arith.constant 388 : index
    %107 = vector.load %arg11[%c0_147, %c388] : memref<8x2688xf32, #tpu.memory_space<vmem>>, vector<8x2048xf32>
    %c128_148 = arith.constant 128 : index
    %c0_149 = arith.constant 0 : index
    %108 = vector.load %arg9[%c128_148, %c0_149] : memref<200x2048xf32, #tpu.memory_space<vmem>>, vector<8x2048xf32>
    tpu.vector_store %arg9[%c128_148, %c0_149], %107 {strides = array<i32>} : memref<200x2048xf32, #tpu.memory_space<vmem>>, vector<8x2048xf32>,
    %c0_150 = arith.constant 0 : index
    %c392 = arith.constant 392 : index
    %109 = vector.load %arg11[%c0_150, %c392] : memref<8x2688xf32, #tpu.memory_space<vmem>>, vector<8x2048xf32>
    %c136_151 = arith.constant 136 : index
    %c0_152 = arith.constant 0 : index
    %110 = vector.load %arg9[%c136_151, %c0_152] : memref<200x2048xf32, #tpu.memory_space<vmem>>, vector<8x2048xf32>
    tpu.vector_store %arg9[%c136_151, %c0_152], %109 {strides = array<i32>} : memref<200x2048xf32, #tpu.memory_space<vmem>>, vector<8x2048xf32>,
    %c0_153 = arith.constant 0 : index
    %c396 = arith.constant 396 : index
    %111 = vector.load %arg11[%c0_153, %c396] : memref<8x2688xf32, #tpu.memory_space<vmem>>, vector<8x2048xf32>
    %c144_154 = arith.constant 144 : index
    %c0_155 = arith.constant 0 : index
    %112 = vector.load %arg9[%c144_154, %c0_155] : memref<200x2048xf32, #tpu.memory_space<vmem>>, vector<8x2048xf32>
    tpu.vector_store %arg9[%c144_154, %c0_155], %111 {strides = array<i32>} : memref<200x2048xf32, #tpu.memory_space<vmem>>, vector<8x2048xf32>,
    %c0_156 = arith.constant 0 : index
    %c400 = arith.constant 400 : index
    %113 = vector.load %arg11[%c0_156, %c400] : memref<8x2688xf32, #tpu.memory_space<vmem>>, vector<8x2048xf32>
    %c152_157 = arith.constant 152 : index
    %c0_158 = arith.constant 0 : index
    %114 = vector.load %arg9[%c152_157, %c0_158] : memref<200x2048xf32, #tpu.memory_space<vmem>>, vector<8x2048xf32>
    tpu.vector_store %arg9[%c152_157, %c0_158], %113 {strides = array<i32>} : memref<200x2048xf32, #tpu.memory_space<vmem>>, vector<8x2048xf32>,
    %c0_159 = arith.constant 0 : index
    %c512 = arith.constant 512 : index
    %115 = vector.load %arg11[%c0_159, %c512] : memref<8x2688xf32, #tpu.memory_space<vmem>>, vector<8x2048xf32>
    %c160_160 = arith.constant 160 : index
    %c0_161 = arith.constant 0 : index
    %116 = vector.load %arg9[%c160_160, %c0_161] : memref<200x2048xf32, #tpu.memory_space<vmem>>, vector<8x2048xf32>
    tpu.vector_store %arg9[%c160_160, %c0_161], %115 {strides = array<i32>} : memref<200x2048xf32, #tpu.memory_space<vmem>>, vector<8x2048xf32>,
    %c0_162 = arith.constant 0 : index
    %c516 = arith.constant 516 : index
    %117 = vector.load %arg11[%c0_162, %c516] : memref<8x2688xf32, #tpu.memory_space<vmem>>, vector<8x2048xf32>
    %c168_163 = arith.constant 168 : index
    %c0_164 = arith.constant 0 : index
    %118 = vector.load %arg9[%c168_163, %c0_164] : memref<200x2048xf32, #tpu.memory_space<vmem>>, vector<8x2048xf32>
    tpu.vector_store %arg9[%c168_163, %c0_164], %117 {strides = array<i32>} : memref<200x2048xf32, #tpu.memory_space<vmem>>, vector<8x2048xf32>,
    %c0_165 = arith.constant 0 : index
    %c520 = arith.constant 520 : index
    %119 = vector.load %arg11[%c0_165, %c520] : memref<8x2688xf32, #tpu.memory_space<vmem>>, vector<8x2048xf32>
    %c176_166 = arith.constant 176 : index
    %c0_167 = arith.constant 0 : index
    %120 = vector.load %arg9[%c176_166, %c0_167] : memref<200x2048xf32, #tpu.memory_space<vmem>>, vector<8x2048xf32>
    tpu.vector_store %arg9[%c176_166, %c0_167], %119 {strides = array<i32>} : memref<200x2048xf32, #tpu.memory_space<vmem>>, vector<8x2048xf32>,
    %c0_168 = arith.constant 0 : index
    %c524 = arith.constant 524 : index
    %121 = vector.load %arg11[%c0_168, %c524] : memref<8x2688xf32, #tpu.memory_space<vmem>>, vector<8x2048xf32>
    %c184_169 = arith.constant 184 : index
    %c0_170 = arith.constant 0 : index
    %122 = vector.load %arg9[%c184_169, %c0_170] : memref<200x2048xf32, #tpu.memory_space<vmem>>, vector<8x2048xf32>
    tpu.vector_store %arg9[%c184_169, %c0_170], %121 {strides = array<i32>} : memref<200x2048xf32, #tpu.memory_space<vmem>>, vector<8x2048xf32>,
    %c0_171 = arith.constant 0 : index
    %c528 = arith.constant 528 : index
    %123 = vector.load %arg11[%c0_171, %c528] : memref<8x2688xf32, #tpu.memory_space<vmem>>, vector<8x2048xf32>
    %c192_172 = arith.constant 192 : index
    %c0_173 = arith.constant 0 : index
    %124 = vector.load %arg9[%c192_172, %c0_173] : memref<200x2048xf32, #tpu.memory_space<vmem>>, vector<8x2048xf32>
    tpu.vector_store %arg9[%c192_172, %c0_173], %123 {strides = array<i32>} : memref<200x2048xf32, #tpu.memory_space<vmem>>, vector<8x2048xf32>,
    %c0_174 = arith.constant 0 : index
    %c0_175 = arith.constant 0 : index
    %125 = vector.load %arg9[%c0_174, %c0_175] : memref<200x2048xf32, #tpu.memory_space<vmem>>, vector<200x2048xf32>
    %cst_176 = arith.constant dense<0.000000e+00> : vector<16x2048xf32>
    %126 = tpu.matmul %73, %125, %cst_176 {dimension_numbers = #tpu.dot_dimension_numbers<[1], [0], [0], [1], [0, 0, 1, 1], [], []>} : vector<16x200xf32>, vector<200x2048xf32>, vector<16x2048xf32> -> vector<16x2048xf32>
    %127 = vector.broadcast %74 : vector<16x1xf32> to vector<16x2048xf32>
    %128 = arith.addf %126, %127 : vector<16x2048xf32>
    %cst_177 = arith.constant 0.000000e+00 : f32
    %129 = vector.broadcast %cst_177 : f32 to vector<16x2048xf32>
    %130 = arith.maximumf %128, %129 : vector<16x2048xf32>
    %c0_178 = arith.constant 0 : index
    %c0_179 = arith.constant 0 : index
    %131 = vector.load %arg12[%c0_178, %c0_179] : memref<16x2688xf32, #tpu.memory_space<vmem>>, vector<16x2048xf32>
    tpu.vector_store %arg12[%c0_178, %c0_179], %130 {strides = array<i32>} : memref<16x2688xf32, #tpu.memory_space<vmem>>, vector<16x2048xf32>,
    %c0_180 = arith.constant 0 : index
    %c0_181 = arith.constant 0 : index
    %132 = vector.load %arg12[%c0_180, %c0_181] : memref<16x2688xf32, #tpu.memory_space<vmem>>, vector<16x2048xf32>
    %c0_182 = arith.constant 0 : index
    %c4_183 = arith.constant 4 : index
    %133 = vector.load %arg12[%c0_182, %c4_183] : memref<16x2688xf32, #tpu.memory_space<vmem>>, vector<16x2048xf32>
    %134 = arith.maximumf %132, %133 : vector<16x2048xf32>
    %c0_184 = arith.constant 0 : index
    %c128_185 = arith.constant 128 : index
    %135 = vector.load %arg12[%c0_184, %c128_185] : memref<16x2688xf32, #tpu.memory_space<vmem>>, vector<16x2048xf32>
    %136 = arith.maximumf %134, %135 : vector<16x2048xf32>
    %c0_186 = arith.constant 0 : index
    %c132_187 = arith.constant 132 : index
    %137 = vector.load %arg12[%c0_186, %c132_187] : memref<16x2688xf32, #tpu.memory_space<vmem>>, vector<16x2048xf32>
    %138 = arith.maximumf %136, %137 : vector<16x2048xf32>
    %c0_188 = arith.constant 0 : index
    %c0_189 = arith.constant 0 : index
    %139 = vector.load %arg13[%c0_188, %c0_189] : memref<16x2048xf32, #tpu.memory_space<vmem>>, vector<16x2048xf32>
    tpu.vector_store %arg13[%c0_188, %c0_189], %138 {strides = array<i32>} : memref<16x2048xf32, #tpu.memory_space<vmem>>, vector<16x2048xf32>,
    %c0_190 = arith.constant 0 : index
    %c0_191 = arith.constant 0 : index
    %140 = vector.load %arg13[%c0_190, %c0_191] : memref<16x2048xf32, #tpu.memory_space<vmem>>, vector<16x2xf32>
    %c0_192 = arith.constant 0 : index
    %c0_193 = arith.constant 0 : index
    %141 = vector.load %arg14[%c0_192, %c0_193] : memref<400x2xf32, #tpu.memory_space<vmem>>, vector<16x2xf32>
    tpu.vector_store %arg14[%c0_192, %c0_193], %140 {strides = array<i32>} : memref<400x2xf32, #tpu.memory_space<vmem>>, vector<16x2xf32>,
    %c0_194 = arith.constant 0 : index
    %c8_195 = arith.constant 8 : index
    %142 = vector.load %arg13[%c0_194, %c8_195] : memref<16x2048xf32, #tpu.memory_space<vmem>>, vector<16x2xf32>
    %c16_196 = arith.constant 16 : index
    %c0_197 = arith.constant 0 : index
    %143 = vector.load %arg14[%c16_196, %c0_197] : memref<400x2xf32, #tpu.memory_space<vmem>>, vector<16x2xf32>
    tpu.vector_store %arg14[%c16_196, %c0_197], %142 {strides = array<i32>} : memref<400x2xf32, #tpu.memory_space<vmem>>, vector<16x2xf32>,
    %c0_198 = arith.constant 0 : index
    %c16_199 = arith.constant 16 : index
    %144 = vector.load %arg13[%c0_198, %c16_199] : memref<16x2048xf32, #tpu.memory_space<vmem>>, vector<16x2xf32>
    %c32_200 = arith.constant 32 : index
    %c0_201 = arith.constant 0 : index
    %145 = vector.load %arg14[%c32_200, %c0_201] : memref<400x2xf32, #tpu.memory_space<vmem>>, vector<16x2xf32>
    tpu.vector_store %arg14[%c32_200, %c0_201], %144 {strides = array<i32>} : memref<400x2xf32, #tpu.memory_space<vmem>>, vector<16x2xf32>,
    %c0_202 = arith.constant 0 : index
    %c24_203 = arith.constant 24 : index
    %146 = vector.load %arg13[%c0_202, %c24_203] : memref<16x2048xf32, #tpu.memory_space<vmem>>, vector<16x2xf32>
    %c48_204 = arith.constant 48 : index
    %c0_205 = arith.constant 0 : index
    %147 = vector.load %arg14[%c48_204, %c0_205] : memref<400x2xf32, #tpu.memory_space<vmem>>, vector<16x2xf32>
    tpu.vector_store %arg14[%c48_204, %c0_205], %146 {strides = array<i32>} : memref<400x2xf32, #tpu.memory_space<vmem>>, vector<16x2xf32>,
    %c0_206 = arith.constant 0 : index
    %c32_207 = arith.constant 32 : index
    %148 = vector.load %arg13[%c0_206, %c32_207] : memref<16x2048xf32, #tpu.memory_space<vmem>>, vector<16x2xf32>
    %c64_208 = arith.constant 64 : index
    %c0_209 = arith.constant 0 : index
    %149 = vector.load %arg14[%c64_208, %c0_209] : memref<400x2xf32, #tpu.memory_space<vmem>>, vector<16x2xf32>
    tpu.vector_store %arg14[%c64_208, %c0_209], %148 {strides = array<i32>} : memref<400x2xf32, #tpu.memory_space<vmem>>, vector<16x2xf32>,
    %c0_210 = arith.constant 0 : index
    %c256_211 = arith.constant 256 : index
    %150 = vector.load %arg13[%c0_210, %c256_211] : memref<16x2048xf32, #tpu.memory_space<vmem>>, vector<16x2xf32>
    %c80_212 = arith.constant 80 : index
    %c0_213 = arith.constant 0 : index
    %151 = vector.load %arg14[%c80_212, %c0_213] : memref<400x2xf32, #tpu.memory_space<vmem>>, vector<16x2xf32>
    tpu.vector_store %arg14[%c80_212, %c0_213], %150 {strides = array<i32>} : memref<400x2xf32, #tpu.memory_space<vmem>>, vector<16x2xf32>,
    %c0_214 = arith.constant 0 : index
    %c264_215 = arith.constant 264 : index
    %152 = vector.load %arg13[%c0_214, %c264_215] : memref<16x2048xf32, #tpu.memory_space<vmem>>, vector<16x2xf32>
    %c96_216 = arith.constant 96 : index
    %c0_217 = arith.constant 0 : index
    %153 = vector.load %arg14[%c96_216, %c0_217] : memref<400x2xf32, #tpu.memory_space<vmem>>, vector<16x2xf32>
    tpu.vector_store %arg14[%c96_216, %c0_217], %152 {strides = array<i32>} : memref<400x2xf32, #tpu.memory_space<vmem>>, vector<16x2xf32>,
    %c0_218 = arith.constant 0 : index
    %c272_219 = arith.constant 272 : index
    %154 = vector.load %arg13[%c0_218, %c272_219] : memref<16x2048xf32, #tpu.memory_space<vmem>>, vector<16x2xf32>
    %c112_220 = arith.constant 112 : index
    %c0_221 = arith.constant 0 : index
    %155 = vector.load %arg14[%c112_220, %c0_221] : memref<400x2xf32, #tpu.memory_space<vmem>>, vector<16x2xf32>
    tpu.vector_store %arg14[%c112_220, %c0_221], %154 {strides = array<i32>} : memref<400x2xf32, #tpu.memory_space<vmem>>, vector<16x2xf32>,
    %c0_222 = arith.constant 0 : index
    %c280 = arith.constant 280 : index
    %156 = vector.load %arg13[%c0_222, %c280] : memref<16x2048xf32, #tpu.memory_space<vmem>>, vector<16x2xf32>
    %c128_223 = arith.constant 128 : index
    %c0_224 = arith.constant 0 : index
    %157 = vector.load %arg14[%c128_223, %c0_224] : memref<400x2xf32, #tpu.memory_space<vmem>>, vector<16x2xf32>
    tpu.vector_store %arg14[%c128_223, %c0_224], %156 {strides = array<i32>} : memref<400x2xf32, #tpu.memory_space<vmem>>, vector<16x2xf32>,
    %c0_225 = arith.constant 0 : index
    %c288 = arith.constant 288 : index
    %158 = vector.load %arg13[%c0_225, %c288] : memref<16x2048xf32, #tpu.memory_space<vmem>>, vector<16x2xf32>
    %c144_226 = arith.constant 144 : index
    %c0_227 = arith.constant 0 : index
    %159 = vector.load %arg14[%c144_226, %c0_227] : memref<400x2xf32, #tpu.memory_space<vmem>>, vector<16x2xf32>
    tpu.vector_store %arg14[%c144_226, %c0_227], %158 {strides = array<i32>} : memref<400x2xf32, #tpu.memory_space<vmem>>, vector<16x2xf32>,
    %c0_228 = arith.constant 0 : index
    %c512_229 = arith.constant 512 : index
    %160 = vector.load %arg13[%c0_228, %c512_229] : memref<16x2048xf32, #tpu.memory_space<vmem>>, vector<16x2xf32>
    %c160_230 = arith.constant 160 : index
    %c0_231 = arith.constant 0 : index
    %161 = vector.load %arg14[%c160_230, %c0_231] : memref<400x2xf32, #tpu.memory_space<vmem>>, vector<16x2xf32>
    tpu.vector_store %arg14[%c160_230, %c0_231], %160 {strides = array<i32>} : memref<400x2xf32, #tpu.memory_space<vmem>>, vector<16x2xf32>,
    %c0_232 = arith.constant 0 : index
    %c520_233 = arith.constant 520 : index
    %162 = vector.load %arg13[%c0_232, %c520_233] : memref<16x2048xf32, #tpu.memory_space<vmem>>, vector<16x2xf32>
    %c176_234 = arith.constant 176 : index
    %c0_235 = arith.constant 0 : index
    %163 = vector.load %arg14[%c176_234, %c0_235] : memref<400x2xf32, #tpu.memory_space<vmem>>, vector<16x2xf32>
    tpu.vector_store %arg14[%c176_234, %c0_235], %162 {strides = array<i32>} : memref<400x2xf32, #tpu.memory_space<vmem>>, vector<16x2xf32>,
    %c0_236 = arith.constant 0 : index
    %c528_237 = arith.constant 528 : index
    %164 = vector.load %arg13[%c0_236, %c528_237] : memref<16x2048xf32, #tpu.memory_space<vmem>>, vector<16x2xf32>
    %c192_238 = arith.constant 192 : index
    %c0_239 = arith.constant 0 : index
    %165 = vector.load %arg14[%c192_238, %c0_239] : memref<400x2xf32, #tpu.memory_space<vmem>>, vector<16x2xf32>
    tpu.vector_store %arg14[%c192_238, %c0_239], %164 {strides = array<i32>} : memref<400x2xf32, #tpu.memory_space<vmem>>, vector<16x2xf32>,
    %c0_240 = arith.constant 0 : index
    %c536 = arith.constant 536 : index
    %166 = vector.load %arg13[%c0_240, %c536] : memref<16x2048xf32, #tpu.memory_space<vmem>>, vector<16x2xf32>
    %c208 = arith.constant 208 : index
    %c0_241 = arith.constant 0 : index
    %167 = vector.load %arg14[%c208, %c0_241] : memref<400x2xf32, #tpu.memory_space<vmem>>, vector<16x2xf32>
    tpu.vector_store %arg14[%c208, %c0_241], %166 {strides = array<i32>} : memref<400x2xf32, #tpu.memory_space<vmem>>, vector<16x2xf32>,
    %c0_242 = arith.constant 0 : index
    %c544 = arith.constant 544 : index
    %168 = vector.load %arg13[%c0_242, %c544] : memref<16x2048xf32, #tpu.memory_space<vmem>>, vector<16x2xf32>
    %c224 = arith.constant 224 : index
    %c0_243 = arith.constant 0 : index
    %169 = vector.load %arg14[%c224, %c0_243] : memref<400x2xf32, #tpu.memory_space<vmem>>, vector<16x2xf32>
    tpu.vector_store %arg14[%c224, %c0_243], %168 {strides = array<i32>} : memref<400x2xf32, #tpu.memory_space<vmem>>, vector<16x2xf32>,
    %c0_244 = arith.constant 0 : index
    %c768 = arith.constant 768 : index
    %170 = vector.load %arg13[%c0_244, %c768] : memref<16x2048xf32, #tpu.memory_space<vmem>>, vector<16x2xf32>
    %c240 = arith.constant 240 : index
    %c0_245 = arith.constant 0 : index
    %171 = vector.load %arg14[%c240, %c0_245] : memref<400x2xf32, #tpu.memory_space<vmem>>, vector<16x2xf32>
    tpu.vector_store %arg14[%c240, %c0_245], %170 {strides = array<i32>} : memref<400x2xf32, #tpu.memory_space<vmem>>, vector<16x2xf32>,
    %c0_246 = arith.constant 0 : index
    %c776 = arith.constant 776 : index
    %172 = vector.load %arg13[%c0_246, %c776] : memref<16x2048xf32, #tpu.memory_space<vmem>>, vector<16x2xf32>
    %c256_247 = arith.constant 256 : index
    %c0_248 = arith.constant 0 : index
    %173 = vector.load %arg14[%c256_247, %c0_248] : memref<400x2xf32, #tpu.memory_space<vmem>>, vector<16x2xf32>
    tpu.vector_store %arg14[%c256_247, %c0_248], %172 {strides = array<i32>} : memref<400x2xf32, #tpu.memory_space<vmem>>, vector<16x2xf32>,
    %c0_249 = arith.constant 0 : index
    %c784 = arith.constant 784 : index
    %174 = vector.load %arg13[%c0_249, %c784] : memref<16x2048xf32, #tpu.memory_space<vmem>>, vector<16x2xf32>
    %c272_250 = arith.constant 272 : index
    %c0_251 = arith.constant 0 : index
    %175 = vector.load %arg14[%c272_250, %c0_251] : memref<400x2xf32, #tpu.memory_space<vmem>>, vector<16x2xf32>
    tpu.vector_store %arg14[%c272_250, %c0_251], %174 {strides = array<i32>} : memref<400x2xf32, #tpu.memory_space<vmem>>, vector<16x2xf32>,
    %c0_252 = arith.constant 0 : index
    %c792 = arith.constant 792 : index
    %176 = vector.load %arg13[%c0_252, %c792] : memref<16x2048xf32, #tpu.memory_space<vmem>>, vector<16x2xf32>
    %c288_253 = arith.constant 288 : index
    %c0_254 = arith.constant 0 : index
    %177 = vector.load %arg14[%c288_253, %c0_254] : memref<400x2xf32, #tpu.memory_space<vmem>>, vector<16x2xf32>
    tpu.vector_store %arg14[%c288_253, %c0_254], %176 {strides = array<i32>} : memref<400x2xf32, #tpu.memory_space<vmem>>, vector<16x2xf32>,
    %c0_255 = arith.constant 0 : index
    %c800 = arith.constant 800 : index
    %178 = vector.load %arg13[%c0_255, %c800] : memref<16x2048xf32, #tpu.memory_space<vmem>>, vector<16x2xf32>
    %c304 = arith.constant 304 : index
    %c0_256 = arith.constant 0 : index
    %179 = vector.load %arg14[%c304, %c0_256] : memref<400x2xf32, #tpu.memory_space<vmem>>, vector<16x2xf32>
    tpu.vector_store %arg14[%c304, %c0_256], %178 {strides = array<i32>} : memref<400x2xf32, #tpu.memory_space<vmem>>, vector<16x2xf32>,
    %c0_257 = arith.constant 0 : index
    %c1024 = arith.constant 1024 : index
    %180 = vector.load %arg13[%c0_257, %c1024] : memref<16x2048xf32, #tpu.memory_space<vmem>>, vector<16x2xf32>
    %c320 = arith.constant 320 : index
    %c0_258 = arith.constant 0 : index
    %181 = vector.load %arg14[%c320, %c0_258] : memref<400x2xf32, #tpu.memory_space<vmem>>, vector<16x2xf32>
    tpu.vector_store %arg14[%c320, %c0_258], %180 {strides = array<i32>} : memref<400x2xf32, #tpu.memory_space<vmem>>, vector<16x2xf32>,
    %c0_259 = arith.constant 0 : index
    %c1032 = arith.constant 1032 : index
    %182 = vector.load %arg13[%c0_259, %c1032] : memref<16x2048xf32, #tpu.memory_space<vmem>>, vector<16x2xf32>
    %c336 = arith.constant 336 : index
    %c0_260 = arith.constant 0 : index
    %183 = vector.load %arg14[%c336, %c0_260] : memref<400x2xf32, #tpu.memory_space<vmem>>, vector<16x2xf32>
    tpu.vector_store %arg14[%c336, %c0_260], %182 {strides = array<i32>} : memref<400x2xf32, #tpu.memory_space<vmem>>, vector<16x2xf32>,
    %c0_261 = arith.constant 0 : index
    %c1040 = arith.constant 1040 : index
    %184 = vector.load %arg13[%c0_261, %c1040] : memref<16x2048xf32, #tpu.memory_space<vmem>>, vector<16x2xf32>
    %c352 = arith.constant 352 : index
    %c0_262 = arith.constant 0 : index
    %185 = vector.load %arg14[%c352, %c0_262] : memref<400x2xf32, #tpu.memory_space<vmem>>, vector<16x2xf32>
    tpu.vector_store %arg14[%c352, %c0_262], %184 {strides = array<i32>} : memref<400x2xf32, #tpu.memory_space<vmem>>, vector<16x2xf32>,
    %c0_263 = arith.constant 0 : index
    %c1048 = arith.constant 1048 : index
    %186 = vector.load %arg13[%c0_263, %c1048] : memref<16x2048xf32, #tpu.memory_space<vmem>>, vector<16x2xf32>
    %c368 = arith.constant 368 : index
    %c0_264 = arith.constant 0 : index
    %187 = vector.load %arg14[%c368, %c0_264] : memref<400x2xf32, #tpu.memory_space<vmem>>, vector<16x2xf32>
    tpu.vector_store %arg14[%c368, %c0_264], %186 {strides = array<i32>} : memref<400x2xf32, #tpu.memory_space<vmem>>, vector<16x2xf32>,
    %c0_265 = arith.constant 0 : index
    %c1056 = arith.constant 1056 : index
    %188 = vector.load %arg13[%c0_265, %c1056] : memref<16x2048xf32, #tpu.memory_space<vmem>>, vector<16x2xf32>
    %c384_266 = arith.constant 384 : index
    %c0_267 = arith.constant 0 : index
    %189 = vector.load %arg14[%c384_266, %c0_267] : memref<400x2xf32, #tpu.memory_space<vmem>>, vector<16x2xf32>
    tpu.vector_store %arg14[%c384_266, %c0_267], %188 {strides = array<i32>} : memref<400x2xf32, #tpu.memory_space<vmem>>, vector<16x2xf32>,
    %c0_268 = arith.constant 0 : index
    %c0_269 = arith.constant 0 : index
    %190 = vector.load %arg14[%c0_268, %c0_269] : memref<400x2xf32, #tpu.memory_space<vmem>>, vector<400x2xf32>
    %c0_270 = arith.constant 0 : index
    %c0_271 = arith.constant 0 : index
    %191 = vector.load %arg3[%c0_270, %c0_271] : memref<120x400xf32, #tpu.memory_space<vmem>>, vector<120x400xf32>
    %cst_272 = arith.constant dense<0.000000e+00> : vector<120x2xf32>
    %192 = tpu.matmul %191, %190, %cst_272 {dimension_numbers = #tpu.dot_dimension_numbers<[1], [0], [0], [1], [0, 0, 1, 1], [], []>} : vector<120x400xf32>, vector<400x2xf32>, vector<120x2xf32> -> vector<120x2xf32>
    %c0_273 = arith.constant 0 : index
    %c0_274 = arith.constant 0 : index
    %193 = vector.load %arg7[%c0_273, %c0_274] : memref<256x1xf32, #tpu.memory_space<vmem>>, vector<120x1xf32>
    %194 = vector.broadcast %193 : vector<120x1xf32> to vector<120x2xf32>
    %195 = arith.addf %192, %194 : vector<120x2xf32>
    %cst_275 = arith.constant 0.000000e+00 : f32
    %196 = vector.broadcast %cst_275 : f32 to vector<120x2xf32>
    %197 = arith.maximumf %195, %196 : vector<120x2xf32>
    %c0_276 = arith.constant 0 : index
    %c0_277 = arith.constant 0 : index
    %198 = vector.load %arg4[%c0_276, %c0_277] : memref<88x120xf32, #tpu.memory_space<vmem>>, vector<88x120xf32>
    %cst_278 = arith.constant dense<0.000000e+00> : vector<88x2xf32>
    %199 = tpu.matmul %198, %197, %cst_278 {dimension_numbers = #tpu.dot_dimension_numbers<[1], [0], [0], [1], [0, 0, 1, 1], [], []>} : vector<88x120xf32>, vector<120x2xf32>, vector<88x2xf32> -> vector<88x2xf32>
    %c120_279 = arith.constant 120 : index
    %c0_280 = arith.constant 0 : index
    %200 = vector.load %arg7[%c120_279, %c0_280] : memref<256x1xf32, #tpu.memory_space<vmem>>, vector<88x1xf32>
    %201 = vector.broadcast %200 : vector<88x1xf32> to vector<88x2xf32>
    %202 = arith.addf %199, %201 : vector<88x2xf32>
    %cst_281 = arith.constant 0.000000e+00 : f32
    %203 = vector.broadcast %cst_281 : f32 to vector<88x2xf32>
    %204 = arith.maximumf %202, %203 : vector<88x2xf32>
    %c0_282 = arith.constant 0 : index
    %c0_283 = arith.constant 0 : index
    %205 = vector.load %arg5[%c0_282, %c0_283] : memref<32x88xf32, #tpu.memory_space<vmem>>, vector<32x88xf32>
    %cst_284 = arith.constant dense<0.000000e+00> : vector<32x2xf32>
    %206 = tpu.matmul %205, %204, %cst_284 {dimension_numbers = #tpu.dot_dimension_numbers<[1], [0], [0], [1], [0, 0, 1, 1], [], []>} : vector<32x88xf32>, vector<88x2xf32>, vector<32x2xf32> -> vector<32x2xf32>
    %c208_285 = arith.constant 208 : index
    %c0_286 = arith.constant 0 : index
    %207 = vector.load %arg7[%c208_285, %c0_286] : memref<256x1xf32, #tpu.memory_space<vmem>>, vector<32x1xf32>
    %208 = vector.broadcast %207 : vector<32x1xf32> to vector<32x2xf32>
    %209 = arith.addf %206, %208 : vector<32x2xf32>
    %cst_287 = arith.constant 0.000000e+00 : f32
    %210 = vector.broadcast %cst_287 : f32 to vector<32x2xf32>
    %211 = arith.maximumf %209, %210 : vector<32x2xf32>
    %c0_288 = arith.constant 0 : index
    %c0_289 = arith.constant 0 : index
    %212 = vector.load %arg6[%c0_288, %c0_289] : memref<16x32xf32, #tpu.memory_space<vmem>>, vector<16x32xf32>
    %cst_290 = arith.constant dense<0.000000e+00> : vector<16x2xf32>
    %213 = tpu.matmul %212, %211, %cst_290 {dimension_numbers = #tpu.dot_dimension_numbers<[1], [0], [0], [1], [0, 0, 1, 1], [], []>} : vector<16x32xf32>, vector<32x2xf32>, vector<16x2xf32> -> vector<16x2xf32>
    %c240_291 = arith.constant 240 : index
    %c0_292 = arith.constant 0 : index
    %214 = vector.load %arg7[%c240_291, %c0_292] : memref<256x1xf32, #tpu.memory_space<vmem>>, vector<16x1xf32>
    %215 = vector.broadcast %214 : vector<16x1xf32> to vector<16x2xf32>
    %216 = arith.addf %213, %215 : vector<16x2xf32>
    %c0_293 = arith.constant 0 : index
    %c0_294 = arith.constant 0 : index
    %217 = vector.load %arg8[%c0_293, %c0_294] : memref<16x2xf32, #tpu.memory_space<vmem>>, vector<16x2xf32>
    tpu.vector_store %arg8[%c0_293, %c0_294], %216 {strides = array<i32>} : memref<16x2xf32, #tpu.memory_space<vmem>>, vector<16x2xf32>,
    return
  }
}

</mosaic_0001>

<llo_original>
// kernel: net_forward.1
$region0: #{net_forward.1}
  #allocation0 [shape = 'u32[]', space=smem, size = 0x4, offset = 0x4, fixed_abs, tag = 'smem constant byte address 0x4 - core index']
  #allocation1 [shape = 'u32[144,128]{1,0:T(1,128)}', space=vmem, size = 0x12000, scoped, tag = 'internal scratch']
  #allocation2 [shape = 'f32[200,2048]{1,0:T(8,128)}', space=vmem, size = 0x190000, scoped, tag = 'scratch operand']
  #allocation3 [shape = 'f32[8,2688]{1,0:T(8,128)}', space=vmem, size = 0x15000, scoped, tag = 'scratch operand']
  #allocation4 [shape = 'f32[8,2688]{1,0:T(8,128)}', space=vmem, size = 0x15000, scoped, tag = 'scratch operand']
  #allocation5 [shape = 'f32[16,2688]{1,0:T(8,128)}', space=vmem, size = 0x2a000, scoped, tag = 'scratch operand']
  #allocation6 [shape = 'f32[16,2048]{1,0:T(8,128)}', space=vmem, size = 0x20000, scoped, tag = 'scratch operand']
  #allocation7 [shape = 'f32[400,2]{1,0:T(8,128)}', space=vmem, size = 0x32000, scoped, tag = 'scratch operand']
  %s0 = inlined_call_operand.vmem [shape: f32[8,2688], index: 0, kind: input, shape index: {}]
  %s1 = inlined_call_operand.vmem [shape: f32[24,200], index: 1, kind: input, shape index: {}]
  %s2 = inlined_call_operand.vmem [shape: f32[24,1], index: 2, kind: input, shape index: {}]
  %s3 = inlined_call_operand.vmem [shape: f32[120,400], index: 3, kind: input, shape index: {}]
  %s4 = inlined_call_operand.vmem [shape: f32[88,120], index: 4, kind: input, shape index: {}]
  %s5 = inlined_call_operand.vmem [shape: f32[32,88], index: 5, kind: input, shape index: {}]
  %s6 = inlined_call_operand.vmem [shape: f32[16,32], index: 6, kind: input, shape index: {}]
  %s7 = inlined_call_operand.vmem [shape: f32[256,1], index: 7, kind: input, shape index: {}]
  %s8 = inlined_call_operand.vmem [shape: f32[16,2], index: 8, kind: output, shape index: {}]
  %s9 = sld [smem:[#allocation0]]
  $region42: #{net_forward.1} parent=0
    _
  %s11 = ssub.s32 1, %s9
  %s12 = scalar_select 0, %s11, %s9
  // Predicated region
  $region2: #{net_forward.1} parent=0 // pred_check
    _
  $region3: #{net_forward.1} parent=0 // pred_check_branch
    %14 = sbr.rel (0) target = $region5
  $region4: #{net_forward.1} parent=0 // pred_region
    _
  $region5: #{net_forward.1} parent=0 // pred_fallthru
    _
  // Predicated region
  $region6: #{net_forward.1} parent=0 // pred_check
    _
  $region7: #{net_forward.1} parent=0 // pred_check_branch
    %16 = sbr.rel (0) target = $region9
  $region8: #{net_forward.1} parent=0 // pred_region
    _
  $region9: #{net_forward.1} parent=0 // pred_fallthru
    _
  // Predicated region
  $region10: #{net_forward.1} parent=0 // pred_check
    _
  $region11: #{net_forward.1} parent=0 // pred_check_branch
    %18 = sbr.rel (0) target = $region13
  $region12: #{net_forward.1} parent=0 // pred_region
    _
  $region13: #{net_forward.1} parent=0 // pred_fallthru
    _
  // Predicated region
  $region14: #{net_forward.1} parent=0 // pred_check
    _
  $region15: #{net_forward.1} parent=0 // pred_check_branch
    %20 = sbr.rel (0) target = $region17
  $region16: #{net_forward.1} parent=0 // pred_region
    _
  $region17: #{net_forward.1} parent=0 // pred_fallthru
    _
  // Predicated region
  $region18: #{net_forward.1} parent=0 // pred_check
    _
  $region19: #{net_forward.1} parent=0 // pred_check_branch
    %22 = sbr.rel (0) target = $region21
  $region20: #{net_forward.1} parent=0 // pred_region
    _
  $region21: #{net_forward.1} parent=0 // pred_fallthru
    _
  // Predicated region
  $region22: #{net_forward.1} parent=0 // pred_check
    _
  $region23: #{net_forward.1} parent=0 // pred_check_branch
    %24 = sbr.rel (0) target = $region25
  $region24: #{net_forward.1} parent=0 // pred_region
    _
  $region25: #{net_forward.1} parent=0 // pred_fallthru
    _
  // Predicated region
  $region26: #{net_forward.1} parent=0 // pred_check
    _
  $region27: #{net_forward.1} parent=0 // pred_check_branch
    %26 = sbr.rel (0) target = $region29
  $region28: #{net_forward.1} parent=0 // pred_region
    _
  $region29: #{net_forward.1} parent=0 // pred_fallthru
    _
  // Predicated region
  $region30: #{net_forward.1} parent=0 // pred_check
    _
  $region31: #{net_forward.1} parent=0 // pred_check_branch
    %28 = sbr.rel (0) target = $region33
  $region32: #{net_forward.1} parent=0 // pred_region
    _
  $region33: #{net_forward.1} parent=0 // pred_fallthru
    _
  %29 = vst [vmem:[#allocation3 + $0x80] sm:$0xff] 0.0
  %30 = vst [vmem:[#allocation3 + $0x88] sm:$0xff] 0.0
  %31 = vst [vmem:[#allocation3 + $0x90] sm:$0xff] 0.0
  %32 = vst [vmem:[#allocation3 + $0x98] sm:$0xff] 0.0
  %33 = vst [vmem:[#allocation3 + $0xa0] sm:$0xff] 0.0
  %34 = vst [vmem:[#allocation4 + $0x80] sm:$0xff] 0.0
  %35 = vst [vmem:[#allocation4 + $0x88] sm:$0xff] 0.0
  %36 = vst [vmem:[#allocation4 + $0x90] sm:$0xff] 0.0
  %37 = vst [vmem:[#allocation4 + $0x98] sm:$0xff] 0.0
  %38 = vst [vmem:[#allocation4 + $0xa0] sm:$0xff] 0.0
  %39 = vst [vmem:[#allocation5 + $0x80] sm:$0xff] 0.0
  %40 = vst [vmem:[#allocation5 + $0x88] sm:$0xff] 0.0
  %41 = vst [vmem:[#allocation5 + $0x90] sm:$0xff] 0.0
  %42 = vst [vmem:[#allocation5 + $0x98] sm:$0xff] 0.0
  %43 = vst [vmem:[#allocation5 + $0xa0] sm:$0xff] 0.0
  %44 = vst [vmem:[#allocation5 + $0x128] sm:$0xff] 0.0
  %45 = vst [vmem:[#allocation5 + $0x130] sm:$0xff] 0.0
  %46 = vst [vmem:[#allocation5 + $0x138] sm:$0xff] 0.0
  %47 = vst [vmem:[#allocation5 + $0x140] sm:$0xff] 0.0
  %48 = vst [vmem:[#allocation5 + $0x148] sm:$0xff] 0.0
  %v49 = vld [vmem:[%s1] sm:$0xff]
  %v50 = vld [vmem:[%s1 + $0x8] sm:$0xff]
  %v51 = vld [vmem:[%s2] sm:$0xff]
  %v52 = vld [vmem:[%s0] sm:$0xff]
  %v53 = vld [vmem:[%s0 + $0x8] sm:$0xff]
  %v54 = vld [vmem:[%s0 + $0x10] sm:$0xff]
  %v55 = vld [vmem:[%s0 + $0x18] sm:$0xff]
  %v56 = vld [vmem:[%s0 + $0x20] sm:$0xff]
  %v57 = vld [vmem:[%s0 + $0x28] sm:$0xff]
  %v58 = vld [vmem:[%s0 + $0x30] sm:$0xff]
  %v59 = vld [vmem:[%s0 + $0x38] sm:$0xff]
  %v60 = vld [vmem:[%s0 + $0x40] sm:$0xff]
  %v61 = vld [vmem:[%s0 + $0x48] sm:$0xff]
  %v62 = vld [vmem:[%s0 + $0x50] sm:$0xff]
  %v63 = vld [vmem:[%s0 + $0x58] sm:$0xff]
  %v64 = vld [vmem:[%s0 + $0x60] sm:$0xff]
  %v65 = vld [vmem:[%s0 + $0x68] sm:$0xff]
  %v66 = vld [vmem:[%s0 + $0x70] sm:$0xff]
  %v67 = vld [vmem:[%s0 + $0x78] sm:$0xff]
  %68 = vst [vmem:[#allocation2] sm:$0xff] %v52
  %69 = vst [vmem:[#allocation2 + $0x8] sm:$0xff] %v53
  %70 = vst [vmem:[#allocation2 + $0x10] sm:$0xff] %v54
  %71 = vst [vmem:[#allocation2 + $0x18] sm:$0xff] %v55
  %72 = vst [vmem:[#allocation2 + $0x20] sm:$0xff] %v56
  %73 = vst [vmem:[#allocation2 + $0x28] sm:$0xff] %v57
  %74 = vst [vmem:[#allocation2 + $0x30] sm:$0xff] %v58
  %75 = vst [vmem:[#allocation2 + $0x38] sm:$0xff] %v59
  %76 = vst [vmem:[#allocation2 + $0x40] sm:$0xff] %v60
  %77 = vst [vmem:[#allocation2 + $0x48] sm:$0xff] %v61
  %78 = vst [vmem:[#allocation2 + $0x50] sm:$0xff] %v62
  %79 = vst [vmem:[#allocation2 + $0x58] sm:$0xff] %v63
  %80 = vst [vmem:[#allocation2 + $0x60] sm:$0xff] %v64
  %81 = vst [vmem:[#allocation2 + $0x68] sm:$0xff] %v65
  %82 = vst [vmem:[#allocation2 + $0x70] sm:$0xff] %v66
  %83 = vst [vmem:[#allocation2 + $0x78] sm:$0xff] %v67
  %v84 = vld [vmem:[%s0] sm:$0xff]
  %v85 = vld [vmem:[%s0 + $0x8] sm:$0xff]
  %v86 = vld [vmem:[%s0 + $0x10] sm:$0xff]
  %v87 = vld [vmem:[%s0 + $0x18] sm:$0xff]
  %v88 = vld [vmem:[%s0 + $0x20] sm:$0xff]
  %v89 = vld [vmem:[%s0 + $0x28] sm:$0xff]
  %v90 = vld [vmem:[%s0 + $0x30] sm:$0xff]
  %v91 = vld [vmem:[%s0 + $0x38] sm:$0xff]
  %v92 = vld [vmem:[%s0 + $0x40] sm:$0xff]
  %v93 = vld [vmem:[%s0 + $0x48] sm:$0xff]
  %v94 = vld [vmem:[%s0 + $0x50] sm:$0xff]
  %v95 = vld [vmem:[%s0 + $0x58] sm:$0xff]
  %v96 = vld [vmem:[%s0 + $0x60] sm:$0xff]
  %v97 = vld [vmem:[%s0 + $0x68] sm:$0xff]
  %v98 = vld [vmem:[%s0 + $0x70] sm:$0xff]
  %v99 = vld [vmem:[%s0 + $0x78] sm:$0xff]
  %v100 = vld [vmem:[%s0 + $0x80] sm:$0xff]
  %118 = vrot.lane.b32.xlu0 %v84, 126
  %v119 = vpop.permute.xlu0 %118
  %120 = vrot.lane.b32.xlu0 %v85, 126
  %v121 = vpop.permute.xlu0 %120
  %122 = vrot.lane.b32.xlu0 %v86, 126
  %v123 = vpop.permute.xlu0 %122
  %124 = vrot.lane.b32.xlu0 %v87, 126
  %v125 = vpop.permute.xlu0 %124
  %126 = vrot.lane.b32.xlu0 %v88, 126
  %v127 = vpop.permute.xlu0 %126
  %128 = vrot.lane.b32.xlu0 %v89, 126
  %v129 = vpop.permute.xlu0 %128
  %130 = vrot.lane.b32.xlu0 %v90, 126
  %v131 = vpop.permute.xlu0 %130
  %132 = vrot.lane.b32.xlu0 %v91, 126
  %v133 = vpop.permute.xlu0 %132
  %134 = vrot.lane.b32.xlu0 %v92, 126
  %v135 = vpop.permute.xlu0 %134
  %136 = vrot.lane.b32.xlu0 %v93, 126
  %v137 = vpop.permute.xlu0 %136
  %138 = vrot.lane.b32.xlu0 %v94, 126
  %v139 = vpop.permute.xlu0 %138
  %140 = vrot.lane.b32.xlu0 %v95, 126
  %v141 = vpop.permute.xlu0 %140
  %142 = vrot.lane.b32.xlu0 %v96, 126
  %v143 = vpop.permute.xlu0 %142
  %144 = vrot.lane.b32.xlu0 %v97, 126
  %v145 = vpop.permute.xlu0 %144
  %146 = vrot.lane.b32.xlu0 %v98, 126
  %v147 = vpop.permute.xlu0 %146
  %148 = vrot.lane.b32.xlu0 %v99, 126
  %v149 = vpop.permute.xlu0 %148
  %150 = vrot.lane.b32.xlu0 %v100, 126
  %v151 = vpop.permute.xlu0 %150
  %vm152 = vcmask 1031168
  %v153 = vsel %vm152, %v119, %v121
  %v154 = vsel %vm152, %v121, %v123
  %v155 = vsel %vm152, %v123, %v125
  %v156 = vsel %vm152, %v125, %v127
  %v157 = vsel %vm152, %v127, %v129
  %v158 = vsel %vm152, %v129, %v131
  %v159 = vsel %vm152, %v131, %v133
  %v160 = vsel %vm152, %v133, %v135
  %v161 = vsel %vm152, %v135, %v137
  %v162 = vsel %vm152, %v137, %v139
  %v163 = vsel %vm152, %v139, %v141
  %v164 = vsel %vm152, %v141, %v143
  %v165 = vsel %vm152, %v143, %v145
  %v166 = vsel %vm152, %v145, %v147
  %v167 = vsel %vm152, %v147, %v149
  %v168 = vsel %vm152, %v149, %v151
  %185 = vst [vmem:[#allocation2 + $0x80] sm:$0xff] %v153
  %186 = vst [vmem:[#allocation2 + $0x88] sm:$0xff] %v154
  %187 = vst [vmem:[#allocation2 + $0x90] sm:$0xff] %v155
  %188 = vst [vmem:[#allocation2 + $0x98] sm:$0xff] %v156
  %189 = vst [vmem:[#allocation2 + $0xa0] sm:$0xff] %v157
  %190 = vst [vmem:[#allocation2 + $0xa8] sm:$0xff] %v158
  %191 = vst [vmem:[#allocation2 + $0xb0] sm:$0xff] %v159
  %192 = vst [vmem:[#allocation2 + $0xb8] sm:$0xff] %v160
  %193 = vst [vmem:[#allocation2 + $0xc0] sm:$0xff] %v161
  %194 = vst [vmem:[#allocation2 + $0xc8] sm:$0xff] %v162
  %195 = vst [vmem:[#allocation2 + $0xd0] sm:$0xff] %v163
  %196 = vst [vmem:[#allocation2 + $0xd8] sm:$0xff] %v164
  %197 = vst [vmem:[#allocation2 + $0xe0] sm:$0xff] %v165
  %198 = vst [vmem:[#allocation2 + $0xe8] sm:$0xff] %v166
  %199 = vst [vmem:[#allocation2 + $0xf0] sm:$0xff] %v167
  %200 = vst [vmem:[#allocation2 + $0xf8] sm:$0xff] %v168
  %v201 = vld [vmem:[%s0] sm:$0xff]
  %v202 = vld [vmem:[%s0 + $0x8] sm:$0xff]
  %v203 = vld [vmem:[%s0 + $0x10] sm:$0xff]
  %v204 = vld [vmem:[%s0 + $0x18] sm:$0xff]
  %v205 = vld [vmem:[%s0 + $0x20] sm:$0xff]
  %v206 = vld [vmem:[%s0 + $0x28] sm:$0xff]
  %v207 = vld [vmem:[%s0 + $0x30] sm:$0xff]
  %v208 = vld [vmem:[%s0 + $0x38] sm:$0xff]
  %v209 = vld [vmem:[%s0 + $0x40] sm:$0xff]
  %v210 = vld [vmem:[%s0 + $0x48] sm:$0xff]
  %v211 = vld [vmem:[%s0 + $0x50] sm:$0xff]
  %v212 = vld [vmem:[%s0 + $0x58] sm:$0xff]
  %v213 = vld [vmem:[%s0 + $0x60] sm:$0xff]
  %v214 = vld [vmem:[%s0 + $0x68] sm:$0xff]
  %v215 = vld [vmem:[%s0 + $0x70] sm:$0xff]
  %v216 = vld [vmem:[%s0 + $0x78] sm:$0xff]
  %v217 = vld [vmem:[%s0 + $0x80] sm:$0xff]
  %235 = vrot.lane.b32.xlu0 %v201, 124
  %v236 = vpop.permute.xlu0 %235
  %237 = vrot.lane.b32.xlu0 %v202, 124
  %v238 = vpop.permute.xlu0 %237
  %239 = vrot.lane.b32.xlu0 %v203, 124
  %v240 = vpop.permute.xlu0 %239
  %241 = vrot.lane.b32.xlu0 %v204, 124
  %v242 = vpop.permute.xlu0 %241
  %243 = vrot.lane.b32.xlu0 %v205, 124
  %v244 = vpop.permute.xlu0 %243
  %245 = vrot.lane.b32.xlu0 %v206, 124
  %v246 = vpop.permute.xlu0 %245
  %247 = vrot.lane.b32.xlu0 %v207, 124
  %v248 = vpop.permute.xlu0 %247
  %249 = vrot.lane.b32.xlu0 %v208, 124
  %v250 = vpop.permute.xlu0 %249
  %251 = vrot.lane.b32.xlu0 %v209, 124
  %v252 = vpop.permute.xlu0 %251
  %253 = vrot.lane.b32.xlu0 %v210, 124
  %v254 = vpop.permute.xlu0 %253
  %255 = vrot.lane.b32.xlu0 %v211, 124
  %v256 = vpop.permute.xlu0 %255
  %257 = vrot.lane.b32.xlu0 %v212, 124
  %v258 = vpop.permute.xlu0 %257
  %259 = vrot.lane.b32.xlu0 %v213, 124
  %v260 = vpop.permute.xlu0 %259
  %261 = vrot.lane.b32.xlu0 %v214, 124
  %v262 = vpop.permute.xlu0 %261
  %263 = vrot.lane.b32.xlu0 %v215, 124
  %v264 = vpop.permute.xlu0 %263
  %265 = vrot.lane.b32.xlu0 %v216, 124
  %v266 = vpop.permute.xlu0 %265
  %267 = vrot.lane.b32.xlu0 %v217, 124
  %v268 = vpop.permute.xlu0 %267
  %vm269 = vcmask 1014784
  %v270 = vsel %vm269, %v236, %v238
  %v271 = vsel %vm269, %v238, %v240
  %v272 = vsel %vm269, %v240, %v242
  %v273 = vsel %vm269, %v242, %v244
  %v274 = vsel %vm269, %v244, %v246
  %v275 = vsel %vm269, %v246, %v248
  %v276 = vsel %vm269, %v248, %v250
  %v277 = vsel %vm269, %v250, %v252
  %v278 = vsel %vm269, %v252, %v254
  %v279 = vsel %vm269, %v254, %v256
  %v280 = vsel %vm269, %v256, %v258
  %v281 = vsel %vm269, %v258, %v260
  %v282 = vsel %vm269, %v260, %v262
  %v283 = vsel %vm269, %v262, %v264
  %v284 = vsel %vm269, %v264, %v266
  %v285 = vsel %vm269, %v266, %v268
  %302 = vst [vmem:[#allocation2 + $0x100] sm:$0xff] %v270
  %303 = vst [vmem:[#allocation2 + $0x108] sm:$0xff] %v271
  %304 = vst [vmem:[#allocation2 + $0x110] sm:$0xff] %v272
  %305 = vst [vmem:[#allocation2 + $0x118] sm:$0xff] %v273
  %306 = vst [vmem:[#allocation2 + $0x120] sm:$0xff] %v274
  %307 = vst [vmem:[#allocation2 + $0x128] sm:$0xff] %v275
  %308 = vst [vmem:[#allocation2 + $0x130] sm:$0xff] %v276
  %309 = vst [vmem:[#allocation2 + $0x138] sm:$0xff] %v277
  %310 = vst [vmem:[#allocation2 + $0x140] sm:$0xff] %v278
  %311 = vst [vmem:[#allocation2 + $0x148] sm:$0xff] %v279
  %312 = vst [vmem:[#allocation2 + $0x150] sm:$0xff] %v280
  %313 = vst [vmem:[#allocation2 + $0x158] sm:$0xff] %v281
  %314 = vst [vmem:[#allocation2 + $0x160] sm:$0xff] %v282
  %315 = vst [vmem:[#allocation2 + $0x168] sm:$0xff] %v283
  %316 = vst [vmem:[#allocation2 + $0x170] sm:$0xff] %v284
  %317 = vst [vmem:[#allocation2 + $0x178] sm:$0xff] %v285
  %v318 = vld [vmem:[%s0] sm:$0xff]
  %v319 = vld [vmem:[%s0 + $0x8] sm:$0xff]
  %v320 = vld [vmem:[%s0 + $0x10] sm:$0xff]
  %v321 = vld [vmem:[%s0 + $0x18] sm:$0xff]
  %v322 = vld [vmem:[%s0 + $0x20] sm:$0xff]
  %v323 = vld [vmem:[%s0 + $0x28] sm:$0xff]
  %v324 = vld [vmem:[%s0 + $0x30] sm:$0xff]
  %v325 = vld [vmem:[%s0 + $0x38] sm:$0xff]
  %v326 = vld [vmem:[%s0 + $0x40] sm:$0xff]
  %v327 = vld [vmem:[%s0 + $0x48] sm:$0xff]
  %v328 = vld [vmem:[%s0 + $0x50] sm:$0xff]
  %v329 = vld [vmem:[%s0 + $0x58] sm:$0xff]
  %v330 = vld [vmem:[%s0 + $0x60] sm:$0xff]
  %v331 = vld [vmem:[%s0 + $0x68] sm:$0xff]
  %v332 = vld [vmem:[%s0 + $0x70] sm:$0xff]
  %v333 = vld [vmem:[%s0 + $0x78] sm:$0xff]
  %v334 = vld [vmem:[%s0 + $0x80] sm:$0xff]
  %352 = vrot.lane.b32.xlu0 %v318, 122
  %v353 = vpop.permute.xlu0 %352
  %354 = vrot.lane.b32.xlu0 %v319, 122
  %v355 = vpop.permute.xlu0 %354
  %356 = vrot.lane.b32.xlu0 %v320, 122
  %v357 = vpop.permute.xlu0 %356
  %358 = vrot.lane.b32.xlu0 %v321, 122
  %v359 = vpop.permute.xlu0 %358
  %360 = vrot.lane.b32.xlu0 %v322, 122
  %v361 = vpop.permute.xlu0 %360
  %362 = vrot.lane.b32.xlu0 %v323, 122
  %v363 = vpop.permute.xlu0 %362
  %364 = vrot.lane.b32.xlu0 %v324, 122
  %v365 = vpop.permute.xlu0 %364
  %366 = vrot.lane.b32.xlu0 %v325, 122
  %v367 = vpop.permute.xlu0 %366
  %368 = vrot.lane.b32.xlu0 %v326, 122
  %v369 = vpop.permute.xlu0 %368
  %370 = vrot.lane.b32.xlu0 %v327, 122
  %v371 = vpop.permute.xlu0 %370
  %372 = vrot.lane.b32.xlu0 %v328, 122
  %v373 = vpop.permute.xlu0 %372
  %374 = vrot.lane.b32.xlu0 %v329, 122
  %v375 = vpop.permute.xlu0 %374
  %376 = vrot.lane.b32.xlu0 %v330, 122
  %v377 = vpop.permute.xlu0 %376
  %378 = vrot.lane.b32.xlu0 %v331, 122
  %v379 = vpop.permute.xlu0 %378
  %380 = vrot.lane.b32.xlu0 %v332, 122
  %v381 = vpop.permute.xlu0 %380
  %382 = vrot.lane.b32.xlu0 %v333, 122
  %v383 = vpop.permute.xlu0 %382
  %384 = vrot.lane.b32.xlu0 %v334, 122
  %v385 = vpop.permute.xlu0 %384
  %vm386 = vcmask 998400
  %v387 = vsel %vm386, %v353, %v355
  %v388 = vsel %vm386, %v355, %v357
  %v389 = vsel %vm386, %v357, %v359
  %v390 = vsel %vm386, %v359, %v361
  %v391 = vsel %vm386, %v361, %v363
  %v392 = vsel %vm386, %v363, %v365
  %v393 = vsel %vm386, %v365, %v367
  %v394 = vsel %vm386, %v367, %v369
  %v395 = vsel %vm386, %v369, %v371
  %v396 = vsel %vm386, %v371, %v373
  %v397 = vsel %vm386, %v373, %v375
  %v398 = vsel %vm386, %v375, %v377
  %v399 = vsel %vm386, %v377, %v379
  %v400 = vsel %vm386, %v379, %v381
  %v401 = vsel %vm386, %v381, %v383
  %v402 = vsel %vm386, %v383, %v385
  %419 = vst [vmem:[#allocation2 + $0x180] sm:$0xff] %v387
  %420 = vst [vmem:[#allocation2 + $0x188] sm:$0xff] %v388
  %421 = vst [vmem:[#allocation2 + $0x190] sm:$0xff] %v389
  %422 = vst [vmem:[#allocation2 + $0x198] sm:$0xff] %v390
  %423 = vst [vmem:[#allocation2 + $0x1a0] sm:$0xff] %v391
  %424 = vst [vmem:[#allocation2 + $0x1a8] sm:$0xff] %v392
  %425 = vst [vmem:[#allocation2 + $0x1b0] sm:$0xff] %v393
  %426 = vst [vmem:[#allocation2 + $0x1b8] sm:$0xff] %v394
  %427 = vst [vmem:[#allocation2 + $0x1c0] sm:$0xff] %v395
  %428 = vst [vmem:[#allocation2 + $0x1c8] sm:$0xff] %v396
  %429 = vst [vmem:[#allocation2 + $0x1d0] sm:$0xff] %v397
  %430 = vst [vmem:[#allocation2 + $0x1d8] sm:$0xff] %v398
  %431 = vst [vmem:[#allocation2 + $0x1e0] sm:$0xff] %v399
  %432 = vst [vmem:[#allocation2 + $0x1e8] sm:$0xff] %v400
  %433 = vst [vmem:[#allocation2 + $0x1f0] sm:$0xff] %v401
  %434 = vst [vmem:[#allocation2 + $0x1f8] sm:$0xff] %v402
  %v435 = vld [vmem:[%s0] sm:$0xff]
  %v436 = vld [vmem:[%s0 + $0x8] sm:$0xff]
  %v437 = vld [vmem:[%s0 + $0x10] sm:$0xff]
  %v438 = vld [vmem:[%s0 + $0x18] sm:$0xff]
  %v439 = vld [vmem:[%s0 + $0x20] sm:$0xff]
  %v440 = vld [vmem:[%s0 + $0x28] sm:$0xff]
  %v441 = vld [vmem:[%s0 + $0x30] sm:$0xff]
  %v442 = vld [vmem:[%s0 + $0x38] sm:$0xff]
  %v443 = vld [vmem:[%s0 + $0x40] sm:$0xff]
  %v444 = vld [vmem:[%s0 + $0x48] sm:$0xff]
  %v445 = vld [vmem:[%s0 + $0x50] sm:$0xff]
  %v446 = vld [vmem:[%s0 + $0x58] sm:$0xff]
  %v447 = vld [vmem:[%s0 + $0x60] sm:$0xff]
  %v448 = vld [vmem:[%s0 + $0x68] sm:$0xff]
  %v449 = vld [vmem:[%s0 + $0x70] sm:$0xff]
  %v450 = vld [vmem:[%s0 + $0x78] sm:$0xff]
  %v451 = vld [vmem:[%s0 + $0x80] sm:$0xff]
  %469 = vrot.lane.b32.xlu0 %v435, 120
  %v470 = vpop.permute.xlu0 %469
  %471 = vrot.lane.b32.xlu0 %v436, 120
  %v472 = vpop.permute.xlu0 %471
  %473 = vrot.lane.b32.xlu0 %v437, 120
  %v474 = vpop.permute.xlu0 %473
  %475 = vrot.lane.b32.xlu0 %v438, 120
  %v476 = vpop.permute.xlu0 %475
  %477 = vrot.lane.b32.xlu0 %v439, 120
  %v478 = vpop.permute.xlu0 %477
  %479 = vrot.lane.b32.xlu0 %v440, 120
  %v480 = vpop.permute.xlu0 %479
  %481 = vrot.lane.b32.xlu0 %v441, 120
  %v482 = vpop.permute.xlu0 %481
  %483 = vrot.lane.b32.xlu0 %v442, 120
  %v484 = vpop.permute.xlu0 %483
  %485 = vrot.lane.b32.xlu0 %v443, 120
  %v486 = vpop.permute.xlu0 %485
  %487 = vrot.lane.b32.xlu0 %v444, 120
  %v488 = vpop.permute.xlu0 %487
  %489 = vrot.lane.b32.xlu0 %v445, 120
  %v490 = vpop.permute.xlu0 %489
  %491 = vrot.lane.b32.xlu0 %v446, 120
  %v492 = vpop.permute.xlu0 %491
  %493 = vrot.lane.b32.xlu0 %v447, 120
  %v494 = vpop.permute.xlu0 %493
  %495 = vrot.lane.b32.xlu0 %v448, 120
  %v496 = vpop.permute.xlu0 %495
  %497 = vrot.lane.b32.xlu0 %v449, 120
  %v498 = vpop.permute.xlu0 %497
  %499 = vrot.lane.b32.xlu0 %v450, 120
  %v500 = vpop.permute.xlu0 %499
  %501 = vrot.lane.b32.xlu0 %v451, 120
  %v502 = vpop.permute.xlu0 %501
  %vm503 = vcmask 982016
  %v504 = vsel %vm503, %v470, %v472
  %v505 = vsel %vm503, %v472, %v474
  %v506 = vsel %vm503, %v474, %v476
  %v507 = vsel %vm503, %v476, %v478
  %v508 = vsel %vm503, %v478, %v480
  %v509 = vsel %vm503, %v480, %v482
  %v510 = vsel %vm503, %v482, %v484
  %v511 = vsel %vm503, %v484, %v486
  %v512 = vsel %vm503, %v486, %v488
  %v513 = vsel %vm503, %v488, %v490
  %v514 = vsel %vm503, %v490, %v492
  %v515 = vsel %vm503, %v492, %v494
  %v516 = vsel %vm503, %v494, %v496
  %v517 = vsel %vm503, %v496, %v498
  %v518 = vsel %vm503, %v498, %v500
  %v519 = vsel %vm503, %v500, %v502
  %536 = vst [vmem:[#allocation2 + $0x200] sm:$0xff] %v504
  %537 = vst [vmem:[#allocation2 + $0x208] sm:$0xff] %v505
  %538 = vst [vmem:[#allocation2 + $0x210] sm:$0xff] %v506
  %539 = vst [vmem:[#allocation2 + $0x218] sm:$0xff] %v507
  %540 = vst [vmem:[#allocation2 + $0x220] sm:$0xff] %v508
  %541 = vst [vmem:[#allocation2 + $0x228] sm:$0xff] %v509
  %542 = vst [vmem:[#allocation2 + $0x230] sm:$0xff] %v510
  %543 = vst [vmem:[#allocation2 + $0x238] sm:$0xff] %v511
  %544 = vst [vmem:[#allocation2 + $0x240] sm:$0xff] %v512
  %545 = vst [vmem:[#allocation2 + $0x248] sm:$0xff] %v513
  %546 = vst [vmem:[#allocation2 + $0x250] sm:$0xff] %v514
  %547 = vst [vmem:[#allocation2 + $0x258] sm:$0xff] %v515
  %548 = vst [vmem:[#allocation2 + $0x260] sm:$0xff] %v516
  %549 = vst [vmem:[#allocation2 + $0x268] sm:$0xff] %v517
  %550 = vst [vmem:[#allocation2 + $0x270] sm:$0xff] %v518
  %551 = vst [vmem:[#allocation2 + $0x278] sm:$0xff] %v519
  %v552 = vld [vmem:[%s0] sm:$0xff]
  %v553 = vld [vmem:[%s0 + $0x8] sm:$0xff]
  %v554 = vld [vmem:[%s0 + $0x10] sm:$0xff]
  %v555 = vld [vmem:[%s0 + $0x18] sm:$0xff]
  %v556 = vld [vmem:[%s0 + $0x20] sm:$0xff]
  %v557 = vld [vmem:[%s0 + $0x28] sm:$0xff]
  %v558 = vld [vmem:[%s0 + $0x30] sm:$0xff]
  %v559 = vld [vmem:[%s0 + $0x38] sm:$0xff]
  %v560 = vld [vmem:[%s0 + $0x40] sm:$0xff]
  %v561 = vld [vmem:[%s0 + $0x48] sm:$0xff]
  %v562 = vld [vmem:[%s0 + $0x50] sm:$0xff]
  %v563 = vld [vmem:[%s0 + $0x58] sm:$0xff]
  %v564 = vld [vmem:[%s0 + $0x60] sm:$0xff]
  %v565 = vld [vmem:[%s0 + $0x68] sm:$0xff]
  %v566 = vld [vmem:[%s0 + $0x70] sm:$0xff]
  %v567 = vld [vmem:[%s0 + $0x78] sm:$0xff]
  %v568 = vld [vmem:[%s0 + $0x80] sm:$0xff]
  %586 = vrot.lane.b32.xlu0 %v552, 64
  %v587 = vpop.permute.xlu0 %586
  %588 = vrot.lane.b32.xlu0 %v553, 64
  %v589 = vpop.permute.xlu0 %588
  %590 = vrot.lane.b32.xlu0 %v554, 64
  %v591 = vpop.permute.xlu0 %590
  %592 = vrot.lane.b32.xlu0 %v555, 64
  %v593 = vpop.permute.xlu0 %592
  %594 = vrot.lane.b32.xlu0 %v556, 64
  %v595 = vpop.permute.xlu0 %594
  %596 = vrot.lane.b32.xlu0 %v557, 64
  %v597 = vpop.permute.xlu0 %596
  %598 = vrot.lane.b32.xlu0 %v558, 64
  %v599 = vpop.permute.xlu0 %598
  %600 = vrot.lane.b32.xlu0 %v559, 64
  %v601 = vpop.permute.xlu0 %600
  %602 = vrot.lane.b32.xlu0 %v560, 64
  %v603 = vpop.permute.xlu0 %602
  %604 = vrot.lane.b32.xlu0 %v561, 64
  %v605 = vpop.permute.xlu0 %604
  %606 = vrot.lane.b32.xlu0 %v562, 64
  %v607 = vpop.permute.xlu0 %606
  %608 = vrot.lane.b32.xlu0 %v563, 64
  %v609 = vpop.permute.xlu0 %608
  %610 = vrot.lane.b32.xlu0 %v564, 64
  %v611 = vpop.permute.xlu0 %610
  %612 = vrot.lane.b32.xlu0 %v565, 64
  %v613 = vpop.permute.xlu0 %612
  %614 = vrot.lane.b32.xlu0 %v566, 64
  %v615 = vpop.permute.xlu0 %614
  %616 = vrot.lane.b32.xlu0 %v567, 64
  %v617 = vpop.permute.xlu0 %616
  %618 = vrot.lane.b32.xlu0 %v568, 64
  %v619 = vpop.permute.xlu0 %618
  %vm620 = vcmask 523264
  %v621 = vsel %vm620, %v587, %v589
  %v622 = vsel %vm620, %v589, %v591
  %v623 = vsel %vm620, %v591, %v593
  %v624 = vsel %vm620, %v593, %v595
  %v625 = vsel %vm620, %v595, %v597
  %v626 = vsel %vm620, %v597, %v599
  %v627 = vsel %vm620, %v599, %v601
  %v628 = vsel %vm620, %v601, %v603
  %v629 = vsel %vm620, %v603, %v605
  %v630 = vsel %vm620, %v605, %v607
  %v631 = vsel %vm620, %v607, %v609
  %v632 = vsel %vm620, %v609, %v611
  %v633 = vsel %vm620, %v611, %v613
  %v634 = vsel %vm620, %v613, %v615
  %v635 = vsel %vm620, %v615, %v617
  %v636 = vsel %vm620, %v617, %v619
  %653 = vst [vmem:[#allocation2 + $0x280] sm:$0xff] %v621
  %654 = vst [vmem:[#allocation2 + $0x288] sm:$0xff] %v622
  %655 = vst [vmem:[#allocation2 + $0x290] sm:$0xff] %v623
  %656 = vst [vmem:[#allocation2 + $0x298] sm:$0xff] %v624
  %657 = vst [vmem:[#allocation2 + $0x2a0] sm:$0xff] %v625
  %658 = vst [vmem:[#allocation2 + $0x2a8] sm:$0xff] %v626
  %659 = vst [vmem:[#allocation2 + $0x2b0] sm:$0xff] %v627
  %660 = vst [vmem:[#allocation2 + $0x2b8] sm:$0xff] %v628
  %661 = vst [vmem:[#allocation2 + $0x2c0] sm:$0xff] %v629
  %662 = vst [vmem:[#allocation2 + $0x2c8] sm:$0xff] %v630
  %663 = vst [vmem:[#allocation2 + $0x2d0] sm:$0xff] %v631
  %664 = vst [vmem:[#allocation2 + $0x2d8] sm:$0xff] %v632
  %665 = vst [vmem:[#allocation2 + $0x2e0] sm:$0xff] %v633
  %666 = vst [vmem:[#allocation2 + $0x2e8] sm:$0xff] %v634
  %667 = vst [vmem:[#allocation2 + $0x2f0] sm:$0xff] %v635
  %668 = vst [vmem:[#allocation2 + $0x2f8] sm:$0xff] %v636
  %v669 = vld [vmem:[%s0] sm:$0xff]
  %v670 = vld [vmem:[%s0 + $0x8] sm:$0xff]
  %v671 = vld [vmem:[%s0 + $0x10] sm:$0xff]
  %v672 = vld [vmem:[%s0 + $0x18] sm:$0xff]
  %v673 = vld [vmem:[%s0 + $0x20] sm:$0xff]
  %v674 = vld [vmem:[%s0 + $0x28] sm:$0xff]
  %v675 = vld [vmem:[%s0 + $0x30] sm:$0xff]
  %v676 = vld [vmem:[%s0 + $0x38] sm:$0xff]
  %v677 = vld [vmem:[%s0 + $0x40] sm:$0xff]
  %v678 = vld [vmem:[%s0 + $0x48] sm:$0xff]
  %v679 = vld [vmem:[%s0 + $0x50] sm:$0xff]
  %v680 = vld [vmem:[%s0 + $0x58] sm:$0xff]
  %v681 = vld [vmem:[%s0 + $0x60] sm:$0xff]
  %v682 = vld [vmem:[%s0 + $0x68] sm:$0xff]
  %v683 = vld [vmem:[%s0 + $0x70] sm:$0xff]
  %v684 = vld [vmem:[%s0 + $0x78] sm:$0xff]
  %v685 = vld [vmem:[%s0 + $0x80] sm:$0xff]
  %703 = vrot.lane.b32.xlu0 %v669, 62
  %v704 = vpop.permute.xlu0 %703
  %705 = vrot.lane.b32.xlu0 %v670, 62
  %v706 = vpop.permute.xlu0 %705
  %707 = vrot.lane.b32.xlu0 %v671, 62
  %v708 = vpop.permute.xlu0 %707
  %709 = vrot.lane.b32.xlu0 %v672, 62
  %v710 = vpop.permute.xlu0 %709
  %711 = vrot.lane.b32.xlu0 %v673, 62
  %v712 = vpop.permute.xlu0 %711
  %713 = vrot.lane.b32.xlu0 %v674, 62
  %v714 = vpop.permute.xlu0 %713
  %715 = vrot.lane.b32.xlu0 %v675, 62
  %v716 = vpop.permute.xlu0 %715
  %717 = vrot.lane.b32.xlu0 %v676, 62
  %v718 = vpop.permute.xlu0 %717
  %719 = vrot.lane.b32.xlu0 %v677, 62
  %v720 = vpop.permute.xlu0 %719
  %721 = vrot.lane.b32.xlu0 %v678, 62
  %v722 = vpop.permute.xlu0 %721
  %723 = vrot.lane.b32.xlu0 %v679, 62
  %v724 = vpop.permute.xlu0 %723
  %725 = vrot.lane.b32.xlu0 %v680, 62
  %v726 = vpop.permute.xlu0 %725
  %727 = vrot.lane.b32.xlu0 %v681, 62
  %v728 = vpop.permute.xlu0 %727
  %729 = vrot.lane.b32.xlu0 %v682, 62
  %v730 = vpop.permute.xlu0 %729
  %731 = vrot.lane.b32.xlu0 %v683, 62
  %v732 = vpop.permute.xlu0 %731
  %733 = vrot.lane.b32.xlu0 %v684, 62
  %v734 = vpop.permute.xlu0 %733
  %735 = vrot.lane.b32.xlu0 %v685, 62
  %v736 = vpop.permute.xlu0 %735
  %vm737 = vcmask 506880
  %v738 = vsel %vm737, %v704, %v706
  %v739 = vsel %vm737, %v706, %v708
  %v740 = vsel %vm737, %v708, %v710
  %v741 = vsel %vm737, %v710, %v712
  %v742 = vsel %vm737, %v712, %v714
  %v743 = vsel %vm737, %v714, %v716
  %v744 = vsel %vm737, %v716, %v718
  %v745 = vsel %vm737, %v718, %v720
  %v746 = vsel %vm737, %v720, %v722
  %v747 = vsel %vm737, %v722, %v724
  %v748 = vsel %vm737, %v724, %v726
  %v749 = vsel %vm737, %v726, %v728
  %v750 = vsel %vm737, %v728, %v730
  %v751 = vsel %vm737, %v730, %v732
  %v752 = vsel %vm737, %v732, %v734
  %v753 = vsel %vm737, %v734, %v736
  %770 = vst [vmem:[#allocation2 + $0x300] sm:$0xff] %v738
  %771 = vst [vmem:[#allocation2 + $0x308] sm:$0xff] %v739
  %772 = vst [vmem:[#allocation2 + $0x310] sm:$0xff] %v740
  %773 = vst [vmem:[#allocation2 + $0x318] sm:$0xff] %v741
  %774 = vst [vmem:[#allocation2 + $0x320] sm:$0xff] %v742
  %775 = vst [vmem:[#allocation2 + $0x328] sm:$0xff] %v743
  %776 = vst [vmem:[#allocation2 + $0x330] sm:$0xff] %v744
  %777 = vst [vmem:[#allocation2 + $0x338] sm:$0xff] %v745
  %778 = vst [vmem:[#allocation2 + $0x340] sm:$0xff] %v746
  %779 = vst [vmem:[#allocation2 + $0x348] sm:$0xff] %v747
  %780 = vst [vmem:[#allocation2 + $0x350] sm:$0xff] %v748
  %781 = vst [vmem:[#allocation2 + $0x358] sm:$0xff] %v749
  %782 = vst [vmem:[#allocation2 + $0x360] sm:$0xff] %v750
  %783 = vst [vmem:[#allocation2 + $0x368] sm:$0xff] %v751
  %784 = vst [vmem:[#allocation2 + $0x370] sm:$0xff] %v752
  %785 = vst [vmem:[#allocation2 + $0x378] sm:$0xff] %v753
  %v786 = vld [vmem:[%s0] sm:$0xff]
  %v787 = vld [vmem:[%s0 + $0x8] sm:$0xff]
  %v788 = vld [vmem:[%s0 + $0x10] sm:$0xff]
  %v789 = vld [vmem:[%s0 + $0x18] sm:$0xff]
  %v790 = vld [vmem:[%s0 + $0x20] sm:$0xff]
  %v791 = vld [vmem:[%s0 + $0x28] sm:$0xff]
  %v792 = vld [vmem:[%s0 + $0x30] sm:$0xff]
  %v793 = vld [vmem:[%s0 + $0x38] sm:$0xff]
  %v794 = vld [vmem:[%s0 + $0x40] sm:$0xff]
  %v795 = vld [vmem:[%s0 + $0x48] sm:$0xff]
  %v796 = vld [vmem:[%s0 + $0x50] sm:$0xff]
  %v797 = vld [vmem:[%s0 + $0x58] sm:$0xff]
  %v798 = vld [vmem:[%s0 + $0x60] sm:$0xff]
  %v799 = vld [vmem:[%s0 + $0x68] sm:$0xff]
  %v800 = vld [vmem:[%s0 + $0x70] sm:$0xff]
  %v801 = vld [vmem:[%s0 + $0x78] sm:$0xff]
  %v802 = vld [vmem:[%s0 + $0x80] sm:$0xff]
  %820 = vrot.lane.b32.xlu0 %v786, 60
  %v821 = vpop.permute.xlu0 %820
  %822 = vrot.lane.b32.xlu0 %v787, 60
  %v823 = vpop.permute.xlu0 %822
  %824 = vrot.lane.b32.xlu0 %v788, 60
  %v825 = vpop.permute.xlu0 %824
  %826 = vrot.lane.b32.xlu0 %v789, 60
  %v827 = vpop.permute.xlu0 %826
  %828 = vrot.lane.b32.xlu0 %v790, 60
  %v829 = vpop.permute.xlu0 %828
  %830 = vrot.lane.b32.xlu0 %v791, 60
  %v831 = vpop.permute.xlu0 %830
  %832 = vrot.lane.b32.xlu0 %v792, 60
  %v833 = vpop.permute.xlu0 %832
  %834 = vrot.lane.b32.xlu0 %v793, 60
  %v835 = vpop.permute.xlu0 %834
  %836 = vrot.lane.b32.xlu0 %v794, 60
  %v837 = vpop.permute.xlu0 %836
  %838 = vrot.lane.b32.xlu0 %v795, 60
  %v839 = vpop.permute.xlu0 %838
  %840 = vrot.lane.b32.xlu0 %v796, 60
  %v841 = vpop.permute.xlu0 %840
  %842 = vrot.lane.b32.xlu0 %v797, 60
  %v843 = vpop.permute.xlu0 %842
  %844 = vrot.lane.b32.xlu0 %v798, 60
  %v845 = vpop.permute.xlu0 %844
  %846 = vrot.lane.b32.xlu0 %v799, 60
  %v847 = vpop.permute.xlu0 %846
  %848 = vrot.lane.b32.xlu0 %v800, 60
  %v849 = vpop.permute.xlu0 %848
  %850 = vrot.lane.b32.xlu0 %v801, 60
  %v851 = vpop.permute.xlu0 %850
  %852 = vrot.lane.b32.xlu0 %v802, 60
  %v853 = vpop.permute.xlu0 %852
  %vm854 = vcmask 490496
  %v855 = vsel %vm854, %v821, %v823
  %v856 = vsel %vm854, %v823, %v825
  %v857 = vsel %vm854, %v825, %v827
  %v858 = vsel %vm854, %v827, %v829
  %v859 = vsel %vm854, %v829, %v831
  %v860 = vsel %vm854, %v831, %v833
  %v861 = vsel %vm854, %v833, %v835
  %v862 = vsel %vm854, %v835, %v837
  %v863 = vsel %vm854, %v837, %v839
  %v864 = vsel %vm854, %v839, %v841
  %v865 = vsel %vm854, %v841, %v843
  %v866 = vsel %vm854, %v843, %v845
  %v867 = vsel %vm854, %v845, %v847
  %v868 = vsel %vm854, %v847, %v849
  %v869 = vsel %vm854, %v849, %v851
  %v870 = vsel %vm854, %v851, %v853
  %887 = vst [vmem:[#allocation2 + $0x380] sm:$0xff] %v855
  %888 = vst [vmem:[#allocation2 + $0x388] sm:$0xff] %v856
  %889 = vst [vmem:[#allocation2 + $0x390] sm:$0xff] %v857
  %890 = vst [vmem:[#allocation2 + $0x398] sm:$0xff] %v858
  %891 = vst [vmem:[#allocation2 + $0x3a0] sm:$0xff] %v859
  %892 = vst [vmem:[#allocation2 + $0x3a8] sm:$0xff] %v860
  %893 = vst [vmem:[#allocation2 + $0x3b0] sm:$0xff] %v861
  %894 = vst [vmem:[#allocation2 + $0x3b8] sm:$0xff] %v862
  %895 = vst [vmem:[#allocation2 + $0x3c0] sm:$0xff] %v863
  %896 = vst [vmem:[#allocation2 + $0x3c8] sm:$0xff] %v864
  %897 = vst [vmem:[#allocation2 + $0x3d0] sm:$0xff] %v865
  %898 = vst [vmem:[#allocation2 + $0x3d8] sm:$0xff] %v866
  %899 = vst [vmem:[#allocation2 + $0x3e0] sm:$0xff] %v867
  %900 = vst [vmem:[#allocation2 + $0x3e8] sm:$0xff] %v868
  %901 = vst [vmem:[#allocation2 + $0x3f0] sm:$0xff] %v869
  %902 = vst [vmem:[#allocation2 + $0x3f8] sm:$0xff] %v870
  %v903 = vld [vmem:[%s0] sm:$0xff]
  %v904 = vld [vmem:[%s0 + $0x8] sm:$0xff]
  %v905 = vld [vmem:[%s0 + $0x10] sm:$0xff]
  %v906 = vld [vmem:[%s0 + $0x18] sm:$0xff]
  %v907 = vld [vmem:[%s0 + $0x20] sm:$0xff]
  %v908 = vld [vmem:[%s0 + $0x28] sm:$0xff]
  %v909 = vld [vmem:[%s0 + $0x30] sm:$0xff]
  %v910 = vld [vmem:[%s0 + $0x38] sm:$0xff]
  %v911 = vld [vmem:[%s0 + $0x40] sm:$0xff]
  %v912 = vld [vmem:[%s0 + $0x48] sm:$0xff]
  %v913 = vld [vmem:[%s0 + $0x50] sm:$0xff]
  %v914 = vld [vmem:[%s0 + $0x58] sm:$0xff]
  %v915 = vld [vmem:[%s0 + $0x60] sm:$0xff]
  %v916 = vld [vmem:[%s0 + $0x68] sm:$0xff]
  %v917 = vld [vmem:[%s0 + $0x70] sm:$0xff]
  %v918 = vld [vmem:[%s0 + $0x78] sm:$0xff]
  %v919 = vld [vmem:[%s0 + $0x80] sm:$0xff]
  %937 = vrot.lane.b32.xlu0 %v903, 58
  %v938 = vpop.permute.xlu0 %937
  %939 = vrot.lane.b32.xlu0 %v904, 58
  %v940 = vpop.permute.xlu0 %939
  %941 = vrot.lane.b32.xlu0 %v905, 58
  %v942 = vpop.permute.xlu0 %941
  %943 = vrot.lane.b32.xlu0 %v906, 58
  %v944 = vpop.permute.xlu0 %943
  %945 = vrot.lane.b32.xlu0 %v907, 58
  %v946 = vpop.permute.xlu0 %945
  %947 = vrot.lane.b32.xlu0 %v908, 58
  %v948 = vpop.permute.xlu0 %947
  %949 = vrot.lane.b32.xlu0 %v909, 58
  %v950 = vpop.permute.xlu0 %949
  %951 = vrot.lane.b32.xlu0 %v910, 58
  %v952 = vpop.permute.xlu0 %951
  %953 = vrot.lane.b32.xlu0 %v911, 58
  %v954 = vpop.permute.xlu0 %953
  %955 = vrot.lane.b32.xlu0 %v912, 58
  %v956 = vpop.permute.xlu0 %955
  %957 = vrot.lane.b32.xlu0 %v913, 58
  %v958 = vpop.permute.xlu0 %957
  %959 = vrot.lane.b32.xlu0 %v914, 58
  %v960 = vpop.permute.xlu0 %959
  %961 = vrot.lane.b32.xlu0 %v915, 58
  %v962 = vpop.permute.xlu0 %961
  %963 = vrot.lane.b32.xlu0 %v916, 58
  %v964 = vpop.permute.xlu0 %963
  %965 = vrot.lane.b32.xlu0 %v917, 58
  %v966 = vpop.permute.xlu0 %965
  %967 = vrot.lane.b32.xlu0 %v918, 58
  %v968 = vpop.permute.xlu0 %967
  %969 = vrot.lane.b32.xlu0 %v919, 58
  %v970 = vpop.permute.xlu0 %969
  %vm971 = vcmask 474112
  %v972 = vsel %vm971, %v938, %v940
  %v973 = vsel %vm971, %v940, %v942
  %v974 = vsel %vm971, %v942, %v944
  %v975 = vsel %vm971, %v944, %v946
  %v976 = vsel %vm971, %v946, %v948
  %v977 = vsel %vm971, %v948, %v950
  %v978 = vsel %vm971, %v950, %v952
  %v979 = vsel %vm971, %v952, %v954
  %v980 = vsel %vm971, %v954, %v956
  %v981 = vsel %vm971, %v956, %v958
  %v982 = vsel %vm971, %v958, %v960
  %v983 = vsel %vm971, %v960, %v962
  %v984 = vsel %vm971, %v962, %v964
  %v985 = vsel %vm971, %v964, %v966
  %v986 = vsel %vm971, %v966, %v968
  %v987 = vsel %vm971, %v968, %v970
  %1004 = vst [vmem:[#allocation2 + $0x400] sm:$0xff] %v972
  %1005 = vst [vmem:[#allocation2 + $0x408] sm:$0xff] %v973
  %1006 = vst [vmem:[#allocation2 + $0x410] sm:$0xff] %v974
  %1007 = vst [vmem:[#allocation2 + $0x418] sm:$0xff] %v975
  %1008 = vst [vmem:[#allocation2 + $0x420] sm:$0xff] %v976
  %1009 = vst [vmem:[#allocation2 + $0x428] sm:$0xff] %v977
  %1010 = vst [vmem:[#allocation2 + $0x430] sm:$0xff] %v978
  %1011 = vst [vmem:[#allocation2 + $0x438] sm:$0xff] %v979
  %1012 = vst [vmem:[#allocation2 + $0x440] sm:$0xff] %v980
  %1013 = vst [vmem:[#allocation2 + $0x448] sm:$0xff] %v981
  %1014 = vst [vmem:[#allocation2 + $0x450] sm:$0xff] %v982
  %1015 = vst [vmem:[#allocation2 + $0x458] sm:$0xff] %v983
  %1016 = vst [vmem:[#allocation2 + $0x460] sm:$0xff] %v984
  %1017 = vst [vmem:[#allocation2 + $0x468] sm:$0xff] %v985
  %1018 = vst [vmem:[#allocation2 + $0x470] sm:$0xff] %v986
  %1019 = vst [vmem:[#allocation2 + $0x478] sm:$0xff] %v987
  %v1020 = vld [vmem:[%s0] sm:$0xff]
  %v1021 = vld [vmem:[%s0 + $0x8] sm:$0xff]
  %v1022 = vld [vmem:[%s0 + $0x10] sm:$0xff]
  %v1023 = vld [vmem:[%s0 + $0x18] sm:$0xff]
  %v1024 = vld [vmem:[%s0 + $0x20] sm:$0xff]
  %v1025 = vld [vmem:[%s0 + $0x28] sm:$0xff]
  %v1026 = vld [vmem:[%s0 + $0x30] sm:$0xff]
  %v1027 = vld [vmem:[%s0 + $0x38] sm:$0xff]
  %v1028 = vld [vmem:[%s0 + $0x40] sm:$0xff]
  %v1029 = vld [vmem:[%s0 + $0x48] sm:$0xff]
  %v1030 = vld [vmem:[%s0 + $0x50] sm:$0xff]
  %v1031 = vld [vmem:[%s0 + $0x58] sm:$0xff]
  %v1032 = vld [vmem:[%s0 + $0x60] sm:$0xff]
  %v1033 = vld [vmem:[%s0 + $0x68] sm:$0xff]
  %v1034 = vld [vmem:[%s0 + $0x70] sm:$0xff]
  %v1035 = vld [vmem:[%s0 + $0x78] sm:$0xff]
  %v1036 = vld [vmem:[%s0 + $0x80] sm:$0xff]
  %1054 = vrot.lane.b32.xlu0 %v1020, 56
  %v1055 = vpop.permute.xlu0 %1054
  %1056 = vrot.lane.b32.xlu0 %v1021, 56
  %v1057 = vpop.permute.xlu0 %1056
  %1058 = vrot.lane.b32.xlu0 %v1022, 56
  %v1059 = vpop.permute.xlu0 %1058
  %1060 = vrot.lane.b32.xlu0 %v1023, 56
  %v1061 = vpop.permute.xlu0 %1060
  %1062 = vrot.lane.b32.xlu0 %v1024, 56
  %v1063 = vpop.permute.xlu0 %1062
  %1064 = vrot.lane.b32.xlu0 %v1025, 56
  %v1065 = vpop.permute.xlu0 %1064
  %1066 = vrot.lane.b32.xlu0 %v1026, 56
  %v1067 = vpop.permute.xlu0 %1066
  %1068 = vrot.lane.b32.xlu0 %v1027, 56
  %v1069 = vpop.permute.xlu0 %1068
  %1070 = vrot.lane.b32.xlu0 %v1028, 56
  %v1071 = vpop.permute.xlu0 %1070
  %1072 = vrot.lane.b32.xlu0 %v1029, 56
  %v1073 = vpop.permute.xlu0 %1072
  %1074 = vrot.lane.b32.xlu0 %v1030, 56
  %v1075 = vpop.permute.xlu0 %1074
  %1076 = vrot.lane.b32.xlu0 %v1031, 56
  %v1077 = vpop.permute.xlu0 %1076
  %1078 = vrot.lane.b32.xlu0 %v1032, 56
  %v1079 = vpop.permute.xlu0 %1078
  %1080 = vrot.lane.b32.xlu0 %v1033, 56
  %v1081 = vpop.permute.xlu0 %1080
  %1082 = vrot.lane.b32.xlu0 %v1034, 56
  %v1083 = vpop.permute.xlu0 %1082
  %1084 = vrot.lane.b32.xlu0 %v1035, 56
  %v1085 = vpop.permute.xlu0 %1084
  %1086 = vrot.lane.b32.xlu0 %v1036, 56
  %v1087 = vpop.permute.xlu0 %1086
  %vm1088 = vcmask 457728
  %v1089 = vsel %vm1088, %v1055, %v1057
  %v1090 = vsel %vm1088, %v1057, %v1059
  %v1091 = vsel %vm1088, %v1059, %v1061
  %v1092 = vsel %vm1088, %v1061, %v1063
  %v1093 = vsel %vm1088, %v1063, %v1065
  %v1094 = vsel %vm1088, %v1065, %v1067
  %v1095 = vsel %vm1088, %v1067, %v1069
  %v1096 = vsel %vm1088, %v1069, %v1071
  %v1097 = vsel %vm1088, %v1071, %v1073
  %v1098 = vsel %vm1088, %v1073, %v1075
  %v1099 = vsel %vm1088, %v1075, %v1077
  %v1100 = vsel %vm1088, %v1077, %v1079
  %v1101 = vsel %vm1088, %v1079, %v1081
  %v1102 = vsel %vm1088, %v1081, %v1083
  %v1103 = vsel %vm1088, %v1083, %v1085
  %v1104 = vsel %vm1088, %v1085, %v1087
  %1121 = vst [vmem:[#allocation2 + $0x480] sm:$0xff] %v1089
  %1122 = vst [vmem:[#allocation2 + $0x488] sm:$0xff] %v1090
  %1123 = vst [vmem:[#allocation2 + $0x490] sm:$0xff] %v1091
  %1124 = vst [vmem:[#allocation2 + $0x498] sm:$0xff] %v1092
  %1125 = vst [vmem:[#allocation2 + $0x4a0] sm:$0xff] %v1093
  %1126 = vst [vmem:[#allocation2 + $0x4a8] sm:$0xff] %v1094
  %1127 = vst [vmem:[#allocation2 + $0x4b0] sm:$0xff] %v1095
  %1128 = vst [vmem:[#allocation2 + $0x4b8] sm:$0xff] %v1096
  %1129 = vst [vmem:[#allocation2 + $0x4c0] sm:$0xff] %v1097
  %1130 = vst [vmem:[#allocation2 + $0x4c8] sm:$0xff] %v1098
  %1131 = vst [vmem:[#allocation2 + $0x4d0] sm:$0xff] %v1099
  %1132 = vst [vmem:[#allocation2 + $0x4d8] sm:$0xff] %v1100
  %1133 = vst [vmem:[#allocation2 + $0x4e0] sm:$0xff] %v1101
  %1134 = vst [vmem:[#allocation2 + $0x4e8] sm:$0xff] %v1102
  %1135 = vst [vmem:[#allocation2 + $0x4f0] sm:$0xff] %v1103
  %1136 = vst [vmem:[#allocation2 + $0x4f8] sm:$0xff] %v1104
  %v1137 = vld [vmem:[%s0 + $0x8] sm:$0xff]
  %v1138 = vld [vmem:[%s0 + $0x10] sm:$0xff]
  %v1139 = vld [vmem:[%s0 + $0x18] sm:$0xff]
  %v1140 = vld [vmem:[%s0 + $0x20] sm:$0xff]
  %v1141 = vld [vmem:[%s0 + $0x28] sm:$0xff]
  %v1142 = vld [vmem:[%s0 + $0x30] sm:$0xff]
  %v1143 = vld [vmem:[%s0 + $0x38] sm:$0xff]
  %v1144 = vld [vmem:[%s0 + $0x40] sm:$0xff]
  %v1145 = vld [vmem:[%s0 + $0x48] sm:$0xff]
  %v1146 = vld [vmem:[%s0 + $0x50] sm:$0xff]
  %v1147 = vld [vmem:[%s0 + $0x58] sm:$0xff]
  %v1148 = vld [vmem:[%s0 + $0x60] sm:$0xff]
  %v1149 = vld [vmem:[%s0 + $0x68] sm:$0xff]
  %v1150 = vld [vmem:[%s0 + $0x70] sm:$0xff]
  %v1151 = vld [vmem:[%s0 + $0x78] sm:$0xff]
  %v1152 = vld [vmem:[%s0 + $0x80] sm:$0xff]
  %1153 = vst [vmem:[#allocation2 + $0x500] sm:$0xff] %v1137
  %1154 = vst [vmem:[#allocation2 + $0x508] sm:$0xff] %v1138
  %1155 = vst [vmem:[#allocation2 + $0x510] sm:$0xff] %v1139
  %1156 = vst [vmem:[#allocation2 + $0x518] sm:$0xff] %v1140
  %1157 = vst [vmem:[#allocation2 + $0x520] sm:$0xff] %v1141
  %1158 = vst [vmem:[#allocation2 + $0x528] sm:$0xff] %v1142
  %1159 = vst [vmem:[#allocation2 + $0x530] sm:$0xff] %v1143
  %1160 = vst [vmem:[#allocation2 + $0x538] sm:$0xff] %v1144
  %1161 = vst [vmem:[#allocation2 + $0x540] sm:$0xff] %v1145
  %1162 = vst [vmem:[#allocation2 + $0x548] sm:$0xff] %v1146
  %1163 = vst [vmem:[#allocation2 + $0x550] sm:$0xff] %v1147
  %1164 = vst [vmem:[#allocation2 + $0x558] sm:$0xff] %v1148
  %1165 = vst [vmem:[#allocation2 + $0x560] sm:$0xff] %v1149
  %1166 = vst [vmem:[#allocation2 + $0x568] sm:$0xff] %v1150
  %1167 = vst [vmem:[#allocation2 + $0x570] sm:$0xff] %v1151
  %1168 = vst [vmem:[#allocation2 + $0x578] sm:$0xff] %v1152
  %v1169 = vld [vmem:[%s0 + $0x8] sm:$0xff]
  %v1170 = vld [vmem:[%s0 + $0x10] sm:$0xff]
  %v1171 = vld [vmem:[%s0 + $0x18] sm:$0xff]
  %v1172 = vld [vmem:[%s0 + $0x20] sm:$0xff]
  %v1173 = vld [vmem:[%s0 + $0x28] sm:$0xff]
  %v1174 = vld [vmem:[%s0 + $0x30] sm:$0xff]
  %v1175 = vld [vmem:[%s0 + $0x38] sm:$0xff]
  %v1176 = vld [vmem:[%s0 + $0x40] sm:$0xff]
  %v1177 = vld [vmem:[%s0 + $0x48] sm:$0xff]
  %v1178 = vld [vmem:[%s0 + $0x50] sm:$0xff]
  %v1179 = vld [vmem:[%s0 + $0x58] sm:$0xff]
  %v1180 = vld [vmem:[%s0 + $0x60] sm:$0xff]
  %v1181 = vld [vmem:[%s0 + $0x68] sm:$0xff]
  %v1182 = vld [vmem:[%s0 + $0x70] sm:$0xff]
  %v1183 = vld [vmem:[%s0 + $0x78] sm:$0xff]
  %v1184 = vld [vmem:[%s0 + $0x80] sm:$0xff]
  %v1185 = vld [vmem:[%s0 + $0x88] sm:$0xff]
  %1203 = vrot.lane.b32.xlu0 %v1169, 126
  %v1204 = vpop.permute.xlu0 %1203
  %1205 = vrot.lane.b32.xlu0 %v1170, 126
  %v1206 = vpop.permute.xlu0 %1205
  %1207 = vrot.lane.b32.xlu0 %v1171, 126
  %v1208 = vpop.permute.xlu0 %1207
  %1209 = vrot.lane.b32.xlu0 %v1172, 126
  %v1210 = vpop.permute.xlu0 %1209
  %1211 = vrot.lane.b32.xlu0 %v1173, 126
  %v1212 = vpop.permute.xlu0 %1211
  %1213 = vrot.lane.b32.xlu0 %v1174, 126
  %v1214 = vpop.permute.xlu0 %1213
  %1215 = vrot.lane.b32.xlu0 %v1175, 126
  %v1216 = vpop.permute.xlu0 %1215
  %1217 = vrot.lane.b32.xlu0 %v1176, 126
  %v1218 = vpop.permute.xlu0 %1217
  %1219 = vrot.lane.b32.xlu0 %v1177, 126
  %v1220 = vpop.permute.xlu0 %1219
  %1221 = vrot.lane.b32.xlu0 %v1178, 126
  %v1222 = vpop.permute.xlu0 %1221
  %1223 = vrot.lane.b32.xlu0 %v1179, 126
  %v1224 = vpop.permute.xlu0 %1223
  %1225 = vrot.lane.b32.xlu0 %v1180, 126
  %v1226 = vpop.permute.xlu0 %1225
  %1227 = vrot.lane.b32.xlu0 %v1181, 126
  %v1228 = vpop.permute.xlu0 %1227
  %1229 = vrot.lane.b32.xlu0 %v1182, 126
  %v1230 = vpop.permute.xlu0 %1229
  %1231 = vrot.lane.b32.xlu0 %v1183, 126
  %v1232 = vpop.permute.xlu0 %1231
  %1233 = vrot.lane.b32.xlu0 %v1184, 126
  %v1234 = vpop.permute.xlu0 %1233
  %1235 = vrot.lane.b32.xlu0 %v1185, 126
  %v1236 = vpop.permute.xlu0 %1235
  %v1237 = vsel %vm152, %v1204, %v1206
  %v1238 = vsel %vm152, %v1206, %v1208
  %v1239 = vsel %vm152, %v1208, %v1210
  %v1240 = vsel %vm152, %v1210, %v1212
  %v1241 = vsel %vm152, %v1212, %v1214
  %v1242 = vsel %vm152, %v1214, %v1216
  %v1243 = vsel %vm152, %v1216, %v1218
  %v1244 = vsel %vm152, %v1218, %v1220
  %v1245 = vsel %vm152, %v1220, %v1222
  %v1246 = vsel %vm152, %v1222, %v1224
  %v1247 = vsel %vm152, %v1224, %v1226
  %v1248 = vsel %vm152, %v1226, %v1228
  %v1249 = vsel %vm152, %v1228, %v1230
  %v1250 = vsel %vm152, %v1230, %v1232
  %v1251 = vsel %vm152, %v1232, %v1234
  %v1252 = vsel %vm152, %v1234, %v1236
  %1269 = vst [vmem:[#allocation2 + $0x580] sm:$0xff] %v1237
  %1270 = vst [vmem:[#allocation2 + $0x588] sm:$0xff] %v1238
  %1271 = vst [vmem:[#allocation2 + $0x590] sm:$0xff] %v1239
  %1272 = vst [vmem:[#allocation2 + $0x598] sm:$0xff] %v1240
  %1273 = vst [vmem:[#allocation2 + $0x5a0] sm:$0xff] %v1241
  %1274 = vst [vmem:[#allocation2 + $0x5a8] sm:$0xff] %v1242
  %1275 = vst [vmem:[#allocation2 + $0x5b0] sm:$0xff] %v1243
  %1276 = vst [vmem:[#allocation2 + $0x5b8] sm:$0xff] %v1244
  %1277 = vst [vmem:[#allocation2 + $0x5c0] sm:$0xff] %v1245
  %1278 = vst [vmem:[#allocation2 + $0x5c8] sm:$0xff] %v1246
  %1279 = vst [vmem:[#allocation2 + $0x5d0] sm:$0xff] %v1247
  %1280 = vst [vmem:[#allocation2 + $0x5d8] sm:$0xff] %v1248
  %1281 = vst [vmem:[#allocation2 + $0x5e0] sm:$0xff] %v1249
  %1282 = vst [vmem:[#allocation2 + $0x5e8] sm:$0xff] %v1250
  %1283 = vst [vmem:[#allocation2 + $0x5f0] sm:$0xff] %v1251
  %1284 = vst [vmem:[#allocation2 + $0x5f8] sm:$0xff] %v1252
  %v1285 = vld [vmem:[%s0 + $0x8] sm:$0xff]
  %v1286 = vld [vmem:[%s0 + $0x10] sm:$0xff]
  %v1287 = vld [vmem:[%s0 + $0x18] sm:$0xff]
  %v1288 = vld [vmem:[%s0 + $0x20] sm:$0xff]
  %v1289 = vld [vmem:[%s0 + $0x28] sm:$0xff]
  %v1290 = vld [vmem:[%s0 + $0x30] sm:$0xff]
  %v1291 = vld [vmem:[%s0 + $0x38] sm:$0xff]
  %v1292 = vld [vmem:[%s0 + $0x40] sm:$0xff]
  %v1293 = vld [vmem:[%s0 + $0x48] sm:$0xff]
  %v1294 = vld [vmem:[%s0 + $0x50] sm:$0xff]
  %v1295 = vld [vmem:[%s0 + $0x58] sm:$0xff]
  %v1296 = vld [vmem:[%s0 + $0x60] sm:$0xff]
  %v1297 = vld [vmem:[%s0 + $0x68] sm:$0xff]
  %v1298 = vld [vmem:[%s0 + $0x70] sm:$0xff]
  %v1299 = vld [vmem:[%s0 + $0x78] sm:$0xff]
  %v1300 = vld [vmem:[%s0 + $0x80] sm:$0xff]
  %v1301 = vld [vmem:[%s0 + $0x88] sm:$0xff]
  %1319 = vrot.lane.b32.xlu0 %v1285, 124
  %v1320 = vpop.permute.xlu0 %1319
  %1321 = vrot.lane.b32.xlu0 %v1286, 124
  %v1322 = vpop.permute.xlu0 %1321
  %1323 = vrot.lane.b32.xlu0 %v1287, 124
  %v1324 = vpop.permute.xlu0 %1323
  %1325 = vrot.lane.b32.xlu0 %v1288, 124
  %v1326 = vpop.permute.xlu0 %1325
  %1327 = vrot.lane.b32.xlu0 %v1289, 124
  %v1328 = vpop.permute.xlu0 %1327
  %1329 = vrot.lane.b32.xlu0 %v1290, 124
  %v1330 = vpop.permute.xlu0 %1329
  %1331 = vrot.lane.b32.xlu0 %v1291, 124
  %v1332 = vpop.permute.xlu0 %1331
  %1333 = vrot.lane.b32.xlu0 %v1292, 124
  %v1334 = vpop.permute.xlu0 %1333
  %1335 = vrot.lane.b32.xlu0 %v1293, 124
  %v1336 = vpop.permute.xlu0 %1335
  %1337 = vrot.lane.b32.xlu0 %v1294, 124
  %v1338 = vpop.permute.xlu0 %1337
  %1339 = vrot.lane.b32.xlu0 %v1295, 124
  %v1340 = vpop.permute.xlu0 %1339
  %1341 = vrot.lane.b32.xlu0 %v1296, 124
  %v1342 = vpop.permute.xlu0 %1341
  %1343 = vrot.lane.b32.xlu0 %v1297, 124
  %v1344 = vpop.permute.xlu0 %1343
  %1345 = vrot.lane.b32.xlu0 %v1298, 124
  %v1346 = vpop.permute.xlu0 %1345
  %1347 = vrot.lane.b32.xlu0 %v1299, 124
  %v1348 = vpop.permute.xlu0 %1347
  %1349 = vrot.lane.b32.xlu0 %v1300, 124
  %v1350 = vpop.permute.xlu0 %1349
  %1351 = vrot.lane.b32.xlu0 %v1301, 124
  %v1352 = vpop.permute.xlu0 %1351
  %v1353 = vsel %vm269, %v1320, %v1322
  %v1354 = vsel %vm269, %v1322, %v1324
  %v1355 = vsel %vm269, %v1324, %v1326
  %v1356 = vsel %vm269, %v1326, %v1328
  %v1357 = vsel %vm269, %v1328, %v1330
  %v1358 = vsel %vm269, %v1330, %v1332
  %v1359 = vsel %vm269, %v1332, %v1334
  %v1360 = vsel %vm269, %v1334, %v1336
  %v1361 = vsel %vm269, %v1336, %v1338
  %v1362 = vsel %vm269, %v1338, %v1340
  %v1363 = vsel %vm269, %v1340, %v1342
  %v1364 = vsel %vm269, %v1342, %v1344
  %v1365 = vsel %vm269, %v1344, %v1346
  %v1366 = vsel %vm269, %v1346, %v1348
  %v1367 = vsel %vm269, %v1348, %v1350
  %v1368 = vsel %vm269, %v1350, %v1352
  %1385 = vst [vmem:[#allocation2 + $0x600] sm:$0xff] %v1353
  %1386 = vst [vmem:[#allocation2 + $0x608] sm:$0xff] %v1354
  %1387 = vst [vmem:[#allocation2 + $0x610] sm:$0xff] %v1355
  %1388 = vst [vmem:[#allocation2 + $0x618] sm:$0xff] %v1356
  %1389 = vst [vmem:[#allocation2 + $0x620] sm:$0xff] %v1357
  %1390 = vst [vmem:[#allocation2 + $0x628] sm:$0xff] %v1358
  %1391 = vst [vmem:[#allocation2 + $0x630] sm:$0xff] %v1359
  %1392 = vst [vmem:[#allocation2 + $0x638] sm:$0xff] %v1360
  %1393 = vst [vmem:[#allocation2 + $0x640] sm:$0xff] %v1361
  %1394 = vst [vmem:[#allocation2 + $0x648] sm:$0xff] %v1362
  %1395 = vst [vmem:[#allocation2 + $0x650] sm:$0xff] %v1363
  %1396 = vst [vmem:[#allocation2 + $0x658] sm:$0xff] %v1364
  %1397 = vst [vmem:[#allocation2 + $0x660] sm:$0xff] %v1365
  %1398 = vst [vmem:[#allocation2 + $0x668] sm:$0xff] %v1366
  %1399 = vst [vmem:[#allocation2 + $0x670] sm:$0xff] %v1367
  %1400 = vst [vmem:[#allocation2 + $0x678] sm:$0xff] %v1368
  %v1401 = vld [vmem:[%s0 + $0x8] sm:$0xff]
  %v1402 = vld [vmem:[%s0 + $0x10] sm:$0xff]
  %v1403 = vld [vmem:[%s0 + $0x18] sm:$0xff]
  %v1404 = vld [vmem:[%s0 + $0x20] sm:$0xff]
  %v1405 = vld [vmem:[%s0 + $0x28] sm:$0xff]
  %v1406 = vld [vmem:[%s0 + $0x30] sm:$0xff]
  %v1407 = vld [vmem:[%s0 + $0x38] sm:$0xff]
  %v1408 = vld [vmem:[%s0 + $0x40] sm:$0xff]
  %v1409 = vld [vmem:[%s0 + $0x48] sm:$0xff]
  %v1410 = vld [vmem:[%s0 + $0x50] sm:$0xff]
  %v1411 = vld [vmem:[%s0 + $0x58] sm:$0xff]
  %v1412 = vld [vmem:[%s0 + $0x60] sm:$0xff]
  %v1413 = vld [vmem:[%s0 + $0x68] sm:$0xff]
  %v1414 = vld [vmem:[%s0 + $0x70] sm:$0xff]
  %v1415 = vld [vmem:[%s0 + $0x78] sm:$0xff]
  %v1416 = vld [vmem:[%s0 + $0x80] sm:$0xff]
  %v1417 = vld [vmem:[%s0 + $0x88] sm:$0xff]
  %1435 = vrot.lane.b32.xlu0 %v1401, 122
  %v1436 = vpop.permute.xlu0 %1435
  %1437 = vrot.lane.b32.xlu0 %v1402, 122
  %v1438 = vpop.permute.xlu0 %1437
  %1439 = vrot.lane.b32.xlu0 %v1403, 122
  %v1440 = vpop.permute.xlu0 %1439
  %1441 = vrot.lane.b32.xlu0 %v1404, 122
  %v1442 = vpop.permute.xlu0 %1441
  %1443 = vrot.lane.b32.xlu0 %v1405, 122
  %v1444 = vpop.permute.xlu0 %1443
  %1445 = vrot.lane.b32.xlu0 %v1406, 122
  %v1446 = vpop.permute.xlu0 %1445
  %1447 = vrot.lane.b32.xlu0 %v1407, 122
  %v1448 = vpop.permute.xlu0 %1447
  %1449 = vrot.lane.b32.xlu0 %v1408, 122
  %v1450 = vpop.permute.xlu0 %1449
  %1451 = vrot.lane.b32.xlu0 %v1409, 122
  %v1452 = vpop.permute.xlu0 %1451
  %1453 = vrot.lane.b32.xlu0 %v1410, 122
  %v1454 = vpop.permute.xlu0 %1453
  %1455 = vrot.lane.b32.xlu0 %v1411, 122
  %v1456 = vpop.permute.xlu0 %1455
  %1457 = vrot.lane.b32.xlu0 %v1412, 122
  %v1458 = vpop.permute.xlu0 %1457
  %1459 = vrot.lane.b32.xlu0 %v1413, 122
  %v1460 = vpop.permute.xlu0 %1459
  %1461 = vrot.lane.b32.xlu0 %v1414, 122
  %v1462 = vpop.permute.xlu0 %1461
  %1463 = vrot.lane.b32.xlu0 %v1415, 122
  %v1464 = vpop.permute.xlu0 %1463
  %1465 = vrot.lane.b32.xlu0 %v1416, 122
  %v1466 = vpop.permute.xlu0 %1465
  %1467 = vrot.lane.b32.xlu0 %v1417, 122
  %v1468 = vpop.permute.xlu0 %1467
  %v1469 = vsel %vm386, %v1436, %v1438
  %v1470 = vsel %vm386, %v1438, %v1440
  %v1471 = vsel %vm386, %v1440, %v1442
  %v1472 = vsel %vm386, %v1442, %v1444
  %v1473 = vsel %vm386, %v1444, %v1446
  %v1474 = vsel %vm386, %v1446, %v1448
  %v1475 = vsel %vm386, %v1448, %v1450
  %v1476 = vsel %vm386, %v1450, %v1452
  %v1477 = vsel %vm386, %v1452, %v1454
  %v1478 = vsel %vm386, %v1454, %v1456
  %v1479 = vsel %vm386, %v1456, %v1458
  %v1480 = vsel %vm386, %v1458, %v1460
  %v1481 = vsel %vm386, %v1460, %v1462
  %v1482 = vsel %vm386, %v1462, %v1464
  %v1483 = vsel %vm386, %v1464, %v1466
  %v1484 = vsel %vm386, %v1466, %v1468
  %1501 = vst [vmem:[#allocation2 + $0x680] sm:$0xff] %v1469
  %1502 = vst [vmem:[#allocation2 + $0x688] sm:$0xff] %v1470
  %1503 = vst [vmem:[#allocation2 + $0x690] sm:$0xff] %v1471
  %1504 = vst [vmem:[#allocation2 + $0x698] sm:$0xff] %v1472
  %1505 = vst [vmem:[#allocation2 + $0x6a0] sm:$0xff] %v1473
  %1506 = vst [vmem:[#allocation2 + $0x6a8] sm:$0xff] %v1474
  %1507 = vst [vmem:[#allocation2 + $0x6b0] sm:$0xff] %v1475
  %1508 = vst [vmem:[#allocation2 + $0x6b8] sm:$0xff] %v1476
  %1509 = vst [vmem:[#allocation2 + $0x6c0] sm:$0xff] %v1477
  %1510 = vst [vmem:[#allocation2 + $0x6c8] sm:$0xff] %v1478
  %1511 = vst [vmem:[#allocation2 + $0x6d0] sm:$0xff] %v1479
  %1512 = vst [vmem:[#allocation2 + $0x6d8] sm:$0xff] %v1480
  %1513 = vst [vmem:[#allocation2 + $0x6e0] sm:$0xff] %v1481
  %1514 = vst [vmem:[#allocation2 + $0x6e8] sm:$0xff] %v1482
  %1515 = vst [vmem:[#allocation2 + $0x6f0] sm:$0xff] %v1483
  %1516 = vst [vmem:[#allocation2 + $0x6f8] sm:$0xff] %v1484
  %v1517 = vld [vmem:[%s0 + $0x8] sm:$0xff]
  %v1518 = vld [vmem:[%s0 + $0x10] sm:$0xff]
  %v1519 = vld [vmem:[%s0 + $0x18] sm:$0xff]
  %v1520 = vld [vmem:[%s0 + $0x20] sm:$0xff]
  %v1521 = vld [vmem:[%s0 + $0x28] sm:$0xff]
  %v1522 = vld [vmem:[%s0 + $0x30] sm:$0xff]
  %v1523 = vld [vmem:[%s0 + $0x38] sm:$0xff]
  %v1524 = vld [vmem:[%s0 + $0x40] sm:$0xff]
  %v1525 = vld [vmem:[%s0 + $0x48] sm:$0xff]
  %v1526 = vld [vmem:[%s0 + $0x50] sm:$0xff]
  %v1527 = vld [vmem:[%s0 + $0x58] sm:$0xff]
  %v1528 = vld [vmem:[%s0 + $0x60] sm:$0xff]
  %v1529 = vld [vmem:[%s0 + $0x68] sm:$0xff]
  %v1530 = vld [vmem:[%s0 + $0x70] sm:$0xff]
  %v1531 = vld [vmem:[%s0 + $0x78] sm:$0xff]
  %v1532 = vld [vmem:[%s0 + $0x80] sm:$0xff]
  %v1533 = vld [vmem:[%s0 + $0x88] sm:$0xff]
  %1551 = vrot.lane.b32.xlu0 %v1517, 120
  %v1552 = vpop.permute.xlu0 %1551
  %1553 = vrot.lane.b32.xlu0 %v1518, 120
  %v1554 = vpop.permute.xlu0 %1553
  %1555 = vrot.lane.b32.xlu0 %v1519, 120
  %v1556 = vpop.permute.xlu0 %1555
  %1557 = vrot.lane.b32.xlu0 %v1520, 120
  %v1558 = vpop.permute.xlu0 %1557
  %1559 = vrot.lane.b32.xlu0 %v1521, 120
  %v1560 = vpop.permute.xlu0 %1559
  %1561 = vrot.lane.b32.xlu0 %v1522, 120
  %v1562 = vpop.permute.xlu0 %1561
  %1563 = vrot.lane.b32.xlu0 %v1523, 120
  %v1564 = vpop.permute.xlu0 %1563
  %1565 = vrot.lane.b32.xlu0 %v1524, 120
  %v1566 = vpop.permute.xlu0 %1565
  %1567 = vrot.lane.b32.xlu0 %v1525, 120
  %v1568 = vpop.permute.xlu0 %1567
  %1569 = vrot.lane.b32.xlu0 %v1526, 120
  %v1570 = vpop.permute.xlu0 %1569
  %1571 = vrot.lane.b32.xlu0 %v1527, 120
  %v1572 = vpop.permute.xlu0 %1571
  %1573 = vrot.lane.b32.xlu0 %v1528, 120
  %v1574 = vpop.permute.xlu0 %1573
  %1575 = vrot.lane.b32.xlu0 %v1529, 120
  %v1576 = vpop.permute.xlu0 %1575
  %1577 = vrot.lane.b32.xlu0 %v1530, 120
  %v1578 = vpop.permute.xlu0 %1577
  %1579 = vrot.lane.b32.xlu0 %v1531, 120
  %v1580 = vpop.permute.xlu0 %1579
  %1581 = vrot.lane.b32.xlu0 %v1532, 120
  %v1582 = vpop.permute.xlu0 %1581
  %1583 = vrot.lane.b32.xlu0 %v1533, 120
  %v1584 = vpop.permute.xlu0 %1583
  %v1585 = vsel %vm503, %v1552, %v1554
  %v1586 = vsel %vm503, %v1554, %v1556
  %v1587 = vsel %vm503, %v1556, %v1558
  %v1588 = vsel %vm503, %v1558, %v1560
  %v1589 = vsel %vm503, %v1560, %v1562
  %v1590 = vsel %vm503, %v1562, %v1564
  %v1591 = vsel %vm503, %v1564, %v1566
  %v1592 = vsel %vm503, %v1566, %v1568
  %v1593 = vsel %vm503, %v1568, %v1570
  %v1594 = vsel %vm503, %v1570, %v1572
  %v1595 = vsel %vm503, %v1572, %v1574
  %v1596 = vsel %vm503, %v1574, %v1576
  %v1597 = vsel %vm503, %v1576, %v1578
  %v1598 = vsel %vm503, %v1578, %v1580
  %v1599 = vsel %vm503, %v1580, %v1582
  %v1600 = vsel %vm503, %v1582, %v1584
  %1617 = vst [vmem:[#allocation2 + $0x700] sm:$0xff] %v1585
  %1618 = vst [vmem:[#allocation2 + $0x708] sm:$0xff] %v1586
  %1619 = vst [vmem:[#allocation2 + $0x710] sm:$0xff] %v1587
  %1620 = vst [vmem:[#allocation2 + $0x718] sm:$0xff] %v1588
  %1621 = vst [vmem:[#allocation2 + $0x720] sm:$0xff] %v1589
  %1622 = vst [vmem:[#allocation2 + $0x728] sm:$0xff] %v1590
  %1623 = vst [vmem:[#allocation2 + $0x730] sm:$0xff] %v1591
  %1624 = vst [vmem:[#allocation2 + $0x738] sm:$0xff] %v1592
  %1625 = vst [vmem:[#allocation2 + $0x740] sm:$0xff] %v1593
  %1626 = vst [vmem:[#allocation2 + $0x748] sm:$0xff] %v1594
  %1627 = vst [vmem:[#allocation2 + $0x750] sm:$0xff] %v1595
  %1628 = vst [vmem:[#allocation2 + $0x758] sm:$0xff] %v1596
  %1629 = vst [vmem:[#allocation2 + $0x760] sm:$0xff] %v1597
  %1630 = vst [vmem:[#allocation2 + $0x768] sm:$0xff] %v1598
  %1631 = vst [vmem:[#allocation2 + $0x770] sm:$0xff] %v1599
  %1632 = vst [vmem:[#allocation2 + $0x778] sm:$0xff] %v1600
  %v1633 = vld [vmem:[%s0 + $0x8] sm:$0xff]
  %v1634 = vld [vmem:[%s0 + $0x10] sm:$0xff]
  %v1635 = vld [vmem:[%s0 + $0x18] sm:$0xff]
  %v1636 = vld [vmem:[%s0 + $0x20] sm:$0xff]
  %v1637 = vld [vmem:[%s0 + $0x28] sm:$0xff]
  %v1638 = vld [vmem:[%s0 + $0x30] sm:$0xff]
  %v1639 = vld [vmem:[%s0 + $0x38] sm:$0xff]
  %v1640 = vld [vmem:[%s0 + $0x40] sm:$0xff]
  %v1641 = vld [vmem:[%s0 + $0x48] sm:$0xff]
  %v1642 = vld [vmem:[%s0 + $0x50] sm:$0xff]
  %v1643 = vld [vmem:[%s0 + $0x58] sm:$0xff]
  %v1644 = vld [vmem:[%s0 + $0x60] sm:$0xff]
  %v1645 = vld [vmem:[%s0 + $0x68] sm:$0xff]
  %v1646 = vld [vmem:[%s0 + $0x70] sm:$0xff]
  %v1647 = vld [vmem:[%s0 + $0x78] sm:$0xff]
  %v1648 = vld [vmem:[%s0 + $0x80] sm:$0xff]
  %v1649 = vld [vmem:[%s0 + $0x88] sm:$0xff]
  %1667 = vrot.lane.b32.xlu0 %v1633, 64
  %v1668 = vpop.permute.xlu0 %1667
  %1669 = vrot.lane.b32.xlu0 %v1634, 64
  %v1670 = vpop.permute.xlu0 %1669
  %1671 = vrot.lane.b32.xlu0 %v1635, 64
  %v1672 = vpop.permute.xlu0 %1671
  %1673 = vrot.lane.b32.xlu0 %v1636, 64
  %v1674 = vpop.permute.xlu0 %1673
  %1675 = vrot.lane.b32.xlu0 %v1637, 64
  %v1676 = vpop.permute.xlu0 %1675
  %1677 = vrot.lane.b32.xlu0 %v1638, 64
  %v1678 = vpop.permute.xlu0 %1677
  %1679 = vrot.lane.b32.xlu0 %v1639, 64
  %v1680 = vpop.permute.xlu0 %1679
  %1681 = vrot.lane.b32.xlu0 %v1640, 64
  %v1682 = vpop.permute.xlu0 %1681
  %1683 = vrot.lane.b32.xlu0 %v1641, 64
  %v1684 = vpop.permute.xlu0 %1683
  %1685 = vrot.lane.b32.xlu0 %v1642, 64
  %v1686 = vpop.permute.xlu0 %1685
  %1687 = vrot.lane.b32.xlu0 %v1643, 64
  %v1688 = vpop.permute.xlu0 %1687
  %1689 = vrot.lane.b32.xlu0 %v1644, 64
  %v1690 = vpop.permute.xlu0 %1689
  %1691 = vrot.lane.b32.xlu0 %v1645, 64
  %v1692 = vpop.permute.xlu0 %1691
  %1693 = vrot.lane.b32.xlu0 %v1646, 64
  %v1694 = vpop.permute.xlu0 %1693
  %1695 = vrot.lane.b32.xlu0 %v1647, 64
  %v1696 = vpop.permute.xlu0 %1695
  %1697 = vrot.lane.b32.xlu0 %v1648, 64
  %v1698 = vpop.permute.xlu0 %1697
  %1699 = vrot.lane.b32.xlu0 %v1649, 64
  %v1700 = vpop.permute.xlu0 %1699
  %v1701 = vsel %vm620, %v1668, %v1670
  %v1702 = vsel %vm620, %v1670, %v1672
  %v1703 = vsel %vm620, %v1672, %v1674
  %v1704 = vsel %vm620, %v1674, %v1676
  %v1705 = vsel %vm620, %v1676, %v1678
  %v1706 = vsel %vm620, %v1678, %v1680
  %v1707 = vsel %vm620, %v1680, %v1682
  %v1708 = vsel %vm620, %v1682, %v1684
  %v1709 = vsel %vm620, %v1684, %v1686
  %v1710 = vsel %vm620, %v1686, %v1688
  %v1711 = vsel %vm620, %v1688, %v1690
  %v1712 = vsel %vm620, %v1690, %v1692
  %v1713 = vsel %vm620, %v1692, %v1694
  %v1714 = vsel %vm620, %v1694, %v1696
  %v1715 = vsel %vm620, %v1696, %v1698
  %v1716 = vsel %vm620, %v1698, %v1700
  %1733 = vst [vmem:[#allocation2 + $0x780] sm:$0xff] %v1701
  %1734 = vst [vmem:[#allocation2 + $0x788] sm:$0xff] %v1702
  %1735 = vst [vmem:[#allocation2 + $0x790] sm:$0xff] %v1703
  %1736 = vst [vmem:[#allocation2 + $0x798] sm:$0xff] %v1704
  %1737 = vst [vmem:[#allocation2 + $0x7a0] sm:$0xff] %v1705
  %1738 = vst [vmem:[#allocation2 + $0x7a8] sm:$0xff] %v1706
  %1739 = vst [vmem:[#allocation2 + $0x7b0] sm:$0xff] %v1707
  %1740 = vst [vmem:[#allocation2 + $0x7b8] sm:$0xff] %v1708
  %1741 = vst [vmem:[#allocation2 + $0x7c0] sm:$0xff] %v1709
  %1742 = vst [vmem:[#allocation2 + $0x7c8] sm:$0xff] %v1710
  %1743 = vst [vmem:[#allocation2 + $0x7d0] sm:$0xff] %v1711
  %1744 = vst [vmem:[#allocation2 + $0x7d8] sm:$0xff] %v1712
  %1745 = vst [vmem:[#allocation2 + $0x7e0] sm:$0xff] %v1713
  %1746 = vst [vmem:[#allocation2 + $0x7e8] sm:$0xff] %v1714
  %1747 = vst [vmem:[#allocation2 + $0x7f0] sm:$0xff] %v1715
  %1748 = vst [vmem:[#allocation2 + $0x7f8] sm:$0xff] %v1716
  %v1749 = vld [vmem:[%s0 + $0x8] sm:$0xff]
  %v1750 = vld [vmem:[%s0 + $0x10] sm:$0xff]
  %v1751 = vld [vmem:[%s0 + $0x18] sm:$0xff]
  %v1752 = vld [vmem:[%s0 + $0x20] sm:$0xff]
  %v1753 = vld [vmem:[%s0 + $0x28] sm:$0xff]
  %v1754 = vld [vmem:[%s0 + $0x30] sm:$0xff]
  %v1755 = vld [vmem:[%s0 + $0x38] sm:$0xff]
  %v1756 = vld [vmem:[%s0 + $0x40] sm:$0xff]
  %v1757 = vld [vmem:[%s0 + $0x48] sm:$0xff]
  %v1758 = vld [vmem:[%s0 + $0x50] sm:$0xff]
  %v1759 = vld [vmem:[%s0 + $0x58] sm:$0xff]
  %v1760 = vld [vmem:[%s0 + $0x60] sm:$0xff]
  %v1761 = vld [vmem:[%s0 + $0x68] sm:$0xff]
  %v1762 = vld [vmem:[%s0 + $0x70] sm:$0xff]
  %v1763 = vld [vmem:[%s0 + $0x78] sm:$0xff]
  %v1764 = vld [vmem:[%s0 + $0x80] sm:$0xff]
  %v1765 = vld [vmem:[%s0 + $0x88] sm:$0xff]
  %1783 = vrot.lane.b32.xlu0 %v1749, 62
  %v1784 = vpop.permute.xlu0 %1783
  %1785 = vrot.lane.b32.xlu0 %v1750, 62
  %v1786 = vpop.permute.xlu0 %1785
  %1787 = vrot.lane.b32.xlu0 %v1751, 62
  %v1788 = vpop.permute.xlu0 %1787
  %1789 = vrot.lane.b32.xlu0 %v1752, 62
  %v1790 = vpop.permute.xlu0 %1789
  %1791 = vrot.lane.b32.xlu0 %v1753, 62
  %v1792 = vpop.permute.xlu0 %1791
  %1793 = vrot.lane.b32.xlu0 %v1754, 62
  %v1794 = vpop.permute.xlu0 %1793
  %1795 = vrot.lane.b32.xlu0 %v1755, 62
  %v1796 = vpop.permute.xlu0 %1795
  %1797 = vrot.lane.b32.xlu0 %v1756, 62
  %v1798 = vpop.permute.xlu0 %1797
  %1799 = vrot.lane.b32.xlu0 %v1757, 62
  %v1800 = vpop.permute.xlu0 %1799
  %1801 = vrot.lane.b32.xlu0 %v1758, 62
  %v1802 = vpop.permute.xlu0 %1801
  %1803 = vrot.lane.b32.xlu0 %v1759, 62
  %v1804 = vpop.permute.xlu0 %1803
  %1805 = vrot.lane.b32.xlu0 %v1760, 62
  %v1806 = vpop.permute.xlu0 %1805
  %1807 = vrot.lane.b32.xlu0 %v1761, 62
  %v1808 = vpop.permute.xlu0 %1807
  %1809 = vrot.lane.b32.xlu0 %v1762, 62
  %v1810 = vpop.permute.xlu0 %1809
  %1811 = vrot.lane.b32.xlu0 %v1763, 62
  %v1812 = vpop.permute.xlu0 %1811
  %1813 = vrot.lane.b32.xlu0 %v1764, 62
  %v1814 = vpop.permute.xlu0 %1813
  %1815 = vrot.lane.b32.xlu0 %v1765, 62
  %v1816 = vpop.permute.xlu0 %1815
  %v1817 = vsel %vm737, %v1784, %v1786
  %v1818 = vsel %vm737, %v1786, %v1788
  %v1819 = vsel %vm737, %v1788, %v1790
  %v1820 = vsel %vm737, %v1790, %v1792
  %v1821 = vsel %vm737, %v1792, %v1794
  %v1822 = vsel %vm737, %v1794, %v1796
  %v1823 = vsel %vm737, %v1796, %v1798
  %v1824 = vsel %vm737, %v1798, %v1800
  %v1825 = vsel %vm737, %v1800, %v1802
  %v1826 = vsel %vm737, %v1802, %v1804
  %v1827 = vsel %vm737, %v1804, %v1806
  %v1828 = vsel %vm737, %v1806, %v1808
  %v1829 = vsel %vm737, %v1808, %v1810
  %v1830 = vsel %vm737, %v1810, %v1812
  %v1831 = vsel %vm737, %v1812, %v1814
  %v1832 = vsel %vm737, %v1814, %v1816
  %1849 = vst [vmem:[#allocation2 + $0x800] sm:$0xff] %v1817
  %1850 = vst [vmem:[#allocation2 + $0x808] sm:$0xff] %v1818
  %1851 = vst [vmem:[#allocation2 + $0x810] sm:$0xff] %v1819
  %1852 = vst [vmem:[#allocation2 + $0x818] sm:$0xff] %v1820
  %1853 = vst [vmem:[#allocation2 + $0x820] sm:$0xff] %v1821
  %1854 = vst [vmem:[#allocation2 + $0x828] sm:$0xff] %v1822
  %1855 = vst [vmem:[#allocation2 + $0x830] sm:$0xff] %v1823
  %1856 = vst [vmem:[#allocation2 + $0x838] sm:$0xff] %v1824
  %1857 = vst [vmem:[#allocation2 + $0x840] sm:$0xff] %v1825
  %1858 = vst [vmem:[#allocation2 + $0x848] sm:$0xff] %v1826
  %1859 = vst [vmem:[#allocation2 + $0x850] sm:$0xff] %v1827
  %1860 = vst [vmem:[#allocation2 + $0x858] sm:$0xff] %v1828
  %1861 = vst [vmem:[#allocation2 + $0x860] sm:$0xff] %v1829
  %1862 = vst [vmem:[#allocation2 + $0x868] sm:$0xff] %v1830
  %1863 = vst [vmem:[#allocation2 + $0x870] sm:$0xff] %v1831
  %1864 = vst [vmem:[#allocation2 + $0x878] sm:$0xff] %v1832
  %v1865 = vld [vmem:[%s0 + $0x8] sm:$0xff]
  %v1866 = vld [vmem:[%s0 + $0x10] sm:$0xff]
  %v1867 = vld [vmem:[%s0 + $0x18] sm:$0xff]
  %v1868 = vld [vmem:[%s0 + $0x20] sm:$0xff]
  %v1869 = vld [vmem:[%s0 + $0x28] sm:$0xff]
  %v1870 = vld [vmem:[%s0 + $0x30] sm:$0xff]
  %v1871 = vld [vmem:[%s0 + $0x38] sm:$0xff]
  %v1872 = vld [vmem:[%s0 + $0x40] sm:$0xff]
  %v1873 = vld [vmem:[%s0 + $0x48] sm:$0xff]
  %v1874 = vld [vmem:[%s0 + $0x50] sm:$0xff]
  %v1875 = vld [vmem:[%s0 + $0x58] sm:$0xff]
  %v1876 = vld [vmem:[%s0 + $0x60] sm:$0xff]
  %v1877 = vld [vmem:[%s0 + $0x68] sm:$0xff]
  %v1878 = vld [vmem:[%s0 + $0x70] sm:$0xff]
  %v1879 = vld [vmem:[%s0 + $0x78] sm:$0xff]
  %v1880 = vld [vmem:[%s0 + $0x80] sm:$0xff]
  %v1881 = vld [vmem:[%s0 + $0x88] sm:$0xff]
  %1899 = vrot.lane.b32.xlu0 %v1865, 60
  %v1900 = vpop.permute.xlu0 %1899
  %1901 = vrot.lane.b32.xlu0 %v1866, 60
  %v1902 = vpop.permute.xlu0 %1901
  %1903 = vrot.lane.b32.xlu0 %v1867, 60
  %v1904 = vpop.permute.xlu0 %1903
  %1905 = vrot.lane.b32.xlu0 %v1868, 60
  %v1906 = vpop.permute.xlu0 %1905
  %1907 = vrot.lane.b32.xlu0 %v1869, 60
  %v1908 = vpop.permute.xlu0 %1907
  %1909 = vrot.lane.b32.xlu0 %v1870, 60
  %v1910 = vpop.permute.xlu0 %1909
  %1911 = vrot.lane.b32.xlu0 %v1871, 60
  %v1912 = vpop.permute.xlu0 %1911
  %1913 = vrot.lane.b32.xlu0 %v1872, 60
  %v1914 = vpop.permute.xlu0 %1913
  %1915 = vrot.lane.b32.xlu0 %v1873, 60
  %v1916 = vpop.permute.xlu0 %1915
  %1917 = vrot.lane.b32.xlu0 %v1874, 60
  %v1918 = vpop.permute.xlu0 %1917
  %1919 = vrot.lane.b32.xlu0 %v1875, 60
  %v1920 = vpop.permute.xlu0 %1919
  %1921 = vrot.lane.b32.xlu0 %v1876, 60
  %v1922 = vpop.permute.xlu0 %1921
  %1923 = vrot.lane.b32.xlu0 %v1877, 60
  %v1924 = vpop.permute.xlu0 %1923
  %1925 = vrot.lane.b32.xlu0 %v1878, 60
  %v1926 = vpop.permute.xlu0 %1925
  %1927 = vrot.lane.b32.xlu0 %v1879, 60
  %v1928 = vpop.permute.xlu0 %1927
  %1929 = vrot.lane.b32.xlu0 %v1880, 60
  %v1930 = vpop.permute.xlu0 %1929
  %1931 = vrot.lane.b32.xlu0 %v1881, 60
  %v1932 = vpop.permute.xlu0 %1931
  %v1933 = vsel %vm854, %v1900, %v1902
  %v1934 = vsel %vm854, %v1902, %v1904
  %v1935 = vsel %vm854, %v1904, %v1906
  %v1936 = vsel %vm854, %v1906, %v1908
  %v1937 = vsel %vm854, %v1908, %v1910
  %v1938 = vsel %vm854, %v1910, %v1912
  %v1939 = vsel %vm854, %v1912, %v1914
  %v1940 = vsel %vm854, %v1914, %v1916
  %v1941 = vsel %vm854, %v1916, %v1918
  %v1942 = vsel %vm854, %v1918, %v1920
  %v1943 = vsel %vm854, %v1920, %v1922
  %v1944 = vsel %vm854, %v1922, %v1924
  %v1945 = vsel %vm854, %v1924, %v1926
  %v1946 = vsel %vm854, %v1926, %v1928
  %v1947 = vsel %vm854, %v1928, %v1930
  %v1948 = vsel %vm854, %v1930, %v1932
  %1965 = vst [vmem:[#allocation2 + $0x880] sm:$0xff] %v1933
  %1966 = vst [vmem:[#allocation2 + $0x888] sm:$0xff] %v1934
  %1967 = vst [vmem:[#allocation2 + $0x890] sm:$0xff] %v1935
  %1968 = vst [vmem:[#allocation2 + $0x898] sm:$0xff] %v1936
  %1969 = vst [vmem:[#allocation2 + $0x8a0] sm:$0xff] %v1937
  %1970 = vst [vmem:[#allocation2 + $0x8a8] sm:$0xff] %v1938
  %1971 = vst [vmem:[#allocation2 + $0x8b0] sm:$0xff] %v1939
  %1972 = vst [vmem:[#allocation2 + $0x8b8] sm:$0xff] %v1940
  %1973 = vst [vmem:[#allocation2 + $0x8c0] sm:$0xff] %v1941
  %1974 = vst [vmem:[#allocation2 + $0x8c8] sm:$0xff] %v1942
  %1975 = vst [vmem:[#allocation2 + $0x8d0] sm:$0xff] %v1943
  %1976 = vst [vmem:[#allocation2 + $0x8d8] sm:$0xff] %v1944
  %1977 = vst [vmem:[#allocation2 + $0x8e0] sm:$0xff] %v1945
  %1978 = vst [vmem:[#allocation2 + $0x8e8] sm:$0xff] %v1946
  %1979 = vst [vmem:[#allocation2 + $0x8f0] sm:$0xff] %v1947
  %1980 = vst [vmem:[#allocation2 + $0x8f8] sm:$0xff] %v1948
  %v1981 = vld [vmem:[%s0 + $0x8] sm:$0xff]
  %v1982 = vld [vmem:[%s0 + $0x10] sm:$0xff]
  %v1983 = vld [vmem:[%s0 + $0x18] sm:$0xff]
  %v1984 = vld [vmem:[%s0 + $0x20] sm:$0xff]
  %v1985 = vld [vmem:[%s0 + $0x28] sm:$0xff]
  %v1986 = vld [vmem:[%s0 + $0x30] sm:$0xff]
  %v1987 = vld [vmem:[%s0 + $0x38] sm:$0xff]
  %v1988 = vld [vmem:[%s0 + $0x40] sm:$0xff]
  %v1989 = vld [vmem:[%s0 + $0x48] sm:$0xff]
  %v1990 = vld [vmem:[%s0 + $0x50] sm:$0xff]
  %v1991 = vld [vmem:[%s0 + $0x58] sm:$0xff]
  %v1992 = vld [vmem:[%s0 + $0x60] sm:$0xff]
  %v1993 = vld [vmem:[%s0 + $0x68] sm:$0xff]
  %v1994 = vld [vmem:[%s0 + $0x70] sm:$0xff]
  %v1995 = vld [vmem:[%s0 + $0x78] sm:$0xff]
  %v1996 = vld [vmem:[%s0 + $0x80] sm:$0xff]
  %v1997 = vld [vmem:[%s0 + $0x88] sm:$0xff]
  %2015 = vrot.lane.b32.xlu0 %v1981, 58
  %v2016 = vpop.permute.xlu0 %2015
  %2017 = vrot.lane.b32.xlu0 %v1982, 58
  %v2018 = vpop.permute.xlu0 %2017
  %2019 = vrot.lane.b32.xlu0 %v1983, 58
  %v2020 = vpop.permute.xlu0 %2019
  %2021 = vrot.lane.b32.xlu0 %v1984, 58
  %v2022 = vpop.permute.xlu0 %2021
  %2023 = vrot.lane.b32.xlu0 %v1985, 58
  %v2024 = vpop.permute.xlu0 %2023
  %2025 = vrot.lane.b32.xlu0 %v1986, 58
  %v2026 = vpop.permute.xlu0 %2025
  %2027 = vrot.lane.b32.xlu0 %v1987, 58
  %v2028 = vpop.permute.xlu0 %2027
  %2029 = vrot.lane.b32.xlu0 %v1988, 58
  %v2030 = vpop.permute.xlu0 %2029
  %2031 = vrot.lane.b32.xlu0 %v1989, 58
  %v2032 = vpop.permute.xlu0 %2031
  %2033 = vrot.lane.b32.xlu0 %v1990, 58
  %v2034 = vpop.permute.xlu0 %2033
  %2035 = vrot.lane.b32.xlu0 %v1991, 58
  %v2036 = vpop.permute.xlu0 %2035
  %2037 = vrot.lane.b32.xlu0 %v1992, 58
  %v2038 = vpop.permute.xlu0 %2037
  %2039 = vrot.lane.b32.xlu0 %v1993, 58
  %v2040 = vpop.permute.xlu0 %2039
  %2041 = vrot.lane.b32.xlu0 %v1994, 58
  %v2042 = vpop.permute.xlu0 %2041
  %2043 = vrot.lane.b32.xlu0 %v1995, 58
  %v2044 = vpop.permute.xlu0 %2043
  %2045 = vrot.lane.b32.xlu0 %v1996, 58
  %v2046 = vpop.permute.xlu0 %2045
  %2047 = vrot.lane.b32.xlu0 %v1997, 58
  %v2048 = vpop.permute.xlu0 %2047
  %v2049 = vsel %vm971, %v2016, %v2018
  %v2050 = vsel %vm971, %v2018, %v2020
  %v2051 = vsel %vm971, %v2020, %v2022
  %v2052 = vsel %vm971, %v2022, %v2024
  %v2053 = vsel %vm971, %v2024, %v2026
  %v2054 = vsel %vm971, %v2026, %v2028
  %v2055 = vsel %vm971, %v2028, %v2030
  %v2056 = vsel %vm971, %v2030, %v2032
  %v2057 = vsel %vm971, %v2032, %v2034
  %v2058 = vsel %vm971, %v2034, %v2036
  %v2059 = vsel %vm971, %v2036, %v2038
  %v2060 = vsel %vm971, %v2038, %v2040
  %v2061 = vsel %vm971, %v2040, %v2042
  %v2062 = vsel %vm971, %v2042, %v2044
  %v2063 = vsel %vm971, %v2044, %v2046
  %v2064 = vsel %vm971, %v2046, %v2048
  %2081 = vst [vmem:[#allocation2 + $0x900] sm:$0xff] %v2049
  %2082 = vst [vmem:[#allocation2 + $0x908] sm:$0xff] %v2050
  %2083 = vst [vmem:[#allocation2 + $0x910] sm:$0xff] %v2051
  %2084 = vst [vmem:[#allocation2 + $0x918] sm:$0xff] %v2052
  %2085 = vst [vmem:[#allocation2 + $0x920] sm:$0xff] %v2053
  %2086 = vst [vmem:[#allocation2 + $0x928] sm:$0xff] %v2054
  %2087 = vst [vmem:[#allocation2 + $0x930] sm:$0xff] %v2055
  %2088 = vst [vmem:[#allocation2 + $0x938] sm:$0xff] %v2056
  %2089 = vst [vmem:[#allocation2 + $0x940] sm:$0xff] %v2057
  %2090 = vst [vmem:[#allocation2 + $0x948] sm:$0xff] %v2058
  %2091 = vst [vmem:[#allocation2 + $0x950] sm:$0xff] %v2059
  %2092 = vst [vmem:[#allocation2 + $0x958] sm:$0xff] %v2060
  %2093 = vst [vmem:[#allocation2 + $0x960] sm:$0xff] %v2061
  %2094 = vst [vmem:[#allocation2 + $0x968] sm:$0xff] %v2062
  %2095 = vst [vmem:[#allocation2 + $0x970] sm:$0xff] %v2063
  %2096 = vst [vmem:[#allocation2 + $0x978] sm:$0xff] %v2064
  %v2097 = vld [vmem:[%s0 + $0x8] sm:$0xff]
  %v2098 = vld [vmem:[%s0 + $0x10] sm:$0xff]
  %v2099 = vld [vmem:[%s0 + $0x18] sm:$0xff]
  %v2100 = vld [vmem:[%s0 + $0x20] sm:$0xff]
  %v2101 = vld [vmem:[%s0 + $0x28] sm:$0xff]
  %v2102 = vld [vmem:[%s0 + $0x30] sm:$0xff]
  %v2103 = vld [vmem:[%s0 + $0x38] sm:$0xff]
  %v2104 = vld [vmem:[%s0 + $0x40] sm:$0xff]
  %v2105 = vld [vmem:[%s0 + $0x48] sm:$0xff]
  %v2106 = vld [vmem:[%s0 + $0x50] sm:$0xff]
  %v2107 = vld [vmem:[%s0 + $0x58] sm:$0xff]
  %v2108 = vld [vmem:[%s0 + $0x60] sm:$0xff]
  %v2109 = vld [vmem:[%s0 + $0x68] sm:$0xff]
  %v2110 = vld [vmem:[%s0 + $0x70] sm:$0xff]
  %v2111 = vld [vmem:[%s0 + $0x78] sm:$0xff]
  %v2112 = vld [vmem:[%s0 + $0x80] sm:$0xff]
  %v2113 = vld [vmem:[%s0 + $0x88] sm:$0xff]
  %2131 = vrot.lane.b32.xlu0 %v2097, 56
  %v2132 = vpop.permute.xlu0 %2131
  %2133 = vrot.lane.b32.xlu0 %v2098, 56
  %v2134 = vpop.permute.xlu0 %2133
  %2135 = vrot.lane.b32.xlu0 %v2099, 56
  %v2136 = vpop.permute.xlu0 %2135
  %2137 = vrot.lane.b32.xlu0 %v2100, 56
  %v2138 = vpop.permute.xlu0 %2137
  %2139 = vrot.lane.b32.xlu0 %v2101, 56
  %v2140 = vpop.permute.xlu0 %2139
  %2141 = vrot.lane.b32.xlu0 %v2102, 56
  %v2142 = vpop.permute.xlu0 %2141
  %2143 = vrot.lane.b32.xlu0 %v2103, 56
  %v2144 = vpop.permute.xlu0 %2143
  %2145 = vrot.lane.b32.xlu0 %v2104, 56
  %v2146 = vpop.permute.xlu0 %2145
  %2147 = vrot.lane.b32.xlu0 %v2105, 56
  %v2148 = vpop.permute.xlu0 %2147
  %2149 = vrot.lane.b32.xlu0 %v2106, 56
  %v2150 = vpop.permute.xlu0 %2149
  %2151 = vrot.lane.b32.xlu0 %v2107, 56
  %v2152 = vpop.permute.xlu0 %2151
  %2153 = vrot.lane.b32.xlu0 %v2108, 56
  %v2154 = vpop.permute.xlu0 %2153
  %2155 = vrot.lane.b32.xlu0 %v2109, 56
  %v2156 = vpop.permute.xlu0 %2155
  %2157 = vrot.lane.b32.xlu0 %v2110, 56
  %v2158 = vpop.permute.xlu0 %2157
  %2159 = vrot.lane.b32.xlu0 %v2111, 56
  %v2160 = vpop.permute.xlu0 %2159
  %2161 = vrot.lane.b32.xlu0 %v2112, 56
  %v2162 = vpop.permute.xlu0 %2161
  %2163 = vrot.lane.b32.xlu0 %v2113, 56
  %v2164 = vpop.permute.xlu0 %2163
  %v2165 = vsel %vm1088, %v2132, %v2134
  %v2166 = vsel %vm1088, %v2134, %v2136
  %v2167 = vsel %vm1088, %v2136, %v2138
  %v2168 = vsel %vm1088, %v2138, %v2140
  %v2169 = vsel %vm1088, %v2140, %v2142
  %v2170 = vsel %vm1088, %v2142, %v2144
  %v2171 = vsel %vm1088, %v2144, %v2146
  %v2172 = vsel %vm1088, %v2146, %v2148
  %v2173 = vsel %vm1088, %v2148, %v2150
  %v2174 = vsel %vm1088, %v2150, %v2152
  %v2175 = vsel %vm1088, %v2152, %v2154
  %v2176 = vsel %vm1088, %v2154, %v2156
  %v2177 = vsel %vm1088, %v2156, %v2158
  %v2178 = vsel %vm1088, %v2158, %v2160
  %v2179 = vsel %vm1088, %v2160, %v2162
  %v2180 = vsel %vm1088, %v2162, %v2164
  %2197 = vst [vmem:[#allocation2 + $0x980] sm:$0xff] %v2165
  %2198 = vst [vmem:[#allocation2 + $0x988] sm:$0xff] %v2166
  %2199 = vst [vmem:[#allocation2 + $0x990] sm:$0xff] %v2167
  %2200 = vst [vmem:[#allocation2 + $0x998] sm:$0xff] %v2168
  %2201 = vst [vmem:[#allocation2 + $0x9a0] sm:$0xff] %v2169
  %2202 = vst [vmem:[#allocation2 + $0x9a8] sm:$0xff] %v2170
  %2203 = vst [vmem:[#allocation2 + $0x9b0] sm:$0xff] %v2171
  %2204 = vst [vmem:[#allocation2 + $0x9b8] sm:$0xff] %v2172
  %2205 = vst [vmem:[#allocation2 + $0x9c0] sm:$0xff] %v2173
  %2206 = vst [vmem:[#allocation2 + $0x9c8] sm:$0xff] %v2174
  %2207 = vst [vmem:[#allocation2 + $0x9d0] sm:$0xff] %v2175
  %2208 = vst [vmem:[#allocation2 + $0x9d8] sm:$0xff] %v2176
  %2209 = vst [vmem:[#allocation2 + $0x9e0] sm:$0xff] %v2177
  %2210 = vst [vmem:[#allocation2 + $0x9e8] sm:$0xff] %v2178
  %2211 = vst [vmem:[#allocation2 + $0x9f0] sm:$0xff] %v2179
  %2212 = vst [vmem:[#allocation2 + $0x9f8] sm:$0xff] %v2180
  %v2213 = vld [vmem:[%s0 + $0x10] sm:$0xff]
  %v2214 = vld [vmem:[%s0 + $0x18] sm:$0xff]
  %v2215 = vld [vmem:[%s0 + $0x20] sm:$0xff]
  %v2216 = vld [vmem:[%s0 + $0x28] sm:$0xff]
  %v2217 = vld [vmem:[%s0 + $0x30] sm:$0xff]
  %v2218 = vld [vmem:[%s0 + $0x38] sm:$0xff]
  %v2219 = vld [vmem:[%s0 + $0x40] sm:$0xff]
  %v2220 = vld [vmem:[%s0 + $0x48] sm:$0xff]
  %v2221 = vld [vmem:[%s0 + $0x50] sm:$0xff]
  %v2222 = vld [vmem:[%s0 + $0x58] sm:$0xff]
  %v2223 = vld [vmem:[%s0 + $0x60] sm:$0xff]
  %v2224 = vld [vmem:[%s0 + $0x68] sm:$0xff]
  %v2225 = vld [vmem:[%s0 + $0x70] sm:$0xff]
  %v2226 = vld [vmem:[%s0 + $0x78] sm:$0xff]
  %v2227 = vld [vmem:[%s0 + $0x80] sm:$0xff]
  %v2228 = vld [vmem:[%s0 + $0x88] sm:$0xff]
  %2229 = vst [vmem:[#allocation2 + $0xa00] sm:$0xff] %v2213
  %2230 = vst [vmem:[#allocation2 + $0xa08] sm:$0xff] %v2214
  %2231 = vst [vmem:[#allocation2 + $0xa10] sm:$0xff] %v2215
  %2232 = vst [vmem:[#allocation2 + $0xa18] sm:$0xff] %v2216
  %2233 = vst [vmem:[#allocation2 + $0xa20] sm:$0xff] %v2217
  %2234 = vst [vmem:[#allocation2 + $0xa28] sm:$0xff] %v2218
  %2235 = vst [vmem:[#allocation2 + $0xa30] sm:$0xff] %v2219
  %2236 = vst [vmem:[#allocation2 + $0xa38] sm:$0xff] %v2220
  %2237 = vst [vmem:[#allocation2 + $0xa40] sm:$0xff] %v2221
  %2238 = vst [vmem:[#allocation2 + $0xa48] sm:$0xff] %v2222
  %2239 = vst [vmem:[#allocation2 + $0xa50] sm:$0xff] %v2223
  %2240 = vst [vmem:[#allocation2 + $0xa58] sm:$0xff] %v2224
  %2241 = vst [vmem:[#allocation2 + $0xa60] sm:$0xff] %v2225
  %2242 = vst [vmem:[#allocation2 + $0xa68] sm:$0xff] %v2226
  %2243 = vst [vmem:[#allocation2 + $0xa70] sm:$0xff] %v2227
  %2244 = vst [vmem:[#allocation2 + $0xa78] sm:$0xff] %v2228
  %v2245 = vld [vmem:[%s0 + $0x10] sm:$0xff]
  %v2246 = vld [vmem:[%s0 + $0x18] sm:$0xff]
  %v2247 = vld [vmem:[%s0 + $0x20] sm:$0xff]
  %v2248 = vld [vmem:[%s0 + $0x28] sm:$0xff]
  %v2249 = vld [vmem:[%s0 + $0x30] sm:$0xff]
  %v2250 = vld [vmem:[%s0 + $0x38] sm:$0xff]
  %v2251 = vld [vmem:[%s0 + $0x40] sm:$0xff]
  %v2252 = vld [vmem:[%s0 + $0x48] sm:$0xff]
  %v2253 = vld [vmem:[%s0 + $0x50] sm:$0xff]
  %v2254 = vld [vmem:[%s0 + $0x58] sm:$0xff]
  %v2255 = vld [vmem:[%s0 + $0x60] sm:$0xff]
  %v2256 = vld [vmem:[%s0 + $0x68] sm:$0xff]
  %v2257 = vld [vmem:[%s0 + $0x70] sm:$0xff]
  %v2258 = vld [vmem:[%s0 + $0x78] sm:$0xff]
  %v2259 = vld [vmem:[%s0 + $0x80] sm:$0xff]
  %v2260 = vld [vmem:[%s0 + $0x88] sm:$0xff]
  %v2261 = vld [vmem:[%s0 + $0x90] sm:$0xff]
  %2279 = vrot.lane.b32.xlu0 %v2245, 126
  %v2280 = vpop.permute.xlu0 %2279
  %2281 = vrot.lane.b32.xlu0 %v2246, 126
  %v2282 = vpop.permute.xlu0 %2281
  %2283 = vrot.lane.b32.xlu0 %v2247, 126
  %v2284 = vpop.permute.xlu0 %2283
  %2285 = vrot.lane.b32.xlu0 %v2248, 126
  %v2286 = vpop.permute.xlu0 %2285
  %2287 = vrot.lane.b32.xlu0 %v2249, 126
  %v2288 = vpop.permute.xlu0 %2287
  %2289 = vrot.lane.b32.xlu0 %v2250, 126
  %v2290 = vpop.permute.xlu0 %2289
  %2291 = vrot.lane.b32.xlu0 %v2251, 126
  %v2292 = vpop.permute.xlu0 %2291
  %2293 = vrot.lane.b32.xlu0 %v2252, 126
  %v2294 = vpop.permute.xlu0 %2293
  %2295 = vrot.lane.b32.xlu0 %v2253, 126
  %v2296 = vpop.permute.xlu0 %2295
  %2297 = vrot.lane.b32.xlu0 %v2254, 126
  %v2298 = vpop.permute.xlu0 %2297
  %2299 = vrot.lane.b32.xlu0 %v2255, 126
  %v2300 = vpop.permute.xlu0 %2299
  %2301 = vrot.lane.b32.xlu0 %v2256, 126
  %v2302 = vpop.permute.xlu0 %2301
  %2303 = vrot.lane.b32.xlu0 %v2257, 126
  %v2304 = vpop.permute.xlu0 %2303
  %2305 = vrot.lane.b32.xlu0 %v2258, 126
  %v2306 = vpop.permute.xlu0 %2305
  %2307 = vrot.lane.b32.xlu0 %v2259, 126
  %v2308 = vpop.permute.xlu0 %2307
  %2309 = vrot.lane.b32.xlu0 %v2260, 126
  %v2310 = vpop.permute.xlu0 %2309
  %2311 = vrot.lane.b32.xlu0 %v2261, 126
  %v2312 = vpop.permute.xlu0 %2311
  %v2313 = vsel %vm152, %v2280, %v2282
  %v2314 = vsel %vm152, %v2282, %v2284
  %v2315 = vsel %vm152, %v2284, %v2286
  %v2316 = vsel %vm152, %v2286, %v2288
  %v2317 = vsel %vm152, %v2288, %v2290
  %v2318 = vsel %vm152, %v2290, %v2292
  %v2319 = vsel %vm152, %v2292, %v2294
  %v2320 = vsel %vm152, %v2294, %v2296
  %v2321 = vsel %vm152, %v2296, %v2298
  %v2322 = vsel %vm152, %v2298, %v2300
  %v2323 = vsel %vm152, %v2300, %v2302
  %v2324 = vsel %vm152, %v2302, %v2304
  %v2325 = vsel %vm152, %v2304, %v2306
  %v2326 = vsel %vm152, %v2306, %v2308
  %v2327 = vsel %vm152, %v2308, %v2310
  %v2328 = vsel %vm152, %v2310, %v2312
  %2345 = vst [vmem:[#allocation2 + $0xa80] sm:$0xff] %v2313
  %2346 = vst [vmem:[#allocation2 + $0xa88] sm:$0xff] %v2314
  %2347 = vst [vmem:[#allocation2 + $0xa90] sm:$0xff] %v2315
  %2348 = vst [vmem:[#allocation2 + $0xa98] sm:$0xff] %v2316
  %2349 = vst [vmem:[#allocation2 + $0xaa0] sm:$0xff] %v2317
  %2350 = vst [vmem:[#allocation2 + $0xaa8] sm:$0xff] %v2318
  %2351 = vst [vmem:[#allocation2 + $0xab0] sm:$0xff] %v2319
  %2352 = vst [vmem:[#allocation2 + $0xab8] sm:$0xff] %v2320
  %2353 = vst [vmem:[#allocation2 + $0xac0] sm:$0xff] %v2321
  %2354 = vst [vmem:[#allocation2 + $0xac8] sm:$0xff] %v2322
  %2355 = vst [vmem:[#allocation2 + $0xad0] sm:$0xff] %v2323
  %2356 = vst [vmem:[#allocation2 + $0xad8] sm:$0xff] %v2324
  %2357 = vst [vmem:[#allocation2 + $0xae0] sm:$0xff] %v2325
  %2358 = vst [vmem:[#allocation2 + $0xae8] sm:$0xff] %v2326
  %2359 = vst [vmem:[#allocation2 + $0xaf0] sm:$0xff] %v2327
  %2360 = vst [vmem:[#allocation2 + $0xaf8] sm:$0xff] %v2328
  %v2361 = vld [vmem:[%s0 + $0x10] sm:$0xff]
  %v2362 = vld [vmem:[%s0 + $0x18] sm:$0xff]
  %v2363 = vld [vmem:[%s0 + $0x20] sm:$0xff]
  %v2364 = vld [vmem:[%s0 + $0x28] sm:$0xff]
  %v2365 = vld [vmem:[%s0 + $0x30] sm:$0xff]
  %v2366 = vld [vmem:[%s0 + $0x38] sm:$0xff]
  %v2367 = vld [vmem:[%s0 + $0x40] sm:$0xff]
  %v2368 = vld [vmem:[%s0 + $0x48] sm:$0xff]
  %v2369 = vld [vmem:[%s0 + $0x50] sm:$0xff]
  %v2370 = vld [vmem:[%s0 + $0x58] sm:$0xff]
  %v2371 = vld [vmem:[%s0 + $0x60] sm:$0xff]
  %v2372 = vld [vmem:[%s0 + $0x68] sm:$0xff]
  %v2373 = vld [vmem:[%s0 + $0x70] sm:$0xff]
  %v2374 = vld [vmem:[%s0 + $0x78] sm:$0xff]
  %v2375 = vld [vmem:[%s0 + $0x80] sm:$0xff]
  %v2376 = vld [vmem:[%s0 + $0x88] sm:$0xff]
  %v2377 = vld [vmem:[%s0 + $0x90] sm:$0xff]
  %2395 = vrot.lane.b32.xlu0 %v2361, 124
  %v2396 = vpop.permute.xlu0 %2395
  %2397 = vrot.lane.b32.xlu0 %v2362, 124
  %v2398 = vpop.permute.xlu0 %2397
  %2399 = vrot.lane.b32.xlu0 %v2363, 124
  %v2400 = vpop.permute.xlu0 %2399
  %2401 = vrot.lane.b32.xlu0 %v2364, 124
  %v2402 = vpop.permute.xlu0 %2401
  %2403 = vrot.lane.b32.xlu0 %v2365, 124
  %v2404 = vpop.permute.xlu0 %2403
  %2405 = vrot.lane.b32.xlu0 %v2366, 124
  %v2406 = vpop.permute.xlu0 %2405
  %2407 = vrot.lane.b32.xlu0 %v2367, 124
  %v2408 = vpop.permute.xlu0 %2407
  %2409 = vrot.lane.b32.xlu0 %v2368, 124
  %v2410 = vpop.permute.xlu0 %2409
  %2411 = vrot.lane.b32.xlu0 %v2369, 124
  %v2412 = vpop.permute.xlu0 %2411
  %2413 = vrot.lane.b32.xlu0 %v2370, 124
  %v2414 = vpop.permute.xlu0 %2413
  %2415 = vrot.lane.b32.xlu0 %v2371, 124
  %v2416 = vpop.permute.xlu0 %2415
  %2417 = vrot.lane.b32.xlu0 %v2372, 124
  %v2418 = vpop.permute.xlu0 %2417
  %2419 = vrot.lane.b32.xlu0 %v2373, 124
  %v2420 = vpop.permute.xlu0 %2419
  %2421 = vrot.lane.b32.xlu0 %v2374, 124
  %v2422 = vpop.permute.xlu0 %2421
  %2423 = vrot.lane.b32.xlu0 %v2375, 124
  %v2424 = vpop.permute.xlu0 %2423
  %2425 = vrot.lane.b32.xlu0 %v2376, 124
  %v2426 = vpop.permute.xlu0 %2425
  %2427 = vrot.lane.b32.xlu0 %v2377, 124
  %v2428 = vpop.permute.xlu0 %2427
  %v2429 = vsel %vm269, %v2396, %v2398
  %v2430 = vsel %vm269, %v2398, %v2400
  %v2431 = vsel %vm269, %v2400, %v2402
  %v2432 = vsel %vm269, %v2402, %v2404
  %v2433 = vsel %vm269, %v2404, %v2406
  %v2434 = vsel %vm269, %v2406, %v2408
  %v2435 = vsel %vm269, %v2408, %v2410
  %v2436 = vsel %vm269, %v2410, %v2412
  %v2437 = vsel %vm269, %v2412, %v2414
  %v2438 = vsel %vm269, %v2414, %v2416
  %v2439 = vsel %vm269, %v2416, %v2418
  %v2440 = vsel %vm269, %v2418, %v2420
  %v2441 = vsel %vm269, %v2420, %v2422
  %v2442 = vsel %vm269, %v2422, %v2424
  %v2443 = vsel %vm269, %v2424, %v2426
  %v2444 = vsel %vm269, %v2426, %v2428
  %2461 = vst [vmem:[#allocation2 + $0xb00] sm:$0xff] %v2429
  %2462 = vst [vmem:[#allocation2 + $0xb08] sm:$0xff] %v2430
  %2463 = vst [vmem:[#allocation2 + $0xb10] sm:$0xff] %v2431
  %2464 = vst [vmem:[#allocation2 + $0xb18] sm:$0xff] %v2432
  %2465 = vst [vmem:[#allocation2 + $0xb20] sm:$0xff] %v2433
  %2466 = vst [vmem:[#allocation2 + $0xb28] sm:$0xff] %v2434
  %2467 = vst [vmem:[#allocation2 + $0xb30] sm:$0xff] %v2435
  %2468 = vst [vmem:[#allocation2 + $0xb38] sm:$0xff] %v2436
  %2469 = vst [vmem:[#allocation2 + $0xb40] sm:$0xff] %v2437
  %2470 = vst [vmem:[#allocation2 + $0xb48] sm:$0xff] %v2438
  %2471 = vst [vmem:[#allocation2 + $0xb50] sm:$0xff] %v2439
  %2472 = vst [vmem:[#allocation2 + $0xb58] sm:$0xff] %v2440
  %2473 = vst [vmem:[#allocation2 + $0xb60] sm:$0xff] %v2441
  %2474 = vst [vmem:[#allocation2 + $0xb68] sm:$0xff] %v2442
  %2475 = vst [vmem:[#allocation2 + $0xb70] sm:$0xff] %v2443
  %2476 = vst [vmem:[#allocation2 + $0xb78] sm:$0xff] %v2444
  %v2477 = vld [vmem:[%s0 + $0x10] sm:$0xff]
  %v2478 = vld [vmem:[%s0 + $0x18] sm:$0xff]
  %v2479 = vld [vmem:[%s0 + $0x20] sm:$0xff]
  %v2480 = vld [vmem:[%s0 + $0x28] sm:$0xff]
  %v2481 = vld [vmem:[%s0 + $0x30] sm:$0xff]
  %v2482 = vld [vmem:[%s0 + $0x38] sm:$0xff]
  %v2483 = vld [vmem:[%s0 + $0x40] sm:$0xff]
  %v2484 = vld [vmem:[%s0 + $0x48] sm:$0xff]
  %v2485 = vld [vmem:[%s0 + $0x50] sm:$0xff]
  %v2486 = vld [vmem:[%s0 + $0x58] sm:$0xff]
  %v2487 = vld [vmem:[%s0 + $0x60] sm:$0xff]
  %v2488 = vld [vmem:[%s0 + $0x68] sm:$0xff]
  %v2489 = vld [vmem:[%s0 + $0x70] sm:$0xff]
  %v2490 = vld [vmem:[%s0 + $0x78] sm:$0xff]
  %v2491 = vld [vmem:[%s0 + $0x80] sm:$0xff]
  %v2492 = vld [vmem:[%s0 + $0x88] sm:$0xff]
  %v2493 = vld [vmem:[%s0 + $0x90] sm:$0xff]
  %2511 = vrot.lane.b32.xlu0 %v2477, 122
  %v2512 = vpop.permute.xlu0 %2511
  %2513 = vrot.lane.b32.xlu0 %v2478, 122
  %v2514 = vpop.permute.xlu0 %2513
  %2515 = vrot.lane.b32.xlu0 %v2479, 122
  %v2516 = vpop.permute.xlu0 %2515
  %2517 = vrot.lane.b32.xlu0 %v2480, 122
  %v2518 = vpop.permute.xlu0 %2517
  %2519 = vrot.lane.b32.xlu0 %v2481, 122
  %v2520 = vpop.permute.xlu0 %2519
  %2521 = vrot.lane.b32.xlu0 %v2482, 122
  %v2522 = vpop.permute.xlu0 %2521
  %2523 = vrot.lane.b32.xlu0 %v2483, 122
  %v2524 = vpop.permute.xlu0 %2523
  %2525 = vrot.lane.b32.xlu0 %v2484, 122
  %v2526 = vpop.permute.xlu0 %2525
  %2527 = vrot.lane.b32.xlu0 %v2485, 122
  %v2528 = vpop.permute.xlu0 %2527
  %2529 = vrot.lane.b32.xlu0 %v2486, 122
  %v2530 = vpop.permute.xlu0 %2529
  %2531 = vrot.lane.b32.xlu0 %v2487, 122
  %v2532 = vpop.permute.xlu0 %2531
  %2533 = vrot.lane.b32.xlu0 %v2488, 122
  %v2534 = vpop.permute.xlu0 %2533
  %2535 = vrot.lane.b32.xlu0 %v2489, 122
  %v2536 = vpop.permute.xlu0 %2535
  %2537 = vrot.lane.b32.xlu0 %v2490, 122
  %v2538 = vpop.permute.xlu0 %2537
  %2539 = vrot.lane.b32.xlu0 %v2491, 122
  %v2540 = vpop.permute.xlu0 %2539
  %2541 = vrot.lane.b32.xlu0 %v2492, 122
  %v2542 = vpop.permute.xlu0 %2541
  %2543 = vrot.lane.b32.xlu0 %v2493, 122
  %v2544 = vpop.permute.xlu0 %2543
  %v2545 = vsel %vm386, %v2512, %v2514
  %v2546 = vsel %vm386, %v2514, %v2516
  %v2547 = vsel %vm386, %v2516, %v2518
  %v2548 = vsel %vm386, %v2518, %v2520
  %v2549 = vsel %vm386, %v2520, %v2522
  %v2550 = vsel %vm386, %v2522, %v2524
  %v2551 = vsel %vm386, %v2524, %v2526
  %v2552 = vsel %vm386, %v2526, %v2528
  %v2553 = vsel %vm386, %v2528, %v2530
  %v2554 = vsel %vm386, %v2530, %v2532
  %v2555 = vsel %vm386, %v2532, %v2534
  %v2556 = vsel %vm386, %v2534, %v2536
  %v2557 = vsel %vm386, %v2536, %v2538
  %v2558 = vsel %vm386, %v2538, %v2540
  %v2559 = vsel %vm386, %v2540, %v2542
  %v2560 = vsel %vm386, %v2542, %v2544
  %2577 = vst [vmem:[#allocation2 + $0xb80] sm:$0xff] %v2545
  %2578 = vst [vmem:[#allocation2 + $0xb88] sm:$0xff] %v2546
  %2579 = vst [vmem:[#allocation2 + $0xb90] sm:$0xff] %v2547
  %2580 = vst [vmem:[#allocation2 + $0xb98] sm:$0xff] %v2548
  %2581 = vst [vmem:[#allocation2 + $0xba0] sm:$0xff] %v2549
  %2582 = vst [vmem:[#allocation2 + $0xba8] sm:$0xff] %v2550
  %2583 = vst [vmem:[#allocation2 + $0xbb0] sm:$0xff] %v2551
  %2584 = vst [vmem:[#allocation2 + $0xbb8] sm:$0xff] %v2552
  %2585 = vst [vmem:[#allocation2 + $0xbc0] sm:$0xff] %v2553
  %2586 = vst [vmem:[#allocation2 + $0xbc8] sm:$0xff] %v2554
  %2587 = vst [vmem:[#allocation2 + $0xbd0] sm:$0xff] %v2555
  %2588 = vst [vmem:[#allocation2 + $0xbd8] sm:$0xff] %v2556
  %2589 = vst [vmem:[#allocation2 + $0xbe0] sm:$0xff] %v2557
  %2590 = vst [vmem:[#allocation2 + $0xbe8] sm:$0xff] %v2558
  %2591 = vst [vmem:[#allocation2 + $0xbf0] sm:$0xff] %v2559
  %2592 = vst [vmem:[#allocation2 + $0xbf8] sm:$0xff] %v2560
  %v2593 = vld [vmem:[%s0 + $0x10] sm:$0xff]
  %v2594 = vld [vmem:[%s0 + $0x18] sm:$0xff]
  %v2595 = vld [vmem:[%s0 + $0x20] sm:$0xff]
  %v2596 = vld [vmem:[%s0 + $0x28] sm:$0xff]
  %v2597 = vld [vmem:[%s0 + $0x30] sm:$0xff]
  %v2598 = vld [vmem:[%s0 + $0x38] sm:$0xff]
  %v2599 = vld [vmem:[%s0 + $0x40] sm:$0xff]
  %v2600 = vld [vmem:[%s0 + $0x48] sm:$0xff]
  %v2601 = vld [vmem:[%s0 + $0x50] sm:$0xff]
  %v2602 = vld [vmem:[%s0 + $0x58] sm:$0xff]
  %v2603 = vld [vmem:[%s0 + $0x60] sm:$0xff]
  %v2604 = vld [vmem:[%s0 + $0x68] sm:$0xff]
  %v2605 = vld [vmem:[%s0 + $0x70] sm:$0xff]
  %v2606 = vld [vmem:[%s0 + $0x78] sm:$0xff]
  %v2607 = vld [vmem:[%s0 + $0x80] sm:$0xff]
  %v2608 = vld [vmem:[%s0 + $0x88] sm:$0xff]
  %v2609 = vld [vmem:[%s0 + $0x90] sm:$0xff]
  %2627 = vrot.lane.b32.xlu0 %v2593, 120
  %v2628 = vpop.permute.xlu0 %2627
  %2629 = vrot.lane.b32.xlu0 %v2594, 120
  %v2630 = vpop.permute.xlu0 %2629
  %2631 = vrot.lane.b32.xlu0 %v2595, 120
  %v2632 = vpop.permute.xlu0 %2631
  %2633 = vrot.lane.b32.xlu0 %v2596, 120
  %v2634 = vpop.permute.xlu0 %2633
  %2635 = vrot.lane.b32.xlu0 %v2597, 120
  %v2636 = vpop.permute.xlu0 %2635
  %2637 = vrot.lane.b32.xlu0 %v2598, 120
  %v2638 = vpop.permute.xlu0 %2637
  %2639 = vrot.lane.b32.xlu0 %v2599, 120
  %v2640 = vpop.permute.xlu0 %2639
  %2641 = vrot.lane.b32.xlu0 %v2600, 120
  %v2642 = vpop.permute.xlu0 %2641
  %2643 = vrot.lane.b32.xlu0 %v2601, 120
  %v2644 = vpop.permute.xlu0 %2643
  %2645 = vrot.lane.b32.xlu0 %v2602, 120
  %v2646 = vpop.permute.xlu0 %2645
  %2647 = vrot.lane.b32.xlu0 %v2603, 120
  %v2648 = vpop.permute.xlu0 %2647
  %2649 = vrot.lane.b32.xlu0 %v2604, 120
  %v2650 = vpop.permute.xlu0 %2649
  %2651 = vrot.lane.b32.xlu0 %v2605, 120
  %v2652 = vpop.permute.xlu0 %2651
  %2653 = vrot.lane.b32.xlu0 %v2606, 120
  %v2654 = vpop.permute.xlu0 %2653
  %2655 = vrot.lane.b32.xlu0 %v2607, 120
  %v2656 = vpop.permute.xlu0 %2655
  %2657 = vrot.lane.b32.xlu0 %v2608, 120
  %v2658 = vpop.permute.xlu0 %2657
  %2659 = vrot.lane.b32.xlu0 %v2609, 120
  %v2660 = vpop.permute.xlu0 %2659
  %v2661 = vsel %vm503, %v2628, %v2630
  %v2662 = vsel %vm503, %v2630, %v2632
  %v2663 = vsel %vm503, %v2632, %v2634
  %v2664 = vsel %vm503, %v2634, %v2636
  %v2665 = vsel %vm503, %v2636, %v2638
  %v2666 = vsel %vm503, %v2638, %v2640
  %v2667 = vsel %vm503, %v2640, %v2642
  %v2668 = vsel %vm503, %v2642, %v2644
  %v2669 = vsel %vm503, %v2644, %v2646
  %v2670 = vsel %vm503, %v2646, %v2648
  %v2671 = vsel %vm503, %v2648, %v2650
  %v2672 = vsel %vm503, %v2650, %v2652
  %v2673 = vsel %vm503, %v2652, %v2654
  %v2674 = vsel %vm503, %v2654, %v2656
  %v2675 = vsel %vm503, %v2656, %v2658
  %v2676 = vsel %vm503, %v2658, %v2660
  %2693 = vst [vmem:[#allocation2 + $0xc00] sm:$0xff] %v2661
  %2694 = vst [vmem:[#allocation2 + $0xc08] sm:$0xff] %v2662
  %2695 = vst [vmem:[#allocation2 + $0xc10] sm:$0xff] %v2663
  %2696 = vst [vmem:[#allocation2 + $0xc18] sm:$0xff] %v2664
  %2697 = vst [vmem:[#allocation2 + $0xc20] sm:$0xff] %v2665
  %2698 = vst [vmem:[#allocation2 + $0xc28] sm:$0xff] %v2666
  %2699 = vst [vmem:[#allocation2 + $0xc30] sm:$0xff] %v2667
  %2700 = vst [vmem:[#allocation2 + $0xc38] sm:$0xff] %v2668
  %2701 = vst [vmem:[#allocation2 + $0xc40] sm:$0xff] %v2669
  %2702 = vst [vmem:[#allocation2 + $0xc48] sm:$0xff] %v2670
  %2703 = vst [vmem:[#allocation2 + $0xc50] sm:$0xff] %v2671
  %2704 = vst [vmem:[#allocation2 + $0xc58] sm:$0xff] %v2672
  %2705 = vst [vmem:[#allocation2 + $0xc60] sm:$0xff] %v2673
  %2706 = vst [vmem:[#allocation2 + $0xc68] sm:$0xff] %v2674
  %2707 = vst [vmem:[#allocation2 + $0xc70] sm:$0xff] %v2675
  %2708 = vst [vmem:[#allocation2 + $0xc78] sm:$0xff] %v2676
  %v2709 = vld [vmem:[#allocation2] sm:$0xff]
  %v2710 = vld [vmem:[#allocation2 + $0x8] sm:$0xff]
  %v2711 = vld [vmem:[#allocation2 + $0x10] sm:$0xff]
  %v2712 = vld [vmem:[#allocation2 + $0x18] sm:$0xff]
  %v2713 = vld [vmem:[#allocation2 + $0x20] sm:$0xff]
  %v2714 = vld [vmem:[#allocation2 + $0x28] sm:$0xff]
  %v2715 = vld [vmem:[#allocation2 + $0x30] sm:$0xff]
  %v2716 = vld [vmem:[#allocation2 + $0x38] sm:$0xff]
  %v2717 = vld [vmem:[#allocation2 + $0x40] sm:$0xff]
  %v2718 = vld [vmem:[#allocation2 + $0x48] sm:$0xff]
  %v2719 = vld [vmem:[#allocation2 + $0x50] sm:$0xff]
  %v2720 = vld [vmem:[#allocation2 + $0x58] sm:$0xff]
  %v2721 = vld [vmem:[#allocation2 + $0x60] sm:$0xff]
  %v2722 = vld [vmem:[#allocation2 + $0x68] sm:$0xff]
  %v2723 = vld [vmem:[#allocation2 + $0x70] sm:$0xff]
  %v2724 = vld [vmem:[#allocation2 + $0x78] sm:$0xff]
  %v2725 = vld [vmem:[#allocation2 + $0x80] sm:$0xff]
  %v2726 = vld [vmem:[#allocation2 + $0x88] sm:$0xff]
  %v2727 = vld [vmem:[#allocation2 + $0x90] sm:$0xff]
  %v2728 = vld [vmem:[#allocation2 + $0x98] sm:$0xff]
  %v2729 = vld [vmem:[#allocation2 + $0xa0] sm:$0xff]
  %v2730 = vld [vmem:[#allocation2 + $0xa8] sm:$0xff]
  %v2731 = vld [vmem:[#allocation2 + $0xb0] sm:$0xff]
  %v2732 = vld [vmem:[#allocation2 + $0xb8] sm:$0xff]
  %v2733 = vld [vmem:[#allocation2 + $0xc0] sm:$0xff]
  %v2734 = vld [vmem:[#allocation2 + $0xc8] sm:$0xff]
  %v2735 = vld [vmem:[#allocation2 + $0xd0] sm:$0xff]
  %v2736 = vld [vmem:[#allocation2 + $0xd8] sm:$0xff]
  %v2737 = vld [vmem:[#allocation2 + $0xe0] sm:$0xff]
  %v2738 = vld [vmem:[#allocation2 + $0xe8] sm:$0xff]
  %v2739 = vld [vmem:[#allocation2 + $0xf0] sm:$0xff]
  %v2740 = vld [vmem:[#allocation2 + $0xf8] sm:$0xff]
  %v2741 = vld [vmem:[#allocation2 + $0x100] sm:$0xff]
  %v2742 = vld [vmem:[#allocation2 + $0x108] sm:$0xff]
  %v2743 = vld [vmem:[#allocation2 + $0x110] sm:$0xff]
  %v2744 = vld [vmem:[#allocation2 + $0x118] sm:$0xff]
  %v2745 = vld [vmem:[#allocation2 + $0x120] sm:$0xff]
  %v2746 = vld [vmem:[#allocation2 + $0x128] sm:$0xff]
  %v2747 = vld [vmem:[#allocation2 + $0x130] sm:$0xff]
  %v2748 = vld [vmem:[#allocation2 + $0x138] sm:$0xff]
  %v2749 = vld [vmem:[#allocation2 + $0x140] sm:$0xff]
  %v2750 = vld [vmem:[#allocation2 + $0x148] sm:$0xff]
  %v2751 = vld [vmem:[#allocation2 + $0x150] sm:$0xff]
  %v2752 = vld [vmem:[#allocation2 + $0x158] sm:$0xff]
  %v2753 = vld [vmem:[#allocation2 + $0x160] sm:$0xff]
  %v2754 = vld [vmem:[#allocation2 + $0x168] sm:$0xff]
  %v2755 = vld [vmem:[#allocation2 + $0x170] sm:$0xff]
  %v2756 = vld [vmem:[#allocation2 + $0x178] sm:$0xff]
  %v2757 = vld [vmem:[#allocation2 + $0x180] sm:$0xff]
  %v2758 = vld [vmem:[#allocation2 + $0x188] sm:$0xff]
  %v2759 = vld [vmem:[#allocation2 + $0x190] sm:$0xff]
  %v2760 = vld [vmem:[#allocation2 + $0x198] sm:$0xff]
  %v2761 = vld [vmem:[#allocation2 + $0x1a0] sm:$0xff]
  %v2762 = vld [vmem:[#allocation2 + $0x1a8] sm:$0xff]
  %v2763 = vld [vmem:[#allocation2 + $0x1b0] sm:$0xff]
  %v2764 = vld [vmem:[#allocation2 + $0x1b8] sm:$0xff]
  %v2765 = vld [vmem:[#allocation2 + $0x1c0] sm:$0xff]
  %v2766 = vld [vmem:[#allocation2 + $0x1c8] sm:$0xff]
  %v2767 = vld [vmem:[#allocation2 + $0x1d0] sm:$0xff]
  %v2768 = vld [vmem:[#allocation2 + $0x1d8] sm:$0xff]
  %v2769 = vld [vmem:[#allocation2 + $0x1e0] sm:$0xff]
  %v2770 = vld [vmem:[#allocation2 + $0x1e8] sm:$0xff]
  %v2771 = vld [vmem:[#allocation2 + $0x1f0] sm:$0xff]
  %v2772 = vld [vmem:[#allocation2 + $0x1f8] sm:$0xff]
  %v2773 = vld [vmem:[#allocation2 + $0x200] sm:$0xff]
  %v2774 = vld [vmem:[#allocation2 + $0x208] sm:$0xff]
  %v2775 = vld [vmem:[#allocation2 + $0x210] sm:$0xff]
  %v2776 = vld [vmem:[#allocation2 + $0x218] sm:$0xff]
  %v2777 = vld [vmem:[#allocation2 + $0x220] sm:$0xff]
  %v2778 = vld [vmem:[#allocation2 + $0x228] sm:$0xff]
  %v2779 = vld [vmem:[#allocation2 + $0x230] sm:$0xff]
  %v2780 = vld [vmem:[#allocation2 + $0x238] sm:$0xff]
  %v2781 = vld [vmem:[#allocation2 + $0x240] sm:$0xff]
  %v2782 = vld [vmem:[#allocation2 + $0x248] sm:$0xff]
  %v2783 = vld [vmem:[#allocation2 + $0x250] sm:$0xff]
  %v2784 = vld [vmem:[#allocation2 + $0x258] sm:$0xff]
  %v2785 = vld [vmem:[#allocation2 + $0x260] sm:$0xff]
  %v2786 = vld [vmem:[#allocation2 + $0x268] sm:$0xff]
  %v2787 = vld [vmem:[#allocation2 + $0x270] sm:$0xff]
  %v2788 = vld [vmem:[#allocation2 + $0x278] sm:$0xff]
  %v2789 = vld [vmem:[#allocation2 + $0x280] sm:$0xff]
  %v2790 = vld [vmem:[#allocation2 + $0x288] sm:$0xff]
  %v2791 = vld [vmem:[#allocation2 + $0x290] sm:$0xff]
  %v2792 = vld [vmem:[#allocation2 + $0x298] sm:$0xff]
  %v2793 = vld [vmem:[#allocation2 + $0x2a0] sm:$0xff]
  %v2794 = vld [vmem:[#allocation2 + $0x2a8] sm:$0xff]
  %v2795 = vld [vmem:[#allocation2 + $0x2b0] sm:$0xff]
  %v2796 = vld [vmem:[#allocation2 + $0x2b8] sm:$0xff]
  %v2797 = vld [vmem:[#allocation2 + $0x2c0] sm:$0xff]
  %v2798 = vld [vmem:[#allocation2 + $0x2c8] sm:$0xff]
  %v2799 = vld [vmem:[#allocation2 + $0x2d0] sm:$0xff]
  %v2800 = vld [vmem:[#allocation2 + $0x2d8] sm:$0xff]
  %v2801 = vld [vmem:[#allocation2 + $0x2e0] sm:$0xff]
  %v2802 = vld [vmem:[#allocation2 + $0x2e8] sm:$0xff]
  %v2803 = vld [vmem:[#allocation2 + $0x2f0] sm:$0xff]
  %v2804 = vld [vmem:[#allocation2 + $0x2f8] sm:$0xff]
  %v2805 = vld [vmem:[#allocation2 + $0x300] sm:$0xff]
  %v2806 = vld [vmem:[#allocation2 + $0x308] sm:$0xff]
  %v2807 = vld [vmem:[#allocation2 + $0x310] sm:$0xff]
  %v2808 = vld [vmem:[#allocation2 + $0x318] sm:$0xff]
  %v2809 = vld [vmem:[#allocation2 + $0x320] sm:$0xff]
  %v2810 = vld [vmem:[#allocation2 + $0x328] sm:$0xff]
  %v2811 = vld [vmem:[#allocation2 + $0x330] sm:$0xff]
  %v2812 = vld [vmem:[#allocation2 + $0x338] sm:$0xff]
  %v2813 = vld [vmem:[#allocation2 + $0x340] sm:$0xff]
  %v2814 = vld [vmem:[#allocation2 + $0x348] sm:$0xff]
  %v2815 = vld [vmem:[#allocation2 + $0x350] sm:$0xff]
  %v2816 = vld [vmem:[#allocation2 + $0x358] sm:$0xff]
  %v2817 = vld [vmem:[#allocation2 + $0x360] sm:$0xff]
  %v2818 = vld [vmem:[#allocation2 + $0x368] sm:$0xff]
  %v2819 = vld [vmem:[#allocation2 + $0x370] sm:$0xff]
  %v2820 = vld [vmem:[#allocation2 + $0x378] sm:$0xff]
  %v2821 = vld [vmem:[#allocation2 + $0x380] sm:$0xff]
  %v2822 = vld [vmem:[#allocation2 + $0x388] sm:$0xff]
  %v2823 = vld [vmem:[#allocation2 + $0x390] sm:$0xff]
  %v2824 = vld [vmem:[#allocation2 + $0x398] sm:$0xff]
  %v2825 = vld [vmem:[#allocation2 + $0x3a0] sm:$0xff]
  %v2826 = vld [vmem:[#allocation2 + $0x3a8] sm:$0xff]
  %v2827 = vld [vmem:[#allocation2 + $0x3b0] sm:$0xff]
  %v2828 = vld [vmem:[#allocation2 + $0x3b8] sm:$0xff]
  %v2829 = vld [vmem:[#allocation2 + $0x3c0] sm:$0xff]
  %v2830 = vld [vmem:[#allocation2 + $0x3c8] sm:$0xff]
  %v2831 = vld [vmem:[#allocation2 + $0x3d0] sm:$0xff]
  %v2832 = vld [vmem:[#allocation2 + $0x3d8] sm:$0xff]
  %v2833 = vld [vmem:[#allocation2 + $0x3e0] sm:$0xff]
  %v2834 = vld [vmem:[#allocation2 + $0x3e8] sm:$0xff]
  %v2835 = vld [vmem:[#allocation2 + $0x3f0] sm:$0xff]
  %v2836 = vld [vmem:[#allocation2 + $0x3f8] sm:$0xff]
  %v2837 = vld [vmem:[#allocation2 + $0x400] sm:$0xff]
  %v2838 = vld [vmem:[#allocation2 + $0x408] sm:$0xff]
  %v2839 = vld [vmem:[#allocation2 + $0x410] sm:$0xff]
  %v2840 = vld [vmem:[#allocation2 + $0x418] sm:$0xff]
  %v2841 = vld [vmem:[#allocation2 + $0x420] sm:$0xff]
  %v2842 = vld [vmem:[#allocation2 + $0x428] sm:$0xff]
  %v2843 = vld [vmem:[#allocation2 + $0x430] sm:$0xff]
  %v2844 = vld [vmem:[#allocation2 + $0x438] sm:$0xff]
  %v2845 = vld [vmem:[#allocation2 + $0x440] sm:$0xff]
  %v2846 = vld [vmem:[#allocation2 + $0x448] sm:$0xff]
  %v2847 = vld [vmem:[#allocation2 + $0x450] sm:$0xff]
  %v2848 = vld [vmem:[#allocation2 + $0x458] sm:$0xff]
  %v2849 = vld [vmem:[#allocation2 + $0x460] sm:$0xff]
  %v2850 = vld [vmem:[#allocation2 + $0x468] sm:$0xff]
  %v2851 = vld [vmem:[#allocation2 + $0x470] sm:$0xff]
  %v2852 = vld [vmem:[#allocation2 + $0x478] sm:$0xff]
  %v2853 = vld [vmem:[#allocation2 + $0x480] sm:$0xff]
  %v2854 = vld [vmem:[#allocation2 + $0x488] sm:$0xff]
  %v2855 = vld [vmem:[#allocation2 + $0x490] sm:$0xff]
  %v2856 = vld [vmem:[#allocation2 + $0x498] sm:$0xff]
  %v2857 = vld [vmem:[#allocation2 + $0x4a0] sm:$0xff]
  %v2858 = vld [vmem:[#allocation2 + $0x4a8] sm:$0xff]
  %v2859 = vld [vmem:[#allocation2 + $0x4b0] sm:$0xff]
  %v2860 = vld [vmem:[#allocation2 + $0x4b8] sm:$0xff]
  %v2861 = vld [vmem:[#allocation2 + $0x4c0] sm:$0xff]
  %v2862 = vld [vmem:[#allocation2 + $0x4c8] sm:$0xff]
  %v2863 = vld [vmem:[#allocation2 + $0x4d0] sm:$0xff]
  %v2864 = vld [vmem:[#allocation2 + $0x4d8] sm:$0xff]
  %v2865 = vld [vmem:[#allocation2 + $0x4e0] sm:$0xff]
  %v2866 = vld [vmem:[#allocation2 + $0x4e8] sm:$0xff]
  %v2867 = vld [vmem:[#allocation2 + $0x4f0] sm:$0xff]
  %v2868 = vld [vmem:[#allocation2 + $0x4f8] sm:$0xff]
  %v2869 = vld [vmem:[#allocation2 + $0x500] sm:$0xff]
  %v2870 = vld [vmem:[#allocation2 + $0x508] sm:$0xff]
  %v2871 = vld [vmem:[#allocation2 + $0x510] sm:$0xff]
  %v2872 = vld [vmem:[#allocation2 + $0x518] sm:$0xff]
  %v2873 = vld [vmem:[#allocation2 + $0x520] sm:$0xff]
  %v2874 = vld [vmem:[#allocation2 + $0x528] sm:$0xff]
  %v2875 = vld [vmem:[#allocation2 + $0x530] sm:$0xff]
  %v2876 = vld [vmem:[#allocation2 + $0x538] sm:$0xff]
  %v2877 = vld [vmem:[#allocation2 + $0x540] sm:$0xff]
  %v2878 = vld [vmem:[#allocation2 + $0x548] sm:$0xff]
  %v2879 = vld [vmem:[#allocation2 + $0x550] sm:$0xff]
  %v2880 = vld [vmem:[#allocation2 + $0x558] sm:$0xff]
  %v2881 = vld [vmem:[#allocation2 + $0x560] sm:$0xff]
  %v2882 = vld [vmem:[#allocation2 + $0x568] sm:$0xff]
  %v2883 = vld [vmem:[#allocation2 + $0x570] sm:$0xff]
  %v2884 = vld [vmem:[#allocation2 + $0x578] sm:$0xff]
  %v2885 = vld [vmem:[#allocation2 + $0x580] sm:$0xff]
  %v2886 = vld [vmem:[#allocation2 + $0x588] sm:$0xff]
  %v2887 = vld [vmem:[#allocation2 + $0x590] sm:$0xff]
  %v2888 = vld [vmem:[#allocation2 + $0x598] sm:$0xff]
  %v2889 = vld [vmem:[#allocation2 + $0x5a0] sm:$0xff]
  %v2890 = vld [vmem:[#allocation2 + $0x5a8] sm:$0xff]
  %v2891 = vld [vmem:[#allocation2 + $0x5b0] sm:$0xff]
  %v2892 = vld [vmem:[#allocation2 + $0x5b8] sm:$0xff]
  %v2893 = vld [vmem:[#allocation2 + $0x5c0] sm:$0xff]
  %v2894 = vld [vmem:[#allocation2 + $0x5c8] sm:$0xff]
  %v2895 = vld [vmem:[#allocation2 + $0x5d0] sm:$0xff]
  %v2896 = vld [vmem:[#allocation2 + $0x5d8] sm:$0xff]
  %v2897 = vld [vmem:[#allocation2 + $0x5e0] sm:$0xff]
  %v2898 = vld [vmem:[#allocation2 + $0x5e8] sm:$0xff]
  %v2899 = vld [vmem:[#allocation2 + $0x5f0] sm:$0xff]
  %v2900 = vld [vmem:[#allocation2 + $0x5f8] sm:$0xff]
  %v2901 = vld [vmem:[#allocation2 + $0x600] sm:$0xff]
  %v2902 = vld [vmem:[#allocation2 + $0x608] sm:$0xff]
  %v2903 = vld [vmem:[#allocation2 + $0x610] sm:$0xff]
  %v2904 = vld [vmem:[#allocation2 + $0x618] sm:$0xff]
  %v2905 = vld [vmem:[#allocation2 + $0x620] sm:$0xff]
  %v2906 = vld [vmem:[#allocation2 + $0x628] sm:$0xff]
  %v2907 = vld [vmem:[#allocation2 + $0x630] sm:$0xff]
  %v2908 = vld [vmem:[#allocation2 + $0x638] sm:$0xff]
  %v2909 = vld [vmem:[#allocation2 + $0x640] sm:$0xff]
  %v2910 = vld [vmem:[#allocation2 + $0x648] sm:$0xff]
  %v2911 = vld [vmem:[#allocation2 + $0x650] sm:$0xff]
  %v2912 = vld [vmem:[#allocation2 + $0x658] sm:$0xff]
  %v2913 = vld [vmem:[#allocation2 + $0x660] sm:$0xff]
  %v2914 = vld [vmem:[#allocation2 + $0x668] sm:$0xff]
  %v2915 = vld [vmem:[#allocation2 + $0x670] sm:$0xff]
  %v2916 = vld [vmem:[#allocation2 + $0x678] sm:$0xff]
  %v2917 = vld [vmem:[#allocation2 + $0x680] sm:$0xff]
  %v2918 = vld [vmem:[#allocation2 + $0x688] sm:$0xff]
  %v2919 = vld [vmem:[#allocation2 + $0x690] sm:$0xff]
  %v2920 = vld [vmem:[#allocation2 + $0x698] sm:$0xff]
  %v2921 = vld [vmem:[#allocation2 + $0x6a0] sm:$0xff]
  %v2922 = vld [vmem:[#allocation2 + $0x6a8] sm:$0xff]
  %v2923 = vld [vmem:[#allocation2 + $0x6b0] sm:$0xff]
  %v2924 = vld [vmem:[#allocation2 + $0x6b8] sm:$0xff]
  %v2925 = vld [vmem:[#allocation2 + $0x6c0] sm:$0xff]
  %v2926 = vld [vmem:[#allocation2 + $0x6c8] sm:$0xff]
  %v2927 = vld [vmem:[#allocation2 + $0x6d0] sm:$0xff]
  %v2928 = vld [vmem:[#allocation2 + $0x6d8] sm:$0xff]
  %v2929 = vld [vmem:[#allocation2 + $0x6e0] sm:$0xff]
  %v2930 = vld [vmem:[#allocation2 + $0x6e8] sm:$0xff]
  %v2931 = vld [vmem:[#allocation2 + $0x6f0] sm:$0xff]
  %v2932 = vld [vmem:[#allocation2 + $0x6f8] sm:$0xff]
  %v2933 = vld [vmem:[#allocation2 + $0x700] sm:$0xff]
  %v2934 = vld [vmem:[#allocation2 + $0x708] sm:$0xff]
  %v2935 = vld [vmem:[#allocation2 + $0x710] sm:$0xff]
  %v2936 = vld [vmem:[#allocation2 + $0x718] sm:$0xff]
  %v2937 = vld [vmem:[#allocation2 + $0x720] sm:$0xff]
  %v2938 = vld [vmem:[#allocation2 + $0x728] sm:$0xff]
  %v2939 = vld [vmem:[#allocation2 + $0x730] sm:$0xff]
  %v2940 = vld [vmem:[#allocation2 + $0x738] sm:$0xff]
  %v2941 = vld [vmem:[#allocation2 + $0x740] sm:$0xff]
  %v2942 = vld [vmem:[#allocation2 + $0x748] sm:$0xff]
  %v2943 = vld [vmem:[#allocation2 + $0x750] sm:$0xff]
  %v2944 = vld [vmem:[#allocation2 + $0x758] sm:$0xff]
  %v2945 = vld [vmem:[#allocation2 + $0x760] sm:$0xff]
  %v2946 = vld [vmem:[#allocation2 + $0x768] sm:$0xff]
  %v2947 = vld [vmem:[#allocation2 + $0x770] sm:$0xff]
  %v2948 = vld [vmem:[#allocation2 + $0x778] sm:$0xff]
  %v2949 = vld [vmem:[#allocation2 + $0x780] sm:$0xff]
  %v2950 = vld [vmem:[#allocation2 + $0x788] sm:$0xff]
  %v2951 = vld [vmem:[#allocation2 + $0x790] sm:$0xff]
  %v2952 = vld [vmem:[#allocation2 + $0x798] sm:$0xff]
  %v2953 = vld [vmem:[#allocation2 + $0x7a0] sm:$0xff]
  %v2954 = vld [vmem:[#allocation2 + $0x7a8] sm:$0xff]
  %v2955 = vld [vmem:[#allocation2 + $0x7b0] sm:$0xff]
  %v2956 = vld [vmem:[#allocation2 + $0x7b8] sm:$0xff]
  %v2957 = vld [vmem:[#allocation2 + $0x7c0] sm:$0xff]
  %v2958 = vld [vmem:[#allocation2 + $0x7c8] sm:$0xff]
  %v2959 = vld [vmem:[#allocation2 + $0x7d0] sm:$0xff]
  %v2960 = vld [vmem:[#allocation2 + $0x7d8] sm:$0xff]
  %v2961 = vld [vmem:[#allocation2 + $0x7e0] sm:$0xff]
  %v2962 = vld [vmem:[#allocation2 + $0x7e8] sm:$0xff]
  %v2963 = vld [vmem:[#allocation2 + $0x7f0] sm:$0xff]
  %v2964 = vld [vmem:[#allocation2 + $0x7f8] sm:$0xff]
  %v2965 = vld [vmem:[#allocation2 + $0x800] sm:$0xff]
  %v2966 = vld [vmem:[#allocation2 + $0x808] sm:$0xff]
  %v2967 = vld [vmem:[#allocation2 + $0x810] sm:$0xff]
  %v2968 = vld [vmem:[#allocation2 + $0x818] sm:$0xff]
  %v2969 = vld [vmem:[#allocation2 + $0x820] sm:$0xff]
  %v2970 = vld [vmem:[#allocation2 + $0x828] sm:$0xff]
  %v2971 = vld [vmem:[#allocation2 + $0x830] sm:$0xff]
  %v2972 = vld [vmem:[#allocation2 + $0x838] sm:$0xff]
  %v2973 = vld [vmem:[#allocation2 + $0x840] sm:$0xff]
  %v2974 = vld [vmem:[#allocation2 + $0x848] sm:$0xff]
  %v2975 = vld [vmem:[#allocation2 + $0x850] sm:$0xff]
  %v2976 = vld [vmem:[#allocation2 + $0x858] sm:$0xff]
  %v2977 = vld [vmem:[#allocation2 + $0x860] sm:$0xff]
  %v2978 = vld [vmem:[#allocation2 + $0x868] sm:$0xff]
  %v2979 = vld [vmem:[#allocation2 + $0x870] sm:$0xff]
  %v2980 = vld [vmem:[#allocation2 + $0x878] sm:$0xff]
  %v2981 = vld [vmem:[#allocation2 + $0x880] sm:$0xff]
  %v2982 = vld [vmem:[#allocation2 + $0x888] sm:$0xff]
  %v2983 = vld [vmem:[#allocation2 + $0x890] sm:$0xff]
  %v2984 = vld [vmem:[#allocation2 + $0x898] sm:$0xff]
  %v2985 = vld [vmem:[#allocation2 + $0x8a0] sm:$0xff]
  %v2986 = vld [vmem:[#allocation2 + $0x8a8] sm:$0xff]
  %v2987 = vld [vmem:[#allocation2 + $0x8b0] sm:$0xff]
  %v2988 = vld [vmem:[#allocation2 + $0x8b8] sm:$0xff]
  %v2989 = vld [vmem:[#allocation2 + $0x8c0] sm:$0xff]
  %v2990 = vld [vmem:[#allocation2 + $0x8c8] sm:$0xff]
  %v2991 = vld [vmem:[#allocation2 + $0x8d0] sm:$0xff]
  %v2992 = vld [vmem:[#allocation2 + $0x8d8] sm:$0xff]
  %v2993 = vld [vmem:[#allocation2 + $0x8e0] sm:$0xff]
  %v2994 = vld [vmem:[#allocation2 + $0x8e8] sm:$0xff]
  %v2995 = vld [vmem:[#allocation2 + $0x8f0] sm:$0xff]
  %v2996 = vld [vmem:[#allocation2 + $0x8f8] sm:$0xff]
  %v2997 = vld [vmem:[#allocation2 + $0x900] sm:$0xff]
  %v2998 = vld [vmem:[#allocation2 + $0x908] sm:$0xff]
  %v2999 = vld [vmem:[#allocation2 + $0x910] sm:$0xff]
  %v3000 = vld [vmem:[#allocation2 + $0x918] sm:$0xff]
  %v3001 = vld [vmem:[#allocation2 + $0x920] sm:$0xff]
  %v3002 = vld [vmem:[#allocation2 + $0x928] sm:$0xff]
  %v3003 = vld [vmem:[#allocation2 + $0x930] sm:$0xff]
  %v3004 = vld [vmem:[#allocation2 + $0x938] sm:$0xff]
  %v3005 = vld [vmem:[#allocation2 + $0x940] sm:$0xff]
  %v3006 = vld [vmem:[#allocation2 + $0x948] sm:$0xff]
  %v3007 = vld [vmem:[#allocation2 + $0x950] sm:$0xff]
  %v3008 = vld [vmem:[#allocation2 + $0x958] sm:$0xff]
  %v3009 = vld [vmem:[#allocation2 + $0x960] sm:$0xff]
  %v3010 = vld [vmem:[#allocation2 + $0x968] sm:$0xff]
  %v3011 = vld [vmem:[#allocation2 + $0x970] sm:$0xff]
  %v3012 = vld [vmem:[#allocation2 + $0x978] sm:$0xff]
  %v3013 = vld [vmem:[#allocation2 + $0x980] sm:$0xff]
  %v3014 = vld [vmem:[#allocation2 + $0x988] sm:$0xff]
  %v3015 = vld [vmem:[#allocation2 + $0x990] sm:$0xff]
  %v3016 = vld [vmem:[#allocation2 + $0x998] sm:$0xff]
  %v3017 = vld [vmem:[#allocation2 + $0x9a0] sm:$0xff]
  %v3018 = vld [vmem:[#allocation2 + $0x9a8] sm:$0xff]
  %v3019 = vld [vmem:[#allocation2 + $0x9b0] sm:$0xff]
  %v3020 = vld [vmem:[#allocation2 + $0x9b8] sm:$0xff]
  %v3021 = vld [vmem:[#allocation2 + $0x9c0] sm:$0xff]
  %v3022 = vld [vmem:[#allocation2 + $0x9c8] sm:$0xff]
  %v3023 = vld [vmem:[#allocation2 + $0x9d0] sm:$0xff]
  %v3024 = vld [vmem:[#allocation2 + $0x9d8] sm:$0xff]
  %v3025 = vld [vmem:[#allocation2 + $0x9e0] sm:$0xff]
  %v3026 = vld [vmem:[#allocation2 + $0x9e8] sm:$0xff]
  %v3027 = vld [vmem:[#allocation2 + $0x9f0] sm:$0xff]
  %v3028 = vld [vmem:[#allocation2 + $0x9f8] sm:$0xff]
  %v3029 = vld [vmem:[#allocation2 + $0xa00] sm:$0xff]
  %v3030 = vld [vmem:[#allocation2 + $0xa08] sm:$0xff]
  %v3031 = vld [vmem:[#allocation2 + $0xa10] sm:$0xff]
  %v3032 = vld [vmem:[#allocation2 + $0xa18] sm:$0xff]
  %v3033 = vld [vmem:[#allocation2 + $0xa20] sm:$0xff]
  %v3034 = vld [vmem:[#allocation2 + $0xa28] sm:$0xff]
  %v3035 = vld [vmem:[#allocation2 + $0xa30] sm:$0xff]
  %v3036 = vld [vmem:[#allocation2 + $0xa38] sm:$0xff]
  %v3037 = vld [vmem:[#allocation2 + $0xa40] sm:$0xff]
  %v3038 = vld [vmem:[#allocation2 + $0xa48] sm:$0xff]
  %v3039 = vld [vmem:[#allocation2 + $0xa50] sm:$0xff]
  %v3040 = vld [vmem:[#allocation2 + $0xa58] sm:$0xff]
  %v3041 = vld [vmem:[#allocation2 + $0xa60] sm:$0xff]
  %v3042 = vld [vmem:[#allocation2 + $0xa68] sm:$0xff]
  %v3043 = vld [vmem:[#allocation2 + $0xa70] sm:$0xff]
  %v3044 = vld [vmem:[#allocation2 + $0xa78] sm:$0xff]
  %v3045 = vld [vmem:[#allocation2 + $0xa80] sm:$0xff]
  %v3046 = vld [vmem:[#allocation2 + $0xa88] sm:$0xff]
  %v3047 = vld [vmem:[#allocation2 + $0xa90] sm:$0xff]
  %v3048 = vld [vmem:[#allocation2 + $0xa98] sm:$0xff]
  %v3049 = vld [vmem:[#allocation2 + $0xaa0] sm:$0xff]
  %v3050 = vld [vmem:[#allocation2 + $0xaa8] sm:$0xff]
  %v3051 = vld [vmem:[#allocation2 + $0xab0] sm:$0xff]
  %v3052 = vld [vmem:[#allocation2 + $0xab8] sm:$0xff]
  %v3053 = vld [vmem:[#allocation2 + $0xac0] sm:$0xff]
  %v3054 = vld [vmem:[#allocation2 + $0xac8] sm:$0xff]
  %v3055 = vld [vmem:[#allocation2 + $0xad0] sm:$0xff]
  %v3056 = vld [vmem:[#allocation2 + $0xad8] sm:$0xff]
  %v3057 = vld [vmem:[#allocation2 + $0xae0] sm:$0xff]
  %v3058 = vld [vmem:[#allocation2 + $0xae8] sm:$0xff]
  %v3059 = vld [vmem:[#allocation2 + $0xaf0] sm:$0xff]
  %v3060 = vld [vmem:[#allocation2 + $0xaf8] sm:$0xff]
  %v3061 = vld [vmem:[#allocation2 + $0xb00] sm:$0xff]
  %v3062 = vld [vmem:[#allocation2 + $0xb08] sm:$0xff]
  %v3063 = vld [vmem:[#allocation2 + $0xb10] sm:$0xff]
  %v3064 = vld [vmem:[#allocation2 + $0xb18] sm:$0xff]
  %v3065 = vld [vmem:[#allocation2 + $0xb20] sm:$0xff]
  %v3066 = vld [vmem:[#allocation2 + $0xb28] sm:$0xff]
  %v3067 = vld [vmem:[#allocation2 + $0xb30] sm:$0xff]
  %v3068 = vld [vmem:[#allocation2 + $0xb38] sm:$0xff]
  %v3069 = vld [vmem:[#allocation2 + $0xb40] sm:$0xff]
  %v3070 = vld [vmem:[#allocation2 + $0xb48] sm:$0xff]
  %v3071 = vld [vmem:[#allocation2 + $0xb50] sm:$0xff]
  %v3072 = vld [vmem:[#allocation2 + $0xb58] sm:$0xff]
  %v3073 = vld [vmem:[#allocation2 + $0xb60] sm:$0xff]
  %v3074 = vld [vmem:[#allocation2 + $0xb68] sm:$0xff]
  %v3075 = vld [vmem:[#allocation2 + $0xb70] sm:$0xff]
  %v3076 = vld [vmem:[#allocation2 + $0xb78] sm:$0xff]
  %v3077 = vld [vmem:[#allocation2 + $0xb80] sm:$0xff]
  %v3078 = vld [vmem:[#allocation2 + $0xb88] sm:$0xff]
  %v3079 = vld [vmem:[#allocation2 + $0xb90] sm:$0xff]
  %v3080 = vld [vmem:[#allocation2 + $0xb98] sm:$0xff]
  %v3081 = vld [vmem:[#allocation2 + $0xba0] sm:$0xff]
  %v3082 = vld [vmem:[#allocation2 + $0xba8] sm:$0xff]
  %v3083 = vld [vmem:[#allocation2 + $0xbb0] sm:$0xff]
  %v3084 = vld [vmem:[#allocation2 + $0xbb8] sm:$0xff]
  %v3085 = vld [vmem:[#allocation2 + $0xbc0] sm:$0xff]
  %v3086 = vld [vmem:[#allocation2 + $0xbc8] sm:$0xff]
  %v3087 = vld [vmem:[#allocation2 + $0xbd0] sm:$0xff]
  %v3088 = vld [vmem:[#allocation2 + $0xbd8] sm:$0xff]
  %v3089 = vld [vmem:[#allocation2 + $0xbe0] sm:$0xff]
  %v3090 = vld [vmem:[#allocation2 + $0xbe8] sm:$0xff]
  %v3091 = vld [vmem:[#allocation2 + $0xbf0] sm:$0xff]
  %v3092 = vld [vmem:[#allocation2 + $0xbf8] sm:$0xff]
  %v3093 = vld [vmem:[#allocation2 + $0xc00] sm:$0xff]
  %v3094 = vld [vmem:[#allocation2 + $0xc08] sm:$0xff]
  %v3095 = vld [vmem:[#allocation2 + $0xc10] sm:$0xff]
  %v3096 = vld [vmem:[#allocation2 + $0xc18] sm:$0xff]
  %v3097 = vld [vmem:[#allocation2 + $0xc20] sm:$0xff]
  %v3098 = vld [vmem:[#allocation2 + $0xc28] sm:$0xff]
  %v3099 = vld [vmem:[#allocation2 + $0xc30] sm:$0xff]
  %v3100 = vld [vmem:[#allocation2 + $0xc38] sm:$0xff]
  %v3101 = vld [vmem:[#allocation2 + $0xc40] sm:$0xff]
  %v3102 = vld [vmem:[#allocation2 + $0xc48] sm:$0xff]
  %v3103 = vld [vmem:[#allocation2 + $0xc50] sm:$0xff]
  %v3104 = vld [vmem:[#allocation2 + $0xc58] sm:$0xff]
  %v3105 = vld [vmem:[#allocation2 + $0xc60] sm:$0xff]
  %v3106 = vld [vmem:[#allocation2 + $0xc68] sm:$0xff]
  %v3107 = vld [vmem:[#allocation2 + $0xc70] sm:$0xff]
  %v3108 = vld [vmem:[#allocation2 + $0xc78] sm:$0xff]
  %3110 = vset.pattern.permute.xlu0 0
  %3111 = vperm.xlu0 %3110, %v51
  %v3112 = vpop.permute.xlu0 %3111
  %vm3114 = vcmask 588800
  %v3116 = vsel %vm3114, %v50, 0
  %3118 = vmatprep.subr.mxu0 %v2710
  %3119 = vmatpush1.msra.mxu0 %v2709
  %3120 = vmatprep.subr.mxu0 %v2726
  %3121 = vmatpush1.msra.mxu0 %v2725
  %3122 = vmatprep.subr.mxu0 %v2742
  %3123 = vmatpush1.msra.mxu0 %v2741
  %3124 = vmatprep.subr.mxu0 %v2758
  %3125 = vmatpush1.msra.mxu0 %v2757
  %3126 = vmatprep.subr.mxu0 %v2774
  %3127 = vmatpush1.msra.mxu0 %v2773
  %3128 = vmatprep.subr.mxu0 %v2790
  %3129 = vmatpush1.msra.mxu0 %v2789
  %3130 = vmatprep.subr.mxu0 %v2806
  %3131 = vmatpush1.msra.mxu0 %v2805
  %3132 = vmatprep.subr.mxu0 %v2822
  %3133 = vmatpush1.msra.mxu0 %v2821
  %3134 = vmatprep.subr.mxu0 %v2838
  %3135 = vmatpush1.msra.mxu0 %v2837
  %3136 = vmatprep.subr.mxu0 %v2854
  %3137 = vmatpush1.msra.mxu0 %v2853
  %3138 = vmatprep.subr.mxu0 %v2870
  %3139 = vmatpush1.msra.mxu0 %v2869
  %3140 = vmatprep.subr.mxu0 %v2886
  %3141 = vmatpush1.msra.mxu0 %v2885
  %3142 = vmatprep.subr.mxu0 %v2902
  %3143 = vmatpush1.msra.mxu0 %v2901
  %3144 = vmatprep.subr.mxu0 %v2918
  %3145 = vmatpush1.msra.mxu0 %v2917
  %3146 = vmatprep.subr.mxu0 %v2934
  %3147 = vmatpush1.msra.mxu0 %v2933
  %3148 = vmatprep.subr.mxu0 %v2950
  %3149 = vmatpush1.msra.mxu0 %v2949
  %3150 = vmatprep.subr.mxu0 %v2966
  %3151 = vmatpush1.msra.mxu0 %v2965
  %3152 = vmatprep.subr.mxu0 %v2982
  %3153 = vmatpush1.msra.mxu0 %v2981
  %3154 = vmatprep.subr.mxu0 %v2998
  %3155 = vmatpush1.msra.mxu0 %v2997
  %3156 = vmatprep.subr.mxu0 %v3014
  %3157 = vmatpush1.msra.mxu0 %v3013
  %3158 = vmatprep.subr.mxu0 %v3030
  %3159 = vmatpush1.msra.mxu0 %v3029
  %3160 = vmatprep.subr.mxu0 %v3046
  %3161 = vmatpush1.msra.mxu0 %v3045
  %3162 = vmatprep.subr.mxu0 %v3062
  %3163 = vmatpush1.msra.mxu0 %v3061
  %3164 = vmatprep.subr.mxu0 %v3078
  %3165 = vmatpush1.msra.mxu0 %v3077
  %3166 = vmatprep.subr.mxu0 %v3094
  %3167 = vmatpush1.msra.mxu0 %v3093
  %3168 = vmatprep.subr.mxu0 0.0
  %3169 = vmatpush1.msra.mxu0 0.0
  %3170 = vmatprep.subr.mxu0 0.0
  %3171 = vmatpush1.msra.mxu0 0.0
  %3172 = vmatprep.subr.mxu0 0.0
  %3173 = vmatpush1.msra.mxu0 0.0
  %3174 = vmatprep.subr.mxu0 0.0
  %3175 = vmatpush1.msra.mxu0 0.0
  %3176 = vmatprep.subr.mxu0 0.0
  %3177 = vmatpush1.msra.mxu0 0.0
  %3178 = vmatprep.subr.mxu0 0.0
  %3179 = vmatpush1.msra.mxu0 0.0
  %3180 = vmatprep.subr.mxu0 0.0
  %3181 = vmatpush1.msra.mxu0 0.0
  %3182 = vmatprep.mubr.f32.mxu0 %v3116
  %3183 = vmatmul.mubr.f32.gmra.mrb[0].mxu0 %v49
  %v3184 = vpop.f32.mrb[0].mxu0
  %v3185 = vadd.f32 %v3112, %v3184
  %v3186 = vpop.f32.mrb[0].mxu0
  %v3187 = vadd.f32 %v3112, %v3186
  %3188 = vdwg.mxu0
  %3189 = vmatprep.subr.mxu0 %v2712
  %3190 = vmatpush1.msra.mxu0 %v2711
  %3191 = vmatprep.subr.mxu0 %v2728
  %3192 = vmatpush1.msra.mxu0 %v2727
  %3193 = vmatprep.subr.mxu0 %v2744
  %3194 = vmatpush1.msra.mxu0 %v2743
  %3195 = vmatprep.subr.mxu0 %v2760
  %3196 = vmatpush1.msra.mxu0 %v2759
  %3197 = vmatprep.subr.mxu0 %v2776
  %3198 = vmatpush1.msra.mxu0 %v2775
  %3199 = vmatprep.subr.mxu0 %v2792
  %3200 = vmatpush1.msra.mxu0 %v2791
  %3201 = vmatprep.subr.mxu0 %v2808
  %3202 = vmatpush1.msra.mxu0 %v2807
  %3203 = vmatprep.subr.mxu0 %v2824
  %3204 = vmatpush1.msra.mxu0 %v2823
  %3205 = vmatprep.subr.mxu0 %v2840
  %3206 = vmatpush1.msra.mxu0 %v2839
  %3207 = vmatprep.subr.mxu0 %v2856
  %3208 = vmatpush1.msra.mxu0 %v2855
  %3209 = vmatprep.subr.mxu0 %v2872
  %3210 = vmatpush1.msra.mxu0 %v2871
  %3211 = vmatprep.subr.mxu0 %v2888
  %3212 = vmatpush1.msra.mxu0 %v2887
  %3213 = vmatprep.subr.mxu0 %v2904
  %3214 = vmatpush1.msra.mxu0 %v2903
  %3215 = vmatprep.subr.mxu0 %v2920
  %3216 = vmatpush1.msra.mxu0 %v2919
  %3217 = vmatprep.subr.mxu0 %v2936
  %3218 = vmatpush1.msra.mxu0 %v2935
  %3219 = vmatprep.subr.mxu0 %v2952
  %3220 = vmatpush1.msra.mxu0 %v2951
  %3221 = vmatprep.subr.mxu0 %v2968
  %3222 = vmatpush1.msra.mxu0 %v2967
  %3223 = vmatprep.subr.mxu0 %v2984
  %3224 = vmatpush1.msra.mxu0 %v2983
  %3225 = vmatprep.subr.mxu0 %v3000
  %3226 = vmatpush1.msra.mxu0 %v2999
  %3227 = vmatprep.subr.mxu0 %v3016
  %3228 = vmatpush1.msra.mxu0 %v3015
  %3229 = vmatprep.subr.mxu0 %v3032
  %3230 = vmatpush1.msra.mxu0 %v3031
  %3231 = vmatprep.subr.mxu0 %v3048
  %3232 = vmatpush1.msra.mxu0 %v3047
  %3233 = vmatprep.subr.mxu0 %v3064
  %3234 = vmatpush1.msra.mxu0 %v3063
  %3235 = vmatprep.subr.mxu0 %v3080
  %3236 = vmatpush1.msra.mxu0 %v3079
  %3237 = vmatprep.subr.mxu0 %v3096
  %3238 = vmatpush1.msra.mxu0 %v3095
  %3239 = vmatprep.subr.mxu0 0.0
  %3240 = vmatpush1.msra.mxu0 0.0
  %3241 = vmatprep.subr.mxu0 0.0
  %3242 = vmatpush1.msra.mxu0 0.0
  %3243 = vmatprep.subr.mxu0 0.0
  %3244 = vmatpush1.msra.mxu0 0.0
  %3245 = vmatprep.subr.mxu0 0.0
  %3246 = vmatpush1.msra.mxu0 0.0
  %3247 = vmatprep.subr.mxu0 0.0
  %3248 = vmatpush1.msra.mxu0 0.0
  %3249 = vmatprep.subr.mxu0 0.0
  %3250 = vmatpush1.msra.mxu0 0.0
  %3251 = vmatprep.subr.mxu0 0.0
  %3252 = vmatpush1.msra.mxu0 0.0
  %3253 = vmatprep.mubr.f32.mxu0 %v3116
  %3254 = vmatmul.mubr.f32.gmra.mrb[0].mxu0 %v49
  %v3255 = vpop.f32.mrb[0].mxu0
  %v3256 = vadd.f32 %v3112, %v3255
  %v3257 = vpop.f32.mrb[0].mxu0
  %v3258 = vadd.f32 %v3112, %v3257
  %3259 = vdwg.mxu0
  %3260 = vmatprep.subr.mxu0 %v2714
  %3261 = vmatpush1.msra.mxu0 %v2713
  %3262 = vmatprep.subr.mxu0 %v2730
  %3263 = vmatpush1.msra.mxu0 %v2729
  %3264 = vmatprep.subr.mxu0 %v2746
  %3265 = vmatpush1.msra.mxu0 %v2745
  %3266 = vmatprep.subr.mxu0 %v2762
  %3267 = vmatpush1.msra.mxu0 %v2761
  %3268 = vmatprep.subr.mxu0 %v2778
  %3269 = vmatpush1.msra.mxu0 %v2777
  %3270 = vmatprep.subr.mxu0 %v2794
  %3271 = vmatpush1.msra.mxu0 %v2793
  %3272 = vmatprep.subr.mxu0 %v2810
  %3273 = vmatpush1.msra.mxu0 %v2809
  %3274 = vmatprep.subr.mxu0 %v2826
  %3275 = vmatpush1.msra.mxu0 %v2825
  %3276 = vmatprep.subr.mxu0 %v2842
  %3277 = vmatpush1.msra.mxu0 %v2841
  %3278 = vmatprep.subr.mxu0 %v2858
  %3279 = vmatpush1.msra.mxu0 %v2857
  %3280 = vmatprep.subr.mxu0 %v2874
  %3281 = vmatpush1.msra.mxu0 %v2873
  %3282 = vmatprep.subr.mxu0 %v2890
  %3283 = vmatpush1.msra.mxu0 %v2889
  %3284 = vmatprep.subr.mxu0 %v2906
  %3285 = vmatpush1.msra.mxu0 %v2905
  %3286 = vmatprep.subr.mxu0 %v2922
  %3287 = vmatpush1.msra.mxu0 %v2921
  %3288 = vmatprep.subr.mxu0 %v2938
  %3289 = vmatpush1.msra.mxu0 %v2937
  %3290 = vmatprep.subr.mxu0 %v2954
  %3291 = vmatpush1.msra.mxu0 %v2953
  %3292 = vmatprep.subr.mxu0 %v2970
  %3293 = vmatpush1.msra.mxu0 %v2969
  %3294 = vmatprep.subr.mxu0 %v2986
  %3295 = vmatpush1.msra.mxu0 %v2985
  %3296 = vmatprep.subr.mxu0 %v3002
  %3297 = vmatpush1.msra.mxu0 %v3001
  %3298 = vmatprep.subr.mxu0 %v3018
  %3299 = vmatpush1.msra.mxu0 %v3017
  %3300 = vmatprep.subr.mxu0 %v3034
  %3301 = vmatpush1.msra.mxu0 %v3033
  %3302 = vmatprep.subr.mxu0 %v3050
  %3303 = vmatpush1.msra.mxu0 %v3049
  %3304 = vmatprep.subr.mxu0 %v3066
  %3305 = vmatpush1.msra.mxu0 %v3065
  %3306 = vmatprep.subr.mxu0 %v3082
  %3307 = vmatpush1.msra.mxu0 %v3081
  %3308 = vmatprep.subr.mxu0 %v3098
  %3309 = vmatpush1.msra.mxu0 %v3097
  %3310 = vmatprep.subr.mxu0 0.0
  %3311 = vmatpush1.msra.mxu0 0.0
  %3312 = vmatprep.subr.mxu0 0.0
  %3313 = vmatpush1.msra.mxu0 0.0
  %3314 = vmatprep.subr.mxu0 0.0
  %3315 = vmatpush1.msra.mxu0 0.0
  %3316 = vmatprep.subr.mxu0 0.0
  %3317 = vmatpush1.msra.mxu0 0.0
  %3318 = vmatprep.subr.mxu0 0.0
  %3319 = vmatpush1.msra.mxu0 0.0
  %3320 = vmatprep.subr.mxu0 0.0
  %3321 = vmatpush1.msra.mxu0 0.0
  %3322 = vmatprep.subr.mxu0 0.0
  %3323 = vmatpush1.msra.mxu0 0.0
  %3324 = vmatprep.mubr.f32.mxu0 %v3116
  %3325 = vmatmul.mubr.f32.gmra.mrb[0].mxu0 %v49
  %v3326 = vpop.f32.mrb[0].mxu0
  %v3327 = vadd.f32 %v3112, %v3326
  %v3328 = vpop.f32.mrb[0].mxu0
  %v3329 = vadd.f32 %v3112, %v3328
  %3330 = vdwg.mxu0
  %3331 = vmatprep.subr.mxu0 %v2716
  %3332 = vmatpush1.msra.mxu0 %v2715
  %3333 = vmatprep.subr.mxu0 %v2732
  %3334 = vmatpush1.msra.mxu0 %v2731
  %3335 = vmatprep.subr.mxu0 %v2748
  %3336 = vmatpush1.msra.mxu0 %v2747
  %3337 = vmatprep.subr.mxu0 %v2764
  %3338 = vmatpush1.msra.mxu0 %v2763
  %3339 = vmatprep.subr.mxu0 %v2780
  %3340 = vmatpush1.msra.mxu0 %v2779
  %3341 = vmatprep.subr.mxu0 %v2796
  %3342 = vmatpush1.msra.mxu0 %v2795
  %3343 = vmatprep.subr.mxu0 %v2812
  %3344 = vmatpush1.msra.mxu0 %v2811
  %3345 = vmatprep.subr.mxu0 %v2828
  %3346 = vmatpush1.msra.mxu0 %v2827
  %3347 = vmatprep.subr.mxu0 %v2844
  %3348 = vmatpush1.msra.mxu0 %v2843
  %3349 = vmatprep.subr.mxu0 %v2860
  %3350 = vmatpush1.msra.mxu0 %v2859
  %3351 = vmatprep.subr.mxu0 %v2876
  %3352 = vmatpush1.msra.mxu0 %v2875
  %3353 = vmatprep.subr.mxu0 %v2892
  %3354 = vmatpush1.msra.mxu0 %v2891
  %3355 = vmatprep.subr.mxu0 %v2908
  %3356 = vmatpush1.msra.mxu0 %v2907
  %3357 = vmatprep.subr.mxu0 %v2924
  %3358 = vmatpush1.msra.mxu0 %v2923
  %3359 = vmatprep.subr.mxu0 %v2940
  %3360 = vmatpush1.msra.mxu0 %v2939
  %3361 = vmatprep.subr.mxu0 %v2956
  %3362 = vmatpush1.msra.mxu0 %v2955
  %3363 = vmatprep.subr.mxu0 %v2972
  %3364 = vmatpush1.msra.mxu0 %v2971
  %3365 = vmatprep.subr.mxu0 %v2988
  %3366 = vmatpush1.msra.mxu0 %v2987
  %3367 = vmatprep.subr.mxu0 %v3004
  %3368 = vmatpush1.msra.mxu0 %v3003
  %3369 = vmatprep.subr.mxu0 %v3020
  %3370 = vmatpush1.msra.mxu0 %v3019
  %3371 = vmatprep.subr.mxu0 %v3036
  %3372 = vmatpush1.msra.mxu0 %v3035
  %3373 = vmatprep.subr.mxu0 %v3052
  %3374 = vmatpush1.msra.mxu0 %v3051
  %3375 = vmatprep.subr.mxu0 %v3068
  %3376 = vmatpush1.msra.mxu0 %v3067
  %3377 = vmatprep.subr.mxu0 %v3084
  %3378 = vmatpush1.msra.mxu0 %v3083
  %3379 = vmatprep.subr.mxu0 %v3100
  %3380 = vmatpush1.msra.mxu0 %v3099
  %3381 = vmatprep.subr.mxu0 0.0
  %3382 = vmatpush1.msra.mxu0 0.0
  %3383 = vmatprep.subr.mxu0 0.0
  %3384 = vmatpush1.msra.mxu0 0.0
  %3385 = vmatprep.subr.mxu0 0.0
  %3386 = vmatpush1.msra.mxu0 0.0
  %3387 = vmatprep.subr.mxu0 0.0
  %3388 = vmatpush1.msra.mxu0 0.0
  %3389 = vmatprep.subr.mxu0 0.0
  %3390 = vmatpush1.msra.mxu0 0.0
  %3391 = vmatprep.subr.mxu0 0.0
  %3392 = vmatpush1.msra.mxu0 0.0
  %3393 = vmatprep.subr.mxu0 0.0
  %3394 = vmatpush1.msra.mxu0 0.0
  %3395 = vmatprep.mubr.f32.mxu0 %v3116
  %3396 = vmatmul.mubr.f32.gmra.mrb[0].mxu0 %v49
  %v3397 = vpop.f32.mrb[0].mxu0
  %v3398 = vadd.f32 %v3112, %v3397
  %v3399 = vpop.f32.mrb[0].mxu0
  %v3400 = vadd.f32 %v3112, %v3399
  %3401 = vdwg.mxu0
  %3402 = vmatprep.subr.mxu0 %v2718
  %3403 = vmatpush1.msra.mxu0 %v2717
  %3404 = vmatprep.subr.mxu0 %v2734
  %3405 = vmatpush1.msra.mxu0 %v2733
  %3406 = vmatprep.subr.mxu0 %v2750
  %3407 = vmatpush1.msra.mxu0 %v2749
  %3408 = vmatprep.subr.mxu0 %v2766
  %3409 = vmatpush1.msra.mxu0 %v2765
  %3410 = vmatprep.subr.mxu0 %v2782
  %3411 = vmatpush1.msra.mxu0 %v2781
  %3412 = vmatprep.subr.mxu0 %v2798
  %3413 = vmatpush1.msra.mxu0 %v2797
  %3414 = vmatprep.subr.mxu0 %v2814
  %3415 = vmatpush1.msra.mxu0 %v2813
  %3416 = vmatprep.subr.mxu0 %v2830
  %3417 = vmatpush1.msra.mxu0 %v2829
  %3418 = vmatprep.subr.mxu0 %v2846
  %3419 = vmatpush1.msra.mxu0 %v2845
  %3420 = vmatprep.subr.mxu0 %v2862
  %3421 = vmatpush1.msra.mxu0 %v2861
  %3422 = vmatprep.subr.mxu0 %v2878
  %3423 = vmatpush1.msra.mxu0 %v2877
  %3424 = vmatprep.subr.mxu0 %v2894
  %3425 = vmatpush1.msra.mxu0 %v2893
  %3426 = vmatprep.subr.mxu0 %v2910
  %3427 = vmatpush1.msra.mxu0 %v2909
  %3428 = vmatprep.subr.mxu0 %v2926
  %3429 = vmatpush1.msra.mxu0 %v2925
  %3430 = vmatprep.subr.mxu0 %v2942
  %3431 = vmatpush1.msra.mxu0 %v2941
  %3432 = vmatprep.subr.mxu0 %v2958
  %3433 = vmatpush1.msra.mxu0 %v2957
  %3434 = vmatprep.subr.mxu0 %v2974
  %3435 = vmatpush1.msra.mxu0 %v2973
  %3436 = vmatprep.subr.mxu0 %v2990
  %3437 = vmatpush1.msra.mxu0 %v2989
  %3438 = vmatprep.subr.mxu0 %v3006
  %3439 = vmatpush1.msra.mxu0 %v3005
  %3440 = vmatprep.subr.mxu0 %v3022
  %3441 = vmatpush1.msra.mxu0 %v3021
  %3442 = vmatprep.subr.mxu0 %v3038
  %3443 = vmatpush1.msra.mxu0 %v3037
  %3444 = vmatprep.subr.mxu0 %v3054
  %3445 = vmatpush1.msra.mxu0 %v3053
  %3446 = vmatprep.subr.mxu0 %v3070
  %3447 = vmatpush1.msra.mxu0 %v3069
  %3448 = vmatprep.subr.mxu0 %v3086
  %3449 = vmatpush1.msra.mxu0 %v3085
  %3450 = vmatprep.subr.mxu0 %v3102
  %3451 = vmatpush1.msra.mxu0 %v3101
  %3452 = vmatprep.subr.mxu0 0.0
  %3453 = vmatpush1.msra.mxu0 0.0
  %3454 = vmatprep.subr.mxu0 0.0
  %3455 = vmatpush1.msra.mxu0 0.0
  %3456 = vmatprep.subr.mxu0 0.0
  %3457 = vmatpush1.msra.mxu0 0.0
  %3458 = vmatprep.subr.mxu0 0.0
  %3459 = vmatpush1.msra.mxu0 0.0
  %3460 = vmatprep.subr.mxu0 0.0
  %3461 = vmatpush1.msra.mxu0 0.0
  %3462 = vmatprep.subr.mxu0 0.0
  %3463 = vmatpush1.msra.mxu0 0.0
  %3464 = vmatprep.subr.mxu0 0.0
  %3465 = vmatpush1.msra.mxu0 0.0
  %3466 = vmatprep.mubr.f32.mxu0 %v3116
  %3467 = vmatmul.mubr.f32.gmra.mrb[0].mxu0 %v49
  %v3468 = vpop.f32.mrb[0].mxu0
  %v3469 = vadd.f32 %v3112, %v3468
  %v3470 = vpop.f32.mrb[0].mxu0
  %v3471 = vadd.f32 %v3112, %v3470
  %3472 = vdwg.mxu0
  %3473 = vmatprep.subr.mxu0 %v2720
  %3474 = vmatpush1.msra.mxu0 %v2719
  %3475 = vmatprep.subr.mxu0 %v2736
  %3476 = vmatpush1.msra.mxu0 %v2735
  %3477 = vmatprep.subr.mxu0 %v2752
  %3478 = vmatpush1.msra.mxu0 %v2751
  %3479 = vmatprep.subr.mxu0 %v2768
  %3480 = vmatpush1.msra.mxu0 %v2767
  %3481 = vmatprep.subr.mxu0 %v2784
  %3482 = vmatpush1.msra.mxu0 %v2783
  %3483 = vmatprep.subr.mxu0 %v2800
  %3484 = vmatpush1.msra.mxu0 %v2799
  %3485 = vmatprep.subr.mxu0 %v2816
  %3486 = vmatpush1.msra.mxu0 %v2815
  %3487 = vmatprep.subr.mxu0 %v2832
  %3488 = vmatpush1.msra.mxu0 %v2831
  %3489 = vmatprep.subr.mxu0 %v2848
  %3490 = vmatpush1.msra.mxu0 %v2847
  %3491 = vmatprep.subr.mxu0 %v2864
  %3492 = vmatpush1.msra.mxu0 %v2863
  %3493 = vmatprep.subr.mxu0 %v2880
  %3494 = vmatpush1.msra.mxu0 %v2879
  %3495 = vmatprep.subr.mxu0 %v2896
  %3496 = vmatpush1.msra.mxu0 %v2895
  %3497 = vmatprep.subr.mxu0 %v2912
  %3498 = vmatpush1.msra.mxu0 %v2911
  %3499 = vmatprep.subr.mxu0 %v2928
  %3500 = vmatpush1.msra.mxu0 %v2927
  %3501 = vmatprep.subr.mxu0 %v2944
  %3502 = vmatpush1.msra.mxu0 %v2943
  %3503 = vmatprep.subr.mxu0 %v2960
  %3504 = vmatpush1.msra.mxu0 %v2959
  %3505 = vmatprep.subr.mxu0 %v2976
  %3506 = vmatpush1.msra.mxu0 %v2975
  %3507 = vmatprep.subr.mxu0 %v2992
  %3508 = vmatpush1.msra.mxu0 %v2991
  %3509 = vmatprep.subr.mxu0 %v3008
  %3510 = vmatpush1.msra.mxu0 %v3007
  %3511 = vmatprep.subr.mxu0 %v3024
  %3512 = vmatpush1.msra.mxu0 %v3023
  %3513 = vmatprep.subr.mxu0 %v3040
  %3514 = vmatpush1.msra.mxu0 %v3039
  %3515 = vmatprep.subr.mxu0 %v3056
  %3516 = vmatpush1.msra.mxu0 %v3055
  %3517 = vmatprep.subr.mxu0 %v3072
  %3518 = vmatpush1.msra.mxu0 %v3071
  %3519 = vmatprep.subr.mxu0 %v3088
  %3520 = vmatpush1.msra.mxu0 %v3087
  %3521 = vmatprep.subr.mxu0 %v3104
  %3522 = vmatpush1.msra.mxu0 %v3103
  %3523 = vmatprep.subr.mxu0 0.0
  %3524 = vmatpush1.msra.mxu0 0.0
  %3525 = vmatprep.subr.mxu0 0.0
  %3526 = vmatpush1.msra.mxu0 0.0
  %3527 = vmatprep.subr.mxu0 0.0
  %3528 = vmatpush1.msra.mxu0 0.0
  %3529 = vmatprep.subr.mxu0 0.0
  %3530 = vmatpush1.msra.mxu0 0.0
  %3531 = vmatprep.subr.mxu0 0.0
  %3532 = vmatpush1.msra.mxu0 0.0
  %3533 = vmatprep.subr.mxu0 0.0
  %3534 = vmatpush1.msra.mxu0 0.0
  %3535 = vmatprep.subr.mxu0 0.0
  %3536 = vmatpush1.msra.mxu0 0.0
  %3537 = vmatprep.mubr.f32.mxu0 %v3116
  %3538 = vmatmul.mubr.f32.gmra.mrb[0].mxu0 %v49
  %v3539 = vpop.f32.mrb[0].mxu0
  %v3540 = vadd.f32 %v3112, %v3539
  %v3541 = vpop.f32.mrb[0].mxu0
  %v3542 = vadd.f32 %v3112, %v3541
  %3543 = vdwg.mxu0
  %3544 = vmatprep.subr.mxu0 %v2722
  %3545 = vmatpush1.msra.mxu0 %v2721
  %3546 = vmatprep.subr.mxu0 %v2738
  %3547 = vmatpush1.msra.mxu0 %v2737
  %3548 = vmatprep.subr.mxu0 %v2754
  %3549 = vmatpush1.msra.mxu0 %v2753
  %3550 = vmatprep.subr.mxu0 %v2770
  %3551 = vmatpush1.msra.mxu0 %v2769
  %3552 = vmatprep.subr.mxu0 %v2786
  %3553 = vmatpush1.msra.mxu0 %v2785
  %3554 = vmatprep.subr.mxu0 %v2802
  %3555 = vmatpush1.msra.mxu0 %v2801
  %3556 = vmatprep.subr.mxu0 %v2818
  %3557 = vmatpush1.msra.mxu0 %v2817
  %3558 = vmatprep.subr.mxu0 %v2834
  %3559 = vmatpush1.msra.mxu0 %v2833
  %3560 = vmatprep.subr.mxu0 %v2850
  %3561 = vmatpush1.msra.mxu0 %v2849
  %3562 = vmatprep.subr.mxu0 %v2866
  %3563 = vmatpush1.msra.mxu0 %v2865
  %3564 = vmatprep.subr.mxu0 %v2882
  %3565 = vmatpush1.msra.mxu0 %v2881
  %3566 = vmatprep.subr.mxu0 %v2898
  %3567 = vmatpush1.msra.mxu0 %v2897
  %3568 = vmatprep.subr.mxu0 %v2914
  %3569 = vmatpush1.msra.mxu0 %v2913
  %3570 = vmatprep.subr.mxu0 %v2930
  %3571 = vmatpush1.msra.mxu0 %v2929
  %3572 = vmatprep.subr.mxu0 %v2946
  %3573 = vmatpush1.msra.mxu0 %v2945
  %3574 = vmatprep.subr.mxu0 %v2962
  %3575 = vmatpush1.msra.mxu0 %v2961
  %3576 = vmatprep.subr.mxu0 %v2978
  %3577 = vmatpush1.msra.mxu0 %v2977
  %3578 = vmatprep.subr.mxu0 %v2994
  %3579 = vmatpush1.msra.mxu0 %v2993
  %3580 = vmatprep.subr.mxu0 %v3010
  %3581 = vmatpush1.msra.mxu0 %v3009
  %3582 = vmatprep.subr.mxu0 %v3026
  %3583 = vmatpush1.msra.mxu0 %v3025
  %3584 = vmatprep.subr.mxu0 %v3042
  %3585 = vmatpush1.msra.mxu0 %v3041
  %3586 = vmatprep.subr.mxu0 %v3058
  %3587 = vmatpush1.msra.mxu0 %v3057
  %3588 = vmatprep.subr.mxu0 %v3074
  %3589 = vmatpush1.msra.mxu0 %v3073
  %3590 = vmatprep.subr.mxu0 %v3090
  %3591 = vmatpush1.msra.mxu0 %v3089
  %3592 = vmatprep.subr.mxu0 %v3106
  %3593 = vmatpush1.msra.mxu0 %v3105
  %3594 = vmatprep.subr.mxu0 0.0
  %3595 = vmatpush1.msra.mxu0 0.0
  %3596 = vmatprep.subr.mxu0 0.0
  %3597 = vmatpush1.msra.mxu0 0.0
  %3598 = vmatprep.subr.mxu0 0.0
  %3599 = vmatpush1.msra.mxu0 0.0
  %3600 = vmatprep.subr.mxu0 0.0
  %3601 = vmatpush1.msra.mxu0 0.0
  %3602 = vmatprep.subr.mxu0 0.0
  %3603 = vmatpush1.msra.mxu0 0.0
  %3604 = vmatprep.subr.mxu0 0.0
  %3605 = vmatpush1.msra.mxu0 0.0
  %3606 = vmatprep.subr.mxu0 0.0
  %3607 = vmatpush1.msra.mxu0 0.0
  %3608 = vmatprep.mubr.f32.mxu0 %v3116
  %3609 = vmatmul.mubr.f32.gmra.mrb[0].mxu0 %v49
  %v3610 = vpop.f32.mrb[0].mxu0
  %v3611 = vadd.f32 %v3112, %v3610
  %v3612 = vpop.f32.mrb[0].mxu0
  %v3613 = vadd.f32 %v3112, %v3612
  %3614 = vdwg.mxu0
  %3615 = vmatprep.subr.mxu0 %v2724
  %3616 = vmatpush1.msra.mxu0 %v2723
  %3617 = vmatprep.subr.mxu0 %v2740
  %3618 = vmatpush1.msra.mxu0 %v2739
  %3619 = vmatprep.subr.mxu0 %v2756
  %3620 = vmatpush1.msra.mxu0 %v2755
  %3621 = vmatprep.subr.mxu0 %v2772
  %3622 = vmatpush1.msra.mxu0 %v2771
  %3623 = vmatprep.subr.mxu0 %v2788
  %3624 = vmatpush1.msra.mxu0 %v2787
  %3625 = vmatprep.subr.mxu0 %v2804
  %3626 = vmatpush1.msra.mxu0 %v2803
  %3627 = vmatprep.subr.mxu0 %v2820
  %3628 = vmatpush1.msra.mxu0 %v2819
  %3629 = vmatprep.subr.mxu0 %v2836
  %3630 = vmatpush1.msra.mxu0 %v2835
  %3631 = vmatprep.subr.mxu0 %v2852
  %3632 = vmatpush1.msra.mxu0 %v2851
  %3633 = vmatprep.subr.mxu0 %v2868
  %3634 = vmatpush1.msra.mxu0 %v2867
  %3635 = vmatprep.subr.mxu0 %v2884
  %3636 = vmatpush1.msra.mxu0 %v2883
  %3637 = vmatprep.subr.mxu0 %v2900
  %3638 = vmatpush1.msra.mxu0 %v2899
  %3639 = vmatprep.subr.mxu0 %v2916
  %3640 = vmatpush1.msra.mxu0 %v2915
  %3641 = vmatprep.subr.mxu0 %v2932
  %3642 = vmatpush1.msra.mxu0 %v2931
  %3643 = vmatprep.subr.mxu0 %v2948
  %3644 = vmatpush1.msra.mxu0 %v2947
  %3645 = vmatprep.subr.mxu0 %v2964
  %3646 = vmatpush1.msra.mxu0 %v2963
  %3647 = vmatprep.subr.mxu0 %v2980
  %3648 = vmatpush1.msra.mxu0 %v2979
  %3649 = vmatprep.subr.mxu0 %v2996
  %3650 = vmatpush1.msra.mxu0 %v2995
  %3651 = vmatprep.subr.mxu0 %v3012
  %3652 = vmatpush1.msra.mxu0 %v3011
  %3653 = vmatprep.subr.mxu0 %v3028
  %3654 = vmatpush1.msra.mxu0 %v3027
  %3655 = vmatprep.subr.mxu0 %v3044
  %3656 = vmatpush1.msra.mxu0 %v3043
  %3657 = vmatprep.subr.mxu0 %v3060
  %3658 = vmatpush1.msra.mxu0 %v3059
  %3659 = vmatprep.subr.mxu0 %v3076
  %3660 = vmatpush1.msra.mxu0 %v3075
  %3661 = vmatprep.subr.mxu0 %v3092
  %3662 = vmatpush1.msra.mxu0 %v3091
  %3663 = vmatprep.subr.mxu0 %v3108
  %3664 = vmatpush1.msra.mxu0 %v3107
  %3665 = vmatprep.subr.mxu0 0.0
  %3666 = vmatpush1.msra.mxu0 0.0
  %3667 = vmatprep.subr.mxu0 0.0
  %3668 = vmatpush1.msra.mxu0 0.0
  %3669 = vmatprep.subr.mxu0 0.0
  %3670 = vmatpush1.msra.mxu0 0.0
  %3671 = vmatprep.subr.mxu0 0.0
  %3672 = vmatpush1.msra.mxu0 0.0
  %3673 = vmatprep.subr.mxu0 0.0
  %3674 = vmatpush1.msra.mxu0 0.0
  %3675 = vmatprep.subr.mxu0 0.0
  %3676 = vmatpush1.msra.mxu0 0.0
  %3677 = vmatprep.subr.mxu0 0.0
  %3678 = vmatpush1.msra.mxu0 0.0
  %3679 = vmatprep.mubr.f32.mxu0 %v3116
  %3680 = vmatmul.mubr.f32.gmra.mrb[0].mxu0 %v49
  %v3681 = vpop.f32.mrb[0].mxu0
  %v3682 = vadd.f32 %v3112, %v3681
  %v3683 = vpop.f32.mrb[0].mxu0
  %v3684 = vadd.f32 %v3112, %v3683
  %3685 = vdwg.mxu0
  %v3686 = vmax.f32 %v3185, 0.0
  %v3687 = vmax.f32 %v3187, 0.0
  %v3688 = vmax.f32 %v3256, 0.0
  %v3689 = vmax.f32 %v3258, 0.0
  %v3690 = vmax.f32 %v3327, 0.0
  %v3691 = vmax.f32 %v3329, 0.0
  %v3692 = vmax.f32 %v3398, 0.0
  %v3693 = vmax.f32 %v3400, 0.0
  %v3694 = vmax.f32 %v3469, 0.0
  %v3695 = vmax.f32 %v3471, 0.0
  %v3696 = vmax.f32 %v3540, 0.0
  %v3697 = vmax.f32 %v3542, 0.0
  %v3698 = vmax.f32 %v3611, 0.0
  %v3699 = vmax.f32 %v3613, 0.0
  %v3700 = vmax.f32 %v3682, 0.0
  %v3701 = vmax.f32 %v3684, 0.0
  %3702 = vst [vmem:[#allocation3] sm:$0xff] %v3686
  %3703 = vst [vmem:[#allocation3 + $0x8] sm:$0xff] %v3687
  %3704 = vst [vmem:[#allocation3 + $0x10] sm:$0xff] %v3688
  %3705 = vst [vmem:[#allocation3 + $0x18] sm:$0xff] %v3689
  %3706 = vst [vmem:[#allocation3 + $0x20] sm:$0xff] %v3690
  %3707 = vst [vmem:[#allocation3 + $0x28] sm:$0xff] %v3691
  %3708 = vst [vmem:[#allocation3 + $0x30] sm:$0xff] %v3692
  %3709 = vst [vmem:[#allocation3 + $0x38] sm:$0xff] %v3693
  %3710 = vst [vmem:[#allocation3 + $0x40] sm:$0xff] %v3694
  %3711 = vst [vmem:[#allocation3 + $0x48] sm:$0xff] %v3695
  %3712 = vst [vmem:[#allocation3 + $0x50] sm:$0xff] %v3696
  %3713 = vst [vmem:[#allocation3 + $0x58] sm:$0xff] %v3697
  %3714 = vst [vmem:[#allocation3 + $0x60] sm:$0xff] %v3698
  %3715 = vst [vmem:[#allocation3 + $0x68] sm:$0xff] %v3699
  %3716 = vst [vmem:[#allocation3 + $0x70] sm:$0xff] %v3700
  %3717 = vst [vmem:[#allocation3 + $0x78] sm:$0xff] %v3701
  %v3718 = vld [vmem:[#allocation3] sm:$0xff]
  %v3719 = vld [vmem:[#allocation3 + $0x8] sm:$0xff]
  %v3720 = vld [vmem:[#allocation3 + $0x10] sm:$0xff]
  %v3721 = vld [vmem:[#allocation3 + $0x18] sm:$0xff]
  %v3722 = vld [vmem:[#allocation3 + $0x20] sm:$0xff]
  %v3723 = vld [vmem:[#allocation3 + $0x28] sm:$0xff]
  %v3724 = vld [vmem:[#allocation3 + $0x30] sm:$0xff]
  %v3725 = vld [vmem:[#allocation3 + $0x38] sm:$0xff]
  %v3726 = vld [vmem:[#allocation3 + $0x40] sm:$0xff]
  %v3727 = vld [vmem:[#allocation3 + $0x48] sm:$0xff]
  %v3728 = vld [vmem:[#allocation3 + $0x50] sm:$0xff]
  %v3729 = vld [vmem:[#allocation3 + $0x58] sm:$0xff]
  %v3730 = vld [vmem:[#allocation3 + $0x60] sm:$0xff]
  %v3731 = vld [vmem:[#allocation3 + $0x68] sm:$0xff]
  %v3732 = vld [vmem:[#allocation3 + $0x70] sm:$0xff]
  %v3733 = vld [vmem:[#allocation3 + $0x78] sm:$0xff]
  %v3734 = vld [vmem:[#allocation3 + $0x80] sm:$0xff]
  %3752 = vrot.lane.b32.xlu0 %v3718, 126
  %v3753 = vpop.permute.xlu0 %3752
  %3754 = vrot.lane.b32.xlu0 %v3719, 126
  %v3755 = vpop.permute.xlu0 %3754
  %3756 = vrot.lane.b32.xlu0 %v3720, 126
  %v3757 = vpop.permute.xlu0 %3756
  %3758 = vrot.lane.b32.xlu0 %v3721, 126
  %v3759 = vpop.permute.xlu0 %3758
  %3760 = vrot.lane.b32.xlu0 %v3722, 126
  %v3761 = vpop.permute.xlu0 %3760
  %3762 = vrot.lane.b32.xlu0 %v3723, 126
  %v3763 = vpop.permute.xlu0 %3762
  %3764 = vrot.lane.b32.xlu0 %v3724, 126
  %v3765 = vpop.permute.xlu0 %3764
  %3766 = vrot.lane.b32.xlu0 %v3725, 126
  %v3767 = vpop.permute.xlu0 %3766
  %3768 = vrot.lane.b32.xlu0 %v3726, 126
  %v3769 = vpop.permute.xlu0 %3768
  %3770 = vrot.lane.b32.xlu0 %v3727, 126
  %v3771 = vpop.permute.xlu0 %3770
  %3772 = vrot.lane.b32.xlu0 %v3728, 126
  %v3773 = vpop.permute.xlu0 %3772
  %3774 = vrot.lane.b32.xlu0 %v3729, 126
  %v3775 = vpop.permute.xlu0 %3774
  %3776 = vrot.lane.b32.xlu0 %v3730, 126
  %v3777 = vpop.permute.xlu0 %3776
  %3778 = vrot.lane.b32.xlu0 %v3731, 126
  %v3779 = vpop.permute.xlu0 %3778
  %3780 = vrot.lane.b32.xlu0 %v3732, 126
  %v3781 = vpop.permute.xlu0 %3780
  %3782 = vrot.lane.b32.xlu0 %v3733, 126
  %v3783 = vpop.permute.xlu0 %3782
  %3784 = vrot.lane.b32.xlu0 %v3734, 126
  %v3785 = vpop.permute.xlu0 %3784
  %v3786 = vsel %vm152, %v3753, %v3755
  %v3787 = vsel %vm152, %v3755, %v3757
  %v3788 = vsel %vm152, %v3757, %v3759
  %v3789 = vsel %vm152, %v3759, %v3761
  %v3790 = vsel %vm152, %v3761, %v3763
  %v3791 = vsel %vm152, %v3763, %v3765
  %v3792 = vsel %vm152, %v3765, %v3767
  %v3793 = vsel %vm152, %v3767, %v3769
  %v3794 = vsel %vm152, %v3769, %v3771
  %v3795 = vsel %vm152, %v3771, %v3773
  %v3796 = vsel %vm152, %v3773, %v3775
  %v3797 = vsel %vm152, %v3775, %v3777
  %v3798 = vsel %vm152, %v3777, %v3779
  %v3799 = vsel %vm152, %v3779, %v3781
  %v3800 = vsel %vm152, %v3781, %v3783
  %v3801 = vsel %vm152, %v3783, %v3785
  %v3818 = vmax.f32 %v3718, %v3786
  %v3819 = vmax.f32 %v3719, %v3787
  %v3820 = vmax.f32 %v3720, %v3788
  %v3821 = vmax.f32 %v3721, %v3789
  %v3822 = vmax.f32 %v3722, %v3790
  %v3823 = vmax.f32 %v3723, %v3791
  %v3824 = vmax.f32 %v3724, %v3792
  %v3825 = vmax.f32 %v3725, %v3793
  %v3826 = vmax.f32 %v3726, %v3794
  %v3827 = vmax.f32 %v3727, %v3795
  %v3828 = vmax.f32 %v3728, %v3796
  %v3829 = vmax.f32 %v3729, %v3797
  %v3830 = vmax.f32 %v3730, %v3798
  %v3831 = vmax.f32 %v3731, %v3799
  %v3832 = vmax.f32 %v3732, %v3800
  %v3833 = vmax.f32 %v3733, %v3801
  %3834 = vrot.lane.b32.xlu0 %v3718, 64
  %v3835 = vpop.permute.xlu0 %3834
  %3836 = vrot.lane.b32.xlu0 %v3719, 64
  %v3837 = vpop.permute.xlu0 %3836
  %3838 = vrot.lane.b32.xlu0 %v3720, 64
  %v3839 = vpop.permute.xlu0 %3838
  %3840 = vrot.lane.b32.xlu0 %v3721, 64
  %v3841 = vpop.permute.xlu0 %3840
  %3842 = vrot.lane.b32.xlu0 %v3722, 64
  %v3843 = vpop.permute.xlu0 %3842
  %3844 = vrot.lane.b32.xlu0 %v3723, 64
  %v3845 = vpop.permute.xlu0 %3844
  %3846 = vrot.lane.b32.xlu0 %v3724, 64
  %v3847 = vpop.permute.xlu0 %3846
  %3848 = vrot.lane.b32.xlu0 %v3725, 64
  %v3849 = vpop.permute.xlu0 %3848
  %3850 = vrot.lane.b32.xlu0 %v3726, 64
  %v3851 = vpop.permute.xlu0 %3850
  %3852 = vrot.lane.b32.xlu0 %v3727, 64
  %v3853 = vpop.permute.xlu0 %3852
  %3854 = vrot.lane.b32.xlu0 %v3728, 64
  %v3855 = vpop.permute.xlu0 %3854
  %3856 = vrot.lane.b32.xlu0 %v3729, 64
  %v3857 = vpop.permute.xlu0 %3856
  %3858 = vrot.lane.b32.xlu0 %v3730, 64
  %v3859 = vpop.permute.xlu0 %3858
  %3860 = vrot.lane.b32.xlu0 %v3731, 64
  %v3861 = vpop.permute.xlu0 %3860
  %3862 = vrot.lane.b32.xlu0 %v3732, 64
  %v3863 = vpop.permute.xlu0 %3862
  %3864 = vrot.lane.b32.xlu0 %v3733, 64
  %v3865 = vpop.permute.xlu0 %3864
  %3866 = vrot.lane.b32.xlu0 %v3734, 64
  %v3867 = vpop.permute.xlu0 %3866
  %v3868 = vsel %vm620, %v3835, %v3837
  %v3869 = vsel %vm620, %v3837, %v3839
  %v3870 = vsel %vm620, %v3839, %v3841
  %v3871 = vsel %vm620, %v3841, %v3843
  %v3872 = vsel %vm620, %v3843, %v3845
  %v3873 = vsel %vm620, %v3845, %v3847
  %v3874 = vsel %vm620, %v3847, %v3849
  %v3875 = vsel %vm620, %v3849, %v3851
  %v3876 = vsel %vm620, %v3851, %v3853
  %v3877 = vsel %vm620, %v3853, %v3855
  %v3878 = vsel %vm620, %v3855, %v3857
  %v3879 = vsel %vm620, %v3857, %v3859
  %v3880 = vsel %vm620, %v3859, %v3861
  %v3881 = vsel %vm620, %v3861, %v3863
  %v3882 = vsel %vm620, %v3863, %v3865
  %v3883 = vsel %vm620, %v3865, %v3867
  %v3900 = vmax.f32 %v3818, %v3868
  %v3901 = vmax.f32 %v3819, %v3869
  %v3902 = vmax.f32 %v3820, %v3870
  %v3903 = vmax.f32 %v3821, %v3871
  %v3904 = vmax.f32 %v3822, %v3872
  %v3905 = vmax.f32 %v3823, %v3873
  %v3906 = vmax.f32 %v3824, %v3874
  %v3907 = vmax.f32 %v3825, %v3875
  %v3908 = vmax.f32 %v3826, %v3876
  %v3909 = vmax.f32 %v3827, %v3877
  %v3910 = vmax.f32 %v3828, %v3878
  %v3911 = vmax.f32 %v3829, %v3879
  %v3912 = vmax.f32 %v3830, %v3880
  %v3913 = vmax.f32 %v3831, %v3881
  %v3914 = vmax.f32 %v3832, %v3882
  %v3915 = vmax.f32 %v3833, %v3883
  %3916 = vrot.lane.b32.xlu0 %v3718, 62
  %v3917 = vpop.permute.xlu0 %3916
  %3918 = vrot.lane.b32.xlu0 %v3719, 62
  %v3919 = vpop.permute.xlu0 %3918
  %3920 = vrot.lane.b32.xlu0 %v3720, 62
  %v3921 = vpop.permute.xlu0 %3920
  %3922 = vrot.lane.b32.xlu0 %v3721, 62
  %v3923 = vpop.permute.xlu0 %3922
  %3924 = vrot.lane.b32.xlu0 %v3722, 62
  %v3925 = vpop.permute.xlu0 %3924
  %3926 = vrot.lane.b32.xlu0 %v3723, 62
  %v3927 = vpop.permute.xlu0 %3926
  %3928 = vrot.lane.b32.xlu0 %v3724, 62
  %v3929 = vpop.permute.xlu0 %3928
  %3930 = vrot.lane.b32.xlu0 %v3725, 62
  %v3931 = vpop.permute.xlu0 %3930
  %3932 = vrot.lane.b32.xlu0 %v3726, 62
  %v3933 = vpop.permute.xlu0 %3932
  %3934 = vrot.lane.b32.xlu0 %v3727, 62
  %v3935 = vpop.permute.xlu0 %3934
  %3936 = vrot.lane.b32.xlu0 %v3728, 62
  %v3937 = vpop.permute.xlu0 %3936
  %3938 = vrot.lane.b32.xlu0 %v3729, 62
  %v3939 = vpop.permute.xlu0 %3938
  %3940 = vrot.lane.b32.xlu0 %v3730, 62
  %v3941 = vpop.permute.xlu0 %3940
  %3942 = vrot.lane.b32.xlu0 %v3731, 62
  %v3943 = vpop.permute.xlu0 %3942
  %3944 = vrot.lane.b32.xlu0 %v3732, 62
  %v3945 = vpop.permute.xlu0 %3944
  %3946 = vrot.lane.b32.xlu0 %v3733, 62
  %v3947 = vpop.permute.xlu0 %3946
  %3948 = vrot.lane.b32.xlu0 %v3734, 62
  %v3949 = vpop.permute.xlu0 %3948
  %v3950 = vsel %vm737, %v3917, %v3919
  %v3951 = vsel %vm737, %v3919, %v3921
  %v3952 = vsel %vm737, %v3921, %v3923
  %v3953 = vsel %vm737, %v3923, %v3925
  %v3954 = vsel %vm737, %v3925, %v3927
  %v3955 = vsel %vm737, %v3927, %v3929
  %v3956 = vsel %vm737, %v3929, %v3931
  %v3957 = vsel %vm737, %v3931, %v3933
  %v3958 = vsel %vm737, %v3933, %v3935
  %v3959 = vsel %vm737, %v3935, %v3937
  %v3960 = vsel %vm737, %v3937, %v3939
  %v3961 = vsel %vm737, %v3939, %v3941
  %v3962 = vsel %vm737, %v3941, %v3943
  %v3963 = vsel %vm737, %v3943, %v3945
  %v3964 = vsel %vm737, %v3945, %v3947
  %v3965 = vsel %vm737, %v3947, %v3949
  %v3982 = vmax.f32 %v3900, %v3950
  %v3983 = vmax.f32 %v3901, %v3951
  %v3984 = vmax.f32 %v3902, %v3952
  %v3985 = vmax.f32 %v3903, %v3953
  %v3986 = vmax.f32 %v3904, %v3954
  %v3987 = vmax.f32 %v3905, %v3955
  %v3988 = vmax.f32 %v3906, %v3956
  %v3989 = vmax.f32 %v3907, %v3957
  %v3990 = vmax.f32 %v3908, %v3958
  %v3991 = vmax.f32 %v3909, %v3959
  %v3992 = vmax.f32 %v3910, %v3960
  %v3993 = vmax.f32 %v3911, %v3961
  %v3994 = vmax.f32 %v3912, %v3962
  %v3995 = vmax.f32 %v3913, %v3963
  %v3996 = vmax.f32 %v3914, %v3964
  %v3997 = vmax.f32 %v3915, %v3965
  %3998 = vst [vmem:[#allocation4] sm:$0xff] %v3982
  %3999 = vst [vmem:[#allocation4 + $0x8] sm:$0xff] %v3983
  %4000 = vst [vmem:[#allocation4 + $0x10] sm:$0xff] %v3984
  %4001 = vst [vmem:[#allocation4 + $0x18] sm:$0xff] %v3985
  %4002 = vst [vmem:[#allocation4 + $0x20] sm:$0xff] %v3986
  %4003 = vst [vmem:[#allocation4 + $0x28] sm:$0xff] %v3987
  %4004 = vst [vmem:[#allocation4 + $0x30] sm:$0xff] %v3988
  %4005 = vst [vmem:[#allocation4 + $0x38] sm:$0xff] %v3989
  %4006 = vst [vmem:[#allocation4 + $0x40] sm:$0xff] %v3990
  %4007 = vst [vmem:[#allocation4 + $0x48] sm:$0xff] %v3991
  %4008 = vst [vmem:[#allocation4 + $0x50] sm:$0xff] %v3992
  %4009 = vst [vmem:[#allocation4 + $0x58] sm:$0xff] %v3993
  %4010 = vst [vmem:[#allocation4 + $0x60] sm:$0xff] %v3994
  %4011 = vst [vmem:[#allocation4 + $0x68] sm:$0xff] %v3995
  %4012 = vst [vmem:[#allocation4 + $0x70] sm:$0xff] %v3996
  %4013 = vst [vmem:[#allocation4 + $0x78] sm:$0xff] %v3997
  %v4014 = vld [vmem:[%s1 + $0x10] sm:$0xff]
  %v4015 = vld [vmem:[%s1 + $0x18] sm:$0xff]
  %v4016 = vld [vmem:[%s1 + $0x20] sm:$0xff]
  %v4017 = vld [vmem:[%s1 + $0x28] sm:$0xff]
  %v4018 = vld [vmem:[%s2 + $0x8] sm:$0xff]
  %v4019 = vld [vmem:[%s2 + $0x10] sm:$0xff]
  %v4020 = vld [vmem:[#allocation4] sm:$0xff]
  %v4021 = vld [vmem:[#allocation4 + $0x8] sm:$0xff]
  %v4022 = vld [vmem:[#allocation4 + $0x10] sm:$0xff]
  %v4023 = vld [vmem:[#allocation4 + $0x18] sm:$0xff]
  %v4024 = vld [vmem:[#allocation4 + $0x20] sm:$0xff]
  %v4025 = vld [vmem:[#allocation4 + $0x28] sm:$0xff]
  %v4026 = vld [vmem:[#allocation4 + $0x30] sm:$0xff]
  %v4027 = vld [vmem:[#allocation4 + $0x38] sm:$0xff]
  %v4028 = vld [vmem:[#allocation4 + $0x40] sm:$0xff]
  %v4029 = vld [vmem:[#allocation4 + $0x48] sm:$0xff]
  %v4030 = vld [vmem:[#allocation4 + $0x50] sm:$0xff]
  %v4031 = vld [vmem:[#allocation4 + $0x58] sm:$0xff]
  %v4032 = vld [vmem:[#allocation4 + $0x60] sm:$0xff]
  %v4033 = vld [vmem:[#allocation4 + $0x68] sm:$0xff]
  %v4034 = vld [vmem:[#allocation4 + $0x70] sm:$0xff]
  %v4035 = vld [vmem:[#allocation4 + $0x78] sm:$0xff]
  %4036 = vst [vmem:[#allocation2] sm:$0xff] %v4020
  %4037 = vst [vmem:[#allocation2 + $0x8] sm:$0xff] %v4021
  %4038 = vst [vmem:[#allocation2 + $0x10] sm:$0xff] %v4022
  %4039 = vst [vmem:[#allocation2 + $0x18] sm:$0xff] %v4023
  %4040 = vst [vmem:[#allocation2 + $0x20] sm:$0xff] %v4024
  %4041 = vst [vmem:[#allocation2 + $0x28] sm:$0xff] %v4025
  %4042 = vst [vmem:[#allocation2 + $0x30] sm:$0xff] %v4026
  %4043 = vst [vmem:[#allocation2 + $0x38] sm:$0xff] %v4027
  %4044 = vst [vmem:[#allocation2 + $0x40] sm:$0xff] %v4028
  %4045 = vst [vmem:[#allocation2 + $0x48] sm:$0xff] %v4029
  %4046 = vst [vmem:[#allocation2 + $0x50] sm:$0xff] %v4030
  %4047 = vst [vmem:[#allocation2 + $0x58] sm:$0xff] %v4031
  %4048 = vst [vmem:[#allocation2 + $0x60] sm:$0xff] %v4032
  %4049 = vst [vmem:[#allocation2 + $0x68] sm:$0xff] %v4033
  %4050 = vst [vmem:[#allocation2 + $0x70] sm:$0xff] %v4034
  %4051 = vst [vmem:[#allocation2 + $0x78] sm:$0xff] %v4035
  %v4052 = vld [vmem:[#allocation4] sm:$0xff]
  %v4053 = vld [vmem:[#allocation4 + $0x8] sm:$0xff]
  %v4054 = vld [vmem:[#allocation4 + $0x10] sm:$0xff]
  %v4055 = vld [vmem:[#allocation4 + $0x18] sm:$0xff]
  %v4056 = vld [vmem:[#allocation4 + $0x20] sm:$0xff]
  %v4057 = vld [vmem:[#allocation4 + $0x28] sm:$0xff]
  %v4058 = vld [vmem:[#allocation4 + $0x30] sm:$0xff]
  %v4059 = vld [vmem:[#allocation4 + $0x38] sm:$0xff]
  %v4060 = vld [vmem:[#allocation4 + $0x40] sm:$0xff]
  %v4061 = vld [vmem:[#allocation4 + $0x48] sm:$0xff]
  %v4062 = vld [vmem:[#allocation4 + $0x50] sm:$0xff]
  %v4063 = vld [vmem:[#allocation4 + $0x58] sm:$0xff]
  %v4064 = vld [vmem:[#allocation4 + $0x60] sm:$0xff]
  %v4065 = vld [vmem:[#allocation4 + $0x68] sm:$0xff]
  %v4066 = vld [vmem:[#allocation4 + $0x70] sm:$0xff]
  %v4067 = vld [vmem:[#allocation4 + $0x78] sm:$0xff]
  %v4068 = vld [vmem:[#allocation4 + $0x80] sm:$0xff]
  %4086 = vrot.lane.b32.xlu0 %v4052, 124
  %v4087 = vpop.permute.xlu0 %4086
  %4088 = vrot.lane.b32.xlu0 %v4053, 124
  %v4089 = vpop.permute.xlu0 %4088
  %4090 = vrot.lane.b32.xlu0 %v4054, 124
  %v4091 = vpop.permute.xlu0 %4090
  %4092 = vrot.lane.b32.xlu0 %v4055, 124
  %v4093 = vpop.permute.xlu0 %4092
  %4094 = vrot.lane.b32.xlu0 %v4056, 124
  %v4095 = vpop.permute.xlu0 %4094
  %4096 = vrot.lane.b32.xlu0 %v4057, 124
  %v4097 = vpop.permute.xlu0 %4096
  %4098 = vrot.lane.b32.xlu0 %v4058, 124
  %v4099 = vpop.permute.xlu0 %4098
  %4100 = vrot.lane.b32.xlu0 %v4059, 124
  %v4101 = vpop.permute.xlu0 %4100
  %4102 = vrot.lane.b32.xlu0 %v4060, 124
  %v4103 = vpop.permute.xlu0 %4102
  %4104 = vrot.lane.b32.xlu0 %v4061, 124
  %v4105 = vpop.permute.xlu0 %4104
  %4106 = vrot.lane.b32.xlu0 %v4062, 124
  %v4107 = vpop.permute.xlu0 %4106
  %4108 = vrot.lane.b32.xlu0 %v4063, 124
  %v4109 = vpop.permute.xlu0 %4108
  %4110 = vrot.lane.b32.xlu0 %v4064, 124
  %v4111 = vpop.permute.xlu0 %4110
  %4112 = vrot.lane.b32.xlu0 %v4065, 124
  %v4113 = vpop.permute.xlu0 %4112
  %4114 = vrot.lane.b32.xlu0 %v4066, 124
  %v4115 = vpop.permute.xlu0 %4114
  %4116 = vrot.lane.b32.xlu0 %v4067, 124
  %v4117 = vpop.permute.xlu0 %4116
  %4118 = vrot.lane.b32.xlu0 %v4068, 124
  %v4119 = vpop.permute.xlu0 %4118
  %v4120 = vsel %vm269, %v4087, %v4089
  %v4121 = vsel %vm269, %v4089, %v4091
  %v4122 = vsel %vm269, %v4091, %v4093
  %v4123 = vsel %vm269, %v4093, %v4095
  %v4124 = vsel %vm269, %v4095, %v4097
  %v4125 = vsel %vm269, %v4097, %v4099
  %v4126 = vsel %vm269, %v4099, %v4101
  %v4127 = vsel %vm269, %v4101, %v4103
  %v4128 = vsel %vm269, %v4103, %v4105
  %v4129 = vsel %vm269, %v4105, %v4107
  %v4130 = vsel %vm269, %v4107, %v4109
  %v4131 = vsel %vm269, %v4109, %v4111
  %v4132 = vsel %vm269, %v4111, %v4113
  %v4133 = vsel %vm269, %v4113, %v4115
  %v4134 = vsel %vm269, %v4115, %v4117
  %v4135 = vsel %vm269, %v4117, %v4119
  %4152 = vst [vmem:[#allocation2 + $0x80] sm:$0xff] %v4120
  %4153 = vst [vmem:[#allocation2 + $0x88] sm:$0xff] %v4121
  %4154 = vst [vmem:[#allocation2 + $0x90] sm:$0xff] %v4122
  %4155 = vst [vmem:[#allocation2 + $0x98] sm:$0xff] %v4123
  %4156 = vst [vmem:[#allocation2 + $0xa0] sm:$0xff] %v4124
  %4157 = vst [vmem:[#allocation2 + $0xa8] sm:$0xff] %v4125
  %4158 = vst [vmem:[#allocation2 + $0xb0] sm:$0xff] %v4126
  %4159 = vst [vmem:[#allocation2 + $0xb8] sm:$0xff] %v4127
  %4160 = vst [vmem:[#allocation2 + $0xc0] sm:$0xff] %v4128
  %4161 = vst [vmem:[#allocation2 + $0xc8] sm:$0xff] %v4129
  %4162 = vst [vmem:[#allocation2 + $0xd0] sm:$0xff] %v4130
  %4163 = vst [vmem:[#allocation2 + $0xd8] sm:$0xff] %v4131
  %4164 = vst [vmem:[#allocation2 + $0xe0] sm:$0xff] %v4132
  %4165 = vst [vmem:[#allocation2 + $0xe8] sm:$0xff] %v4133
  %4166 = vst [vmem:[#allocation2 + $0xf0] sm:$0xff] %v4134
  %4167 = vst [vmem:[#allocation2 + $0xf8] sm:$0xff] %v4135
  %v4168 = vld [vmem:[#allocation4] sm:$0xff]
  %v4169 = vld [vmem:[#allocation4 + $0x8] sm:$0xff]
  %v4170 = vld [vmem:[#allocation4 + $0x10] sm:$0xff]
  %v4171 = vld [vmem:[#allocation4 + $0x18] sm:$0xff]
  %v4172 = vld [vmem:[#allocation4 + $0x20] sm:$0xff]
  %v4173 = vld [vmem:[#allocation4 + $0x28] sm:$0xff]
  %v4174 = vld [vmem:[#allocation4 + $0x30] sm:$0xff]
  %v4175 = vld [vmem:[#allocation4 + $0x38] sm:$0xff]
  %v4176 = vld [vmem:[#allocation4 + $0x40] sm:$0xff]
  %v4177 = vld [vmem:[#allocation4 + $0x48] sm:$0xff]
  %v4178 = vld [vmem:[#allocation4 + $0x50] sm:$0xff]
  %v4179 = vld [vmem:[#allocation4 + $0x58] sm:$0xff]
  %v4180 = vld [vmem:[#allocation4 + $0x60] sm:$0xff]
  %v4181 = vld [vmem:[#allocation4 + $0x68] sm:$0xff]
  %v4182 = vld [vmem:[#allocation4 + $0x70] sm:$0xff]
  %v4183 = vld [vmem:[#allocation4 + $0x78] sm:$0xff]
  %v4184 = vld [vmem:[#allocation4 + $0x80] sm:$0xff]
  %4202 = vrot.lane.b32.xlu0 %v4168, 120
  %v4203 = vpop.permute.xlu0 %4202
  %4204 = vrot.lane.b32.xlu0 %v4169, 120
  %v4205 = vpop.permute.xlu0 %4204
  %4206 = vrot.lane.b32.xlu0 %v4170, 120
  %v4207 = vpop.permute.xlu0 %4206
  %4208 = vrot.lane.b32.xlu0 %v4171, 120
  %v4209 = vpop.permute.xlu0 %4208
  %4210 = vrot.lane.b32.xlu0 %v4172, 120
  %v4211 = vpop.permute.xlu0 %4210
  %4212 = vrot.lane.b32.xlu0 %v4173, 120
  %v4213 = vpop.permute.xlu0 %4212
  %4214 = vrot.lane.b32.xlu0 %v4174, 120
  %v4215 = vpop.permute.xlu0 %4214
  %4216 = vrot.lane.b32.xlu0 %v4175, 120
  %v4217 = vpop.permute.xlu0 %4216
  %4218 = vrot.lane.b32.xlu0 %v4176, 120
  %v4219 = vpop.permute.xlu0 %4218
  %4220 = vrot.lane.b32.xlu0 %v4177, 120
  %v4221 = vpop.permute.xlu0 %4220
  %4222 = vrot.lane.b32.xlu0 %v4178, 120
  %v4223 = vpop.permute.xlu0 %4222
  %4224 = vrot.lane.b32.xlu0 %v4179, 120
  %v4225 = vpop.permute.xlu0 %4224
  %4226 = vrot.lane.b32.xlu0 %v4180, 120
  %v4227 = vpop.permute.xlu0 %4226
  %4228 = vrot.lane.b32.xlu0 %v4181, 120
  %v4229 = vpop.permute.xlu0 %4228
  %4230 = vrot.lane.b32.xlu0 %v4182, 120
  %v4231 = vpop.permute.xlu0 %4230
  %4232 = vrot.lane.b32.xlu0 %v4183, 120
  %v4233 = vpop.permute.xlu0 %4232
  %4234 = vrot.lane.b32.xlu0 %v4184, 120
  %v4235 = vpop.permute.xlu0 %4234
  %v4236 = vsel %vm503, %v4203, %v4205
  %v4237 = vsel %vm503, %v4205, %v4207
  %v4238 = vsel %vm503, %v4207, %v4209
  %v4239 = vsel %vm503, %v4209, %v4211
  %v4240 = vsel %vm503, %v4211, %v4213
  %v4241 = vsel %vm503, %v4213, %v4215
  %v4242 = vsel %vm503, %v4215, %v4217
  %v4243 = vsel %vm503, %v4217, %v4219
  %v4244 = vsel %vm503, %v4219, %v4221
  %v4245 = vsel %vm503, %v4221, %v4223
  %v4246 = vsel %vm503, %v4223, %v4225
  %v4247 = vsel %vm503, %v4225, %v4227
  %v4248 = vsel %vm503, %v4227, %v4229
  %v4249 = vsel %vm503, %v4229, %v4231
  %v4250 = vsel %vm503, %v4231, %v4233
  %v4251 = vsel %vm503, %v4233, %v4235
  %4268 = vst [vmem:[#allocation2 + $0x100] sm:$0xff] %v4236
  %4269 = vst [vmem:[#allocation2 + $0x108] sm:$0xff] %v4237
  %4270 = vst [vmem:[#allocation2 + $0x110] sm:$0xff] %v4238
  %4271 = vst [vmem:[#allocation2 + $0x118] sm:$0xff] %v4239
  %4272 = vst [vmem:[#allocation2 + $0x120] sm:$0xff] %v4240
  %4273 = vst [vmem:[#allocation2 + $0x128] sm:$0xff] %v4241
  %4274 = vst [vmem:[#allocation2 + $0x130] sm:$0xff] %v4242
  %4275 = vst [vmem:[#allocation2 + $0x138] sm:$0xff] %v4243
  %4276 = vst [vmem:[#allocation2 + $0x140] sm:$0xff] %v4244
  %4277 = vst [vmem:[#allocation2 + $0x148] sm:$0xff] %v4245
  %4278 = vst [vmem:[#allocation2 + $0x150] sm:$0xff] %v4246
  %4279 = vst [vmem:[#allocation2 + $0x158] sm:$0xff] %v4247
  %4280 = vst [vmem:[#allocation2 + $0x160] sm:$0xff] %v4248
  %4281 = vst [vmem:[#allocation2 + $0x168] sm:$0xff] %v4249
  %4282 = vst [vmem:[#allocation2 + $0x170] sm:$0xff] %v4250
  %4283 = vst [vmem:[#allocation2 + $0x178] sm:$0xff] %v4251
  %v4284 = vld [vmem:[#allocation4] sm:$0xff]
  %v4285 = vld [vmem:[#allocation4 + $0x8] sm:$0xff]
  %v4286 = vld [vmem:[#allocation4 + $0x10] sm:$0xff]
  %v4287 = vld [vmem:[#allocation4 + $0x18] sm:$0xff]
  %v4288 = vld [vmem:[#allocation4 + $0x20] sm:$0xff]
  %v4289 = vld [vmem:[#allocation4 + $0x28] sm:$0xff]
  %v4290 = vld [vmem:[#allocation4 + $0x30] sm:$0xff]
  %v4291 = vld [vmem:[#allocation4 + $0x38] sm:$0xff]
  %v4292 = vld [vmem:[#allocation4 + $0x40] sm:$0xff]
  %v4293 = vld [vmem:[#allocation4 + $0x48] sm:$0xff]
  %v4294 = vld [vmem:[#allocation4 + $0x50] sm:$0xff]
  %v4295 = vld [vmem:[#allocation4 + $0x58] sm:$0xff]
  %v4296 = vld [vmem:[#allocation4 + $0x60] sm:$0xff]
  %v4297 = vld [vmem:[#allocation4 + $0x68] sm:$0xff]
  %v4298 = vld [vmem:[#allocation4 + $0x70] sm:$0xff]
  %v4299 = vld [vmem:[#allocation4 + $0x78] sm:$0xff]
  %v4300 = vld [vmem:[#allocation4 + $0x80] sm:$0xff]
  %4318 = vrot.lane.b32.xlu0 %v4284, 116
  %v4319 = vpop.permute.xlu0 %4318
  %4320 = vrot.lane.b32.xlu0 %v4285, 116
  %v4321 = vpop.permute.xlu0 %4320
  %4322 = vrot.lane.b32.xlu0 %v4286, 116
  %v4323 = vpop.permute.xlu0 %4322
  %4324 = vrot.lane.b32.xlu0 %v4287, 116
  %v4325 = vpop.permute.xlu0 %4324
  %4326 = vrot.lane.b32.xlu0 %v4288, 116
  %v4327 = vpop.permute.xlu0 %4326
  %4328 = vrot.lane.b32.xlu0 %v4289, 116
  %v4329 = vpop.permute.xlu0 %4328
  %4330 = vrot.lane.b32.xlu0 %v4290, 116
  %v4331 = vpop.permute.xlu0 %4330
  %4332 = vrot.lane.b32.xlu0 %v4291, 116
  %v4333 = vpop.permute.xlu0 %4332
  %4334 = vrot.lane.b32.xlu0 %v4292, 116
  %v4335 = vpop.permute.xlu0 %4334
  %4336 = vrot.lane.b32.xlu0 %v4293, 116
  %v4337 = vpop.permute.xlu0 %4336
  %4338 = vrot.lane.b32.xlu0 %v4294, 116
  %v4339 = vpop.permute.xlu0 %4338
  %4340 = vrot.lane.b32.xlu0 %v4295, 116
  %v4341 = vpop.permute.xlu0 %4340
  %4342 = vrot.lane.b32.xlu0 %v4296, 116
  %v4343 = vpop.permute.xlu0 %4342
  %4344 = vrot.lane.b32.xlu0 %v4297, 116
  %v4345 = vpop.permute.xlu0 %4344
  %4346 = vrot.lane.b32.xlu0 %v4298, 116
  %v4347 = vpop.permute.xlu0 %4346
  %4348 = vrot.lane.b32.xlu0 %v4299, 116
  %v4349 = vpop.permute.xlu0 %4348
  %4350 = vrot.lane.b32.xlu0 %v4300, 116
  %v4351 = vpop.permute.xlu0 %4350
  %vm4352 = vcmask 949248
  %v4353 = vsel %vm4352, %v4319, %v4321
  %v4354 = vsel %vm4352, %v4321, %v4323
  %v4355 = vsel %vm4352, %v4323, %v4325
  %v4356 = vsel %vm4352, %v4325, %v4327
  %v4357 = vsel %vm4352, %v4327, %v4329
  %v4358 = vsel %vm4352, %v4329, %v4331
  %v4359 = vsel %vm4352, %v4331, %v4333
  %v4360 = vsel %vm4352, %v4333, %v4335
  %v4361 = vsel %vm4352, %v4335, %v4337
  %v4362 = vsel %vm4352, %v4337, %v4339
  %v4363 = vsel %vm4352, %v4339, %v4341
  %v4364 = vsel %vm4352, %v4341, %v4343
  %v4365 = vsel %vm4352, %v4343, %v4345
  %v4366 = vsel %vm4352, %v4345, %v4347
  %v4367 = vsel %vm4352, %v4347, %v4349
  %v4368 = vsel %vm4352, %v4349, %v4351
  %4385 = vst [vmem:[#allocation2 + $0x180] sm:$0xff] %v4353
  %4386 = vst [vmem:[#allocation2 + $0x188] sm:$0xff] %v4354
  %4387 = vst [vmem:[#allocation2 + $0x190] sm:$0xff] %v4355
  %4388 = vst [vmem:[#allocation2 + $0x198] sm:$0xff] %v4356
  %4389 = vst [vmem:[#allocation2 + $0x1a0] sm:$0xff] %v4357
  %4390 = vst [vmem:[#allocation2 + $0x1a8] sm:$0xff] %v4358
  %4391 = vst [vmem:[#allocation2 + $0x1b0] sm:$0xff] %v4359
  %4392 = vst [vmem:[#allocation2 + $0x1b8] sm:$0xff] %v4360
  %4393 = vst [vmem:[#allocation2 + $0x1c0] sm:$0xff] %v4361
  %4394 = vst [vmem:[#allocation2 + $0x1c8] sm:$0xff] %v4362
  %4395 = vst [vmem:[#allocation2 + $0x1d0] sm:$0xff] %v4363
  %4396 = vst [vmem:[#allocation2 + $0x1d8] sm:$0xff] %v4364
  %4397 = vst [vmem:[#allocation2 + $0x1e0] sm:$0xff] %v4365
  %4398 = vst [vmem:[#allocation2 + $0x1e8] sm:$0xff] %v4366
  %4399 = vst [vmem:[#allocation2 + $0x1f0] sm:$0xff] %v4367
  %4400 = vst [vmem:[#allocation2 + $0x1f8] sm:$0xff] %v4368
  %v4401 = vld [vmem:[#allocation4] sm:$0xff]
  %v4402 = vld [vmem:[#allocation4 + $0x8] sm:$0xff]
  %v4403 = vld [vmem:[#allocation4 + $0x10] sm:$0xff]
  %v4404 = vld [vmem:[#allocation4 + $0x18] sm:$0xff]
  %v4405 = vld [vmem:[#allocation4 + $0x20] sm:$0xff]
  %v4406 = vld [vmem:[#allocation4 + $0x28] sm:$0xff]
  %v4407 = vld [vmem:[#allocation4 + $0x30] sm:$0xff]
  %v4408 = vld [vmem:[#allocation4 + $0x38] sm:$0xff]
  %v4409 = vld [vmem:[#allocation4 + $0x40] sm:$0xff]
  %v4410 = vld [vmem:[#allocation4 + $0x48] sm:$0xff]
  %v4411 = vld [vmem:[#allocation4 + $0x50] sm:$0xff]
  %v4412 = vld [vmem:[#allocation4 + $0x58] sm:$0xff]
  %v4413 = vld [vmem:[#allocation4 + $0x60] sm:$0xff]
  %v4414 = vld [vmem:[#allocation4 + $0x68] sm:$0xff]
  %v4415 = vld [vmem:[#allocation4 + $0x70] sm:$0xff]
  %v4416 = vld [vmem:[#allocation4 + $0x78] sm:$0xff]
  %v4417 = vld [vmem:[#allocation4 + $0x80] sm:$0xff]
  %4435 = vrot.lane.b32.xlu0 %v4401, 112
  %v4436 = vpop.permute.xlu0 %4435
  %4437 = vrot.lane.b32.xlu0 %v4402, 112
  %v4438 = vpop.permute.xlu0 %4437
  %4439 = vrot.lane.b32.xlu0 %v4403, 112
  %v4440 = vpop.permute.xlu0 %4439
  %4441 = vrot.lane.b32.xlu0 %v4404, 112
  %v4442 = vpop.permute.xlu0 %4441
  %4443 = vrot.lane.b32.xlu0 %v4405, 112
  %v4444 = vpop.permute.xlu0 %4443
  %4445 = vrot.lane.b32.xlu0 %v4406, 112
  %v4446 = vpop.permute.xlu0 %4445
  %4447 = vrot.lane.b32.xlu0 %v4407, 112
  %v4448 = vpop.permute.xlu0 %4447
  %4449 = vrot.lane.b32.xlu0 %v4408, 112
  %v4450 = vpop.permute.xlu0 %4449
  %4451 = vrot.lane.b32.xlu0 %v4409, 112
  %v4452 = vpop.permute.xlu0 %4451
  %4453 = vrot.lane.b32.xlu0 %v4410, 112
  %v4454 = vpop.permute.xlu0 %4453
  %4455 = vrot.lane.b32.xlu0 %v4411, 112
  %v4456 = vpop.permute.xlu0 %4455
  %4457 = vrot.lane.b32.xlu0 %v4412, 112
  %v4458 = vpop.permute.xlu0 %4457
  %4459 = vrot.lane.b32.xlu0 %v4413, 112
  %v4460 = vpop.permute.xlu0 %4459
  %4461 = vrot.lane.b32.xlu0 %v4414, 112
  %v4462 = vpop.permute.xlu0 %4461
  %4463 = vrot.lane.b32.xlu0 %v4415, 112
  %v4464 = vpop.permute.xlu0 %4463
  %4465 = vrot.lane.b32.xlu0 %v4416, 112
  %v4466 = vpop.permute.xlu0 %4465
  %4467 = vrot.lane.b32.xlu0 %v4417, 112
  %v4468 = vpop.permute.xlu0 %4467
  %vm4469 = vcmask 916480
  %v4470 = vsel %vm4469, %v4436, %v4438
  %v4471 = vsel %vm4469, %v4438, %v4440
  %v4472 = vsel %vm4469, %v4440, %v4442
  %v4473 = vsel %vm4469, %v4442, %v4444
  %v4474 = vsel %vm4469, %v4444, %v4446
  %v4475 = vsel %vm4469, %v4446, %v4448
  %v4476 = vsel %vm4469, %v4448, %v4450
  %v4477 = vsel %vm4469, %v4450, %v4452
  %v4478 = vsel %vm4469, %v4452, %v4454
  %v4479 = vsel %vm4469, %v4454, %v4456
  %v4480 = vsel %vm4469, %v4456, %v4458
  %v4481 = vsel %vm4469, %v4458, %v4460
  %v4482 = vsel %vm4469, %v4460, %v4462
  %v4483 = vsel %vm4469, %v4462, %v4464
  %v4484 = vsel %vm4469, %v4464, %v4466
  %v4485 = vsel %vm4469, %v4466, %v4468
  %4502 = vst [vmem:[#allocation2 + $0x200] sm:$0xff] %v4470
  %4503 = vst [vmem:[#allocation2 + $0x208] sm:$0xff] %v4471
  %4504 = vst [vmem:[#allocation2 + $0x210] sm:$0xff] %v4472
  %4505 = vst [vmem:[#allocation2 + $0x218] sm:$0xff] %v4473
  %4506 = vst [vmem:[#allocation2 + $0x220] sm:$0xff] %v4474
  %4507 = vst [vmem:[#allocation2 + $0x228] sm:$0xff] %v4475
  %4508 = vst [vmem:[#allocation2 + $0x230] sm:$0xff] %v4476
  %4509 = vst [vmem:[#allocation2 + $0x238] sm:$0xff] %v4477
  %4510 = vst [vmem:[#allocation2 + $0x240] sm:$0xff] %v4478
  %4511 = vst [vmem:[#allocation2 + $0x248] sm:$0xff] %v4479
  %4512 = vst [vmem:[#allocation2 + $0x250] sm:$0xff] %v4480
  %4513 = vst [vmem:[#allocation2 + $0x258] sm:$0xff] %v4481
  %4514 = vst [vmem:[#allocation2 + $0x260] sm:$0xff] %v4482
  %4515 = vst [vmem:[#allocation2 + $0x268] sm:$0xff] %v4483
  %4516 = vst [vmem:[#allocation2 + $0x270] sm:$0xff] %v4484
  %4517 = vst [vmem:[#allocation2 + $0x278] sm:$0xff] %v4485
  %v4518 = vld [vmem:[#allocation4 + $0x8] sm:$0xff]
  %v4519 = vld [vmem:[#allocation4 + $0x10] sm:$0xff]
  %v4520 = vld [vmem:[#allocation4 + $0x18] sm:$0xff]
  %v4521 = vld [vmem:[#allocation4 + $0x20] sm:$0xff]
  %v4522 = vld [vmem:[#allocation4 + $0x28] sm:$0xff]
  %v4523 = vld [vmem:[#allocation4 + $0x30] sm:$0xff]
  %v4524 = vld [vmem:[#allocation4 + $0x38] sm:$0xff]
  %v4525 = vld [vmem:[#allocation4 + $0x40] sm:$0xff]
  %v4526 = vld [vmem:[#allocation4 + $0x48] sm:$0xff]
  %v4527 = vld [vmem:[#allocation4 + $0x50] sm:$0xff]
  %v4528 = vld [vmem:[#allocation4 + $0x58] sm:$0xff]
  %v4529 = vld [vmem:[#allocation4 + $0x60] sm:$0xff]
  %v4530 = vld [vmem:[#allocation4 + $0x68] sm:$0xff]
  %v4531 = vld [vmem:[#allocation4 + $0x70] sm:$0xff]
  %v4532 = vld [vmem:[#allocation4 + $0x78] sm:$0xff]
  %v4533 = vld [vmem:[#allocation4 + $0x80] sm:$0xff]
  %4534 = vst [vmem:[#allocation2 + $0x280] sm:$0xff] %v4518
  %4535 = vst [vmem:[#allocation2 + $0x288] sm:$0xff] %v4519
  %4536 = vst [vmem:[#allocation2 + $0x290] sm:$0xff] %v4520
  %4537 = vst [vmem:[#allocation2 + $0x298] sm:$0xff] %v4521
  %4538 = vst [vmem:[#allocation2 + $0x2a0] sm:$0xff] %v4522
  %4539 = vst [vmem:[#allocation2 + $0x2a8] sm:$0xff] %v4523
  %4540 = vst [vmem:[#allocation2 + $0x2b0] sm:$0xff] %v4524
  %4541 = vst [vmem:[#allocation2 + $0x2b8] sm:$0xff] %v4525
  %4542 = vst [vmem:[#allocation2 + $0x2c0] sm:$0xff] %v4526
  %4543 = vst [vmem:[#allocation2 + $0x2c8] sm:$0xff] %v4527
  %4544 = vst [vmem:[#allocation2 + $0x2d0] sm:$0xff] %v4528
  %4545 = vst [vmem:[#allocation2 + $0x2d8] sm:$0xff] %v4529
  %4546 = vst [vmem:[#allocation2 + $0x2e0] sm:$0xff] %v4530
  %4547 = vst [vmem:[#allocation2 + $0x2e8] sm:$0xff] %v4531
  %4548 = vst [vmem:[#allocation2 + $0x2f0] sm:$0xff] %v4532
  %4549 = vst [vmem:[#allocation2 + $0x2f8] sm:$0xff] %v4533
  %v4550 = vld [vmem:[#allocation4 + $0x8] sm:$0xff]
  %v4551 = vld [vmem:[#allocation4 + $0x10] sm:$0xff]
  %v4552 = vld [vmem:[#allocation4 + $0x18] sm:$0xff]
  %v4553 = vld [vmem:[#allocation4 + $0x20] sm:$0xff]
  %v4554 = vld [vmem:[#allocation4 + $0x28] sm:$0xff]
  %v4555 = vld [vmem:[#allocation4 + $0x30] sm:$0xff]
  %v4556 = vld [vmem:[#allocation4 + $0x38] sm:$0xff]
  %v4557 = vld [vmem:[#allocation4 + $0x40] sm:$0xff]
  %v4558 = vld [vmem:[#allocation4 + $0x48] sm:$0xff]
  %v4559 = vld [vmem:[#allocation4 + $0x50] sm:$0xff]
  %v4560 = vld [vmem:[#allocation4 + $0x58] sm:$0xff]
  %v4561 = vld [vmem:[#allocation4 + $0x60] sm:$0xff]
  %v4562 = vld [vmem:[#allocation4 + $0x68] sm:$0xff]
  %v4563 = vld [vmem:[#allocation4 + $0x70] sm:$0xff]
  %v4564 = vld [vmem:[#allocation4 + $0x78] sm:$0xff]
  %v4565 = vld [vmem:[#allocation4 + $0x80] sm:$0xff]
  %v4566 = vld [vmem:[#allocation4 + $0x88] sm:$0xff]
  %4584 = vrot.lane.b32.xlu0 %v4550, 124
  %v4585 = vpop.permute.xlu0 %4584
  %4586 = vrot.lane.b32.xlu0 %v4551, 124
  %v4587 = vpop.permute.xlu0 %4586
  %4588 = vrot.lane.b32.xlu0 %v4552, 124
  %v4589 = vpop.permute.xlu0 %4588
  %4590 = vrot.lane.b32.xlu0 %v4553, 124
  %v4591 = vpop.permute.xlu0 %4590
  %4592 = vrot.lane.b32.xlu0 %v4554, 124
  %v4593 = vpop.permute.xlu0 %4592
  %4594 = vrot.lane.b32.xlu0 %v4555, 124
  %v4595 = vpop.permute.xlu0 %4594
  %4596 = vrot.lane.b32.xlu0 %v4556, 124
  %v4597 = vpop.permute.xlu0 %4596
  %4598 = vrot.lane.b32.xlu0 %v4557, 124
  %v4599 = vpop.permute.xlu0 %4598
  %4600 = vrot.lane.b32.xlu0 %v4558, 124
  %v4601 = vpop.permute.xlu0 %4600
  %4602 = vrot.lane.b32.xlu0 %v4559, 124
  %v4603 = vpop.permute.xlu0 %4602
  %4604 = vrot.lane.b32.xlu0 %v4560, 124
  %v4605 = vpop.permute.xlu0 %4604
  %4606 = vrot.lane.b32.xlu0 %v4561, 124
  %v4607 = vpop.permute.xlu0 %4606
  %4608 = vrot.lane.b32.xlu0 %v4562, 124
  %v4609 = vpop.permute.xlu0 %4608
  %4610 = vrot.lane.b32.xlu0 %v4563, 124
  %v4611 = vpop.permute.xlu0 %4610
  %4612 = vrot.lane.b32.xlu0 %v4564, 124
  %v4613 = vpop.permute.xlu0 %4612
  %4614 = vrot.lane.b32.xlu0 %v4565, 124
  %v4615 = vpop.permute.xlu0 %4614
  %4616 = vrot.lane.b32.xlu0 %v4566, 124
  %v4617 = vpop.permute.xlu0 %4616
  %v4618 = vsel %vm269, %v4585, %v4587
  %v4619 = vsel %vm269, %v4587, %v4589
  %v4620 = vsel %vm269, %v4589, %v4591
  %v4621 = vsel %vm269, %v4591, %v4593
  %v4622 = vsel %vm269, %v4593, %v4595
  %v4623 = vsel %vm269, %v4595, %v4597
  %v4624 = vsel %vm269, %v4597, %v4599
  %v4625 = vsel %vm269, %v4599, %v4601
  %v4626 = vsel %vm269, %v4601, %v4603
  %v4627 = vsel %vm269, %v4603, %v4605
  %v4628 = vsel %vm269, %v4605, %v4607
  %v4629 = vsel %vm269, %v4607, %v4609
  %v4630 = vsel %vm269, %v4609, %v4611
  %v4631 = vsel %vm269, %v4611, %v4613
  %v4632 = vsel %vm269, %v4613, %v4615
  %v4633 = vsel %vm269, %v4615, %v4617
  %4650 = vst [vmem:[#allocation2 + $0x300] sm:$0xff] %v4618
  %4651 = vst [vmem:[#allocation2 + $0x308] sm:$0xff] %v4619
  %4652 = vst [vmem:[#allocation2 + $0x310] sm:$0xff] %v4620
  %4653 = vst [vmem:[#allocation2 + $0x318] sm:$0xff] %v4621
  %4654 = vst [vmem:[#allocation2 + $0x320] sm:$0xff] %v4622
  %4655 = vst [vmem:[#allocation2 + $0x328] sm:$0xff] %v4623
  %4656 = vst [vmem:[#allocation2 + $0x330] sm:$0xff] %v4624
  %4657 = vst [vmem:[#allocation2 + $0x338] sm:$0xff] %v4625
  %4658 = vst [vmem:[#allocation2 + $0x340] sm:$0xff] %v4626
  %4659 = vst [vmem:[#allocation2 + $0x348] sm:$0xff] %v4627
  %4660 = vst [vmem:[#allocation2 + $0x350] sm:$0xff] %v4628
  %4661 = vst [vmem:[#allocation2 + $0x358] sm:$0xff] %v4629
  %4662 = vst [vmem:[#allocation2 + $0x360] sm:$0xff] %v4630
  %4663 = vst [vmem:[#allocation2 + $0x368] sm:$0xff] %v4631
  %4664 = vst [vmem:[#allocation2 + $0x370] sm:$0xff] %v4632
  %4665 = vst [vmem:[#allocation2 + $0x378] sm:$0xff] %v4633
  %v4666 = vld [vmem:[#allocation4 + $0x8] sm:$0xff]
  %v4667 = vld [vmem:[#allocation4 + $0x10] sm:$0xff]
  %v4668 = vld [vmem:[#allocation4 + $0x18] sm:$0xff]
  %v4669 = vld [vmem:[#allocation4 + $0x20] sm:$0xff]
  %v4670 = vld [vmem:[#allocation4 + $0x28] sm:$0xff]
  %v4671 = vld [vmem:[#allocation4 + $0x30] sm:$0xff]
  %v4672 = vld [vmem:[#allocation4 + $0x38] sm:$0xff]
  %v4673 = vld [vmem:[#allocation4 + $0x40] sm:$0xff]
  %v4674 = vld [vmem:[#allocation4 + $0x48] sm:$0xff]
  %v4675 = vld [vmem:[#allocation4 + $0x50] sm:$0xff]
  %v4676 = vld [vmem:[#allocation4 + $0x58] sm:$0xff]
  %v4677 = vld [vmem:[#allocation4 + $0x60] sm:$0xff]
  %v4678 = vld [vmem:[#allocation4 + $0x68] sm:$0xff]
  %v4679 = vld [vmem:[#allocation4 + $0x70] sm:$0xff]
  %v4680 = vld [vmem:[#allocation4 + $0x78] sm:$0xff]
  %v4681 = vld [vmem:[#allocation4 + $0x80] sm:$0xff]
  %v4682 = vld [vmem:[#allocation4 + $0x88] sm:$0xff]
  %4700 = vrot.lane.b32.xlu0 %v4666, 120
  %v4701 = vpop.permute.xlu0 %4700
  %4702 = vrot.lane.b32.xlu0 %v4667, 120
  %v4703 = vpop.permute.xlu0 %4702
  %4704 = vrot.lane.b32.xlu0 %v4668, 120
  %v4705 = vpop.permute.xlu0 %4704
  %4706 = vrot.lane.b32.xlu0 %v4669, 120
  %v4707 = vpop.permute.xlu0 %4706
  %4708 = vrot.lane.b32.xlu0 %v4670, 120
  %v4709 = vpop.permute.xlu0 %4708
  %4710 = vrot.lane.b32.xlu0 %v4671, 120
  %v4711 = vpop.permute.xlu0 %4710
  %4712 = vrot.lane.b32.xlu0 %v4672, 120
  %v4713 = vpop.permute.xlu0 %4712
  %4714 = vrot.lane.b32.xlu0 %v4673, 120
  %v4715 = vpop.permute.xlu0 %4714
  %4716 = vrot.lane.b32.xlu0 %v4674, 120
  %v4717 = vpop.permute.xlu0 %4716
  %4718 = vrot.lane.b32.xlu0 %v4675, 120
  %v4719 = vpop.permute.xlu0 %4718
  %4720 = vrot.lane.b32.xlu0 %v4676, 120
  %v4721 = vpop.permute.xlu0 %4720
  %4722 = vrot.lane.b32.xlu0 %v4677, 120
  %v4723 = vpop.permute.xlu0 %4722
  %4724 = vrot.lane.b32.xlu0 %v4678, 120
  %v4725 = vpop.permute.xlu0 %4724
  %4726 = vrot.lane.b32.xlu0 %v4679, 120
  %v4727 = vpop.permute.xlu0 %4726
  %4728 = vrot.lane.b32.xlu0 %v4680, 120
  %v4729 = vpop.permute.xlu0 %4728
  %4730 = vrot.lane.b32.xlu0 %v4681, 120
  %v4731 = vpop.permute.xlu0 %4730
  %4732 = vrot.lane.b32.xlu0 %v4682, 120
  %v4733 = vpop.permute.xlu0 %4732
  %v4734 = vsel %vm503, %v4701, %v4703
  %v4735 = vsel %vm503, %v4703, %v4705
  %v4736 = vsel %vm503, %v4705, %v4707
  %v4737 = vsel %vm503, %v4707, %v4709
  %v4738 = vsel %vm503, %v4709, %v4711
  %v4739 = vsel %vm503, %v4711, %v4713
  %v4740 = vsel %vm503, %v4713, %v4715
  %v4741 = vsel %vm503, %v4715, %v4717
  %v4742 = vsel %vm503, %v4717, %v4719
  %v4743 = vsel %vm503, %v4719, %v4721
  %v4744 = vsel %vm503, %v4721, %v4723
  %v4745 = vsel %vm503, %v4723, %v4725
  %v4746 = vsel %vm503, %v4725, %v4727
  %v4747 = vsel %vm503, %v4727, %v4729
  %v4748 = vsel %vm503, %v4729, %v4731
  %v4749 = vsel %vm503, %v4731, %v4733
  %4766 = vst [vmem:[#allocation2 + $0x380] sm:$0xff] %v4734
  %4767 = vst [vmem:[#allocation2 + $0x388] sm:$0xff] %v4735
  %4768 = vst [vmem:[#allocation2 + $0x390] sm:$0xff] %v4736
  %4769 = vst [vmem:[#allocation2 + $0x398] sm:$0xff] %v4737
  %4770 = vst [vmem:[#allocation2 + $0x3a0] sm:$0xff] %v4738
  %4771 = vst [vmem:[#allocation2 + $0x3a8] sm:$0xff] %v4739
  %4772 = vst [vmem:[#allocation2 + $0x3b0] sm:$0xff] %v4740
  %4773 = vst [vmem:[#allocation2 + $0x3b8] sm:$0xff] %v4741
  %4774 = vst [vmem:[#allocation2 + $0x3c0] sm:$0xff] %v4742
  %4775 = vst [vmem:[#allocation2 + $0x3c8] sm:$0xff] %v4743
  %4776 = vst [vmem:[#allocation2 + $0x3d0] sm:$0xff] %v4744
  %4777 = vst [vmem:[#allocation2 + $0x3d8] sm:$0xff] %v4745
  %4778 = vst [vmem:[#allocation2 + $0x3e0] sm:$0xff] %v4746
  %4779 = vst [vmem:[#allocation2 + $0x3e8] sm:$0xff] %v4747
  %4780 = vst [vmem:[#allocation2 + $0x3f0] sm:$0xff] %v4748
  %4781 = vst [vmem:[#allocation2 + $0x3f8] sm:$0xff] %v4749
  %v4782 = vld [vmem:[#allocation4 + $0x8] sm:$0xff]
  %v4783 = vld [vmem:[#allocation4 + $0x10] sm:$0xff]
  %v4784 = vld [vmem:[#allocation4 + $0x18] sm:$0xff]
  %v4785 = vld [vmem:[#allocation4 + $0x20] sm:$0xff]
  %v4786 = vld [vmem:[#allocation4 + $0x28] sm:$0xff]
  %v4787 = vld [vmem:[#allocation4 + $0x30] sm:$0xff]
  %v4788 = vld [vmem:[#allocation4 + $0x38] sm:$0xff]
  %v4789 = vld [vmem:[#allocation4 + $0x40] sm:$0xff]
  %v4790 = vld [vmem:[#allocation4 + $0x48] sm:$0xff]
  %v4791 = vld [vmem:[#allocation4 + $0x50] sm:$0xff]
  %v4792 = vld [vmem:[#allocation4 + $0x58] sm:$0xff]
  %v4793 = vld [vmem:[#allocation4 + $0x60] sm:$0xff]
  %v4794 = vld [vmem:[#allocation4 + $0x68] sm:$0xff]
  %v4795 = vld [vmem:[#allocation4 + $0x70] sm:$0xff]
  %v4796 = vld [vmem:[#allocation4 + $0x78] sm:$0xff]
  %v4797 = vld [vmem:[#allocation4 + $0x80] sm:$0xff]
  %v4798 = vld [vmem:[#allocation4 + $0x88] sm:$0xff]
  %4816 = vrot.lane.b32.xlu0 %v4782, 116
  %v4817 = vpop.permute.xlu0 %4816
  %4818 = vrot.lane.b32.xlu0 %v4783, 116
  %v4819 = vpop.permute.xlu0 %4818
  %4820 = vrot.lane.b32.xlu0 %v4784, 116
  %v4821 = vpop.permute.xlu0 %4820
  %4822 = vrot.lane.b32.xlu0 %v4785, 116
  %v4823 = vpop.permute.xlu0 %4822
  %4824 = vrot.lane.b32.xlu0 %v4786, 116
  %v4825 = vpop.permute.xlu0 %4824
  %4826 = vrot.lane.b32.xlu0 %v4787, 116
  %v4827 = vpop.permute.xlu0 %4826
  %4828 = vrot.lane.b32.xlu0 %v4788, 116
  %v4829 = vpop.permute.xlu0 %4828
  %4830 = vrot.lane.b32.xlu0 %v4789, 116
  %v4831 = vpop.permute.xlu0 %4830
  %4832 = vrot.lane.b32.xlu0 %v4790, 116
  %v4833 = vpop.permute.xlu0 %4832
  %4834 = vrot.lane.b32.xlu0 %v4791, 116
  %v4835 = vpop.permute.xlu0 %4834
  %4836 = vrot.lane.b32.xlu0 %v4792, 116
  %v4837 = vpop.permute.xlu0 %4836
  %4838 = vrot.lane.b32.xlu0 %v4793, 116
  %v4839 = vpop.permute.xlu0 %4838
  %4840 = vrot.lane.b32.xlu0 %v4794, 116
  %v4841 = vpop.permute.xlu0 %4840
  %4842 = vrot.lane.b32.xlu0 %v4795, 116
  %v4843 = vpop.permute.xlu0 %4842
  %4844 = vrot.lane.b32.xlu0 %v4796, 116
  %v4845 = vpop.permute.xlu0 %4844
  %4846 = vrot.lane.b32.xlu0 %v4797, 116
  %v4847 = vpop.permute.xlu0 %4846
  %4848 = vrot.lane.b32.xlu0 %v4798, 116
  %v4849 = vpop.permute.xlu0 %4848
  %v4850 = vsel %vm4352, %v4817, %v4819
  %v4851 = vsel %vm4352, %v4819, %v4821
  %v4852 = vsel %vm4352, %v4821, %v4823
  %v4853 = vsel %vm4352, %v4823, %v4825
  %v4854 = vsel %vm4352, %v4825, %v4827
  %v4855 = vsel %vm4352, %v4827, %v4829
  %v4856 = vsel %vm4352, %v4829, %v4831
  %v4857 = vsel %vm4352, %v4831, %v4833
  %v4858 = vsel %vm4352, %v4833, %v4835
  %v4859 = vsel %vm4352, %v4835, %v4837
  %v4860 = vsel %vm4352, %v4837, %v4839
  %v4861 = vsel %vm4352, %v4839, %v4841
  %v4862 = vsel %vm4352, %v4841, %v4843
  %v4863 = vsel %vm4352, %v4843, %v4845
  %v4864 = vsel %vm4352, %v4845, %v4847
  %v4865 = vsel %vm4352, %v4847, %v4849
  %4882 = vst [vmem:[#allocation2 + $0x400] sm:$0xff] %v4850
  %4883 = vst [vmem:[#allocation2 + $0x408] sm:$0xff] %v4851
  %4884 = vst [vmem:[#allocation2 + $0x410] sm:$0xff] %v4852
  %4885 = vst [vmem:[#allocation2 + $0x418] sm:$0xff] %v4853
  %4886 = vst [vmem:[#allocation2 + $0x420] sm:$0xff] %v4854
  %4887 = vst [vmem:[#allocation2 + $0x428] sm:$0xff] %v4855
  %4888 = vst [vmem:[#allocation2 + $0x430] sm:$0xff] %v4856
  %4889 = vst [vmem:[#allocation2 + $0x438] sm:$0xff] %v4857
  %4890 = vst [vmem:[#allocation2 + $0x440] sm:$0xff] %v4858
  %4891 = vst [vmem:[#allocation2 + $0x448] sm:$0xff] %v4859
  %4892 = vst [vmem:[#allocation2 + $0x450] sm:$0xff] %v4860
  %4893 = vst [vmem:[#allocation2 + $0x458] sm:$0xff] %v4861
  %4894 = vst [vmem:[#allocation2 + $0x460] sm:$0xff] %v4862
  %4895 = vst [vmem:[#allocation2 + $0x468] sm:$0xff] %v4863
  %4896 = vst [vmem:[#allocation2 + $0x470] sm:$0xff] %v4864
  %4897 = vst [vmem:[#allocation2 + $0x478] sm:$0xff] %v4865
  %v4898 = vld [vmem:[#allocation4 + $0x8] sm:$0xff]
  %v4899 = vld [vmem:[#allocation4 + $0x10] sm:$0xff]
  %v4900 = vld [vmem:[#allocation4 + $0x18] sm:$0xff]
  %v4901 = vld [vmem:[#allocation4 + $0x20] sm:$0xff]
  %v4902 = vld [vmem:[#allocation4 + $0x28] sm:$0xff]
  %v4903 = vld [vmem:[#allocation4 + $0x30] sm:$0xff]
  %v4904 = vld [vmem:[#allocation4 + $0x38] sm:$0xff]
  %v4905 = vld [vmem:[#allocation4 + $0x40] sm:$0xff]
  %v4906 = vld [vmem:[#allocation4 + $0x48] sm:$0xff]
  %v4907 = vld [vmem:[#allocation4 + $0x50] sm:$0xff]
  %v4908 = vld [vmem:[#allocation4 + $0x58] sm:$0xff]
  %v4909 = vld [vmem:[#allocation4 + $0x60] sm:$0xff]
  %v4910 = vld [vmem:[#allocation4 + $0x68] sm:$0xff]
  %v4911 = vld [vmem:[#allocation4 + $0x70] sm:$0xff]
  %v4912 = vld [vmem:[#allocation4 + $0x78] sm:$0xff]
  %v4913 = vld [vmem:[#allocation4 + $0x80] sm:$0xff]
  %v4914 = vld [vmem:[#allocation4 + $0x88] sm:$0xff]
  %4932 = vrot.lane.b32.xlu0 %v4898, 112
  %v4933 = vpop.permute.xlu0 %4932
  %4934 = vrot.lane.b32.xlu0 %v4899, 112
  %v4935 = vpop.permute.xlu0 %4934
  %4936 = vrot.lane.b32.xlu0 %v4900, 112
  %v4937 = vpop.permute.xlu0 %4936
  %4938 = vrot.lane.b32.xlu0 %v4901, 112
  %v4939 = vpop.permute.xlu0 %4938
  %4940 = vrot.lane.b32.xlu0 %v4902, 112
  %v4941 = vpop.permute.xlu0 %4940
  %4942 = vrot.lane.b32.xlu0 %v4903, 112
  %v4943 = vpop.permute.xlu0 %4942
  %4944 = vrot.lane.b32.xlu0 %v4904, 112
  %v4945 = vpop.permute.xlu0 %4944
  %4946 = vrot.lane.b32.xlu0 %v4905, 112
  %v4947 = vpop.permute.xlu0 %4946
  %4948 = vrot.lane.b32.xlu0 %v4906, 112
  %v4949 = vpop.permute.xlu0 %4948
  %4950 = vrot.lane.b32.xlu0 %v4907, 112
  %v4951 = vpop.permute.xlu0 %4950
  %4952 = vrot.lane.b32.xlu0 %v4908, 112
  %v4953 = vpop.permute.xlu0 %4952
  %4954 = vrot.lane.b32.xlu0 %v4909, 112
  %v4955 = vpop.permute.xlu0 %4954
  %4956 = vrot.lane.b32.xlu0 %v4910, 112
  %v4957 = vpop.permute.xlu0 %4956
  %4958 = vrot.lane.b32.xlu0 %v4911, 112
  %v4959 = vpop.permute.xlu0 %4958
  %4960 = vrot.lane.b32.xlu0 %v4912, 112
  %v4961 = vpop.permute.xlu0 %4960
  %4962 = vrot.lane.b32.xlu0 %v4913, 112
  %v4963 = vpop.permute.xlu0 %4962
  %4964 = vrot.lane.b32.xlu0 %v4914, 112
  %v4965 = vpop.permute.xlu0 %4964
  %v4966 = vsel %vm4469, %v4933, %v4935
  %v4967 = vsel %vm4469, %v4935, %v4937
  %v4968 = vsel %vm4469, %v4937, %v4939
  %v4969 = vsel %vm4469, %v4939, %v4941
  %v4970 = vsel %vm4469, %v4941, %v4943
  %v4971 = vsel %vm4469, %v4943, %v4945
  %v4972 = vsel %vm4469, %v4945, %v4947
  %v4973 = vsel %vm4469, %v4947, %v4949
  %v4974 = vsel %vm4469, %v4949, %v4951
  %v4975 = vsel %vm4469, %v4951, %v4953
  %v4976 = vsel %vm4469, %v4953, %v4955
  %v4977 = vsel %vm4469, %v4955, %v4957
  %v4978 = vsel %vm4469, %v4957, %v4959
  %v4979 = vsel %vm4469, %v4959, %v4961
  %v4980 = vsel %vm4469, %v4961, %v4963
  %v4981 = vsel %vm4469, %v4963, %v4965
  %4998 = vst [vmem:[#allocation2 + $0x480] sm:$0xff] %v4966
  %4999 = vst [vmem:[#allocation2 + $0x488] sm:$0xff] %v4967
  %5000 = vst [vmem:[#allocation2 + $0x490] sm:$0xff] %v4968
  %5001 = vst [vmem:[#allocation2 + $0x498] sm:$0xff] %v4969
  %5002 = vst [vmem:[#allocation2 + $0x4a0] sm:$0xff] %v4970
  %5003 = vst [vmem:[#allocation2 + $0x4a8] sm:$0xff] %v4971
  %5004 = vst [vmem:[#allocation2 + $0x4b0] sm:$0xff] %v4972
  %5005 = vst [vmem:[#allocation2 + $0x4b8] sm:$0xff] %v4973
  %5006 = vst [vmem:[#allocation2 + $0x4c0] sm:$0xff] %v4974
  %5007 = vst [vmem:[#allocation2 + $0x4c8] sm:$0xff] %v4975
  %5008 = vst [vmem:[#allocation2 + $0x4d0] sm:$0xff] %v4976
  %5009 = vst [vmem:[#allocation2 + $0x4d8] sm:$0xff] %v4977
  %5010 = vst [vmem:[#allocation2 + $0x4e0] sm:$0xff] %v4978
  %5011 = vst [vmem:[#allocation2 + $0x4e8] sm:$0xff] %v4979
  %5012 = vst [vmem:[#allocation2 + $0x4f0] sm:$0xff] %v4980
  %5013 = vst [vmem:[#allocation2 + $0x4f8] sm:$0xff] %v4981
  %v5014 = vld [vmem:[#allocation4 + $0x10] sm:$0xff]
  %v5015 = vld [vmem:[#allocation4 + $0x18] sm:$0xff]
  %v5016 = vld [vmem:[#allocation4 + $0x20] sm:$0xff]
  %v5017 = vld [vmem:[#allocation4 + $0x28] sm:$0xff]
  %v5018 = vld [vmem:[#allocation4 + $0x30] sm:$0xff]
  %v5019 = vld [vmem:[#allocation4 + $0x38] sm:$0xff]
  %v5020 = vld [vmem:[#allocation4 + $0x40] sm:$0xff]
  %v5021 = vld [vmem:[#allocation4 + $0x48] sm:$0xff]
  %v5022 = vld [vmem:[#allocation4 + $0x50] sm:$0xff]
  %v5023 = vld [vmem:[#allocation4 + $0x58] sm:$0xff]
  %v5024 = vld [vmem:[#allocation4 + $0x60] sm:$0xff]
  %v5025 = vld [vmem:[#allocation4 + $0x68] sm:$0xff]
  %v5026 = vld [vmem:[#allocation4 + $0x70] sm:$0xff]
  %v5027 = vld [vmem:[#allocation4 + $0x78] sm:$0xff]
  %v5028 = vld [vmem:[#allocation4 + $0x80] sm:$0xff]
  %v5029 = vld [vmem:[#allocation4 + $0x88] sm:$0xff]
  %5030 = vst [vmem:[#allocation2 + $0x500] sm:$0xff] %v5014
  %5031 = vst [vmem:[#allocation2 + $0x508] sm:$0xff] %v5015
  %5032 = vst [vmem:[#allocation2 + $0x510] sm:$0xff] %v5016
  %5033 = vst [vmem:[#allocation2 + $0x518] sm:$0xff] %v5017
  %5034 = vst [vmem:[#allocation2 + $0x520] sm:$0xff] %v5018
  %5035 = vst [vmem:[#allocation2 + $0x528] sm:$0xff] %v5019
  %5036 = vst [vmem:[#allocation2 + $0x530] sm:$0xff] %v5020
  %5037 = vst [vmem:[#allocation2 + $0x538] sm:$0xff] %v5021
  %5038 = vst [vmem:[#allocation2 + $0x540] sm:$0xff] %v5022
  %5039 = vst [vmem:[#allocation2 + $0x548] sm:$0xff] %v5023
  %5040 = vst [vmem:[#allocation2 + $0x550] sm:$0xff] %v5024
  %5041 = vst [vmem:[#allocation2 + $0x558] sm:$0xff] %v5025
  %5042 = vst [vmem:[#allocation2 + $0x560] sm:$0xff] %v5026
  %5043 = vst [vmem:[#allocation2 + $0x568] sm:$0xff] %v5027
  %5044 = vst [vmem:[#allocation2 + $0x570] sm:$0xff] %v5028
  %5045 = vst [vmem:[#allocation2 + $0x578] sm:$0xff] %v5029
  %v5046 = vld [vmem:[#allocation4 + $0x10] sm:$0xff]
  %v5047 = vld [vmem:[#allocation4 + $0x18] sm:$0xff]
  %v5048 = vld [vmem:[#allocation4 + $0x20] sm:$0xff]
  %v5049 = vld [vmem:[#allocation4 + $0x28] sm:$0xff]
  %v5050 = vld [vmem:[#allocation4 + $0x30] sm:$0xff]
  %v5051 = vld [vmem:[#allocation4 + $0x38] sm:$0xff]
  %v5052 = vld [vmem:[#allocation4 + $0x40] sm:$0xff]
  %v5053 = vld [vmem:[#allocation4 + $0x48] sm:$0xff]
  %v5054 = vld [vmem:[#allocation4 + $0x50] sm:$0xff]
  %v5055 = vld [vmem:[#allocation4 + $0x58] sm:$0xff]
  %v5056 = vld [vmem:[#allocation4 + $0x60] sm:$0xff]
  %v5057 = vld [vmem:[#allocation4 + $0x68] sm:$0xff]
  %v5058 = vld [vmem:[#allocation4 + $0x70] sm:$0xff]
  %v5059 = vld [vmem:[#allocation4 + $0x78] sm:$0xff]
  %v5060 = vld [vmem:[#allocation4 + $0x80] sm:$0xff]
  %v5061 = vld [vmem:[#allocation4 + $0x88] sm:$0xff]
  %v5062 = vld [vmem:[#allocation4 + $0x90] sm:$0xff]
  %5080 = vrot.lane.b32.xlu0 %v5046, 124
  %v5081 = vpop.permute.xlu0 %5080
  %5082 = vrot.lane.b32.xlu0 %v5047, 124
  %v5083 = vpop.permute.xlu0 %5082
  %5084 = vrot.lane.b32.xlu0 %v5048, 124
  %v5085 = vpop.permute.xlu0 %5084
  %5086 = vrot.lane.b32.xlu0 %v5049, 124
  %v5087 = vpop.permute.xlu0 %5086
  %5088 = vrot.lane.b32.xlu0 %v5050, 124
  %v5089 = vpop.permute.xlu0 %5088
  %5090 = vrot.lane.b32.xlu0 %v5051, 124
  %v5091 = vpop.permute.xlu0 %5090
  %5092 = vrot.lane.b32.xlu0 %v5052, 124
  %v5093 = vpop.permute.xlu0 %5092
  %5094 = vrot.lane.b32.xlu0 %v5053, 124
  %v5095 = vpop.permute.xlu0 %5094
  %5096 = vrot.lane.b32.xlu0 %v5054, 124
  %v5097 = vpop.permute.xlu0 %5096
  %5098 = vrot.lane.b32.xlu0 %v5055, 124
  %v5099 = vpop.permute.xlu0 %5098
  %5100 = vrot.lane.b32.xlu0 %v5056, 124
  %v5101 = vpop.permute.xlu0 %5100
  %5102 = vrot.lane.b32.xlu0 %v5057, 124
  %v5103 = vpop.permute.xlu0 %5102
  %5104 = vrot.lane.b32.xlu0 %v5058, 124
  %v5105 = vpop.permute.xlu0 %5104
  %5106 = vrot.lane.b32.xlu0 %v5059, 124
  %v5107 = vpop.permute.xlu0 %5106
  %5108 = vrot.lane.b32.xlu0 %v5060, 124
  %v5109 = vpop.permute.xlu0 %5108
  %5110 = vrot.lane.b32.xlu0 %v5061, 124
  %v5111 = vpop.permute.xlu0 %5110
  %5112 = vrot.lane.b32.xlu0 %v5062, 124
  %v5113 = vpop.permute.xlu0 %5112
  %v5114 = vsel %vm269, %v5081, %v5083
  %v5115 = vsel %vm269, %v5083, %v5085
  %v5116 = vsel %vm269, %v5085, %v5087
  %v5117 = vsel %vm269, %v5087, %v5089
  %v5118 = vsel %vm269, %v5089, %v5091
  %v5119 = vsel %vm269, %v5091, %v5093
  %v5120 = vsel %vm269, %v5093, %v5095
  %v5121 = vsel %vm269, %v5095, %v5097
  %v5122 = vsel %vm269, %v5097, %v5099
  %v5123 = vsel %vm269, %v5099, %v5101
  %v5124 = vsel %vm269, %v5101, %v5103
  %v5125 = vsel %vm269, %v5103, %v5105
  %v5126 = vsel %vm269, %v5105, %v5107
  %v5127 = vsel %vm269, %v5107, %v5109
  %v5128 = vsel %vm269, %v5109, %v5111
  %v5129 = vsel %vm269, %v5111, %v5113
  %5146 = vst [vmem:[#allocation2 + $0x580] sm:$0xff] %v5114
  %5147 = vst [vmem:[#allocation2 + $0x588] sm:$0xff] %v5115
  %5148 = vst [vmem:[#allocation2 + $0x590] sm:$0xff] %v5116
  %5149 = vst [vmem:[#allocation2 + $0x598] sm:$0xff] %v5117
  %5150 = vst [vmem:[#allocation2 + $0x5a0] sm:$0xff] %v5118
  %5151 = vst [vmem:[#allocation2 + $0x5a8] sm:$0xff] %v5119
  %5152 = vst [vmem:[#allocation2 + $0x5b0] sm:$0xff] %v5120
  %5153 = vst [vmem:[#allocation2 + $0x5b8] sm:$0xff] %v5121
  %5154 = vst [vmem:[#allocation2 + $0x5c0] sm:$0xff] %v5122
  %5155 = vst [vmem:[#allocation2 + $0x5c8] sm:$0xff] %v5123
  %5156 = vst [vmem:[#allocation2 + $0x5d0] sm:$0xff] %v5124
  %5157 = vst [vmem:[#allocation2 + $0x5d8] sm:$0xff] %v5125
  %5158 = vst [vmem:[#allocation2 + $0x5e0] sm:$0xff] %v5126
  %5159 = vst [vmem:[#allocation2 + $0x5e8] sm:$0xff] %v5127
  %5160 = vst [vmem:[#allocation2 + $0x5f0] sm:$0xff] %v5128
  %5161 = vst [vmem:[#allocation2 + $0x5f8] sm:$0xff] %v5129
  %v5162 = vld [vmem:[#allocation4 + $0x10] sm:$0xff]
  %v5163 = vld [vmem:[#allocation4 + $0x18] sm:$0xff]
  %v5164 = vld [vmem:[#allocation4 + $0x20] sm:$0xff]
  %v5165 = vld [vmem:[#allocation4 + $0x28] sm:$0xff]
  %v5166 = vld [vmem:[#allocation4 + $0x30] sm:$0xff]
  %v5167 = vld [vmem:[#allocation4 + $0x38] sm:$0xff]
  %v5168 = vld [vmem:[#allocation4 + $0x40] sm:$0xff]
  %v5169 = vld [vmem:[#allocation4 + $0x48] sm:$0xff]
  %v5170 = vld [vmem:[#allocation4 + $0x50] sm:$0xff]
  %v5171 = vld [vmem:[#allocation4 + $0x58] sm:$0xff]
  %v5172 = vld [vmem:[#allocation4 + $0x60] sm:$0xff]
  %v5173 = vld [vmem:[#allocation4 + $0x68] sm:$0xff]
  %v5174 = vld [vmem:[#allocation4 + $0x70] sm:$0xff]
  %v5175 = vld [vmem:[#allocation4 + $0x78] sm:$0xff]
  %v5176 = vld [vmem:[#allocation4 + $0x80] sm:$0xff]
  %v5177 = vld [vmem:[#allocation4 + $0x88] sm:$0xff]
  %v5178 = vld [vmem:[#allocation4 + $0x90] sm:$0xff]
  %5196 = vrot.lane.b32.xlu0 %v5162, 120
  %v5197 = vpop.permute.xlu0 %5196
  %5198 = vrot.lane.b32.xlu0 %v5163, 120
  %v5199 = vpop.permute.xlu0 %5198
  %5200 = vrot.lane.b32.xlu0 %v5164, 120
  %v5201 = vpop.permute.xlu0 %5200
  %5202 = vrot.lane.b32.xlu0 %v5165, 120
  %v5203 = vpop.permute.xlu0 %5202
  %5204 = vrot.lane.b32.xlu0 %v5166, 120
  %v5205 = vpop.permute.xlu0 %5204
  %5206 = vrot.lane.b32.xlu0 %v5167, 120
  %v5207 = vpop.permute.xlu0 %5206
  %5208 = vrot.lane.b32.xlu0 %v5168, 120
  %v5209 = vpop.permute.xlu0 %5208
  %5210 = vrot.lane.b32.xlu0 %v5169, 120
  %v5211 = vpop.permute.xlu0 %5210
  %5212 = vrot.lane.b32.xlu0 %v5170, 120
  %v5213 = vpop.permute.xlu0 %5212
  %5214 = vrot.lane.b32.xlu0 %v5171, 120
  %v5215 = vpop.permute.xlu0 %5214
  %5216 = vrot.lane.b32.xlu0 %v5172, 120
  %v5217 = vpop.permute.xlu0 %5216
  %5218 = vrot.lane.b32.xlu0 %v5173, 120
  %v5219 = vpop.permute.xlu0 %5218
  %5220 = vrot.lane.b32.xlu0 %v5174, 120
  %v5221 = vpop.permute.xlu0 %5220
  %5222 = vrot.lane.b32.xlu0 %v5175, 120
  %v5223 = vpop.permute.xlu0 %5222
  %5224 = vrot.lane.b32.xlu0 %v5176, 120
  %v5225 = vpop.permute.xlu0 %5224
  %5226 = vrot.lane.b32.xlu0 %v5177, 120
  %v5227 = vpop.permute.xlu0 %5226
  %5228 = vrot.lane.b32.xlu0 %v5178, 120
  %v5229 = vpop.permute.xlu0 %5228
  %v5230 = vsel %vm503, %v5197, %v5199
  %v5231 = vsel %vm503, %v5199, %v5201
  %v5232 = vsel %vm503, %v5201, %v5203
  %v5233 = vsel %vm503, %v5203, %v5205
  %v5234 = vsel %vm503, %v5205, %v5207
  %v5235 = vsel %vm503, %v5207, %v5209
  %v5236 = vsel %vm503, %v5209, %v5211
  %v5237 = vsel %vm503, %v5211, %v5213
  %v5238 = vsel %vm503, %v5213, %v5215
  %v5239 = vsel %vm503, %v5215, %v5217
  %v5240 = vsel %vm503, %v5217, %v5219
  %v5241 = vsel %vm503, %v5219, %v5221
  %v5242 = vsel %vm503, %v5221, %v5223
  %v5243 = vsel %vm503, %v5223, %v5225
  %v5244 = vsel %vm503, %v5225, %v5227
  %v5245 = vsel %vm503, %v5227, %v5229
  %5262 = vst [vmem:[#allocation2 + $0x600] sm:$0xff] %v5230
  %5263 = vst [vmem:[#allocation2 + $0x608] sm:$0xff] %v5231
  %5264 = vst [vmem:[#allocation2 + $0x610] sm:$0xff] %v5232
  %5265 = vst [vmem:[#allocation2 + $0x618] sm:$0xff] %v5233
  %5266 = vst [vmem:[#allocation2 + $0x620] sm:$0xff] %v5234
  %5267 = vst [vmem:[#allocation2 + $0x628] sm:$0xff] %v5235
  %5268 = vst [vmem:[#allocation2 + $0x630] sm:$0xff] %v5236
  %5269 = vst [vmem:[#allocation2 + $0x638] sm:$0xff] %v5237
  %5270 = vst [vmem:[#allocation2 + $0x640] sm:$0xff] %v5238
  %5271 = vst [vmem:[#allocation2 + $0x648] sm:$0xff] %v5239
  %5272 = vst [vmem:[#allocation2 + $0x650] sm:$0xff] %v5240
  %5273 = vst [vmem:[#allocation2 + $0x658] sm:$0xff] %v5241
  %5274 = vst [vmem:[#allocation2 + $0x660] sm:$0xff] %v5242
  %5275 = vst [vmem:[#allocation2 + $0x668] sm:$0xff] %v5243
  %5276 = vst [vmem:[#allocation2 + $0x670] sm:$0xff] %v5244
  %5277 = vst [vmem:[#allocation2 + $0x678] sm:$0xff] %v5245
  %v5278 = vld [vmem:[#allocation4 + $0x10] sm:$0xff]
  %v5279 = vld [vmem:[#allocation4 + $0x18] sm:$0xff]
  %v5280 = vld [vmem:[#allocation4 + $0x20] sm:$0xff]
  %v5281 = vld [vmem:[#allocation4 + $0x28] sm:$0xff]
  %v5282 = vld [vmem:[#allocation4 + $0x30] sm:$0xff]
  %v5283 = vld [vmem:[#allocation4 + $0x38] sm:$0xff]
  %v5284 = vld [vmem:[#allocation4 + $0x40] sm:$0xff]
  %v5285 = vld [vmem:[#allocation4 + $0x48] sm:$0xff]
  %v5286 = vld [vmem:[#allocation4 + $0x50] sm:$0xff]
  %v5287 = vld [vmem:[#allocation4 + $0x58] sm:$0xff]
  %v5288 = vld [vmem:[#allocation4 + $0x60] sm:$0xff]
  %v5289 = vld [vmem:[#allocation4 + $0x68] sm:$0xff]
  %v5290 = vld [vmem:[#allocation4 + $0x70] sm:$0xff]
  %v5291 = vld [vmem:[#allocation4 + $0x78] sm:$0xff]
  %v5292 = vld [vmem:[#allocation4 + $0x80] sm:$0xff]
  %v5293 = vld [vmem:[#allocation4 + $0x88] sm:$0xff]
  %v5294 = vld [vmem:[#allocation4 + $0x90] sm:$0xff]
  %5312 = vrot.lane.b32.xlu0 %v5278, 116
  %v5313 = vpop.permute.xlu0 %5312
  %5314 = vrot.lane.b32.xlu0 %v5279, 116
  %v5315 = vpop.permute.xlu0 %5314
  %5316 = vrot.lane.b32.xlu0 %v5280, 116
  %v5317 = vpop.permute.xlu0 %5316
  %5318 = vrot.lane.b32.xlu0 %v5281, 116
  %v5319 = vpop.permute.xlu0 %5318
  %5320 = vrot.lane.b32.xlu0 %v5282, 116
  %v5321 = vpop.permute.xlu0 %5320
  %5322 = vrot.lane.b32.xlu0 %v5283, 116
  %v5323 = vpop.permute.xlu0 %5322
  %5324 = vrot.lane.b32.xlu0 %v5284, 116
  %v5325 = vpop.permute.xlu0 %5324
  %5326 = vrot.lane.b32.xlu0 %v5285, 116
  %v5327 = vpop.permute.xlu0 %5326
  %5328 = vrot.lane.b32.xlu0 %v5286, 116
  %v5329 = vpop.permute.xlu0 %5328
  %5330 = vrot.lane.b32.xlu0 %v5287, 116
  %v5331 = vpop.permute.xlu0 %5330
  %5332 = vrot.lane.b32.xlu0 %v5288, 116
  %v5333 = vpop.permute.xlu0 %5332
  %5334 = vrot.lane.b32.xlu0 %v5289, 116
  %v5335 = vpop.permute.xlu0 %5334
  %5336 = vrot.lane.b32.xlu0 %v5290, 116
  %v5337 = vpop.permute.xlu0 %5336
  %5338 = vrot.lane.b32.xlu0 %v5291, 116
  %v5339 = vpop.permute.xlu0 %5338
  %5340 = vrot.lane.b32.xlu0 %v5292, 116
  %v5341 = vpop.permute.xlu0 %5340
  %5342 = vrot.lane.b32.xlu0 %v5293, 116
  %v5343 = vpop.permute.xlu0 %5342
  %5344 = vrot.lane.b32.xlu0 %v5294, 116
  %v5345 = vpop.permute.xlu0 %5344
  %v5346 = vsel %vm4352, %v5313, %v5315
  %v5347 = vsel %vm4352, %v5315, %v5317
  %v5348 = vsel %vm4352, %v5317, %v5319
  %v5349 = vsel %vm4352, %v5319, %v5321
  %v5350 = vsel %vm4352, %v5321, %v5323
  %v5351 = vsel %vm4352, %v5323, %v5325
  %v5352 = vsel %vm4352, %v5325, %v5327
  %v5353 = vsel %vm4352, %v5327, %v5329
  %v5354 = vsel %vm4352, %v5329, %v5331
  %v5355 = vsel %vm4352, %v5331, %v5333
  %v5356 = vsel %vm4352, %v5333, %v5335
  %v5357 = vsel %vm4352, %v5335, %v5337
  %v5358 = vsel %vm4352, %v5337, %v5339
  %v5359 = vsel %vm4352, %v5339, %v5341
  %v5360 = vsel %vm4352, %v5341, %v5343
  %v5361 = vsel %vm4352, %v5343, %v5345
  %5378 = vst [vmem:[#allocation2 + $0x680] sm:$0xff] %v5346
  %5379 = vst [vmem:[#allocation2 + $0x688] sm:$0xff] %v5347
  %5380 = vst [vmem:[#allocation2 + $0x690] sm:$0xff] %v5348
  %5381 = vst [vmem:[#allocation2 + $0x698] sm:$0xff] %v5349
  %5382 = vst [vmem:[#allocation2 + $0x6a0] sm:$0xff] %v5350
  %5383 = vst [vmem:[#allocation2 + $0x6a8] sm:$0xff] %v5351
  %5384 = vst [vmem:[#allocation2 + $0x6b0] sm:$0xff] %v5352
  %5385 = vst [vmem:[#allocation2 + $0x6b8] sm:$0xff] %v5353
  %5386 = vst [vmem:[#allocation2 + $0x6c0] sm:$0xff] %v5354
  %5387 = vst [vmem:[#allocation2 + $0x6c8] sm:$0xff] %v5355
  %5388 = vst [vmem:[#allocation2 + $0x6d0] sm:$0xff] %v5356
  %5389 = vst [vmem:[#allocation2 + $0x6d8] sm:$0xff] %v5357
  %5390 = vst [vmem:[#allocation2 + $0x6e0] sm:$0xff] %v5358
  %5391 = vst [vmem:[#allocation2 + $0x6e8] sm:$0xff] %v5359
  %5392 = vst [vmem:[#allocation2 + $0x6f0] sm:$0xff] %v5360
  %5393 = vst [vmem:[#allocation2 + $0x6f8] sm:$0xff] %v5361
  %v5394 = vld [vmem:[#allocation4 + $0x10] sm:$0xff]
  %v5395 = vld [vmem:[#allocation4 + $0x18] sm:$0xff]
  %v5396 = vld [vmem:[#allocation4 + $0x20] sm:$0xff]
  %v5397 = vld [vmem:[#allocation4 + $0x28] sm:$0xff]
  %v5398 = vld [vmem:[#allocation4 + $0x30] sm:$0xff]
  %v5399 = vld [vmem:[#allocation4 + $0x38] sm:$0xff]
  %v5400 = vld [vmem:[#allocation4 + $0x40] sm:$0xff]
  %v5401 = vld [vmem:[#allocation4 + $0x48] sm:$0xff]
  %v5402 = vld [vmem:[#allocation4 + $0x50] sm:$0xff]
  %v5403 = vld [vmem:[#allocation4 + $0x58] sm:$0xff]
  %v5404 = vld [vmem:[#allocation4 + $0x60] sm:$0xff]
  %v5405 = vld [vmem:[#allocation4 + $0x68] sm:$0xff]
  %v5406 = vld [vmem:[#allocation4 + $0x70] sm:$0xff]
  %v5407 = vld [vmem:[#allocation4 + $0x78] sm:$0xff]
  %v5408 = vld [vmem:[#allocation4 + $0x80] sm:$0xff]
  %v5409 = vld [vmem:[#allocation4 + $0x88] sm:$0xff]
  %v5410 = vld [vmem:[#allocation4 + $0x90] sm:$0xff]
  %5428 = vrot.lane.b32.xlu0 %v5394, 112
  %v5429 = vpop.permute.xlu0 %5428
  %5430 = vrot.lane.b32.xlu0 %v5395, 112
  %v5431 = vpop.permute.xlu0 %5430
  %5432 = vrot.lane.b32.xlu0 %v5396, 112
  %v5433 = vpop.permute.xlu0 %5432
  %5434 = vrot.lane.b32.xlu0 %v5397, 112
  %v5435 = vpop.permute.xlu0 %5434
  %5436 = vrot.lane.b32.xlu0 %v5398, 112
  %v5437 = vpop.permute.xlu0 %5436
  %5438 = vrot.lane.b32.xlu0 %v5399, 112
  %v5439 = vpop.permute.xlu0 %5438
  %5440 = vrot.lane.b32.xlu0 %v5400, 112
  %v5441 = vpop.permute.xlu0 %5440
  %5442 = vrot.lane.b32.xlu0 %v5401, 112
  %v5443 = vpop.permute.xlu0 %5442
  %5444 = vrot.lane.b32.xlu0 %v5402, 112
  %v5445 = vpop.permute.xlu0 %5444
  %5446 = vrot.lane.b32.xlu0 %v5403, 112
  %v5447 = vpop.permute.xlu0 %5446
  %5448 = vrot.lane.b32.xlu0 %v5404, 112
  %v5449 = vpop.permute.xlu0 %5448
  %5450 = vrot.lane.b32.xlu0 %v5405, 112
  %v5451 = vpop.permute.xlu0 %5450
  %5452 = vrot.lane.b32.xlu0 %v5406, 112
  %v5453 = vpop.permute.xlu0 %5452
  %5454 = vrot.lane.b32.xlu0 %v5407, 112
  %v5455 = vpop.permute.xlu0 %5454
  %5456 = vrot.lane.b32.xlu0 %v5408, 112
  %v5457 = vpop.permute.xlu0 %5456
  %5458 = vrot.lane.b32.xlu0 %v5409, 112
  %v5459 = vpop.permute.xlu0 %5458
  %5460 = vrot.lane.b32.xlu0 %v5410, 112
  %v5461 = vpop.permute.xlu0 %5460
  %v5462 = vsel %vm4469, %v5429, %v5431
  %v5463 = vsel %vm4469, %v5431, %v5433
  %v5464 = vsel %vm4469, %v5433, %v5435
  %v5465 = vsel %vm4469, %v5435, %v5437
  %v5466 = vsel %vm4469, %v5437, %v5439
  %v5467 = vsel %vm4469, %v5439, %v5441
  %v5468 = vsel %vm4469, %v5441, %v5443
  %v5469 = vsel %vm4469, %v5443, %v5445
  %v5470 = vsel %vm4469, %v5445, %v5447
  %v5471 = vsel %vm4469, %v5447, %v5449
  %v5472 = vsel %vm4469, %v5449, %v5451
  %v5473 = vsel %vm4469, %v5451, %v5453
  %v5474 = vsel %vm4469, %v5453, %v5455
  %v5475 = vsel %vm4469, %v5455, %v5457
  %v5476 = vsel %vm4469, %v5457, %v5459
  %v5477 = vsel %vm4469, %v5459, %v5461
  %5494 = vst [vmem:[#allocation2 + $0x700] sm:$0xff] %v5462
  %5495 = vst [vmem:[#allocation2 + $0x708] sm:$0xff] %v5463
  %5496 = vst [vmem:[#allocation2 + $0x710] sm:$0xff] %v5464
  %5497 = vst [vmem:[#allocation2 + $0x718] sm:$0xff] %v5465
  %5498 = vst [vmem:[#allocation2 + $0x720] sm:$0xff] %v5466
  %5499 = vst [vmem:[#allocation2 + $0x728] sm:$0xff] %v5467
  %5500 = vst [vmem:[#allocation2 + $0x730] sm:$0xff] %v5468
  %5501 = vst [vmem:[#allocation2 + $0x738] sm:$0xff] %v5469
  %5502 = vst [vmem:[#allocation2 + $0x740] sm:$0xff] %v5470
  %5503 = vst [vmem:[#allocation2 + $0x748] sm:$0xff] %v5471
  %5504 = vst [vmem:[#allocation2 + $0x750] sm:$0xff] %v5472
  %5505 = vst [vmem:[#allocation2 + $0x758] sm:$0xff] %v5473
  %5506 = vst [vmem:[#allocation2 + $0x760] sm:$0xff] %v5474
  %5507 = vst [vmem:[#allocation2 + $0x768] sm:$0xff] %v5475
  %5508 = vst [vmem:[#allocation2 + $0x770] sm:$0xff] %v5476
  %5509 = vst [vmem:[#allocation2 + $0x778] sm:$0xff] %v5477
  %v5510 = vld [vmem:[#allocation4 + $0x18] sm:$0xff]
  %v5511 = vld [vmem:[#allocation4 + $0x20] sm:$0xff]
  %v5512 = vld [vmem:[#allocation4 + $0x28] sm:$0xff]
  %v5513 = vld [vmem:[#allocation4 + $0x30] sm:$0xff]
  %v5514 = vld [vmem:[#allocation4 + $0x38] sm:$0xff]
  %v5515 = vld [vmem:[#allocation4 + $0x40] sm:$0xff]
  %v5516 = vld [vmem:[#allocation4 + $0x48] sm:$0xff]
  %v5517 = vld [vmem:[#allocation4 + $0x50] sm:$0xff]
  %v5518 = vld [vmem:[#allocation4 + $0x58] sm:$0xff]
  %v5519 = vld [vmem:[#allocation4 + $0x60] sm:$0xff]
  %v5520 = vld [vmem:[#allocation4 + $0x68] sm:$0xff]
  %v5521 = vld [vmem:[#allocation4 + $0x70] sm:$0xff]
  %v5522 = vld [vmem:[#allocation4 + $0x78] sm:$0xff]
  %v5523 = vld [vmem:[#allocation4 + $0x80] sm:$0xff]
  %v5524 = vld [vmem:[#allocation4 + $0x88] sm:$0xff]
  %v5525 = vld [vmem:[#allocation4 + $0x90] sm:$0xff]
  %5526 = vst [vmem:[#allocation2 + $0x780] sm:$0xff] %v5510
  %5527 = vst [vmem:[#allocation2 + $0x788] sm:$0xff] %v5511
  %5528 = vst [vmem:[#allocation2 + $0x790] sm:$0xff] %v5512
  %5529 = vst [vmem:[#allocation2 + $0x798] sm:$0xff] %v5513
  %5530 = vst [vmem:[#allocation2 + $0x7a0] sm:$0xff] %v5514
  %5531 = vst [vmem:[#allocation2 + $0x7a8] sm:$0xff] %v5515
  %5532 = vst [vmem:[#allocation2 + $0x7b0] sm:$0xff] %v5516
  %5533 = vst [vmem:[#allocation2 + $0x7b8] sm:$0xff] %v5517
  %5534 = vst [vmem:[#allocation2 + $0x7c0] sm:$0xff] %v5518
  %5535 = vst [vmem:[#allocation2 + $0x7c8] sm:$0xff] %v5519
  %5536 = vst [vmem:[#allocation2 + $0x7d0] sm:$0xff] %v5520
  %5537 = vst [vmem:[#allocation2 + $0x7d8] sm:$0xff] %v5521
  %5538 = vst [vmem:[#allocation2 + $0x7e0] sm:$0xff] %v5522
  %5539 = vst [vmem:[#allocation2 + $0x7e8] sm:$0xff] %v5523
  %5540 = vst [vmem:[#allocation2 + $0x7f0] sm:$0xff] %v5524
  %5541 = vst [vmem:[#allocation2 + $0x7f8] sm:$0xff] %v5525
  %v5542 = vld [vmem:[#allocation4 + $0x18] sm:$0xff]
  %v5543 = vld [vmem:[#allocation4 + $0x20] sm:$0xff]
  %v5544 = vld [vmem:[#allocation4 + $0x28] sm:$0xff]
  %v5545 = vld [vmem:[#allocation4 + $0x30] sm:$0xff]
  %v5546 = vld [vmem:[#allocation4 + $0x38] sm:$0xff]
  %v5547 = vld [vmem:[#allocation4 + $0x40] sm:$0xff]
  %v5548 = vld [vmem:[#allocation4 + $0x48] sm:$0xff]
  %v5549 = vld [vmem:[#allocation4 + $0x50] sm:$0xff]
  %v5550 = vld [vmem:[#allocation4 + $0x58] sm:$0xff]
  %v5551 = vld [vmem:[#allocation4 + $0x60] sm:$0xff]
  %v5552 = vld [vmem:[#allocation4 + $0x68] sm:$0xff]
  %v5553 = vld [vmem:[#allocation4 + $0x70] sm:$0xff]
  %v5554 = vld [vmem:[#allocation4 + $0x78] sm:$0xff]
  %v5555 = vld [vmem:[#allocation4 + $0x80] sm:$0xff]
  %v5556 = vld [vmem:[#allocation4 + $0x88] sm:$0xff]
  %v5557 = vld [vmem:[#allocation4 + $0x90] sm:$0xff]
  %v5558 = vld [vmem:[#allocation4 + $0x98] sm:$0xff]
  %5576 = vrot.lane.b32.xlu0 %v5542, 124
  %v5577 = vpop.permute.xlu0 %5576
  %5578 = vrot.lane.b32.xlu0 %v5543, 124
  %v5579 = vpop.permute.xlu0 %5578
  %5580 = vrot.lane.b32.xlu0 %v5544, 124
  %v5581 = vpop.permute.xlu0 %5580
  %5582 = vrot.lane.b32.xlu0 %v5545, 124
  %v5583 = vpop.permute.xlu0 %5582
  %5584 = vrot.lane.b32.xlu0 %v5546, 124
  %v5585 = vpop.permute.xlu0 %5584
  %5586 = vrot.lane.b32.xlu0 %v5547, 124
  %v5587 = vpop.permute.xlu0 %5586
  %5588 = vrot.lane.b32.xlu0 %v5548, 124
  %v5589 = vpop.permute.xlu0 %5588
  %5590 = vrot.lane.b32.xlu0 %v5549, 124
  %v5591 = vpop.permute.xlu0 %5590
  %5592 = vrot.lane.b32.xlu0 %v5550, 124
  %v5593 = vpop.permute.xlu0 %5592
  %5594 = vrot.lane.b32.xlu0 %v5551, 124
  %v5595 = vpop.permute.xlu0 %5594
  %5596 = vrot.lane.b32.xlu0 %v5552, 124
  %v5597 = vpop.permute.xlu0 %5596
  %5598 = vrot.lane.b32.xlu0 %v5553, 124
  %v5599 = vpop.permute.xlu0 %5598
  %5600 = vrot.lane.b32.xlu0 %v5554, 124
  %v5601 = vpop.permute.xlu0 %5600
  %5602 = vrot.lane.b32.xlu0 %v5555, 124
  %v5603 = vpop.permute.xlu0 %5602
  %5604 = vrot.lane.b32.xlu0 %v5556, 124
  %v5605 = vpop.permute.xlu0 %5604
  %5606 = vrot.lane.b32.xlu0 %v5557, 124
  %v5607 = vpop.permute.xlu0 %5606
  %5608 = vrot.lane.b32.xlu0 %v5558, 124
  %v5609 = vpop.permute.xlu0 %5608
  %v5610 = vsel %vm269, %v5577, %v5579
  %v5611 = vsel %vm269, %v5579, %v5581
  %v5612 = vsel %vm269, %v5581, %v5583
  %v5613 = vsel %vm269, %v5583, %v5585
  %v5614 = vsel %vm269, %v5585, %v5587
  %v5615 = vsel %vm269, %v5587, %v5589
  %v5616 = vsel %vm269, %v5589, %v5591
  %v5617 = vsel %vm269, %v5591, %v5593
  %v5618 = vsel %vm269, %v5593, %v5595
  %v5619 = vsel %vm269, %v5595, %v5597
  %v5620 = vsel %vm269, %v5597, %v5599
  %v5621 = vsel %vm269, %v5599, %v5601
  %v5622 = vsel %vm269, %v5601, %v5603
  %v5623 = vsel %vm269, %v5603, %v5605
  %v5624 = vsel %vm269, %v5605, %v5607
  %v5625 = vsel %vm269, %v5607, %v5609
  %5642 = vst [vmem:[#allocation2 + $0x800] sm:$0xff] %v5610
  %5643 = vst [vmem:[#allocation2 + $0x808] sm:$0xff] %v5611
  %5644 = vst [vmem:[#allocation2 + $0x810] sm:$0xff] %v5612
  %5645 = vst [vmem:[#allocation2 + $0x818] sm:$0xff] %v5613
  %5646 = vst [vmem:[#allocation2 + $0x820] sm:$0xff] %v5614
  %5647 = vst [vmem:[#allocation2 + $0x828] sm:$0xff] %v5615
  %5648 = vst [vmem:[#allocation2 + $0x830] sm:$0xff] %v5616
  %5649 = vst [vmem:[#allocation2 + $0x838] sm:$0xff] %v5617
  %5650 = vst [vmem:[#allocation2 + $0x840] sm:$0xff] %v5618
  %5651 = vst [vmem:[#allocation2 + $0x848] sm:$0xff] %v5619
  %5652 = vst [vmem:[#allocation2 + $0x850] sm:$0xff] %v5620
  %5653 = vst [vmem:[#allocation2 + $0x858] sm:$0xff] %v5621
  %5654 = vst [vmem:[#allocation2 + $0x860] sm:$0xff] %v5622
  %5655 = vst [vmem:[#allocation2 + $0x868] sm:$0xff] %v5623
  %5656 = vst [vmem:[#allocation2 + $0x870] sm:$0xff] %v5624
  %5657 = vst [vmem:[#allocation2 + $0x878] sm:$0xff] %v5625
  %v5658 = vld [vmem:[#allocation4 + $0x18] sm:$0xff]
  %v5659 = vld [vmem:[#allocation4 + $0x20] sm:$0xff]
  %v5660 = vld [vmem:[#allocation4 + $0x28] sm:$0xff]
  %v5661 = vld [vmem:[#allocation4 + $0x30] sm:$0xff]
  %v5662 = vld [vmem:[#allocation4 + $0x38] sm:$0xff]
  %v5663 = vld [vmem:[#allocation4 + $0x40] sm:$0xff]
  %v5664 = vld [vmem:[#allocation4 + $0x48] sm:$0xff]
  %v5665 = vld [vmem:[#allocation4 + $0x50] sm:$0xff]
  %v5666 = vld [vmem:[#allocation4 + $0x58] sm:$0xff]
  %v5667 = vld [vmem:[#allocation4 + $0x60] sm:$0xff]
  %v5668 = vld [vmem:[#allocation4 + $0x68] sm:$0xff]
  %v5669 = vld [vmem:[#allocation4 + $0x70] sm:$0xff]
  %v5670 = vld [vmem:[#allocation4 + $0x78] sm:$0xff]
  %v5671 = vld [vmem:[#allocation4 + $0x80] sm:$0xff]
  %v5672 = vld [vmem:[#allocation4 + $0x88] sm:$0xff]
  %v5673 = vld [vmem:[#allocation4 + $0x90] sm:$0xff]
  %v5674 = vld [vmem:[#allocation4 + $0x98] sm:$0xff]
  %5692 = vrot.lane.b32.xlu0 %v5658, 120
  %v5693 = vpop.permute.xlu0 %5692
  %5694 = vrot.lane.b32.xlu0 %v5659, 120
  %v5695 = vpop.permute.xlu0 %5694
  %5696 = vrot.lane.b32.xlu0 %v5660, 120
  %v5697 = vpop.permute.xlu0 %5696
  %5698 = vrot.lane.b32.xlu0 %v5661, 120
  %v5699 = vpop.permute.xlu0 %5698
  %5700 = vrot.lane.b32.xlu0 %v5662, 120
  %v5701 = vpop.permute.xlu0 %5700
  %5702 = vrot.lane.b32.xlu0 %v5663, 120
  %v5703 = vpop.permute.xlu0 %5702
  %5704 = vrot.lane.b32.xlu0 %v5664, 120
  %v5705 = vpop.permute.xlu0 %5704
  %5706 = vrot.lane.b32.xlu0 %v5665, 120
  %v5707 = vpop.permute.xlu0 %5706
  %5708 = vrot.lane.b32.xlu0 %v5666, 120
  %v5709 = vpop.permute.xlu0 %5708
  %5710 = vrot.lane.b32.xlu0 %v5667, 120
  %v5711 = vpop.permute.xlu0 %5710
  %5712 = vrot.lane.b32.xlu0 %v5668, 120
  %v5713 = vpop.permute.xlu0 %5712
  %5714 = vrot.lane.b32.xlu0 %v5669, 120
  %v5715 = vpop.permute.xlu0 %5714
  %5716 = vrot.lane.b32.xlu0 %v5670, 120
  %v5717 = vpop.permute.xlu0 %5716
  %5718 = vrot.lane.b32.xlu0 %v5671, 120
  %v5719 = vpop.permute.xlu0 %5718
  %5720 = vrot.lane.b32.xlu0 %v5672, 120
  %v5721 = vpop.permute.xlu0 %5720
  %5722 = vrot.lane.b32.xlu0 %v5673, 120
  %v5723 = vpop.permute.xlu0 %5722
  %5724 = vrot.lane.b32.xlu0 %v5674, 120
  %v5725 = vpop.permute.xlu0 %5724
  %v5726 = vsel %vm503, %v5693, %v5695
  %v5727 = vsel %vm503, %v5695, %v5697
  %v5728 = vsel %vm503, %v5697, %v5699
  %v5729 = vsel %vm503, %v5699, %v5701
  %v5730 = vsel %vm503, %v5701, %v5703
  %v5731 = vsel %vm503, %v5703, %v5705
  %v5732 = vsel %vm503, %v5705, %v5707
  %v5733 = vsel %vm503, %v5707, %v5709
  %v5734 = vsel %vm503, %v5709, %v5711
  %v5735 = vsel %vm503, %v5711, %v5713
  %v5736 = vsel %vm503, %v5713, %v5715
  %v5737 = vsel %vm503, %v5715, %v5717
  %v5738 = vsel %vm503, %v5717, %v5719
  %v5739 = vsel %vm503, %v5719, %v5721
  %v5740 = vsel %vm503, %v5721, %v5723
  %v5741 = vsel %vm503, %v5723, %v5725
  %5758 = vst [vmem:[#allocation2 + $0x880] sm:$0xff] %v5726
  %5759 = vst [vmem:[#allocation2 + $0x888] sm:$0xff] %v5727
  %5760 = vst [vmem:[#allocation2 + $0x890] sm:$0xff] %v5728
  %5761 = vst [vmem:[#allocation2 + $0x898] sm:$0xff] %v5729
  %5762 = vst [vmem:[#allocation2 + $0x8a0] sm:$0xff] %v5730
  %5763 = vst [vmem:[#allocation2 + $0x8a8] sm:$0xff] %v5731
  %5764 = vst [vmem:[#allocation2 + $0x8b0] sm:$0xff] %v5732
  %5765 = vst [vmem:[#allocation2 + $0x8b8] sm:$0xff] %v5733
  %5766 = vst [vmem:[#allocation2 + $0x8c0] sm:$0xff] %v5734
  %5767 = vst [vmem:[#allocation2 + $0x8c8] sm:$0xff] %v5735
  %5768 = vst [vmem:[#allocation2 + $0x8d0] sm:$0xff] %v5736
  %5769 = vst [vmem:[#allocation2 + $0x8d8] sm:$0xff] %v5737
  %5770 = vst [vmem:[#allocation2 + $0x8e0] sm:$0xff] %v5738
  %5771 = vst [vmem:[#allocation2 + $0x8e8] sm:$0xff] %v5739
  %5772 = vst [vmem:[#allocation2 + $0x8f0] sm:$0xff] %v5740
  %5773 = vst [vmem:[#allocation2 + $0x8f8] sm:$0xff] %v5741
  %v5774 = vld [vmem:[#allocation4 + $0x18] sm:$0xff]
  %v5775 = vld [vmem:[#allocation4 + $0x20] sm:$0xff]
  %v5776 = vld [vmem:[#allocation4 + $0x28] sm:$0xff]
  %v5777 = vld [vmem:[#allocation4 + $0x30] sm:$0xff]
  %v5778 = vld [vmem:[#allocation4 + $0x38] sm:$0xff]
  %v5779 = vld [vmem:[#allocation4 + $0x40] sm:$0xff]
  %v5780 = vld [vmem:[#allocation4 + $0x48] sm:$0xff]
  %v5781 = vld [vmem:[#allocation4 + $0x50] sm:$0xff]
  %v5782 = vld [vmem:[#allocation4 + $0x58] sm:$0xff]
  %v5783 = vld [vmem:[#allocation4 + $0x60] sm:$0xff]
  %v5784 = vld [vmem:[#allocation4 + $0x68] sm:$0xff]
  %v5785 = vld [vmem:[#allocation4 + $0x70] sm:$0xff]
  %v5786 = vld [vmem:[#allocation4 + $0x78] sm:$0xff]
  %v5787 = vld [vmem:[#allocation4 + $0x80] sm:$0xff]
  %v5788 = vld [vmem:[#allocation4 + $0x88] sm:$0xff]
  %v5789 = vld [vmem:[#allocation4 + $0x90] sm:$0xff]
  %v5790 = vld [vmem:[#allocation4 + $0x98] sm:$0xff]
  %5808 = vrot.lane.b32.xlu0 %v5774, 116
  %v5809 = vpop.permute.xlu0 %5808
  %5810 = vrot.lane.b32.xlu0 %v5775, 116
  %v5811 = vpop.permute.xlu0 %5810
  %5812 = vrot.lane.b32.xlu0 %v5776, 116
  %v5813 = vpop.permute.xlu0 %5812
  %5814 = vrot.lane.b32.xlu0 %v5777, 116
  %v5815 = vpop.permute.xlu0 %5814
  %5816 = vrot.lane.b32.xlu0 %v5778, 116
  %v5817 = vpop.permute.xlu0 %5816
  %5818 = vrot.lane.b32.xlu0 %v5779, 116
  %v5819 = vpop.permute.xlu0 %5818
  %5820 = vrot.lane.b32.xlu0 %v5780, 116
  %v5821 = vpop.permute.xlu0 %5820
  %5822 = vrot.lane.b32.xlu0 %v5781, 116
  %v5823 = vpop.permute.xlu0 %5822
  %5824 = vrot.lane.b32.xlu0 %v5782, 116
  %v5825 = vpop.permute.xlu0 %5824
  %5826 = vrot.lane.b32.xlu0 %v5783, 116
  %v5827 = vpop.permute.xlu0 %5826
  %5828 = vrot.lane.b32.xlu0 %v5784, 116
  %v5829 = vpop.permute.xlu0 %5828
  %5830 = vrot.lane.b32.xlu0 %v5785, 116
  %v5831 = vpop.permute.xlu0 %5830
  %5832 = vrot.lane.b32.xlu0 %v5786, 116
  %v5833 = vpop.permute.xlu0 %5832
  %5834 = vrot.lane.b32.xlu0 %v5787, 116
  %v5835 = vpop.permute.xlu0 %5834
  %5836 = vrot.lane.b32.xlu0 %v5788, 116
  %v5837 = vpop.permute.xlu0 %5836
  %5838 = vrot.lane.b32.xlu0 %v5789, 116
  %v5839 = vpop.permute.xlu0 %5838
  %5840 = vrot.lane.b32.xlu0 %v5790, 116
  %v5841 = vpop.permute.xlu0 %5840
  %v5842 = vsel %vm4352, %v5809, %v5811
  %v5843 = vsel %vm4352, %v5811, %v5813
  %v5844 = vsel %vm4352, %v5813, %v5815
  %v5845 = vsel %vm4352, %v5815, %v5817
  %v5846 = vsel %vm4352, %v5817, %v5819
  %v5847 = vsel %vm4352, %v5819, %v5821
  %v5848 = vsel %vm4352, %v5821, %v5823
  %v5849 = vsel %vm4352, %v5823, %v5825
  %v5850 = vsel %vm4352, %v5825, %v5827
  %v5851 = vsel %vm4352, %v5827, %v5829
  %v5852 = vsel %vm4352, %v5829, %v5831
  %v5853 = vsel %vm4352, %v5831, %v5833
  %v5854 = vsel %vm4352, %v5833, %v5835
  %v5855 = vsel %vm4352, %v5835, %v5837
  %v5856 = vsel %vm4352, %v5837, %v5839
  %v5857 = vsel %vm4352, %v5839, %v5841
  %5874 = vst [vmem:[#allocation2 + $0x900] sm:$0xff] %v5842
  %5875 = vst [vmem:[#allocation2 + $0x908] sm:$0xff] %v5843
  %5876 = vst [vmem:[#allocation2 + $0x910] sm:$0xff] %v5844
  %5877 = vst [vmem:[#allocation2 + $0x918] sm:$0xff] %v5845
  %5878 = vst [vmem:[#allocation2 + $0x920] sm:$0xff] %v5846
  %5879 = vst [vmem:[#allocation2 + $0x928] sm:$0xff] %v5847
  %5880 = vst [vmem:[#allocation2 + $0x930] sm:$0xff] %v5848
  %5881 = vst [vmem:[#allocation2 + $0x938] sm:$0xff] %v5849
  %5882 = vst [vmem:[#allocation2 + $0x940] sm:$0xff] %v5850
  %5883 = vst [vmem:[#allocation2 + $0x948] sm:$0xff] %v5851
  %5884 = vst [vmem:[#allocation2 + $0x950] sm:$0xff] %v5852
  %5885 = vst [vmem:[#allocation2 + $0x958] sm:$0xff] %v5853
  %5886 = vst [vmem:[#allocation2 + $0x960] sm:$0xff] %v5854
  %5887 = vst [vmem:[#allocation2 + $0x968] sm:$0xff] %v5855
  %5888 = vst [vmem:[#allocation2 + $0x970] sm:$0xff] %v5856
  %5889 = vst [vmem:[#allocation2 + $0x978] sm:$0xff] %v5857
  %v5890 = vld [vmem:[#allocation4 + $0x18] sm:$0xff]
  %v5891 = vld [vmem:[#allocation4 + $0x20] sm:$0xff]
  %v5892 = vld [vmem:[#allocation4 + $0x28] sm:$0xff]
  %v5893 = vld [vmem:[#allocation4 + $0x30] sm:$0xff]
  %v5894 = vld [vmem:[#allocation4 + $0x38] sm:$0xff]
  %v5895 = vld [vmem:[#allocation4 + $0x40] sm:$0xff]
  %v5896 = vld [vmem:[#allocation4 + $0x48] sm:$0xff]
  %v5897 = vld [vmem:[#allocation4 + $0x50] sm:$0xff]
  %v5898 = vld [vmem:[#allocation4 + $0x58] sm:$0xff]
  %v5899 = vld [vmem:[#allocation4 + $0x60] sm:$0xff]
  %v5900 = vld [vmem:[#allocation4 + $0x68] sm:$0xff]
  %v5901 = vld [vmem:[#allocation4 + $0x70] sm:$0xff]
  %v5902 = vld [vmem:[#allocation4 + $0x78] sm:$0xff]
  %v5903 = vld [vmem:[#allocation4 + $0x80] sm:$0xff]
  %v5904 = vld [vmem:[#allocation4 + $0x88] sm:$0xff]
  %v5905 = vld [vmem:[#allocation4 + $0x90] sm:$0xff]
  %v5906 = vld [vmem:[#allocation4 + $0x98] sm:$0xff]
  %5924 = vrot.lane.b32.xlu0 %v5890, 112
  %v5925 = vpop.permute.xlu0 %5924
  %5926 = vrot.lane.b32.xlu0 %v5891, 112
  %v5927 = vpop.permute.xlu0 %5926
  %5928 = vrot.lane.b32.xlu0 %v5892, 112
  %v5929 = vpop.permute.xlu0 %5928
  %5930 = vrot.lane.b32.xlu0 %v5893, 112
  %v5931 = vpop.permute.xlu0 %5930
  %5932 = vrot.lane.b32.xlu0 %v5894, 112
  %v5933 = vpop.permute.xlu0 %5932
  %5934 = vrot.lane.b32.xlu0 %v5895, 112
  %v5935 = vpop.permute.xlu0 %5934
  %5936 = vrot.lane.b32.xlu0 %v5896, 112
  %v5937 = vpop.permute.xlu0 %5936
  %5938 = vrot.lane.b32.xlu0 %v5897, 112
  %v5939 = vpop.permute.xlu0 %5938
  %5940 = vrot.lane.b32.xlu0 %v5898, 112
  %v5941 = vpop.permute.xlu0 %5940
  %5942 = vrot.lane.b32.xlu0 %v5899, 112
  %v5943 = vpop.permute.xlu0 %5942
  %5944 = vrot.lane.b32.xlu0 %v5900, 112
  %v5945 = vpop.permute.xlu0 %5944
  %5946 = vrot.lane.b32.xlu0 %v5901, 112
  %v5947 = vpop.permute.xlu0 %5946
  %5948 = vrot.lane.b32.xlu0 %v5902, 112
  %v5949 = vpop.permute.xlu0 %5948
  %5950 = vrot.lane.b32.xlu0 %v5903, 112
  %v5951 = vpop.permute.xlu0 %5950
  %5952 = vrot.lane.b32.xlu0 %v5904, 112
  %v5953 = vpop.permute.xlu0 %5952
  %5954 = vrot.lane.b32.xlu0 %v5905, 112
  %v5955 = vpop.permute.xlu0 %5954
  %5956 = vrot.lane.b32.xlu0 %v5906, 112
  %v5957 = vpop.permute.xlu0 %5956
  %v5958 = vsel %vm4469, %v5925, %v5927
  %v5959 = vsel %vm4469, %v5927, %v5929
  %v5960 = vsel %vm4469, %v5929, %v5931
  %v5961 = vsel %vm4469, %v5931, %v5933
  %v5962 = vsel %vm4469, %v5933, %v5935
  %v5963 = vsel %vm4469, %v5935, %v5937
  %v5964 = vsel %vm4469, %v5937, %v5939
  %v5965 = vsel %vm4469, %v5939, %v5941
  %v5966 = vsel %vm4469, %v5941, %v5943
  %v5967 = vsel %vm4469, %v5943, %v5945
  %v5968 = vsel %vm4469, %v5945, %v5947
  %v5969 = vsel %vm4469, %v5947, %v5949
  %v5970 = vsel %vm4469, %v5949, %v5951
  %v5971 = vsel %vm4469, %v5951, %v5953
  %v5972 = vsel %vm4469, %v5953, %v5955
  %v5973 = vsel %vm4469, %v5955, %v5957
  %5990 = vst [vmem:[#allocation2 + $0x980] sm:$0xff] %v5958
  %5991 = vst [vmem:[#allocation2 + $0x988] sm:$0xff] %v5959
  %5992 = vst [vmem:[#allocation2 + $0x990] sm:$0xff] %v5960
  %5993 = vst [vmem:[#allocation2 + $0x998] sm:$0xff] %v5961
  %5994 = vst [vmem:[#allocation2 + $0x9a0] sm:$0xff] %v5962
  %5995 = vst [vmem:[#allocation2 + $0x9a8] sm:$0xff] %v5963
  %5996 = vst [vmem:[#allocation2 + $0x9b0] sm:$0xff] %v5964
  %5997 = vst [vmem:[#allocation2 + $0x9b8] sm:$0xff] %v5965
  %5998 = vst [vmem:[#allocation2 + $0x9c0] sm:$0xff] %v5966
  %5999 = vst [vmem:[#allocation2 + $0x9c8] sm:$0xff] %v5967
  %6000 = vst [vmem:[#allocation2 + $0x9d0] sm:$0xff] %v5968
  %6001 = vst [vmem:[#allocation2 + $0x9d8] sm:$0xff] %v5969
  %6002 = vst [vmem:[#allocation2 + $0x9e0] sm:$0xff] %v5970
  %6003 = vst [vmem:[#allocation2 + $0x9e8] sm:$0xff] %v5971
  %6004 = vst [vmem:[#allocation2 + $0x9f0] sm:$0xff] %v5972
  %6005 = vst [vmem:[#allocation2 + $0x9f8] sm:$0xff] %v5973
  %v6006 = vld [vmem:[#allocation4 + $0x20] sm:$0xff]
  %v6007 = vld [vmem:[#allocation4 + $0x28] sm:$0xff]
  %v6008 = vld [vmem:[#allocation4 + $0x30] sm:$0xff]
  %v6009 = vld [vmem:[#allocation4 + $0x38] sm:$0xff]
  %v6010 = vld [vmem:[#allocation4 + $0x40] sm:$0xff]
  %v6011 = vld [vmem:[#allocation4 + $0x48] sm:$0xff]
  %v6012 = vld [vmem:[#allocation4 + $0x50] sm:$0xff]
  %v6013 = vld [vmem:[#allocation4 + $0x58] sm:$0xff]
  %v6014 = vld [vmem:[#allocation4 + $0x60] sm:$0xff]
  %v6015 = vld [vmem:[#allocation4 + $0x68] sm:$0xff]
  %v6016 = vld [vmem:[#allocation4 + $0x70] sm:$0xff]
  %v6017 = vld [vmem:[#allocation4 + $0x78] sm:$0xff]
  %v6018 = vld [vmem:[#allocation4 + $0x80] sm:$0xff]
  %v6019 = vld [vmem:[#allocation4 + $0x88] sm:$0xff]
  %v6020 = vld [vmem:[#allocation4 + $0x90] sm:$0xff]
  %v6021 = vld [vmem:[#allocation4 + $0x98] sm:$0xff]
  %6022 = vst [vmem:[#allocation2 + $0xa00] sm:$0xff] %v6006
  %6023 = vst [vmem:[#allocation2 + $0xa08] sm:$0xff] %v6007
  %6024 = vst [vmem:[#allocation2 + $0xa10] sm:$0xff] %v6008
  %6025 = vst [vmem:[#allocation2 + $0xa18] sm:$0xff] %v6009
  %6026 = vst [vmem:[#allocation2 + $0xa20] sm:$0xff] %v6010
  %6027 = vst [vmem:[#allocation2 + $0xa28] sm:$0xff] %v6011
  %6028 = vst [vmem:[#allocation2 + $0xa30] sm:$0xff] %v6012
  %6029 = vst [vmem:[#allocation2 + $0xa38] sm:$0xff] %v6013
  %6030 = vst [vmem:[#allocation2 + $0xa40] sm:$0xff] %v6014
  %6031 = vst [vmem:[#allocation2 + $0xa48] sm:$0xff] %v6015
  %6032 = vst [vmem:[#allocation2 + $0xa50] sm:$0xff] %v6016
  %6033 = vst [vmem:[#allocation2 + $0xa58] sm:$0xff] %v6017
  %6034 = vst [vmem:[#allocation2 + $0xa60] sm:$0xff] %v6018
  %6035 = vst [vmem:[#allocation2 + $0xa68] sm:$0xff] %v6019
  %6036 = vst [vmem:[#allocation2 + $0xa70] sm:$0xff] %v6020
  %6037 = vst [vmem:[#allocation2 + $0xa78] sm:$0xff] %v6021
  %v6038 = vld [vmem:[#allocation4 + $0x20] sm:$0xff]
  %v6039 = vld [vmem:[#allocation4 + $0x28] sm:$0xff]
  %v6040 = vld [vmem:[#allocation4 + $0x30] sm:$0xff]
  %v6041 = vld [vmem:[#allocation4 + $0x38] sm:$0xff]
  %v6042 = vld [vmem:[#allocation4 + $0x40] sm:$0xff]
  %v6043 = vld [vmem:[#allocation4 + $0x48] sm:$0xff]
  %v6044 = vld [vmem:[#allocation4 + $0x50] sm:$0xff]
  %v6045 = vld [vmem:[#allocation4 + $0x58] sm:$0xff]
  %v6046 = vld [vmem:[#allocation4 + $0x60] sm:$0xff]
  %v6047 = vld [vmem:[#allocation4 + $0x68] sm:$0xff]
  %v6048 = vld [vmem:[#allocation4 + $0x70] sm:$0xff]
  %v6049 = vld [vmem:[#allocation4 + $0x78] sm:$0xff]
  %v6050 = vld [vmem:[#allocation4 + $0x80] sm:$0xff]
  %v6051 = vld [vmem:[#allocation4 + $0x88] sm:$0xff]
  %v6052 = vld [vmem:[#allocation4 + $0x90] sm:$0xff]
  %v6053 = vld [vmem:[#allocation4 + $0x98] sm:$0xff]
  %v6054 = vld [vmem:[#allocation4 + $0xa0] sm:$0xff]
  %6072 = vrot.lane.b32.xlu0 %v6038, 124
  %v6073 = vpop.permute.xlu0 %6072
  %6074 = vrot.lane.b32.xlu0 %v6039, 124
  %v6075 = vpop.permute.xlu0 %6074
  %6076 = vrot.lane.b32.xlu0 %v6040, 124
  %v6077 = vpop.permute.xlu0 %6076
  %6078 = vrot.lane.b32.xlu0 %v6041, 124
  %v6079 = vpop.permute.xlu0 %6078
  %6080 = vrot.lane.b32.xlu0 %v6042, 124
  %v6081 = vpop.permute.xlu0 %6080
  %6082 = vrot.lane.b32.xlu0 %v6043, 124
  %v6083 = vpop.permute.xlu0 %6082
  %6084 = vrot.lane.b32.xlu0 %v6044, 124
  %v6085 = vpop.permute.xlu0 %6084
  %6086 = vrot.lane.b32.xlu0 %v6045, 124
  %v6087 = vpop.permute.xlu0 %6086
  %6088 = vrot.lane.b32.xlu0 %v6046, 124
  %v6089 = vpop.permute.xlu0 %6088
  %6090 = vrot.lane.b32.xlu0 %v6047, 124
  %v6091 = vpop.permute.xlu0 %6090
  %6092 = vrot.lane.b32.xlu0 %v6048, 124
  %v6093 = vpop.permute.xlu0 %6092
  %6094 = vrot.lane.b32.xlu0 %v6049, 124
  %v6095 = vpop.permute.xlu0 %6094
  %6096 = vrot.lane.b32.xlu0 %v6050, 124
  %v6097 = vpop.permute.xlu0 %6096
  %6098 = vrot.lane.b32.xlu0 %v6051, 124
  %v6099 = vpop.permute.xlu0 %6098
  %6100 = vrot.lane.b32.xlu0 %v6052, 124
  %v6101 = vpop.permute.xlu0 %6100
  %6102 = vrot.lane.b32.xlu0 %v6053, 124
  %v6103 = vpop.permute.xlu0 %6102
  %6104 = vrot.lane.b32.xlu0 %v6054, 124
  %v6105 = vpop.permute.xlu0 %6104
  %v6106 = vsel %vm269, %v6073, %v6075
  %v6107 = vsel %vm269, %v6075, %v6077
  %v6108 = vsel %vm269, %v6077, %v6079
  %v6109 = vsel %vm269, %v6079, %v6081
  %v6110 = vsel %vm269, %v6081, %v6083
  %v6111 = vsel %vm269, %v6083, %v6085
  %v6112 = vsel %vm269, %v6085, %v6087
  %v6113 = vsel %vm269, %v6087, %v6089
  %v6114 = vsel %vm269, %v6089, %v6091
  %v6115 = vsel %vm269, %v6091, %v6093
  %v6116 = vsel %vm269, %v6093, %v6095
  %v6117 = vsel %vm269, %v6095, %v6097
  %v6118 = vsel %vm269, %v6097, %v6099
  %v6119 = vsel %vm269, %v6099, %v6101
  %v6120 = vsel %vm269, %v6101, %v6103
  %v6121 = vsel %vm269, %v6103, %v6105
  %6138 = vst [vmem:[#allocation2 + $0xa80] sm:$0xff] %v6106
  %6139 = vst [vmem:[#allocation2 + $0xa88] sm:$0xff] %v6107
  %6140 = vst [vmem:[#allocation2 + $0xa90] sm:$0xff] %v6108
  %6141 = vst [vmem:[#allocation2 + $0xa98] sm:$0xff] %v6109
  %6142 = vst [vmem:[#allocation2 + $0xaa0] sm:$0xff] %v6110
  %6143 = vst [vmem:[#allocation2 + $0xaa8] sm:$0xff] %v6111
  %6144 = vst [vmem:[#allocation2 + $0xab0] sm:$0xff] %v6112
  %6145 = vst [vmem:[#allocation2 + $0xab8] sm:$0xff] %v6113
  %6146 = vst [vmem:[#allocation2 + $0xac0] sm:$0xff] %v6114
  %6147 = vst [vmem:[#allocation2 + $0xac8] sm:$0xff] %v6115
  %6148 = vst [vmem:[#allocation2 + $0xad0] sm:$0xff] %v6116
  %6149 = vst [vmem:[#allocation2 + $0xad8] sm:$0xff] %v6117
  %6150 = vst [vmem:[#allocation2 + $0xae0] sm:$0xff] %v6118
  %6151 = vst [vmem:[#allocation2 + $0xae8] sm:$0xff] %v6119
  %6152 = vst [vmem:[#allocation2 + $0xaf0] sm:$0xff] %v6120
  %6153 = vst [vmem:[#allocation2 + $0xaf8] sm:$0xff] %v6121
  %v6154 = vld [vmem:[#allocation4 + $0x20] sm:$0xff]
  %v6155 = vld [vmem:[#allocation4 + $0x28] sm:$0xff]
  %v6156 = vld [vmem:[#allocation4 + $0x30] sm:$0xff]
  %v6157 = vld [vmem:[#allocation4 + $0x38] sm:$0xff]
  %v6158 = vld [vmem:[#allocation4 + $0x40] sm:$0xff]
  %v6159 = vld [vmem:[#allocation4 + $0x48] sm:$0xff]
  %v6160 = vld [vmem:[#allocation4 + $0x50] sm:$0xff]
  %v6161 = vld [vmem:[#allocation4 + $0x58] sm:$0xff]
  %v6162 = vld [vmem:[#allocation4 + $0x60] sm:$0xff]
  %v6163 = vld [vmem:[#allocation4 + $0x68] sm:$0xff]
  %v6164 = vld [vmem:[#allocation4 + $0x70] sm:$0xff]
  %v6165 = vld [vmem:[#allocation4 + $0x78] sm:$0xff]
  %v6166 = vld [vmem:[#allocation4 + $0x80] sm:$0xff]
  %v6167 = vld [vmem:[#allocation4 + $0x88] sm:$0xff]
  %v6168 = vld [vmem:[#allocation4 + $0x90] sm:$0xff]
  %v6169 = vld [vmem:[#allocation4 + $0x98] sm:$0xff]
  %v6170 = vld [vmem:[#allocation4 + $0xa0] sm:$0xff]
  %6188 = vrot.lane.b32.xlu0 %v6154, 120
  %v6189 = vpop.permute.xlu0 %6188
  %6190 = vrot.lane.b32.xlu0 %v6155, 120
  %v6191 = vpop.permute.xlu0 %6190
  %6192 = vrot.lane.b32.xlu0 %v6156, 120
  %v6193 = vpop.permute.xlu0 %6192
  %6194 = vrot.lane.b32.xlu0 %v6157, 120
  %v6195 = vpop.permute.xlu0 %6194
  %6196 = vrot.lane.b32.xlu0 %v6158, 120
  %v6197 = vpop.permute.xlu0 %6196
  %6198 = vrot.lane.b32.xlu0 %v6159, 120
  %v6199 = vpop.permute.xlu0 %6198
  %6200 = vrot.lane.b32.xlu0 %v6160, 120
  %v6201 = vpop.permute.xlu0 %6200
  %6202 = vrot.lane.b32.xlu0 %v6161, 120
  %v6203 = vpop.permute.xlu0 %6202
  %6204 = vrot.lane.b32.xlu0 %v6162, 120
  %v6205 = vpop.permute.xlu0 %6204
  %6206 = vrot.lane.b32.xlu0 %v6163, 120
  %v6207 = vpop.permute.xlu0 %6206
  %6208 = vrot.lane.b32.xlu0 %v6164, 120
  %v6209 = vpop.permute.xlu0 %6208
  %6210 = vrot.lane.b32.xlu0 %v6165, 120
  %v6211 = vpop.permute.xlu0 %6210
  %6212 = vrot.lane.b32.xlu0 %v6166, 120
  %v6213 = vpop.permute.xlu0 %6212
  %6214 = vrot.lane.b32.xlu0 %v6167, 120
  %v6215 = vpop.permute.xlu0 %6214
  %6216 = vrot.lane.b32.xlu0 %v6168, 120
  %v6217 = vpop.permute.xlu0 %6216
  %6218 = vrot.lane.b32.xlu0 %v6169, 120
  %v6219 = vpop.permute.xlu0 %6218
  %6220 = vrot.lane.b32.xlu0 %v6170, 120
  %v6221 = vpop.permute.xlu0 %6220
  %v6222 = vsel %vm503, %v6189, %v6191
  %v6223 = vsel %vm503, %v6191, %v6193
  %v6224 = vsel %vm503, %v6193, %v6195
  %v6225 = vsel %vm503, %v6195, %v6197
  %v6226 = vsel %vm503, %v6197, %v6199
  %v6227 = vsel %vm503, %v6199, %v6201
  %v6228 = vsel %vm503, %v6201, %v6203
  %v6229 = vsel %vm503, %v6203, %v6205
  %v6230 = vsel %vm503, %v6205, %v6207
  %v6231 = vsel %vm503, %v6207, %v6209
  %v6232 = vsel %vm503, %v6209, %v6211
  %v6233 = vsel %vm503, %v6211, %v6213
  %v6234 = vsel %vm503, %v6213, %v6215
  %v6235 = vsel %vm503, %v6215, %v6217
  %v6236 = vsel %vm503, %v6217, %v6219
  %v6237 = vsel %vm503, %v6219, %v6221
  %6254 = vst [vmem:[#allocation2 + $0xb00] sm:$0xff] %v6222
  %6255 = vst [vmem:[#allocation2 + $0xb08] sm:$0xff] %v6223
  %6256 = vst [vmem:[#allocation2 + $0xb10] sm:$0xff] %v6224
  %6257 = vst [vmem:[#allocation2 + $0xb18] sm:$0xff] %v6225
  %6258 = vst [vmem:[#allocation2 + $0xb20] sm:$0xff] %v6226
  %6259 = vst [vmem:[#allocation2 + $0xb28] sm:$0xff] %v6227
  %6260 = vst [vmem:[#allocation2 + $0xb30] sm:$0xff] %v6228
  %6261 = vst [vmem:[#allocation2 + $0xb38] sm:$0xff] %v6229
  %6262 = vst [vmem:[#allocation2 + $0xb40] sm:$0xff] %v6230
  %6263 = vst [vmem:[#allocation2 + $0xb48] sm:$0xff] %v6231
  %6264 = vst [vmem:[#allocation2 + $0xb50] sm:$0xff] %v6232
  %6265 = vst [vmem:[#allocation2 + $0xb58] sm:$0xff] %v6233
  %6266 = vst [vmem:[#allocation2 + $0xb60] sm:$0xff] %v6234
  %6267 = vst [vmem:[#allocation2 + $0xb68] sm:$0xff] %v6235
  %6268 = vst [vmem:[#allocation2 + $0xb70] sm:$0xff] %v6236
  %6269 = vst [vmem:[#allocation2 + $0xb78] sm:$0xff] %v6237
  %v6270 = vld [vmem:[#allocation4 + $0x20] sm:$0xff]
  %v6271 = vld [vmem:[#allocation4 + $0x28] sm:$0xff]
  %v6272 = vld [vmem:[#allocation4 + $0x30] sm:$0xff]
  %v6273 = vld [vmem:[#allocation4 + $0x38] sm:$0xff]
  %v6274 = vld [vmem:[#allocation4 + $0x40] sm:$0xff]
  %v6275 = vld [vmem:[#allocation4 + $0x48] sm:$0xff]
  %v6276 = vld [vmem:[#allocation4 + $0x50] sm:$0xff]
  %v6277 = vld [vmem:[#allocation4 + $0x58] sm:$0xff]
  %v6278 = vld [vmem:[#allocation4 + $0x60] sm:$0xff]
  %v6279 = vld [vmem:[#allocation4 + $0x68] sm:$0xff]
  %v6280 = vld [vmem:[#allocation4 + $0x70] sm:$0xff]
  %v6281 = vld [vmem:[#allocation4 + $0x78] sm:$0xff]
  %v6282 = vld [vmem:[#allocation4 + $0x80] sm:$0xff]
  %v6283 = vld [vmem:[#allocation4 + $0x88] sm:$0xff]
  %v6284 = vld [vmem:[#allocation4 + $0x90] sm:$0xff]
  %v6285 = vld [vmem:[#allocation4 + $0x98] sm:$0xff]
  %v6286 = vld [vmem:[#allocation4 + $0xa0] sm:$0xff]
  %6304 = vrot.lane.b32.xlu0 %v6270, 116
  %v6305 = vpop.permute.xlu0 %6304
  %6306 = vrot.lane.b32.xlu0 %v6271, 116
  %v6307 = vpop.permute.xlu0 %6306
  %6308 = vrot.lane.b32.xlu0 %v6272, 116
  %v6309 = vpop.permute.xlu0 %6308
  %6310 = vrot.lane.b32.xlu0 %v6273, 116
  %v6311 = vpop.permute.xlu0 %6310
  %6312 = vrot.lane.b32.xlu0 %v6274, 116
  %v6313 = vpop.permute.xlu0 %6312
  %6314 = vrot.lane.b32.xlu0 %v6275, 116
  %v6315 = vpop.permute.xlu0 %6314
  %6316 = vrot.lane.b32.xlu0 %v6276, 116
  %v6317 = vpop.permute.xlu0 %6316
  %6318 = vrot.lane.b32.xlu0 %v6277, 116
  %v6319 = vpop.permute.xlu0 %6318
  %6320 = vrot.lane.b32.xlu0 %v6278, 116
  %v6321 = vpop.permute.xlu0 %6320
  %6322 = vrot.lane.b32.xlu0 %v6279, 116
  %v6323 = vpop.permute.xlu0 %6322
  %6324 = vrot.lane.b32.xlu0 %v6280, 116
  %v6325 = vpop.permute.xlu0 %6324
  %6326 = vrot.lane.b32.xlu0 %v6281, 116
  %v6327 = vpop.permute.xlu0 %6326
  %6328 = vrot.lane.b32.xlu0 %v6282, 116
  %v6329 = vpop.permute.xlu0 %6328
  %6330 = vrot.lane.b32.xlu0 %v6283, 116
  %v6331 = vpop.permute.xlu0 %6330
  %6332 = vrot.lane.b32.xlu0 %v6284, 116
  %v6333 = vpop.permute.xlu0 %6332
  %6334 = vrot.lane.b32.xlu0 %v6285, 116
  %v6335 = vpop.permute.xlu0 %6334
  %6336 = vrot.lane.b32.xlu0 %v6286, 116
  %v6337 = vpop.permute.xlu0 %6336
  %v6338 = vsel %vm4352, %v6305, %v6307
  %v6339 = vsel %vm4352, %v6307, %v6309
  %v6340 = vsel %vm4352, %v6309, %v6311
  %v6341 = vsel %vm4352, %v6311, %v6313
  %v6342 = vsel %vm4352, %v6313, %v6315
  %v6343 = vsel %vm4352, %v6315, %v6317
  %v6344 = vsel %vm4352, %v6317, %v6319
  %v6345 = vsel %vm4352, %v6319, %v6321
  %v6346 = vsel %vm4352, %v6321, %v6323
  %v6347 = vsel %vm4352, %v6323, %v6325
  %v6348 = vsel %vm4352, %v6325, %v6327
  %v6349 = vsel %vm4352, %v6327, %v6329
  %v6350 = vsel %vm4352, %v6329, %v6331
  %v6351 = vsel %vm4352, %v6331, %v6333
  %v6352 = vsel %vm4352, %v6333, %v6335
  %v6353 = vsel %vm4352, %v6335, %v6337
  %6370 = vst [vmem:[#allocation2 + $0xb80] sm:$0xff] %v6338
  %6371 = vst [vmem:[#allocation2 + $0xb88] sm:$0xff] %v6339
  %6372 = vst [vmem:[#allocation2 + $0xb90] sm:$0xff] %v6340
  %6373 = vst [vmem:[#allocation2 + $0xb98] sm:$0xff] %v6341
  %6374 = vst [vmem:[#allocation2 + $0xba0] sm:$0xff] %v6342
  %6375 = vst [vmem:[#allocation2 + $0xba8] sm:$0xff] %v6343
  %6376 = vst [vmem:[#allocation2 + $0xbb0] sm:$0xff] %v6344
  %6377 = vst [vmem:[#allocation2 + $0xbb8] sm:$0xff] %v6345
  %6378 = vst [vmem:[#allocation2 + $0xbc0] sm:$0xff] %v6346
  %6379 = vst [vmem:[#allocation2 + $0xbc8] sm:$0xff] %v6347
  %6380 = vst [vmem:[#allocation2 + $0xbd0] sm:$0xff] %v6348
  %6381 = vst [vmem:[#allocation2 + $0xbd8] sm:$0xff] %v6349
  %6382 = vst [vmem:[#allocation2 + $0xbe0] sm:$0xff] %v6350
  %6383 = vst [vmem:[#allocation2 + $0xbe8] sm:$0xff] %v6351
  %6384 = vst [vmem:[#allocation2 + $0xbf0] sm:$0xff] %v6352
  %6385 = vst [vmem:[#allocation2 + $0xbf8] sm:$0xff] %v6353
  %v6386 = vld [vmem:[#allocation4 + $0x20] sm:$0xff]
  %v6387 = vld [vmem:[#allocation4 + $0x28] sm:$0xff]
  %v6388 = vld [vmem:[#allocation4 + $0x30] sm:$0xff]
  %v6389 = vld [vmem:[#allocation4 + $0x38] sm:$0xff]
  %v6390 = vld [vmem:[#allocation4 + $0x40] sm:$0xff]
  %v6391 = vld [vmem:[#allocation4 + $0x48] sm:$0xff]
  %v6392 = vld [vmem:[#allocation4 + $0x50] sm:$0xff]
  %v6393 = vld [vmem:[#allocation4 + $0x58] sm:$0xff]
  %v6394 = vld [vmem:[#allocation4 + $0x60] sm:$0xff]
  %v6395 = vld [vmem:[#allocation4 + $0x68] sm:$0xff]
  %v6396 = vld [vmem:[#allocation4 + $0x70] sm:$0xff]
  %v6397 = vld [vmem:[#allocation4 + $0x78] sm:$0xff]
  %v6398 = vld [vmem:[#allocation4 + $0x80] sm:$0xff]
  %v6399 = vld [vmem:[#allocation4 + $0x88] sm:$0xff]
  %v6400 = vld [vmem:[#allocation4 + $0x90] sm:$0xff]
  %v6401 = vld [vmem:[#allocation4 + $0x98] sm:$0xff]
  %v6402 = vld [vmem:[#allocation4 + $0xa0] sm:$0xff]
  %6420 = vrot.lane.b32.xlu0 %v6386, 112
  %v6421 = vpop.permute.xlu0 %6420
  %6422 = vrot.lane.b32.xlu0 %v6387, 112
  %v6423 = vpop.permute.xlu0 %6422
  %6424 = vrot.lane.b32.xlu0 %v6388, 112
  %v6425 = vpop.permute.xlu0 %6424
  %6426 = vrot.lane.b32.xlu0 %v6389, 112
  %v6427 = vpop.permute.xlu0 %6426
  %6428 = vrot.lane.b32.xlu0 %v6390, 112
  %v6429 = vpop.permute.xlu0 %6428
  %6430 = vrot.lane.b32.xlu0 %v6391, 112
  %v6431 = vpop.permute.xlu0 %6430
  %6432 = vrot.lane.b32.xlu0 %v6392, 112
  %v6433 = vpop.permute.xlu0 %6432
  %6434 = vrot.lane.b32.xlu0 %v6393, 112
  %v6435 = vpop.permute.xlu0 %6434
  %6436 = vrot.lane.b32.xlu0 %v6394, 112
  %v6437 = vpop.permute.xlu0 %6436
  %6438 = vrot.lane.b32.xlu0 %v6395, 112
  %v6439 = vpop.permute.xlu0 %6438
  %6440 = vrot.lane.b32.xlu0 %v6396, 112
  %v6441 = vpop.permute.xlu0 %6440
  %6442 = vrot.lane.b32.xlu0 %v6397, 112
  %v6443 = vpop.permute.xlu0 %6442
  %6444 = vrot.lane.b32.xlu0 %v6398, 112
  %v6445 = vpop.permute.xlu0 %6444
  %6446 = vrot.lane.b32.xlu0 %v6399, 112
  %v6447 = vpop.permute.xlu0 %6446
  %6448 = vrot.lane.b32.xlu0 %v6400, 112
  %v6449 = vpop.permute.xlu0 %6448
  %6450 = vrot.lane.b32.xlu0 %v6401, 112
  %v6451 = vpop.permute.xlu0 %6450
  %6452 = vrot.lane.b32.xlu0 %v6402, 112
  %v6453 = vpop.permute.xlu0 %6452
  %v6454 = vsel %vm4469, %v6421, %v6423
  %v6455 = vsel %vm4469, %v6423, %v6425
  %v6456 = vsel %vm4469, %v6425, %v6427
  %v6457 = vsel %vm4469, %v6427, %v6429
  %v6458 = vsel %vm4469, %v6429, %v6431
  %v6459 = vsel %vm4469, %v6431, %v6433
  %v6460 = vsel %vm4469, %v6433, %v6435
  %v6461 = vsel %vm4469, %v6435, %v6437
  %v6462 = vsel %vm4469, %v6437, %v6439
  %v6463 = vsel %vm4469, %v6439, %v6441
  %v6464 = vsel %vm4469, %v6441, %v6443
  %v6465 = vsel %vm4469, %v6443, %v6445
  %v6466 = vsel %vm4469, %v6445, %v6447
  %v6467 = vsel %vm4469, %v6447, %v6449
  %v6468 = vsel %vm4469, %v6449, %v6451
  %v6469 = vsel %vm4469, %v6451, %v6453
  %6486 = vst [vmem:[#allocation2 + $0xc00] sm:$0xff] %v6454
  %6487 = vst [vmem:[#allocation2 + $0xc08] sm:$0xff] %v6455
  %6488 = vst [vmem:[#allocation2 + $0xc10] sm:$0xff] %v6456
  %6489 = vst [vmem:[#allocation2 + $0xc18] sm:$0xff] %v6457
  %6490 = vst [vmem:[#allocation2 + $0xc20] sm:$0xff] %v6458
  %6491 = vst [vmem:[#allocation2 + $0xc28] sm:$0xff] %v6459
  %6492 = vst [vmem:[#allocation2 + $0xc30] sm:$0xff] %v6460
  %6493 = vst [vmem:[#allocation2 + $0xc38] sm:$0xff] %v6461
  %6494 = vst [vmem:[#allocation2 + $0xc40] sm:$0xff] %v6462
  %6495 = vst [vmem:[#allocation2 + $0xc48] sm:$0xff] %v6463
  %6496 = vst [vmem:[#allocation2 + $0xc50] sm:$0xff] %v6464
  %6497 = vst [vmem:[#allocation2 + $0xc58] sm:$0xff] %v6465
  %6498 = vst [vmem:[#allocation2 + $0xc60] sm:$0xff] %v6466
  %6499 = vst [vmem:[#allocation2 + $0xc68] sm:$0xff] %v6467
  %6500 = vst [vmem:[#allocation2 + $0xc70] sm:$0xff] %v6468
  %6501 = vst [vmem:[#allocation2 + $0xc78] sm:$0xff] %v6469
  %v6502 = vld [vmem:[#allocation2] sm:$0xff]
  %v6503 = vld [vmem:[#allocation2 + $0x8] sm:$0xff]
  %v6504 = vld [vmem:[#allocation2 + $0x10] sm:$0xff]
  %v6505 = vld [vmem:[#allocation2 + $0x18] sm:$0xff]
  %v6506 = vld [vmem:[#allocation2 + $0x20] sm:$0xff]
  %v6507 = vld [vmem:[#allocation2 + $0x28] sm:$0xff]
  %v6508 = vld [vmem:[#allocation2 + $0x30] sm:$0xff]
  %v6509 = vld [vmem:[#allocation2 + $0x38] sm:$0xff]
  %v6510 = vld [vmem:[#allocation2 + $0x40] sm:$0xff]
  %v6511 = vld [vmem:[#allocation2 + $0x48] sm:$0xff]
  %v6512 = vld [vmem:[#allocation2 + $0x50] sm:$0xff]
  %v6513 = vld [vmem:[#allocation2 + $0x58] sm:$0xff]
  %v6514 = vld [vmem:[#allocation2 + $0x60] sm:$0xff]
  %v6515 = vld [vmem:[#allocation2 + $0x68] sm:$0xff]
  %v6516 = vld [vmem:[#allocation2 + $0x70] sm:$0xff]
  %v6517 = vld [vmem:[#allocation2 + $0x78] sm:$0xff]
  %v6518 = vld [vmem:[#allocation2 + $0x80] sm:$0xff]
  %v6519 = vld [vmem:[#allocation2 + $0x88] sm:$0xff]
  %v6520 = vld [vmem:[#allocation2 + $0x90] sm:$0xff]
  %v6521 = vld [vmem:[#allocation2 + $0x98] sm:$0xff]
  %v6522 = vld [vmem:[#allocation2 + $0xa0] sm:$0xff]
  %v6523 = vld [vmem:[#allocation2 + $0xa8] sm:$0xff]
  %v6524 = vld [vmem:[#allocation2 + $0xb0] sm:$0xff]
  %v6525 = vld [vmem:[#allocation2 + $0xb8] sm:$0xff]
  %v6526 = vld [vmem:[#allocation2 + $0xc0] sm:$0xff]
  %v6527 = vld [vmem:[#allocation2 + $0xc8] sm:$0xff]
  %v6528 = vld [vmem:[#allocation2 + $0xd0] sm:$0xff]
  %v6529 = vld [vmem:[#allocation2 + $0xd8] sm:$0xff]
  %v6530 = vld [vmem:[#allocation2 + $0xe0] sm:$0xff]
  %v6531 = vld [vmem:[#allocation2 + $0xe8] sm:$0xff]
  %v6532 = vld [vmem:[#allocation2 + $0xf0] sm:$0xff]
  %v6533 = vld [vmem:[#allocation2 + $0xf8] sm:$0xff]
  %v6534 = vld [vmem:[#allocation2 + $0x100] sm:$0xff]
  %v6535 = vld [vmem:[#allocation2 + $0x108] sm:$0xff]
  %v6536 = vld [vmem:[#allocation2 + $0x110] sm:$0xff]
  %v6537 = vld [vmem:[#allocation2 + $0x118] sm:$0xff]
  %v6538 = vld [vmem:[#allocation2 + $0x120] sm:$0xff]
  %v6539 = vld [vmem:[#allocation2 + $0x128] sm:$0xff]
  %v6540 = vld [vmem:[#allocation2 + $0x130] sm:$0xff]
  %v6541 = vld [vmem:[#allocation2 + $0x138] sm:$0xff]
  %v6542 = vld [vmem:[#allocation2 + $0x140] sm:$0xff]
  %v6543 = vld [vmem:[#allocation2 + $0x148] sm:$0xff]
  %v6544 = vld [vmem:[#allocation2 + $0x150] sm:$0xff]
  %v6545 = vld [vmem:[#allocation2 + $0x158] sm:$0xff]
  %v6546 = vld [vmem:[#allocation2 + $0x160] sm:$0xff]
  %v6547 = vld [vmem:[#allocation2 + $0x168] sm:$0xff]
  %v6548 = vld [vmem:[#allocation2 + $0x170] sm:$0xff]
  %v6549 = vld [vmem:[#allocation2 + $0x178] sm:$0xff]
  %v6550 = vld [vmem:[#allocation2 + $0x180] sm:$0xff]
  %v6551 = vld [vmem:[#allocation2 + $0x188] sm:$0xff]
  %v6552 = vld [vmem:[#allocation2 + $0x190] sm:$0xff]
  %v6553 = vld [vmem:[#allocation2 + $0x198] sm:$0xff]
  %v6554 = vld [vmem:[#allocation2 + $0x1a0] sm:$0xff]
  %v6555 = vld [vmem:[#allocation2 + $0x1a8] sm:$0xff]
  %v6556 = vld [vmem:[#allocation2 + $0x1b0] sm:$0xff]
  %v6557 = vld [vmem:[#allocation2 + $0x1b8] sm:$0xff]
  %v6558 = vld [vmem:[#allocation2 + $0x1c0] sm:$0xff]
  %v6559 = vld [vmem:[#allocation2 + $0x1c8] sm:$0xff]
  %v6560 = vld [vmem:[#allocation2 + $0x1d0] sm:$0xff]
  %v6561 = vld [vmem:[#allocation2 + $0x1d8] sm:$0xff]
  %v6562 = vld [vmem:[#allocation2 + $0x1e0] sm:$0xff]
  %v6563 = vld [vmem:[#allocation2 + $0x1e8] sm:$0xff]
  %v6564 = vld [vmem:[#allocation2 + $0x1f0] sm:$0xff]
  %v6565 = vld [vmem:[#allocation2 + $0x1f8] sm:$0xff]
  %v6566 = vld [vmem:[#allocation2 + $0x200] sm:$0xff]
  %v6567 = vld [vmem:[#allocation2 + $0x208] sm:$0xff]
  %v6568 = vld [vmem:[#allocation2 + $0x210] sm:$0xff]
  %v6569 = vld [vmem:[#allocation2 + $0x218] sm:$0xff]
  %v6570 = vld [vmem:[#allocation2 + $0x220] sm:$0xff]
  %v6571 = vld [vmem:[#allocation2 + $0x228] sm:$0xff]
  %v6572 = vld [vmem:[#allocation2 + $0x230] sm:$0xff]
  %v6573 = vld [vmem:[#allocation2 + $0x238] sm:$0xff]
  %v6574 = vld [vmem:[#allocation2 + $0x240] sm:$0xff]
  %v6575 = vld [vmem:[#allocation2 + $0x248] sm:$0xff]
  %v6576 = vld [vmem:[#allocation2 + $0x250] sm:$0xff]
  %v6577 = vld [vmem:[#allocation2 + $0x258] sm:$0xff]
  %v6578 = vld [vmem:[#allocation2 + $0x260] sm:$0xff]
  %v6579 = vld [vmem:[#allocation2 + $0x268] sm:$0xff]
  %v6580 = vld [vmem:[#allocation2 + $0x270] sm:$0xff]
  %v6581 = vld [vmem:[#allocation2 + $0x278] sm:$0xff]
  %v6582 = vld [vmem:[#allocation2 + $0x280] sm:$0xff]
  %v6583 = vld [vmem:[#allocation2 + $0x288] sm:$0xff]
  %v6584 = vld [vmem:[#allocation2 + $0x290] sm:$0xff]
  %v6585 = vld [vmem:[#allocation2 + $0x298] sm:$0xff]
  %v6586 = vld [vmem:[#allocation2 + $0x2a0] sm:$0xff]
  %v6587 = vld [vmem:[#allocation2 + $0x2a8] sm:$0xff]
  %v6588 = vld [vmem:[#allocation2 + $0x2b0] sm:$0xff]
  %v6589 = vld [vmem:[#allocation2 + $0x2b8] sm:$0xff]
  %v6590 = vld [vmem:[#allocation2 + $0x2c0] sm:$0xff]
  %v6591 = vld [vmem:[#allocation2 + $0x2c8] sm:$0xff]
  %v6592 = vld [vmem:[#allocation2 + $0x2d0] sm:$0xff]
  %v6593 = vld [vmem:[#allocation2 + $0x2d8] sm:$0xff]
  %v6594 = vld [vmem:[#allocation2 + $0x2e0] sm:$0xff]
  %v6595 = vld [vmem:[#allocation2 + $0x2e8] sm:$0xff]
  %v6596 = vld [vmem:[#allocation2 + $0x2f0] sm:$0xff]
  %v6597 = vld [vmem:[#allocation2 + $0x2f8] sm:$0xff]
  %v6598 = vld [vmem:[#allocation2 + $0x300] sm:$0xff]
  %v6599 = vld [vmem:[#allocation2 + $0x308] sm:$0xff]
  %v6600 = vld [vmem:[#allocation2 + $0x310] sm:$0xff]
  %v6601 = vld [vmem:[#allocation2 + $0x318] sm:$0xff]
  %v6602 = vld [vmem:[#allocation2 + $0x320] sm:$0xff]
  %v6603 = vld [vmem:[#allocation2 + $0x328] sm:$0xff]
  %v6604 = vld [vmem:[#allocation2 + $0x330] sm:$0xff]
  %v6605 = vld [vmem:[#allocation2 + $0x338] sm:$0xff]
  %v6606 = vld [vmem:[#allocation2 + $0x340] sm:$0xff]
  %v6607 = vld [vmem:[#allocation2 + $0x348] sm:$0xff]
  %v6608 = vld [vmem:[#allocation2 + $0x350] sm:$0xff]
  %v6609 = vld [vmem:[#allocation2 + $0x358] sm:$0xff]
  %v6610 = vld [vmem:[#allocation2 + $0x360] sm:$0xff]
  %v6611 = vld [vmem:[#allocation2 + $0x368] sm:$0xff]
  %v6612 = vld [vmem:[#allocation2 + $0x370] sm:$0xff]
  %v6613 = vld [vmem:[#allocation2 + $0x378] sm:$0xff]
  %v6614 = vld [vmem:[#allocation2 + $0x380] sm:$0xff]
  %v6615 = vld [vmem:[#allocation2 + $0x388] sm:$0xff]
  %v6616 = vld [vmem:[#allocation2 + $0x390] sm:$0xff]
  %v6617 = vld [vmem:[#allocation2 + $0x398] sm:$0xff]
  %v6618 = vld [vmem:[#allocation2 + $0x3a0] sm:$0xff]
  %v6619 = vld [vmem:[#allocation2 + $0x3a8] sm:$0xff]
  %v6620 = vld [vmem:[#allocation2 + $0x3b0] sm:$0xff]
  %v6621 = vld [vmem:[#allocation2 + $0x3b8] sm:$0xff]
  %v6622 = vld [vmem:[#allocation2 + $0x3c0] sm:$0xff]
  %v6623 = vld [vmem:[#allocation2 + $0x3c8] sm:$0xff]
  %v6624 = vld [vmem:[#allocation2 + $0x3d0] sm:$0xff]
  %v6625 = vld [vmem:[#allocation2 + $0x3d8] sm:$0xff]
  %v6626 = vld [vmem:[#allocation2 + $0x3e0] sm:$0xff]
  %v6627 = vld [vmem:[#allocation2 + $0x3e8] sm:$0xff]
  %v6628 = vld [vmem:[#allocation2 + $0x3f0] sm:$0xff]
  %v6629 = vld [vmem:[#allocation2 + $0x3f8] sm:$0xff]
  %v6630 = vld [vmem:[#allocation2 + $0x400] sm:$0xff]
  %v6631 = vld [vmem:[#allocation2 + $0x408] sm:$0xff]
  %v6632 = vld [vmem:[#allocation2 + $0x410] sm:$0xff]
  %v6633 = vld [vmem:[#allocation2 + $0x418] sm:$0xff]
  %v6634 = vld [vmem:[#allocation2 + $0x420] sm:$0xff]
  %v6635 = vld [vmem:[#allocation2 + $0x428] sm:$0xff]
  %v6636 = vld [vmem:[#allocation2 + $0x430] sm:$0xff]
  %v6637 = vld [vmem:[#allocation2 + $0x438] sm:$0xff]
  %v6638 = vld [vmem:[#allocation2 + $0x440] sm:$0xff]
  %v6639 = vld [vmem:[#allocation2 + $0x448] sm:$0xff]
  %v6640 = vld [vmem:[#allocation2 + $0x450] sm:$0xff]
  %v6641 = vld [vmem:[#allocation2 + $0x458] sm:$0xff]
  %v6642 = vld [vmem:[#allocation2 + $0x460] sm:$0xff]
  %v6643 = vld [vmem:[#allocation2 + $0x468] sm:$0xff]
  %v6644 = vld [vmem:[#allocation2 + $0x470] sm:$0xff]
  %v6645 = vld [vmem:[#allocation2 + $0x478] sm:$0xff]
  %v6646 = vld [vmem:[#allocation2 + $0x480] sm:$0xff]
  %v6647 = vld [vmem:[#allocation2 + $0x488] sm:$0xff]
  %v6648 = vld [vmem:[#allocation2 + $0x490] sm:$0xff]
  %v6649 = vld [vmem:[#allocation2 + $0x498] sm:$0xff]
  %v6650 = vld [vmem:[#allocation2 + $0x4a0] sm:$0xff]
  %v6651 = vld [vmem:[#allocation2 + $0x4a8] sm:$0xff]
  %v6652 = vld [vmem:[#allocation2 + $0x4b0] sm:$0xff]
  %v6653 = vld [vmem:[#allocation2 + $0x4b8] sm:$0xff]
  %v6654 = vld [vmem:[#allocation2 + $0x4c0] sm:$0xff]
  %v6655 = vld [vmem:[#allocation2 + $0x4c8] sm:$0xff]
  %v6656 = vld [vmem:[#allocation2 + $0x4d0] sm:$0xff]
  %v6657 = vld [vmem:[#allocation2 + $0x4d8] sm:$0xff]
  %v6658 = vld [vmem:[#allocation2 + $0x4e0] sm:$0xff]
  %v6659 = vld [vmem:[#allocation2 + $0x4e8] sm:$0xff]
  %v6660 = vld [vmem:[#allocation2 + $0x4f0] sm:$0xff]
  %v6661 = vld [vmem:[#allocation2 + $0x4f8] sm:$0xff]
  %v6662 = vld [vmem:[#allocation2 + $0x500] sm:$0xff]
  %v6663 = vld [vmem:[#allocation2 + $0x508] sm:$0xff]
  %v6664 = vld [vmem:[#allocation2 + $0x510] sm:$0xff]
  %v6665 = vld [vmem:[#allocation2 + $0x518] sm:$0xff]
  %v6666 = vld [vmem:[#allocation2 + $0x520] sm:$0xff]
  %v6667 = vld [vmem:[#allocation2 + $0x528] sm:$0xff]
  %v6668 = vld [vmem:[#allocation2 + $0x530] sm:$0xff]
  %v6669 = vld [vmem:[#allocation2 + $0x538] sm:$0xff]
  %v6670 = vld [vmem:[#allocation2 + $0x540] sm:$0xff]
  %v6671 = vld [vmem:[#allocation2 + $0x548] sm:$0xff]
  %v6672 = vld [vmem:[#allocation2 + $0x550] sm:$0xff]
  %v6673 = vld [vmem:[#allocation2 + $0x558] sm:$0xff]
  %v6674 = vld [vmem:[#allocation2 + $0x560] sm:$0xff]
  %v6675 = vld [vmem:[#allocation2 + $0x568] sm:$0xff]
  %v6676 = vld [vmem:[#allocation2 + $0x570] sm:$0xff]
  %v6677 = vld [vmem:[#allocation2 + $0x578] sm:$0xff]
  %v6678 = vld [vmem:[#allocation2 + $0x580] sm:$0xff]
  %v6679 = vld [vmem:[#allocation2 + $0x588] sm:$0xff]
  %v6680 = vld [vmem:[#allocation2 + $0x590] sm:$0xff]
  %v6681 = vld [vmem:[#allocation2 + $0x598] sm:$0xff]
  %v6682 = vld [vmem:[#allocation2 + $0x5a0] sm:$0xff]
  %v6683 = vld [vmem:[#allocation2 + $0x5a8] sm:$0xff]
  %v6684 = vld [vmem:[#allocation2 + $0x5b0] sm:$0xff]
  %v6685 = vld [vmem:[#allocation2 + $0x5b8] sm:$0xff]
  %v6686 = vld [vmem:[#allocation2 + $0x5c0] sm:$0xff]
  %v6687 = vld [vmem:[#allocation2 + $0x5c8] sm:$0xff]
  %v6688 = vld [vmem:[#allocation2 + $0x5d0] sm:$0xff]
  %v6689 = vld [vmem:[#allocation2 + $0x5d8] sm:$0xff]
  %v6690 = vld [vmem:[#allocation2 + $0x5e0] sm:$0xff]
  %v6691 = vld [vmem:[#allocation2 + $0x5e8] sm:$0xff]
  %v6692 = vld [vmem:[#allocation2 + $0x5f0] sm:$0xff]
  %v6693 = vld [vmem:[#allocation2 + $0x5f8] sm:$0xff]
  %v6694 = vld [vmem:[#allocation2 + $0x600] sm:$0xff]
  %v6695 = vld [vmem:[#allocation2 + $0x608] sm:$0xff]
  %v6696 = vld [vmem:[#allocation2 + $0x610] sm:$0xff]
  %v6697 = vld [vmem:[#allocation2 + $0x618] sm:$0xff]
  %v6698 = vld [vmem:[#allocation2 + $0x620] sm:$0xff]
  %v6699 = vld [vmem:[#allocation2 + $0x628] sm:$0xff]
  %v6700 = vld [vmem:[#allocation2 + $0x630] sm:$0xff]
  %v6701 = vld [vmem:[#allocation2 + $0x638] sm:$0xff]
  %v6702 = vld [vmem:[#allocation2 + $0x640] sm:$0xff]
  %v6703 = vld [vmem:[#allocation2 + $0x648] sm:$0xff]
  %v6704 = vld [vmem:[#allocation2 + $0x650] sm:$0xff]
  %v6705 = vld [vmem:[#allocation2 + $0x658] sm:$0xff]
  %v6706 = vld [vmem:[#allocation2 + $0x660] sm:$0xff]
  %v6707 = vld [vmem:[#allocation2 + $0x668] sm:$0xff]
  %v6708 = vld [vmem:[#allocation2 + $0x670] sm:$0xff]
  %v6709 = vld [vmem:[#allocation2 + $0x678] sm:$0xff]
  %v6710 = vld [vmem:[#allocation2 + $0x680] sm:$0xff]
  %v6711 = vld [vmem:[#allocation2 + $0x688] sm:$0xff]
  %v6712 = vld [vmem:[#allocation2 + $0x690] sm:$0xff]
  %v6713 = vld [vmem:[#allocation2 + $0x698] sm:$0xff]
  %v6714 = vld [vmem:[#allocation2 + $0x6a0] sm:$0xff]
  %v6715 = vld [vmem:[#allocation2 + $0x6a8] sm:$0xff]
  %v6716 = vld [vmem:[#allocation2 + $0x6b0] sm:$0xff]
  %v6717 = vld [vmem:[#allocation2 + $0x6b8] sm:$0xff]
  %v6718 = vld [vmem:[#allocation2 + $0x6c0] sm:$0xff]
  %v6719 = vld [vmem:[#allocation2 + $0x6c8] sm:$0xff]
  %v6720 = vld [vmem:[#allocation2 + $0x6d0] sm:$0xff]
  %v6721 = vld [vmem:[#allocation2 + $0x6d8] sm:$0xff]
  %v6722 = vld [vmem:[#allocation2 + $0x6e0] sm:$0xff]
  %v6723 = vld [vmem:[#allocation2 + $0x6e8] sm:$0xff]
  %v6724 = vld [vmem:[#allocation2 + $0x6f0] sm:$0xff]
  %v6725 = vld [vmem:[#allocation2 + $0x6f8] sm:$0xff]
  %v6726 = vld [vmem:[#allocation2 + $0x700] sm:$0xff]
  %v6727 = vld [vmem:[#allocation2 + $0x708] sm:$0xff]
  %v6728 = vld [vmem:[#allocation2 + $0x710] sm:$0xff]
  %v6729 = vld [vmem:[#allocation2 + $0x718] sm:$0xff]
  %v6730 = vld [vmem:[#allocation2 + $0x720] sm:$0xff]
  %v6731 = vld [vmem:[#allocation2 + $0x728] sm:$0xff]
  %v6732 = vld [vmem:[#allocation2 + $0x730] sm:$0xff]
  %v6733 = vld [vmem:[#allocation2 + $0x738] sm:$0xff]
  %v6734 = vld [vmem:[#allocation2 + $0x740] sm:$0xff]
  %v6735 = vld [vmem:[#allocation2 + $0x748] sm:$0xff]
  %v6736 = vld [vmem:[#allocation2 + $0x750] sm:$0xff]
  %v6737 = vld [vmem:[#allocation2 + $0x758] sm:$0xff]
  %v6738 = vld [vmem:[#allocation2 + $0x760] sm:$0xff]
  %v6739 = vld [vmem:[#allocation2 + $0x768] sm:$0xff]
  %v6740 = vld [vmem:[#allocation2 + $0x770] sm:$0xff]
  %v6741 = vld [vmem:[#allocation2 + $0x778] sm:$0xff]
  %v6742 = vld [vmem:[#allocation2 + $0x780] sm:$0xff]
  %v6743 = vld [vmem:[#allocation2 + $0x788] sm:$0xff]
  %v6744 = vld [vmem:[#allocation2 + $0x790] sm:$0xff]
  %v6745 = vld [vmem:[#allocation2 + $0x798] sm:$0xff]
  %v6746 = vld [vmem:[#allocation2 + $0x7a0] sm:$0xff]
  %v6747 = vld [vmem:[#allocation2 + $0x7a8] sm:$0xff]
  %v6748 = vld [vmem:[#allocation2 + $0x7b0] sm:$0xff]
  %v6749 = vld [vmem:[#allocation2 + $0x7b8] sm:$0xff]
  %v6750 = vld [vmem:[#allocation2 + $0x7c0] sm:$0xff]
  %v6751 = vld [vmem:[#allocation2 + $0x7c8] sm:$0xff]
  %v6752 = vld [vmem:[#allocation2 + $0x7d0] sm:$0xff]
  %v6753 = vld [vmem:[#allocation2 + $0x7d8] sm:$0xff]
  %v6754 = vld [vmem:[#allocation2 + $0x7e0] sm:$0xff]
  %v6755 = vld [vmem:[#allocation2 + $0x7e8] sm:$0xff]
  %v6756 = vld [vmem:[#allocation2 + $0x7f0] sm:$0xff]
  %v6757 = vld [vmem:[#allocation2 + $0x7f8] sm:$0xff]
  %v6758 = vld [vmem:[#allocation2 + $0x800] sm:$0xff]
  %v6759 = vld [vmem:[#allocation2 + $0x808] sm:$0xff]
  %v6760 = vld [vmem:[#allocation2 + $0x810] sm:$0xff]
  %v6761 = vld [vmem:[#allocation2 + $0x818] sm:$0xff]
  %v6762 = vld [vmem:[#allocation2 + $0x820] sm:$0xff]
  %v6763 = vld [vmem:[#allocation2 + $0x828] sm:$0xff]
  %v6764 = vld [vmem:[#allocation2 + $0x830] sm:$0xff]
  %v6765 = vld [vmem:[#allocation2 + $0x838] sm:$0xff]
  %v6766 = vld [vmem:[#allocation2 + $0x840] sm:$0xff]
  %v6767 = vld [vmem:[#allocation2 + $0x848] sm:$0xff]
  %v6768 = vld [vmem:[#allocation2 + $0x850] sm:$0xff]
  %v6769 = vld [vmem:[#allocation2 + $0x858] sm:$0xff]
  %v6770 = vld [vmem:[#allocation2 + $0x860] sm:$0xff]
  %v6771 = vld [vmem:[#allocation2 + $0x868] sm:$0xff]
  %v6772 = vld [vmem:[#allocation2 + $0x870] sm:$0xff]
  %v6773 = vld [vmem:[#allocation2 + $0x878] sm:$0xff]
  %v6774 = vld [vmem:[#allocation2 + $0x880] sm:$0xff]
  %v6775 = vld [vmem:[#allocation2 + $0x888] sm:$0xff]
  %v6776 = vld [vmem:[#allocation2 + $0x890] sm:$0xff]
  %v6777 = vld [vmem:[#allocation2 + $0x898] sm:$0xff]
  %v6778 = vld [vmem:[#allocation2 + $0x8a0] sm:$0xff]
  %v6779 = vld [vmem:[#allocation2 + $0x8a8] sm:$0xff]
  %v6780 = vld [vmem:[#allocation2 + $0x8b0] sm:$0xff]
  %v6781 = vld [vmem:[#allocation2 + $0x8b8] sm:$0xff]
  %v6782 = vld [vmem:[#allocation2 + $0x8c0] sm:$0xff]
  %v6783 = vld [vmem:[#allocation2 + $0x8c8] sm:$0xff]
  %v6784 = vld [vmem:[#allocation2 + $0x8d0] sm:$0xff]
  %v6785 = vld [vmem:[#allocation2 + $0x8d8] sm:$0xff]
  %v6786 = vld [vmem:[#allocation2 + $0x8e0] sm:$0xff]
  %v6787 = vld [vmem:[#allocation2 + $0x8e8] sm:$0xff]
  %v6788 = vld [vmem:[#allocation2 + $0x8f0] sm:$0xff]
  %v6789 = vld [vmem:[#allocation2 + $0x8f8] sm:$0xff]
  %v6790 = vld [vmem:[#allocation2 + $0x900] sm:$0xff]
  %v6791 = vld [vmem:[#allocation2 + $0x908] sm:$0xff]
  %v6792 = vld [vmem:[#allocation2 + $0x910] sm:$0xff]
  %v6793 = vld [vmem:[#allocation2 + $0x918] sm:$0xff]
  %v6794 = vld [vmem:[#allocation2 + $0x920] sm:$0xff]
  %v6795 = vld [vmem:[#allocation2 + $0x928] sm:$0xff]
  %v6796 = vld [vmem:[#allocation2 + $0x930] sm:$0xff]
  %v6797 = vld [vmem:[#allocation2 + $0x938] sm:$0xff]
  %v6798 = vld [vmem:[#allocation2 + $0x940] sm:$0xff]
  %v6799 = vld [vmem:[#allocation2 + $0x948] sm:$0xff]
  %v6800 = vld [vmem:[#allocation2 + $0x950] sm:$0xff]
  %v6801 = vld [vmem:[#allocation2 + $0x958] sm:$0xff]
  %v6802 = vld [vmem:[#allocation2 + $0x960] sm:$0xff]
  %v6803 = vld [vmem:[#allocation2 + $0x968] sm:$0xff]
  %v6804 = vld [vmem:[#allocation2 + $0x970] sm:$0xff]
  %v6805 = vld [vmem:[#allocation2 + $0x978] sm:$0xff]
  %v6806 = vld [vmem:[#allocation2 + $0x980] sm:$0xff]
  %v6807 = vld [vmem:[#allocation2 + $0x988] sm:$0xff]
  %v6808 = vld [vmem:[#allocation2 + $0x990] sm:$0xff]
  %v6809 = vld [vmem:[#allocation2 + $0x998] sm:$0xff]
  %v6810 = vld [vmem:[#allocation2 + $0x9a0] sm:$0xff]
  %v6811 = vld [vmem:[#allocation2 + $0x9a8] sm:$0xff]
  %v6812 = vld [vmem:[#allocation2 + $0x9b0] sm:$0xff]
  %v6813 = vld [vmem:[#allocation2 + $0x9b8] sm:$0xff]
  %v6814 = vld [vmem:[#allocation2 + $0x9c0] sm:$0xff]
  %v6815 = vld [vmem:[#allocation2 + $0x9c8] sm:$0xff]
  %v6816 = vld [vmem:[#allocation2 + $0x9d0] sm:$0xff]
  %v6817 = vld [vmem:[#allocation2 + $0x9d8] sm:$0xff]
  %v6818 = vld [vmem:[#allocation2 + $0x9e0] sm:$0xff]
  %v6819 = vld [vmem:[#allocation2 + $0x9e8] sm:$0xff]
  %v6820 = vld [vmem:[#allocation2 + $0x9f0] sm:$0xff]
  %v6821 = vld [vmem:[#allocation2 + $0x9f8] sm:$0xff]
  %v6822 = vld [vmem:[#allocation2 + $0xa00] sm:$0xff]
  %v6823 = vld [vmem:[#allocation2 + $0xa08] sm:$0xff]
  %v6824 = vld [vmem:[#allocation2 + $0xa10] sm:$0xff]
  %v6825 = vld [vmem:[#allocation2 + $0xa18] sm:$0xff]
  %v6826 = vld [vmem:[#allocation2 + $0xa20] sm:$0xff]
  %v6827 = vld [vmem:[#allocation2 + $0xa28] sm:$0xff]
  %v6828 = vld [vmem:[#allocation2 + $0xa30] sm:$0xff]
  %v6829 = vld [vmem:[#allocation2 + $0xa38] sm:$0xff]
  %v6830 = vld [vmem:[#allocation2 + $0xa40] sm:$0xff]
  %v6831 = vld [vmem:[#allocation2 + $0xa48] sm:$0xff]
  %v6832 = vld [vmem:[#allocation2 + $0xa50] sm:$0xff]
  %v6833 = vld [vmem:[#allocation2 + $0xa58] sm:$0xff]
  %v6834 = vld [vmem:[#allocation2 + $0xa60] sm:$0xff]
  %v6835 = vld [vmem:[#allocation2 + $0xa68] sm:$0xff]
  %v6836 = vld [vmem:[#allocation2 + $0xa70] sm:$0xff]
  %v6837 = vld [vmem:[#allocation2 + $0xa78] sm:$0xff]
  %v6838 = vld [vmem:[#allocation2 + $0xa80] sm:$0xff]
  %v6839 = vld [vmem:[#allocation2 + $0xa88] sm:$0xff]
  %v6840 = vld [vmem:[#allocation2 + $0xa90] sm:$0xff]
  %v6841 = vld [vmem:[#allocation2 + $0xa98] sm:$0xff]
  %v6842 = vld [vmem:[#allocation2 + $0xaa0] sm:$0xff]
  %v6843 = vld [vmem:[#allocation2 + $0xaa8] sm:$0xff]
  %v6844 = vld [vmem:[#allocation2 + $0xab0] sm:$0xff]
  %v6845 = vld [vmem:[#allocation2 + $0xab8] sm:$0xff]
  %v6846 = vld [vmem:[#allocation2 + $0xac0] sm:$0xff]
  %v6847 = vld [vmem:[#allocation2 + $0xac8] sm:$0xff]
  %v6848 = vld [vmem:[#allocation2 + $0xad0] sm:$0xff]
  %v6849 = vld [vmem:[#allocation2 + $0xad8] sm:$0xff]
  %v6850 = vld [vmem:[#allocation2 + $0xae0] sm:$0xff]
  %v6851 = vld [vmem:[#allocation2 + $0xae8] sm:$0xff]
  %v6852 = vld [vmem:[#allocation2 + $0xaf0] sm:$0xff]
  %v6853 = vld [vmem:[#allocation2 + $0xaf8] sm:$0xff]
  %v6854 = vld [vmem:[#allocation2 + $0xb00] sm:$0xff]
  %v6855 = vld [vmem:[#allocation2 + $0xb08] sm:$0xff]
  %v6856 = vld [vmem:[#allocation2 + $0xb10] sm:$0xff]
  %v6857 = vld [vmem:[#allocation2 + $0xb18] sm:$0xff]
  %v6858 = vld [vmem:[#allocation2 + $0xb20] sm:$0xff]
  %v6859 = vld [vmem:[#allocation2 + $0xb28] sm:$0xff]
  %v6860 = vld [vmem:[#allocation2 + $0xb30] sm:$0xff]
  %v6861 = vld [vmem:[#allocation2 + $0xb38] sm:$0xff]
  %v6862 = vld [vmem:[#allocation2 + $0xb40] sm:$0xff]
  %v6863 = vld [vmem:[#allocation2 + $0xb48] sm:$0xff]
  %v6864 = vld [vmem:[#allocation2 + $0xb50] sm:$0xff]
  %v6865 = vld [vmem:[#allocation2 + $0xb58] sm:$0xff]
  %v6866 = vld [vmem:[#allocation2 + $0xb60] sm:$0xff]
  %v6867 = vld [vmem:[#allocation2 + $0xb68] sm:$0xff]
  %v6868 = vld [vmem:[#allocation2 + $0xb70] sm:$0xff]
  %v6869 = vld [vmem:[#allocation2 + $0xb78] sm:$0xff]
  %v6870 = vld [vmem:[#allocation2 + $0xb80] sm:$0xff]
  %v6871 = vld [vmem:[#allocation2 + $0xb88] sm:$0xff]
  %v6872 = vld [vmem:[#allocation2 + $0xb90] sm:$0xff]
  %v6873 = vld [vmem:[#allocation2 + $0xb98] sm:$0xff]
  %v6874 = vld [vmem:[#allocation2 + $0xba0] sm:$0xff]
  %v6875 = vld [vmem:[#allocation2 + $0xba8] sm:$0xff]
  %v6876 = vld [vmem:[#allocation2 + $0xbb0] sm:$0xff]
  %v6877 = vld [vmem:[#allocation2 + $0xbb8] sm:$0xff]
  %v6878 = vld [vmem:[#allocation2 + $0xbc0] sm:$0xff]
  %v6879 = vld [vmem:[#allocation2 + $0xbc8] sm:$0xff]
  %v6880 = vld [vmem:[#allocation2 + $0xbd0] sm:$0xff]
  %v6881 = vld [vmem:[#allocation2 + $0xbd8] sm:$0xff]
  %v6882 = vld [vmem:[#allocation2 + $0xbe0] sm:$0xff]
  %v6883 = vld [vmem:[#allocation2 + $0xbe8] sm:$0xff]
  %v6884 = vld [vmem:[#allocation2 + $0xbf0] sm:$0xff]
  %v6885 = vld [vmem:[#allocation2 + $0xbf8] sm:$0xff]
  %v6886 = vld [vmem:[#allocation2 + $0xc00] sm:$0xff]
  %v6887 = vld [vmem:[#allocation2 + $0xc08] sm:$0xff]
  %v6888 = vld [vmem:[#allocation2 + $0xc10] sm:$0xff]
  %v6889 = vld [vmem:[#allocation2 + $0xc18] sm:$0xff]
  %v6890 = vld [vmem:[#allocation2 + $0xc20] sm:$0xff]
  %v6891 = vld [vmem:[#allocation2 + $0xc28] sm:$0xff]
  %v6892 = vld [vmem:[#allocation2 + $0xc30] sm:$0xff]
  %v6893 = vld [vmem:[#allocation2 + $0xc38] sm:$0xff]
  %v6894 = vld [vmem:[#allocation2 + $0xc40] sm:$0xff]
  %v6895 = vld [vmem:[#allocation2 + $0xc48] sm:$0xff]
  %v6896 = vld [vmem:[#allocation2 + $0xc50] sm:$0xff]
  %v6897 = vld [vmem:[#allocation2 + $0xc58] sm:$0xff]
  %v6898 = vld [vmem:[#allocation2 + $0xc60] sm:$0xff]
  %v6899 = vld [vmem:[#allocation2 + $0xc68] sm:$0xff]
  %v6900 = vld [vmem:[#allocation2 + $0xc70] sm:$0xff]
  %v6901 = vld [vmem:[#allocation2 + $0xc78] sm:$0xff]
  %6903 = vset.pattern.permute.xlu0 0
  %6904 = vperm.xlu0 %6903, %v4018
  %v6905 = vpop.permute.xlu0 %6904
  %6908 = vset.pattern.permute.xlu0 0
  %6909 = vperm.xlu0 %6908, %v4019
  %v6910 = vpop.permute.xlu0 %6909
  %v6913 = vsel %vm3114, %v4015, 0
  %v6916 = vsel %vm3114, %v4017, 0
  %6918 = vmatprep.subr.mxu0 %v6503
  %6919 = vmatpush1.msra.mxu0 %v6502
  %6920 = vmatprep.subr.mxu0 %v6519
  %6921 = vmatpush1.msra.mxu0 %v6518
  %6922 = vmatprep.subr.mxu0 %v6535
  %6923 = vmatpush1.msra.mxu0 %v6534
  %6924 = vmatprep.subr.mxu0 %v6551
  %6925 = vmatpush1.msra.mxu0 %v6550
  %6926 = vmatprep.subr.mxu0 %v6567
  %6927 = vmatpush1.msra.mxu0 %v6566
  %6928 = vmatprep.subr.mxu0 %v6583
  %6929 = vmatpush1.msra.mxu0 %v6582
  %6930 = vmatprep.subr.mxu0 %v6599
  %6931 = vmatpush1.msra.mxu0 %v6598
  %6932 = vmatprep.subr.mxu0 %v6615
  %6933 = vmatpush1.msra.mxu0 %v6614
  %6934 = vmatprep.subr.mxu0 %v6631
  %6935 = vmatpush1.msra.mxu0 %v6630
  %6936 = vmatprep.subr.mxu0 %v6647
  %6937 = vmatpush1.msra.mxu0 %v6646
  %6938 = vmatprep.subr.mxu0 %v6663
  %6939 = vmatpush1.msra.mxu0 %v6662
  %6940 = vmatprep.subr.mxu0 %v6679
  %6941 = vmatpush1.msra.mxu0 %v6678
  %6942 = vmatprep.subr.mxu0 %v6695
  %6943 = vmatpush1.msra.mxu0 %v6694
  %6944 = vmatprep.subr.mxu0 %v6711
  %6945 = vmatpush1.msra.mxu0 %v6710
  %6946 = vmatprep.subr.mxu0 %v6727
  %6947 = vmatpush1.msra.mxu0 %v6726
  %6948 = vmatprep.subr.mxu0 %v6743
  %6949 = vmatpush1.msra.mxu0 %v6742
  %6950 = vmatprep.subr.mxu0 %v6759
  %6951 = vmatpush1.msra.mxu0 %v6758
  %6952 = vmatprep.subr.mxu0 %v6775
  %6953 = vmatpush1.msra.mxu0 %v6774
  %6954 = vmatprep.subr.mxu0 %v6791
  %6955 = vmatpush1.msra.mxu0 %v6790
  %6956 = vmatprep.subr.mxu0 %v6807
  %6957 = vmatpush1.msra.mxu0 %v6806
  %6958 = vmatprep.subr.mxu0 %v6823
  %6959 = vmatpush1.msra.mxu0 %v6822
  %6960 = vmatprep.subr.mxu0 %v6839
  %6961 = vmatpush1.msra.mxu0 %v6838
  %6962 = vmatprep.subr.mxu0 %v6855
  %6963 = vmatpush1.msra.mxu0 %v6854
  %6964 = vmatprep.subr.mxu0 %v6871
  %6965 = vmatpush1.msra.mxu0 %v6870
  %6966 = vmatprep.subr.mxu0 %v6887
  %6967 = vmatpush1.msra.mxu0 %v6886
  %6968 = vmatprep.subr.mxu0 0.0
  %6969 = vmatpush1.msra.mxu0 0.0
  %6970 = vmatprep.subr.mxu0 0.0
  %6971 = vmatpush1.msra.mxu0 0.0
  %6972 = vmatprep.subr.mxu0 0.0
  %6973 = vmatpush1.msra.mxu0 0.0
  %6974 = vmatprep.subr.mxu0 0.0
  %6975 = vmatpush1.msra.mxu0 0.0
  %6976 = vmatprep.subr.mxu0 0.0
  %6977 = vmatpush1.msra.mxu0 0.0
  %6978 = vmatprep.subr.mxu0 0.0
  %6979 = vmatpush1.msra.mxu0 0.0
  %6980 = vmatprep.subr.mxu0 0.0
  %6981 = vmatpush1.msra.mxu0 0.0
  %6982 = vmatprep.mubr.f32.mxu0 %v6913
  %6983 = vmatmul.mubr.f32.gmra.mrb[0].mxu0 %v4014
  %v6984 = vpop.f32.mrb[0].mxu0
  %v6985 = vadd.f32 %v6905, %v6984
  %v6986 = vpop.f32.mrb[0].mxu0
  %v6987 = vadd.f32 %v6905, %v6986
  %6988 = vmatprep.mubr.f32.mxu0 %v6916
  %6989 = vmatmul.mubr.f32.gmra.mrb[0].mxu0 %v4016
  %v6990 = vpop.f32.mrb[0].mxu0
  %v6991 = vadd.f32 %v6910, %v6990
  %v6992 = vpop.f32.mrb[0].mxu0
  %v6993 = vadd.f32 %v6910, %v6992
  %6994 = vdwg.mxu0
  %6995 = vmatprep.subr.mxu0 %v6505
  %6996 = vmatpush1.msra.mxu0 %v6504
  %6997 = vmatprep.subr.mxu0 %v6521
  %6998 = vmatpush1.msra.mxu0 %v6520
  %6999 = vmatprep.subr.mxu0 %v6537
  %7000 = vmatpush1.msra.mxu0 %v6536
  %7001 = vmatprep.subr.mxu0 %v6553
  %7002 = vmatpush1.msra.mxu0 %v6552
  %7003 = vmatprep.subr.mxu0 %v6569
  %7004 = vmatpush1.msra.mxu0 %v6568
  %7005 = vmatprep.subr.mxu0 %v6585
  %7006 = vmatpush1.msra.mxu0 %v6584
  %7007 = vmatprep.subr.mxu0 %v6601
  %7008 = vmatpush1.msra.mxu0 %v6600
  %7009 = vmatprep.subr.mxu0 %v6617
  %7010 = vmatpush1.msra.mxu0 %v6616
  %7011 = vmatprep.subr.mxu0 %v6633
  %7012 = vmatpush1.msra.mxu0 %v6632
  %7013 = vmatprep.subr.mxu0 %v6649
  %7014 = vmatpush1.msra.mxu0 %v6648
  %7015 = vmatprep.subr.mxu0 %v6665
  %7016 = vmatpush1.msra.mxu0 %v6664
  %7017 = vmatprep.subr.mxu0 %v6681
  %7018 = vmatpush1.msra.mxu0 %v6680
  %7019 = vmatprep.subr.mxu0 %v6697
  %7020 = vmatpush1.msra.mxu0 %v6696
  %7021 = vmatprep.subr.mxu0 %v6713
  %7022 = vmatpush1.msra.mxu0 %v6712
  %7023 = vmatprep.subr.mxu0 %v6729
  %7024 = vmatpush1.msra.mxu0 %v6728
  %7025 = vmatprep.subr.mxu0 %v6745
  %7026 = vmatpush1.msra.mxu0 %v6744
  %7027 = vmatprep.subr.mxu0 %v6761
  %7028 = vmatpush1.msra.mxu0 %v6760
  %7029 = vmatprep.subr.mxu0 %v6777
  %7030 = vmatpush1.msra.mxu0 %v6776
  %7031 = vmatprep.subr.mxu0 %v6793
  %7032 = vmatpush1.msra.mxu0 %v6792
  %7033 = vmatprep.subr.mxu0 %v6809
  %7034 = vmatpush1.msra.mxu0 %v6808
  %7035 = vmatprep.subr.mxu0 %v6825
  %7036 = vmatpush1.msra.mxu0 %v6824
  %7037 = vmatprep.subr.mxu0 %v6841
  %7038 = vmatpush1.msra.mxu0 %v6840
  %7039 = vmatprep.subr.mxu0 %v6857
  %7040 = vmatpush1.msra.mxu0 %v6856
  %7041 = vmatprep.subr.mxu0 %v6873
  %7042 = vmatpush1.msra.mxu0 %v6872
  %7043 = vmatprep.subr.mxu0 %v6889
  %7044 = vmatpush1.msra.mxu0 %v6888
  %7045 = vmatprep.subr.mxu0 0.0
  %7046 = vmatpush1.msra.mxu0 0.0
  %7047 = vmatprep.subr.mxu0 0.0
  %7048 = vmatpush1.msra.mxu0 0.0
  %7049 = vmatprep.subr.mxu0 0.0
  %7050 = vmatpush1.msra.mxu0 0.0
  %7051 = vmatprep.subr.mxu0 0.0
  %7052 = vmatpush1.msra.mxu0 0.0
  %7053 = vmatprep.subr.mxu0 0.0
  %7054 = vmatpush1.msra.mxu0 0.0
  %7055 = vmatprep.subr.mxu0 0.0
  %7056 = vmatpush1.msra.mxu0 0.0
  %7057 = vmatprep.subr.mxu0 0.0
  %7058 = vmatpush1.msra.mxu0 0.0
  %7059 = vmatprep.mubr.f32.mxu0 %v6913
  %7060 = vmatmul.mubr.f32.gmra.mrb[0].mxu0 %v4014
  %v7061 = vpop.f32.mrb[0].mxu0
  %v7062 = vadd.f32 %v6905, %v7061
  %v7063 = vpop.f32.mrb[0].mxu0
  %v7064 = vadd.f32 %v6905, %v7063
  %7065 = vmatprep.mubr.f32.mxu0 %v6916
  %7066 = vmatmul.mubr.f32.gmra.mrb[0].mxu0 %v4016
  %v7067 = vpop.f32.mrb[0].mxu0
  %v7068 = vadd.f32 %v6910, %v7067
  %v7069 = vpop.f32.mrb[0].mxu0
  %v7070 = vadd.f32 %v6910, %v7069
  %7071 = vdwg.mxu0
  %7072 = vmatprep.subr.mxu0 %v6507
  %7073 = vmatpush1.msra.mxu0 %v6506
  %7074 = vmatprep.subr.mxu0 %v6523
  %7075 = vmatpush1.msra.mxu0 %v6522
  %7076 = vmatprep.subr.mxu0 %v6539
  %7077 = vmatpush1.msra.mxu0 %v6538
  %7078 = vmatprep.subr.mxu0 %v6555
  %7079 = vmatpush1.msra.mxu0 %v6554
  %7080 = vmatprep.subr.mxu0 %v6571
  %7081 = vmatpush1.msra.mxu0 %v6570
  %7082 = vmatprep.subr.mxu0 %v6587
  %7083 = vmatpush1.msra.mxu0 %v6586
  %7084 = vmatprep.subr.mxu0 %v6603
  %7085 = vmatpush1.msra.mxu0 %v6602
  %7086 = vmatprep.subr.mxu0 %v6619
  %7087 = vmatpush1.msra.mxu0 %v6618
  %7088 = vmatprep.subr.mxu0 %v6635
  %7089 = vmatpush1.msra.mxu0 %v6634
  %7090 = vmatprep.subr.mxu0 %v6651
  %7091 = vmatpush1.msra.mxu0 %v6650
  %7092 = vmatprep.subr.mxu0 %v6667
  %7093 = vmatpush1.msra.mxu0 %v6666
  %7094 = vmatprep.subr.mxu0 %v6683
  %7095 = vmatpush1.msra.mxu0 %v6682
  %7096 = vmatprep.subr.mxu0 %v6699
  %7097 = vmatpush1.msra.mxu0 %v6698
  %7098 = vmatprep.subr.mxu0 %v6715
  %7099 = vmatpush1.msra.mxu0 %v6714
  %7100 = vmatprep.subr.mxu0 %v6731
  %7101 = vmatpush1.msra.mxu0 %v6730
  %7102 = vmatprep.subr.mxu0 %v6747
  %7103 = vmatpush1.msra.mxu0 %v6746
  %7104 = vmatprep.subr.mxu0 %v6763
  %7105 = vmatpush1.msra.mxu0 %v6762
  %7106 = vmatprep.subr.mxu0 %v6779
  %7107 = vmatpush1.msra.mxu0 %v6778
  %7108 = vmatprep.subr.mxu0 %v6795
  %7109 = vmatpush1.msra.mxu0 %v6794
  %7110 = vmatprep.subr.mxu0 %v6811
  %7111 = vmatpush1.msra.mxu0 %v6810
  %7112 = vmatprep.subr.mxu0 %v6827
  %7113 = vmatpush1.msra.mxu0 %v6826
  %7114 = vmatprep.subr.mxu0 %v6843
  %7115 = vmatpush1.msra.mxu0 %v6842
  %7116 = vmatprep.subr.mxu0 %v6859
  %7117 = vmatpush1.msra.mxu0 %v6858
  %7118 = vmatprep.subr.mxu0 %v6875
  %7119 = vmatpush1.msra.mxu0 %v6874
  %7120 = vmatprep.subr.mxu0 %v6891
  %7121 = vmatpush1.msra.mxu0 %v6890
  %7122 = vmatprep.subr.mxu0 0.0
  %7123 = vmatpush1.msra.mxu0 0.0
  %7124 = vmatprep.subr.mxu0 0.0
  %7125 = vmatpush1.msra.mxu0 0.0
  %7126 = vmatprep.subr.mxu0 0.0
  %7127 = vmatpush1.msra.mxu0 0.0
  %7128 = vmatprep.subr.mxu0 0.0
  %7129 = vmatpush1.msra.mxu0 0.0
  %7130 = vmatprep.subr.mxu0 0.0
  %7131 = vmatpush1.msra.mxu0 0.0
  %7132 = vmatprep.subr.mxu0 0.0
  %7133 = vmatpush1.msra.mxu0 0.0
  %7134 = vmatprep.subr.mxu0 0.0
  %7135 = vmatpush1.msra.mxu0 0.0
  %7136 = vmatprep.mubr.f32.mxu0 %v6913
  %7137 = vmatmul.mubr.f32.gmra.mrb[0].mxu0 %v4014
  %v7138 = vpop.f32.mrb[0].mxu0
  %v7139 = vadd.f32 %v6905, %v7138
  %v7140 = vpop.f32.mrb[0].mxu0
  %v7141 = vadd.f32 %v6905, %v7140
  %7142 = vmatprep.mubr.f32.mxu0 %v6916
  %7143 = vmatmul.mubr.f32.gmra.mrb[0].mxu0 %v4016
  %v7144 = vpop.f32.mrb[0].mxu0
  %v7145 = vadd.f32 %v6910, %v7144
  %v7146 = vpop.f32.mrb[0].mxu0
  %v7147 = vadd.f32 %v6910, %v7146
  %7148 = vdwg.mxu0
  %7149 = vmatprep.subr.mxu0 %v6509
  %7150 = vmatpush1.msra.mxu0 %v6508
  %7151 = vmatprep.subr.mxu0 %v6525
  %7152 = vmatpush1.msra.mxu0 %v6524
  %7153 = vmatprep.subr.mxu0 %v6541
  %7154 = vmatpush1.msra.mxu0 %v6540
  %7155 = vmatprep.subr.mxu0 %v6557
  %7156 = vmatpush1.msra.mxu0 %v6556
  %7157 = vmatprep.subr.mxu0 %v6573
  %7158 = vmatpush1.msra.mxu0 %v6572
  %7159 = vmatprep.subr.mxu0 %v6589
  %7160 = vmatpush1.msra.mxu0 %v6588
  %7161 = vmatprep.subr.mxu0 %v6605
  %7162 = vmatpush1.msra.mxu0 %v6604
  %7163 = vmatprep.subr.mxu0 %v6621
  %7164 = vmatpush1.msra.mxu0 %v6620
  %7165 = vmatprep.subr.mxu0 %v6637
  %7166 = vmatpush1.msra.mxu0 %v6636
  %7167 = vmatprep.subr.mxu0 %v6653
  %7168 = vmatpush1.msra.mxu0 %v6652
  %7169 = vmatprep.subr.mxu0 %v6669
  %7170 = vmatpush1.msra.mxu0 %v6668
  %7171 = vmatprep.subr.mxu0 %v6685
  %7172 = vmatpush1.msra.mxu0 %v6684
  %7173 = vmatprep.subr.mxu0 %v6701
  %7174 = vmatpush1.msra.mxu0 %v6700
  %7175 = vmatprep.subr.mxu0 %v6717
  %7176 = vmatpush1.msra.mxu0 %v6716
  %7177 = vmatprep.subr.mxu0 %v6733
  %7178 = vmatpush1.msra.mxu0 %v6732
  %7179 = vmatprep.subr.mxu0 %v6749
  %7180 = vmatpush1.msra.mxu0 %v6748
  %7181 = vmatprep.subr.mxu0 %v6765
  %7182 = vmatpush1.msra.mxu0 %v6764
  %7183 = vmatprep.subr.mxu0 %v6781
  %7184 = vmatpush1.msra.mxu0 %v6780
  %7185 = vmatprep.subr.mxu0 %v6797
  %7186 = vmatpush1.msra.mxu0 %v6796
  %7187 = vmatprep.subr.mxu0 %v6813
  %7188 = vmatpush1.msra.mxu0 %v6812
  %7189 = vmatprep.subr.mxu0 %v6829
  %7190 = vmatpush1.msra.mxu0 %v6828
  %7191 = vmatprep.subr.mxu0 %v6845
  %7192 = vmatpush1.msra.mxu0 %v6844
  %7193 = vmatprep.subr.mxu0 %v6861
  %7194 = vmatpush1.msra.mxu0 %v6860
  %7195 = vmatprep.subr.mxu0 %v6877
  %7196 = vmatpush1.msra.mxu0 %v6876
  %7197 = vmatprep.subr.mxu0 %v6893
  %7198 = vmatpush1.msra.mxu0 %v6892
  %7199 = vmatprep.subr.mxu0 0.0
  %7200 = vmatpush1.msra.mxu0 0.0
  %7201 = vmatprep.subr.mxu0 0.0
  %7202 = vmatpush1.msra.mxu0 0.0
  %7203 = vmatprep.subr.mxu0 0.0
  %7204 = vmatpush1.msra.mxu0 0.0
  %7205 = vmatprep.subr.mxu0 0.0
  %7206 = vmatpush1.msra.mxu0 0.0
  %7207 = vmatprep.subr.mxu0 0.0
  %7208 = vmatpush1.msra.mxu0 0.0
  %7209 = vmatprep.subr.mxu0 0.0
  %7210 = vmatpush1.msra.mxu0 0.0
  %7211 = vmatprep.subr.mxu0 0.0
  %7212 = vmatpush1.msra.mxu0 0.0
  %7213 = vmatprep.mubr.f32.mxu0 %v6913
  %7214 = vmatmul.mubr.f32.gmra.mrb[0].mxu0 %v4014
  %v7215 = vpop.f32.mrb[0].mxu0
  %v7216 = vadd.f32 %v6905, %v7215
  %v7217 = vpop.f32.mrb[0].mxu0
  %v7218 = vadd.f32 %v6905, %v7217
  %7219 = vmatprep.mubr.f32.mxu0 %v6916
  %7220 = vmatmul.mubr.f32.gmra.mrb[0].mxu0 %v4016
  %v7221 = vpop.f32.mrb[0].mxu0
  %v7222 = vadd.f32 %v6910, %v7221
  %v7223 = vpop.f32.mrb[0].mxu0
  %v7224 = vadd.f32 %v6910, %v7223
  %7225 = vdwg.mxu0
  %7226 = vmatprep.subr.mxu0 %v6511
  %7227 = vmatpush1.msra.mxu0 %v6510
  %7228 = vmatprep.subr.mxu0 %v6527
  %7229 = vmatpush1.msra.mxu0 %v6526
  %7230 = vmatprep.subr.mxu0 %v6543
  %7231 = vmatpush1.msra.mxu0 %v6542
  %7232 = vmatprep.subr.mxu0 %v6559
  %7233 = vmatpush1.msra.mxu0 %v6558
  %7234 = vmatprep.subr.mxu0 %v6575
  %7235 = vmatpush1.msra.mxu0 %v6574
  %7236 = vmatprep.subr.mxu0 %v6591
  %7237 = vmatpush1.msra.mxu0 %v6590
  %7238 = vmatprep.subr.mxu0 %v6607
  %7239 = vmatpush1.msra.mxu0 %v6606
  %7240 = vmatprep.subr.mxu0 %v6623
  %7241 = vmatpush1.msra.mxu0 %v6622
  %7242 = vmatprep.subr.mxu0 %v6639
  %7243 = vmatpush1.msra.mxu0 %v6638
  %7244 = vmatprep.subr.mxu0 %v6655
  %7245 = vmatpush1.msra.mxu0 %v6654
  %7246 = vmatprep.subr.mxu0 %v6671
  %7247 = vmatpush1.msra.mxu0 %v6670
  %7248 = vmatprep.subr.mxu0 %v6687
  %7249 = vmatpush1.msra.mxu0 %v6686
  %7250 = vmatprep.subr.mxu0 %v6703
  %7251 = vmatpush1.msra.mxu0 %v6702
  %7252 = vmatprep.subr.mxu0 %v6719
  %7253 = vmatpush1.msra.mxu0 %v6718
  %7254 = vmatprep.subr.mxu0 %v6735
  %7255 = vmatpush1.msra.mxu0 %v6734
  %7256 = vmatprep.subr.mxu0 %v6751
  %7257 = vmatpush1.msra.mxu0 %v6750
  %7258 = vmatprep.subr.mxu0 %v6767
  %7259 = vmatpush1.msra.mxu0 %v6766
  %7260 = vmatprep.subr.mxu0 %v6783
  %7261 = vmatpush1.msra.mxu0 %v6782
  %7262 = vmatprep.subr.mxu0 %v6799
  %7263 = vmatpush1.msra.mxu0 %v6798
  %7264 = vmatprep.subr.mxu0 %v6815
  %7265 = vmatpush1.msra.mxu0 %v6814
  %7266 = vmatprep.subr.mxu0 %v6831
  %7267 = vmatpush1.msra.mxu0 %v6830
  %7268 = vmatprep.subr.mxu0 %v6847
  %7269 = vmatpush1.msra.mxu0 %v6846
  %7270 = vmatprep.subr.mxu0 %v6863
  %7271 = vmatpush1.msra.mxu0 %v6862
  %7272 = vmatprep.subr.mxu0 %v6879
  %7273 = vmatpush1.msra.mxu0 %v6878
  %7274 = vmatprep.subr.mxu0 %v6895
  %7275 = vmatpush1.msra.mxu0 %v6894
  %7276 = vmatprep.subr.mxu0 0.0
  %7277 = vmatpush1.msra.mxu0 0.0
  %7278 = vmatprep.subr.mxu0 0.0
  %7279 = vmatpush1.msra.mxu0 0.0
  %7280 = vmatprep.subr.mxu0 0.0
  %7281 = vmatpush1.msra.mxu0 0.0
  %7282 = vmatprep.subr.mxu0 0.0
  %7283 = vmatpush1.msra.mxu0 0.0
  %7284 = vmatprep.subr.mxu0 0.0
  %7285 = vmatpush1.msra.mxu0 0.0
  %7286 = vmatprep.subr.mxu0 0.0
  %7287 = vmatpush1.msra.mxu0 0.0
  %7288 = vmatprep.subr.mxu0 0.0
  %7289 = vmatpush1.msra.mxu0 0.0
  %7290 = vmatprep.mubr.f32.mxu0 %v6913
  %7291 = vmatmul.mubr.f32.gmra.mrb[0].mxu0 %v4014
  %v7292 = vpop.f32.mrb[0].mxu0
  %v7293 = vadd.f32 %v6905, %v7292
  %v7294 = vpop.f32.mrb[0].mxu0
  %v7295 = vadd.f32 %v6905, %v7294
  %7296 = vmatprep.mubr.f32.mxu0 %v6916
  %7297 = vmatmul.mubr.f32.gmra.mrb[0].mxu0 %v4016
  %v7298 = vpop.f32.mrb[0].mxu0
  %v7299 = vadd.f32 %v6910, %v7298
  %v7300 = vpop.f32.mrb[0].mxu0
  %v7301 = vadd.f32 %v6910, %v7300
  %7302 = vdwg.mxu0
  %7303 = vmatprep.subr.mxu0 %v6513
  %7304 = vmatpush1.msra.mxu0 %v6512
  %7305 = vmatprep.subr.mxu0 %v6529
  %7306 = vmatpush1.msra.mxu0 %v6528
  %7307 = vmatprep.subr.mxu0 %v6545
  %7308 = vmatpush1.msra.mxu0 %v6544
  %7309 = vmatprep.subr.mxu0 %v6561
  %7310 = vmatpush1.msra.mxu0 %v6560
  %7311 = vmatprep.subr.mxu0 %v6577
  %7312 = vmatpush1.msra.mxu0 %v6576
  %7313 = vmatprep.subr.mxu0 %v6593
  %7314 = vmatpush1.msra.mxu0 %v6592
  %7315 = vmatprep.subr.mxu0 %v6609
  %7316 = vmatpush1.msra.mxu0 %v6608
  %7317 = vmatprep.subr.mxu0 %v6625
  %7318 = vmatpush1.msra.mxu0 %v6624
  %7319 = vmatprep.subr.mxu0 %v6641
  %7320 = vmatpush1.msra.mxu0 %v6640
  %7321 = vmatprep.subr.mxu0 %v6657
  %7322 = vmatpush1.msra.mxu0 %v6656
  %7323 = vmatprep.subr.mxu0 %v6673
  %7324 = vmatpush1.msra.mxu0 %v6672
  %7325 = vmatprep.subr.mxu0 %v6689
  %7326 = vmatpush1.msra.mxu0 %v6688
  %7327 = vmatprep.subr.mxu0 %v6705
  %7328 = vmatpush1.msra.mxu0 %v6704
  %7329 = vmatprep.subr.mxu0 %v6721
  %7330 = vmatpush1.msra.mxu0 %v6720
  %7331 = vmatprep.subr.mxu0 %v6737
  %7332 = vmatpush1.msra.mxu0 %v6736
  %7333 = vmatprep.subr.mxu0 %v6753
  %7334 = vmatpush1.msra.mxu0 %v6752
  %7335 = vmatprep.subr.mxu0 %v6769
  %7336 = vmatpush1.msra.mxu0 %v6768
  %7337 = vmatprep.subr.mxu0 %v6785
  %7338 = vmatpush1.msra.mxu0 %v6784
  %7339 = vmatprep.subr.mxu0 %v6801
  %7340 = vmatpush1.msra.mxu0 %v6800
  %7341 = vmatprep.subr.mxu0 %v6817
  %7342 = vmatpush1.msra.mxu0 %v6816
  %7343 = vmatprep.subr.mxu0 %v6833
  %7344 = vmatpush1.msra.mxu0 %v6832
  %7345 = vmatprep.subr.mxu0 %v6849
  %7346 = vmatpush1.msra.mxu0 %v6848
  %7347 = vmatprep.subr.mxu0 %v6865
  %7348 = vmatpush1.msra.mxu0 %v6864
  %7349 = vmatprep.subr.mxu0 %v6881
  %7350 = vmatpush1.msra.mxu0 %v6880
  %7351 = vmatprep.subr.mxu0 %v6897
  %7352 = vmatpush1.msra.mxu0 %v6896
  %7353 = vmatprep.subr.mxu0 0.0
  %7354 = vmatpush1.msra.mxu0 0.0
  %7355 = vmatprep.subr.mxu0 0.0
  %7356 = vmatpush1.msra.mxu0 0.0
  %7357 = vmatprep.subr.mxu0 0.0
  %7358 = vmatpush1.msra.mxu0 0.0
  %7359 = vmatprep.subr.mxu0 0.0
  %7360 = vmatpush1.msra.mxu0 0.0
  %7361 = vmatprep.subr.mxu0 0.0
  %7362 = vmatpush1.msra.mxu0 0.0
  %7363 = vmatprep.subr.mxu0 0.0
  %7364 = vmatpush1.msra.mxu0 0.0
  %7365 = vmatprep.subr.mxu0 0.0
  %7366 = vmatpush1.msra.mxu0 0.0
  %7367 = vmatprep.mubr.f32.mxu0 %v6913
  %7368 = vmatmul.mubr.f32.gmra.mrb[0].mxu0 %v4014
  %v7369 = vpop.f32.mrb[0].mxu0
  %v7370 = vadd.f32 %v6905, %v7369
  %v7371 = vpop.f32.mrb[0].mxu0
  %v7372 = vadd.f32 %v6905, %v7371
  %7373 = vmatprep.mubr.f32.mxu0 %v6916
  %7374 = vmatmul.mubr.f32.gmra.mrb[0].mxu0 %v4016
  %v7375 = vpop.f32.mrb[0].mxu0
  %v7376 = vadd.f32 %v6910, %v7375
  %v7377 = vpop.f32.mrb[0].mxu0
  %v7378 = vadd.f32 %v6910, %v7377
  %7379 = vdwg.mxu0
  %7380 = vmatprep.subr.mxu0 %v6515
  %7381 = vmatpush1.msra.mxu0 %v6514
  %7382 = vmatprep.subr.mxu0 %v6531
  %7383 = vmatpush1.msra.mxu0 %v6530
  %7384 = vmatprep.subr.mxu0 %v6547
  %7385 = vmatpush1.msra.mxu0 %v6546
  %7386 = vmatprep.subr.mxu0 %v6563
  %7387 = vmatpush1.msra.mxu0 %v6562
  %7388 = vmatprep.subr.mxu0 %v6579
  %7389 = vmatpush1.msra.mxu0 %v6578
  %7390 = vmatprep.subr.mxu0 %v6595
  %7391 = vmatpush1.msra.mxu0 %v6594
  %7392 = vmatprep.subr.mxu0 %v6611
  %7393 = vmatpush1.msra.mxu0 %v6610
  %7394 = vmatprep.subr.mxu0 %v6627
  %7395 = vmatpush1.msra.mxu0 %v6626
  %7396 = vmatprep.subr.mxu0 %v6643
  %7397 = vmatpush1.msra.mxu0 %v6642
  %7398 = vmatprep.subr.mxu0 %v6659
  %7399 = vmatpush1.msra.mxu0 %v6658
  %7400 = vmatprep.subr.mxu0 %v6675
  %7401 = vmatpush1.msra.mxu0 %v6674
  %7402 = vmatprep.subr.mxu0 %v6691
  %7403 = vmatpush1.msra.mxu0 %v6690
  %7404 = vmatprep.subr.mxu0 %v6707
  %7405 = vmatpush1.msra.mxu0 %v6706
  %7406 = vmatprep.subr.mxu0 %v6723
  %7407 = vmatpush1.msra.mxu0 %v6722
  %7408 = vmatprep.subr.mxu0 %v6739
  %7409 = vmatpush1.msra.mxu0 %v6738
  %7410 = vmatprep.subr.mxu0 %v6755
  %7411 = vmatpush1.msra.mxu0 %v6754
  %7412 = vmatprep.subr.mxu0 %v6771
  %7413 = vmatpush1.msra.mxu0 %v6770
  %7414 = vmatprep.subr.mxu0 %v6787
  %7415 = vmatpush1.msra.mxu0 %v6786
  %7416 = vmatprep.subr.mxu0 %v6803
  %7417 = vmatpush1.msra.mxu0 %v6802
  %7418 = vmatprep.subr.mxu0 %v6819
  %7419 = vmatpush1.msra.mxu0 %v6818
  %7420 = vmatprep.subr.mxu0 %v6835
  %7421 = vmatpush1.msra.mxu0 %v6834
  %7422 = vmatprep.subr.mxu0 %v6851
  %7423 = vmatpush1.msra.mxu0 %v6850
  %7424 = vmatprep.subr.mxu0 %v6867
  %7425 = vmatpush1.msra.mxu0 %v6866
  %7426 = vmatprep.subr.mxu0 %v6883
  %7427 = vmatpush1.msra.mxu0 %v6882
  %7428 = vmatprep.subr.mxu0 %v6899
  %7429 = vmatpush1.msra.mxu0 %v6898
  %7430 = vmatprep.subr.mxu0 0.0
  %7431 = vmatpush1.msra.mxu0 0.0
  %7432 = vmatprep.subr.mxu0 0.0
  %7433 = vmatpush1.msra.mxu0 0.0
  %7434 = vmatprep.subr.mxu0 0.0
  %7435 = vmatpush1.msra.mxu0 0.0
  %7436 = vmatprep.subr.mxu0 0.0
  %7437 = vmatpush1.msra.mxu0 0.0
  %7438 = vmatprep.subr.mxu0 0.0
  %7439 = vmatpush1.msra.mxu0 0.0
  %7440 = vmatprep.subr.mxu0 0.0
  %7441 = vmatpush1.msra.mxu0 0.0
  %7442 = vmatprep.subr.mxu0 0.0
  %7443 = vmatpush1.msra.mxu0 0.0
  %7444 = vmatprep.mubr.f32.mxu0 %v6913
  %7445 = vmatmul.mubr.f32.gmra.mrb[0].mxu0 %v4014
  %v7446 = vpop.f32.mrb[0].mxu0
  %v7447 = vadd.f32 %v6905, %v7446
  %v7448 = vpop.f32.mrb[0].mxu0
  %v7449 = vadd.f32 %v6905, %v7448
  %7450 = vmatprep.mubr.f32.mxu0 %v6916
  %7451 = vmatmul.mubr.f32.gmra.mrb[0].mxu0 %v4016
  %v7452 = vpop.f32.mrb[0].mxu0
  %v7453 = vadd.f32 %v6910, %v7452
  %v7454 = vpop.f32.mrb[0].mxu0
  %v7455 = vadd.f32 %v6910, %v7454
  %7456 = vdwg.mxu0
  %7457 = vmatprep.subr.mxu0 %v6517
  %7458 = vmatpush1.msra.mxu0 %v6516
  %7459 = vmatprep.subr.mxu0 %v6533
  %7460 = vmatpush1.msra.mxu0 %v6532
  %7461 = vmatprep.subr.mxu0 %v6549
  %7462 = vmatpush1.msra.mxu0 %v6548
  %7463 = vmatprep.subr.mxu0 %v6565
  %7464 = vmatpush1.msra.mxu0 %v6564
  %7465 = vmatprep.subr.mxu0 %v6581
  %7466 = vmatpush1.msra.mxu0 %v6580
  %7467 = vmatprep.subr.mxu0 %v6597
  %7468 = vmatpush1.msra.mxu0 %v6596
  %7469 = vmatprep.subr.mxu0 %v6613
  %7470 = vmatpush1.msra.mxu0 %v6612
  %7471 = vmatprep.subr.mxu0 %v6629
  %7472 = vmatpush1.msra.mxu0 %v6628
  %7473 = vmatprep.subr.mxu0 %v6645
  %7474 = vmatpush1.msra.mxu0 %v6644
  %7475 = vmatprep.subr.mxu0 %v6661
  %7476 = vmatpush1.msra.mxu0 %v6660
  %7477 = vmatprep.subr.mxu0 %v6677
  %7478 = vmatpush1.msra.mxu0 %v6676
  %7479 = vmatprep.subr.mxu0 %v6693
  %7480 = vmatpush1.msra.mxu0 %v6692
  %7481 = vmatprep.subr.mxu0 %v6709
  %7482 = vmatpush1.msra.mxu0 %v6708
  %7483 = vmatprep.subr.mxu0 %v6725
  %7484 = vmatpush1.msra.mxu0 %v6724
  %7485 = vmatprep.subr.mxu0 %v6741
  %7486 = vmatpush1.msra.mxu0 %v6740
  %7487 = vmatprep.subr.mxu0 %v6757
  %7488 = vmatpush1.msra.mxu0 %v6756
  %7489 = vmatprep.subr.mxu0 %v6773
  %7490 = vmatpush1.msra.mxu0 %v6772
  %7491 = vmatprep.subr.mxu0 %v6789
  %7492 = vmatpush1.msra.mxu0 %v6788
  %7493 = vmatprep.subr.mxu0 %v6805
  %7494 = vmatpush1.msra.mxu0 %v6804
  %7495 = vmatprep.subr.mxu0 %v6821
  %7496 = vmatpush1.msra.mxu0 %v6820
  %7497 = vmatprep.subr.mxu0 %v6837
  %7498 = vmatpush1.msra.mxu0 %v6836
  %7499 = vmatprep.subr.mxu0 %v6853
  %7500 = vmatpush1.msra.mxu0 %v6852
  %7501 = vmatprep.subr.mxu0 %v6869
  %7502 = vmatpush1.msra.mxu0 %v6868
  %7503 = vmatprep.subr.mxu0 %v6885
  %7504 = vmatpush1.msra.mxu0 %v6884
  %7505 = vmatprep.subr.mxu0 %v6901
  %7506 = vmatpush1.msra.mxu0 %v6900
  %7507 = vmatprep.subr.mxu0 0.0
  %7508 = vmatpush1.msra.mxu0 0.0
  %7509 = vmatprep.subr.mxu0 0.0
  %7510 = vmatpush1.msra.mxu0 0.0
  %7511 = vmatprep.subr.mxu0 0.0
  %7512 = vmatpush1.msra.mxu0 0.0
  %7513 = vmatprep.subr.mxu0 0.0
  %7514 = vmatpush1.msra.mxu0 0.0
  %7515 = vmatprep.subr.mxu0 0.0
  %7516 = vmatpush1.msra.mxu0 0.0
  %7517 = vmatprep.subr.mxu0 0.0
  %7518 = vmatpush1.msra.mxu0 0.0
  %7519 = vmatprep.subr.mxu0 0.0
  %7520 = vmatpush1.msra.mxu0 0.0
  %7521 = vmatprep.mubr.f32.mxu0 %v6913
  %7522 = vmatmul.mubr.f32.gmra.mrb[0].mxu0 %v4014
  %v7523 = vpop.f32.mrb[0].mxu0
  %v7524 = vadd.f32 %v6905, %v7523
  %v7525 = vpop.f32.mrb[0].mxu0
  %v7526 = vadd.f32 %v6905, %v7525
  %7527 = vmatprep.mubr.f32.mxu0 %v6916
  %7528 = vmatmul.mubr.f32.gmra.mrb[0].mxu0 %v4016
  %v7529 = vpop.f32.mrb[0].mxu0
  %v7530 = vadd.f32 %v6910, %v7529
  %v7531 = vpop.f32.mrb[0].mxu0
  %v7532 = vadd.f32 %v6910, %v7531
  %7533 = vdwg.mxu0
  %v7534 = vmax.f32 %v6985, 0.0
  %v7535 = vmax.f32 %v6987, 0.0
  %v7536 = vmax.f32 %v7062, 0.0
  %v7537 = vmax.f32 %v7064, 0.0
  %v7538 = vmax.f32 %v7139, 0.0
  %v7539 = vmax.f32 %v7141, 0.0
  %v7540 = vmax.f32 %v7216, 0.0
  %v7541 = vmax.f32 %v7218, 0.0
  %v7542 = vmax.f32 %v7293, 0.0
  %v7543 = vmax.f32 %v7295, 0.0
  %v7544 = vmax.f32 %v7370, 0.0
  %v7545 = vmax.f32 %v7372, 0.0
  %v7546 = vmax.f32 %v7447, 0.0
  %v7547 = vmax.f32 %v7449, 0.0
  %v7548 = vmax.f32 %v7524, 0.0
  %v7549 = vmax.f32 %v7526, 0.0
  %v7550 = vmax.f32 %v6991, 0.0
  %v7551 = vmax.f32 %v6993, 0.0
  %v7552 = vmax.f32 %v7068, 0.0
  %v7553 = vmax.f32 %v7070, 0.0
  %v7554 = vmax.f32 %v7145, 0.0
  %v7555 = vmax.f32 %v7147, 0.0
  %v7556 = vmax.f32 %v7222, 0.0
  %v7557 = vmax.f32 %v7224, 0.0
  %v7558 = vmax.f32 %v7299, 0.0
  %v7559 = vmax.f32 %v7301, 0.0
  %v7560 = vmax.f32 %v7376, 0.0
  %v7561 = vmax.f32 %v7378, 0.0
  %v7562 = vmax.f32 %v7453, 0.0
  %v7563 = vmax.f32 %v7455, 0.0
  %v7564 = vmax.f32 %v7530, 0.0
  %v7565 = vmax.f32 %v7532, 0.0
  %7566 = vst [vmem:[#allocation5] sm:$0xff] %v7534
  %7567 = vst [vmem:[#allocation5 + $0x8] sm:$0xff] %v7535
  %7568 = vst [vmem:[#allocation5 + $0x10] sm:$0xff] %v7536
  %7569 = vst [vmem:[#allocation5 + $0x18] sm:$0xff] %v7537
  %7570 = vst [vmem:[#allocation5 + $0x20] sm:$0xff] %v7538
  %7571 = vst [vmem:[#allocation5 + $0x28] sm:$0xff] %v7539
  %7572 = vst [vmem:[#allocation5 + $0x30] sm:$0xff] %v7540
  %7573 = vst [vmem:[#allocation5 + $0x38] sm:$0xff] %v7541
  %7574 = vst [vmem:[#allocation5 + $0x40] sm:$0xff] %v7542
  %7575 = vst [vmem:[#allocation5 + $0x48] sm:$0xff] %v7543
  %7576 = vst [vmem:[#allocation5 + $0x50] sm:$0xff] %v7544
  %7577 = vst [vmem:[#allocation5 + $0x58] sm:$0xff] %v7545
  %7578 = vst [vmem:[#allocation5 + $0x60] sm:$0xff] %v7546
  %7579 = vst [vmem:[#allocation5 + $0x68] sm:$0xff] %v7547
  %7580 = vst [vmem:[#allocation5 + $0x70] sm:$0xff] %v7548
  %7581 = vst [vmem:[#allocation5 + $0x78] sm:$0xff] %v7549
  %7582 = vst [vmem:[#allocation5 + $0xa8] sm:$0xff] %v7550
  %7583 = vst [vmem:[#allocation5 + $0xb0] sm:$0xff] %v7551
  %7584 = vst [vmem:[#allocation5 + $0xb8] sm:$0xff] %v7552
  %7585 = vst [vmem:[#allocation5 + $0xc0] sm:$0xff] %v7553
  %7586 = vst [vmem:[#allocation5 + $0xc8] sm:$0xff] %v7554
  %7587 = vst [vmem:[#allocation5 + $0xd0] sm:$0xff] %v7555
  %7588 = vst [vmem:[#allocation5 + $0xd8] sm:$0xff] %v7556
  %7589 = vst [vmem:[#allocation5 + $0xe0] sm:$0xff] %v7557
  %7590 = vst [vmem:[#allocation5 + $0xe8] sm:$0xff] %v7558
  %7591 = vst [vmem:[#allocation5 + $0xf0] sm:$0xff] %v7559
  %7592 = vst [vmem:[#allocation5 + $0xf8] sm:$0xff] %v7560
  %7593 = vst [vmem:[#allocation5 + $0x100] sm:$0xff] %v7561
  %7594 = vst [vmem:[#allocation5 + $0x108] sm:$0xff] %v7562
  %7595 = vst [vmem:[#allocation5 + $0x110] sm:$0xff] %v7563
  %7596 = vst [vmem:[#allocation5 + $0x118] sm:$0xff] %v7564
  %7597 = vst [vmem:[#allocation5 + $0x120] sm:$0xff] %v7565
  %v7598 = vld [vmem:[#allocation5] sm:$0xff]
  %v7599 = vld [vmem:[#allocation5 + $0x8] sm:$0xff]
  %v7600 = vld [vmem:[#allocation5 + $0x10] sm:$0xff]
  %v7601 = vld [vmem:[#allocation5 + $0x18] sm:$0xff]
  %v7602 = vld [vmem:[#allocation5 + $0x20] sm:$0xff]
  %v7603 = vld [vmem:[#allocation5 + $0x28] sm:$0xff]
  %v7604 = vld [vmem:[#allocation5 + $0x30] sm:$0xff]
  %v7605 = vld [vmem:[#allocation5 + $0x38] sm:$0xff]
  %v7606 = vld [vmem:[#allocation5 + $0x40] sm:$0xff]
  %v7607 = vld [vmem:[#allocation5 + $0x48] sm:$0xff]
  %v7608 = vld [vmem:[#allocation5 + $0x50] sm:$0xff]
  %v7609 = vld [vmem:[#allocation5 + $0x58] sm:$0xff]
  %v7610 = vld [vmem:[#allocation5 + $0x60] sm:$0xff]
  %v7611 = vld [vmem:[#allocation5 + $0x68] sm:$0xff]
  %v7612 = vld [vmem:[#allocation5 + $0x70] sm:$0xff]
  %v7613 = vld [vmem:[#allocation5 + $0x78] sm:$0xff]
  %v7614 = vld [vmem:[#allocation5 + $0xa8] sm:$0xff]
  %v7615 = vld [vmem:[#allocation5 + $0xb0] sm:$0xff]
  %v7616 = vld [vmem:[#allocation5 + $0xb8] sm:$0xff]
  %v7617 = vld [vmem:[#allocation5 + $0xc0] sm:$0xff]
  %v7618 = vld [vmem:[#allocation5 + $0xc8] sm:$0xff]
  %v7619 = vld [vmem:[#allocation5 + $0xd0] sm:$0xff]
  %v7620 = vld [vmem:[#allocation5 + $0xd8] sm:$0xff]
  %v7621 = vld [vmem:[#allocation5 + $0xe0] sm:$0xff]
  %v7622 = vld [vmem:[#allocation5 + $0xe8] sm:$0xff]
  %v7623 = vld [vmem:[#allocation5 + $0xf0] sm:$0xff]
  %v7624 = vld [vmem:[#allocation5 + $0xf8] sm:$0xff]
  %v7625 = vld [vmem:[#allocation5 + $0x100] sm:$0xff]
  %v7626 = vld [vmem:[#allocation5 + $0x108] sm:$0xff]
  %v7627 = vld [vmem:[#allocation5 + $0x110] sm:$0xff]
  %v7628 = vld [vmem:[#allocation5 + $0x118] sm:$0xff]
  %v7629 = vld [vmem:[#allocation5 + $0x120] sm:$0xff]
  %v7630 = vld [vmem:[#allocation5 + $0x80] sm:$0xff]
  %v7631 = vld [vmem:[#allocation5 + $0x128] sm:$0xff]
  %7666 = vrot.lane.b32.xlu0 %v7598, 124
  %v7667 = vpop.permute.xlu0 %7666
  %7668 = vrot.lane.b32.xlu0 %v7599, 124
  %v7669 = vpop.permute.xlu0 %7668
  %7670 = vrot.lane.b32.xlu0 %v7600, 124
  %v7671 = vpop.permute.xlu0 %7670
  %7672 = vrot.lane.b32.xlu0 %v7601, 124
  %v7673 = vpop.permute.xlu0 %7672
  %7674 = vrot.lane.b32.xlu0 %v7602, 124
  %v7675 = vpop.permute.xlu0 %7674
  %7676 = vrot.lane.b32.xlu0 %v7603, 124
  %v7677 = vpop.permute.xlu0 %7676
  %7678 = vrot.lane.b32.xlu0 %v7604, 124
  %v7679 = vpop.permute.xlu0 %7678
  %7680 = vrot.lane.b32.xlu0 %v7605, 124
  %v7681 = vpop.permute.xlu0 %7680
  %7682 = vrot.lane.b32.xlu0 %v7606, 124
  %v7683 = vpop.permute.xlu0 %7682
  %7684 = vrot.lane.b32.xlu0 %v7607, 124
  %v7685 = vpop.permute.xlu0 %7684
  %7686 = vrot.lane.b32.xlu0 %v7608, 124
  %v7687 = vpop.permute.xlu0 %7686
  %7688 = vrot.lane.b32.xlu0 %v7609, 124
  %v7689 = vpop.permute.xlu0 %7688
  %7690 = vrot.lane.b32.xlu0 %v7610, 124
  %v7691 = vpop.permute.xlu0 %7690
  %7692 = vrot.lane.b32.xlu0 %v7611, 124
  %v7693 = vpop.permute.xlu0 %7692
  %7694 = vrot.lane.b32.xlu0 %v7612, 124
  %v7695 = vpop.permute.xlu0 %7694
  %7696 = vrot.lane.b32.xlu0 %v7613, 124
  %v7697 = vpop.permute.xlu0 %7696
  %7698 = vrot.lane.b32.xlu0 %v7630, 124
  %v7699 = vpop.permute.xlu0 %7698
  %7700 = vrot.lane.b32.xlu0 %v7614, 124
  %v7701 = vpop.permute.xlu0 %7700
  %7702 = vrot.lane.b32.xlu0 %v7615, 124
  %v7703 = vpop.permute.xlu0 %7702
  %7704 = vrot.lane.b32.xlu0 %v7616, 124
  %v7705 = vpop.permute.xlu0 %7704
  %7706 = vrot.lane.b32.xlu0 %v7617, 124
  %v7707 = vpop.permute.xlu0 %7706
  %7708 = vrot.lane.b32.xlu0 %v7618, 124
  %v7709 = vpop.permute.xlu0 %7708
  %7710 = vrot.lane.b32.xlu0 %v7619, 124
  %v7711 = vpop.permute.xlu0 %7710
  %7712 = vrot.lane.b32.xlu0 %v7620, 124
  %v7713 = vpop.permute.xlu0 %7712
  %7714 = vrot.lane.b32.xlu0 %v7621, 124
  %v7715 = vpop.permute.xlu0 %7714
  %7716 = vrot.lane.b32.xlu0 %v7622, 124
  %v7717 = vpop.permute.xlu0 %7716
  %7718 = vrot.lane.b32.xlu0 %v7623, 124
  %v7719 = vpop.permute.xlu0 %7718
  %7720 = vrot.lane.b32.xlu0 %v7624, 124
  %v7721 = vpop.permute.xlu0 %7720
  %7722 = vrot.lane.b32.xlu0 %v7625, 124
  %v7723 = vpop.permute.xlu0 %7722
  %7724 = vrot.lane.b32.xlu0 %v7626, 124
  %v7725 = vpop.permute.xlu0 %7724
  %7726 = vrot.lane.b32.xlu0 %v7627, 124
  %v7727 = vpop.permute.xlu0 %7726
  %7728 = vrot.lane.b32.xlu0 %v7628, 124
  %v7729 = vpop.permute.xlu0 %7728
  %7730 = vrot.lane.b32.xlu0 %v7629, 124
  %v7731 = vpop.permute.xlu0 %7730
  %7732 = vrot.lane.b32.xlu0 %v7631, 124
  %v7733 = vpop.permute.xlu0 %7732
  %v7734 = vsel %vm269, %v7667, %v7669
  %v7735 = vsel %vm269, %v7669, %v7671
  %v7736 = vsel %vm269, %v7671, %v7673
  %v7737 = vsel %vm269, %v7673, %v7675
  %v7738 = vsel %vm269, %v7675, %v7677
  %v7739 = vsel %vm269, %v7677, %v7679
  %v7740 = vsel %vm269, %v7679, %v7681
  %v7741 = vsel %vm269, %v7681, %v7683
  %v7742 = vsel %vm269, %v7683, %v7685
  %v7743 = vsel %vm269, %v7685, %v7687
  %v7744 = vsel %vm269, %v7687, %v7689
  %v7745 = vsel %vm269, %v7689, %v7691
  %v7746 = vsel %vm269, %v7691, %v7693
  %v7747 = vsel %vm269, %v7693, %v7695
  %v7748 = vsel %vm269, %v7695, %v7697
  %v7749 = vsel %vm269, %v7697, %v7699
  %v7750 = vsel %vm269, %v7701, %v7703
  %v7751 = vsel %vm269, %v7703, %v7705
  %v7752 = vsel %vm269, %v7705, %v7707
  %v7753 = vsel %vm269, %v7707, %v7709
  %v7754 = vsel %vm269, %v7709, %v7711
  %v7755 = vsel %vm269, %v7711, %v7713
  %v7756 = vsel %vm269, %v7713, %v7715
  %v7757 = vsel %vm269, %v7715, %v7717
  %v7758 = vsel %vm269, %v7717, %v7719
  %v7759 = vsel %vm269, %v7719, %v7721
  %v7760 = vsel %vm269, %v7721, %v7723
  %v7761 = vsel %vm269, %v7723, %v7725
  %v7762 = vsel %vm269, %v7725, %v7727
  %v7763 = vsel %vm269, %v7727, %v7729
  %v7764 = vsel %vm269, %v7729, %v7731
  %v7765 = vsel %vm269, %v7731, %v7733
  %v7798 = vmax.f32 %v7598, %v7734
  %v7799 = vmax.f32 %v7599, %v7735
  %v7800 = vmax.f32 %v7600, %v7736
  %v7801 = vmax.f32 %v7601, %v7737
  %v7802 = vmax.f32 %v7602, %v7738
  %v7803 = vmax.f32 %v7603, %v7739
  %v7804 = vmax.f32 %v7604, %v7740
  %v7805 = vmax.f32 %v7605, %v7741
  %v7806 = vmax.f32 %v7606, %v7742
  %v7807 = vmax.f32 %v7607, %v7743
  %v7808 = vmax.f32 %v7608, %v7744
  %v7809 = vmax.f32 %v7609, %v7745
  %v7810 = vmax.f32 %v7610, %v7746
  %v7811 = vmax.f32 %v7611, %v7747
  %v7812 = vmax.f32 %v7612, %v7748
  %v7813 = vmax.f32 %v7613, %v7749
  %v7814 = vmax.f32 %v7614, %v7750
  %v7815 = vmax.f32 %v7615, %v7751
  %v7816 = vmax.f32 %v7616, %v7752
  %v7817 = vmax.f32 %v7617, %v7753
  %v7818 = vmax.f32 %v7618, %v7754
  %v7819 = vmax.f32 %v7619, %v7755
  %v7820 = vmax.f32 %v7620, %v7756
  %v7821 = vmax.f32 %v7621, %v7757
  %v7822 = vmax.f32 %v7622, %v7758
  %v7823 = vmax.f32 %v7623, %v7759
  %v7824 = vmax.f32 %v7624, %v7760
  %v7825 = vmax.f32 %v7625, %v7761
  %v7826 = vmax.f32 %v7626, %v7762
  %v7827 = vmax.f32 %v7627, %v7763
  %v7828 = vmax.f32 %v7628, %v7764
  %v7829 = vmax.f32 %v7629, %v7765
  %v7830 = vmax.f32 %v7798, %v7599
  %v7831 = vmax.f32 %v7799, %v7600
  %v7832 = vmax.f32 %v7800, %v7601
  %v7833 = vmax.f32 %v7801, %v7602
  %v7834 = vmax.f32 %v7802, %v7603
  %v7835 = vmax.f32 %v7803, %v7604
  %v7836 = vmax.f32 %v7804, %v7605
  %v7837 = vmax.f32 %v7805, %v7606
  %v7838 = vmax.f32 %v7806, %v7607
  %v7839 = vmax.f32 %v7807, %v7608
  %v7840 = vmax.f32 %v7808, %v7609
  %v7841 = vmax.f32 %v7809, %v7610
  %v7842 = vmax.f32 %v7810, %v7611
  %v7843 = vmax.f32 %v7811, %v7612
  %v7844 = vmax.f32 %v7812, %v7613
  %v7845 = vmax.f32 %v7813, %v7630
  %v7846 = vmax.f32 %v7814, %v7615
  %v7847 = vmax.f32 %v7815, %v7616
  %v7848 = vmax.f32 %v7816, %v7617
  %v7849 = vmax.f32 %v7817, %v7618
  %v7850 = vmax.f32 %v7818, %v7619
  %v7851 = vmax.f32 %v7819, %v7620
  %v7852 = vmax.f32 %v7820, %v7621
  %v7853 = vmax.f32 %v7821, %v7622
  %v7854 = vmax.f32 %v7822, %v7623
  %v7855 = vmax.f32 %v7823, %v7624
  %v7856 = vmax.f32 %v7824, %v7625
  %v7857 = vmax.f32 %v7825, %v7626
  %v7858 = vmax.f32 %v7826, %v7627
  %v7859 = vmax.f32 %v7827, %v7628
  %v7860 = vmax.f32 %v7828, %v7629
  %v7861 = vmax.f32 %v7829, %v7631
  %v7862 = vld [vmem:[#allocation5 + $0x88] sm:$0xff]
  %v7863 = vld [vmem:[#allocation5 + $0x130] sm:$0xff]
  %7866 = vrot.lane.b32.xlu0 %v7862, 124
  %v7867 = vpop.permute.xlu0 %7866
  %7868 = vrot.lane.b32.xlu0 %v7863, 124
  %v7869 = vpop.permute.xlu0 %7868
  %v7870 = vsel %vm269, %v7699, %v7867
  %v7871 = vsel %vm269, %v7733, %v7869
  %v7874 = vmax.f32 %v7830, %v7735
  %v7875 = vmax.f32 %v7831, %v7736
  %v7876 = vmax.f32 %v7832, %v7737
  %v7877 = vmax.f32 %v7833, %v7738
  %v7878 = vmax.f32 %v7834, %v7739
  %v7879 = vmax.f32 %v7835, %v7740
  %v7880 = vmax.f32 %v7836, %v7741
  %v7881 = vmax.f32 %v7837, %v7742
  %v7882 = vmax.f32 %v7838, %v7743
  %v7883 = vmax.f32 %v7839, %v7744
  %v7884 = vmax.f32 %v7840, %v7745
  %v7885 = vmax.f32 %v7841, %v7746
  %v7886 = vmax.f32 %v7842, %v7747
  %v7887 = vmax.f32 %v7843, %v7748
  %v7888 = vmax.f32 %v7844, %v7749
  %v7889 = vmax.f32 %v7845, %v7870
  %v7890 = vmax.f32 %v7846, %v7751
  %v7891 = vmax.f32 %v7847, %v7752
  %v7892 = vmax.f32 %v7848, %v7753
  %v7893 = vmax.f32 %v7849, %v7754
  %v7894 = vmax.f32 %v7850, %v7755
  %v7895 = vmax.f32 %v7851, %v7756
  %v7896 = vmax.f32 %v7852, %v7757
  %v7897 = vmax.f32 %v7853, %v7758
  %v7898 = vmax.f32 %v7854, %v7759
  %v7899 = vmax.f32 %v7855, %v7760
  %v7900 = vmax.f32 %v7856, %v7761
  %v7901 = vmax.f32 %v7857, %v7762
  %v7902 = vmax.f32 %v7858, %v7763
  %v7903 = vmax.f32 %v7859, %v7764
  %v7904 = vmax.f32 %v7860, %v7765
  %v7905 = vmax.f32 %v7861, %v7871
  %7906 = vst [vmem:[#allocation6] sm:$0xff] %v7874
  %7907 = vst [vmem:[#allocation6 + $0x8] sm:$0xff] %v7875
  %7908 = vst [vmem:[#allocation6 + $0x10] sm:$0xff] %v7876
  %7909 = vst [vmem:[#allocation6 + $0x18] sm:$0xff] %v7877
  %7910 = vst [vmem:[#allocation6 + $0x20] sm:$0xff] %v7878
  %7911 = vst [vmem:[#allocation6 + $0x28] sm:$0xff] %v7879
  %7912 = vst [vmem:[#allocation6 + $0x30] sm:$0xff] %v7880
  %7913 = vst [vmem:[#allocation6 + $0x38] sm:$0xff] %v7881
  %7914 = vst [vmem:[#allocation6 + $0x40] sm:$0xff] %v7882
  %7915 = vst [vmem:[#allocation6 + $0x48] sm:$0xff] %v7883
  %7916 = vst [vmem:[#allocation6 + $0x50] sm:$0xff] %v7884
  %7917 = vst [vmem:[#allocation6 + $0x58] sm:$0xff] %v7885
  %7918 = vst [vmem:[#allocation6 + $0x60] sm:$0xff] %v7886
  %7919 = vst [vmem:[#allocation6 + $0x68] sm:$0xff] %v7887
  %7920 = vst [vmem:[#allocation6 + $0x70] sm:$0xff] %v7888
  %7921 = vst [vmem:[#allocation6 + $0x78] sm:$0xff] %v7889
  %7922 = vst [vmem:[#allocation6 + $0x80] sm:$0xff] %v7890
  %7923 = vst [vmem:[#allocation6 + $0x88] sm:$0xff] %v7891
  %7924 = vst [vmem:[#allocation6 + $0x90] sm:$0xff] %v7892
  %7925 = vst [vmem:[#allocation6 + $0x98] sm:$0xff] %v7893
  %7926 = vst [vmem:[#allocation6 + $0xa0] sm:$0xff] %v7894
  %7927 = vst [vmem:[#allocation6 + $0xa8] sm:$0xff] %v7895
  %7928 = vst [vmem:[#allocation6 + $0xb0] sm:$0xff] %v7896
  %7929 = vst [vmem:[#allocation6 + $0xb8] sm:$0xff] %v7897
  %7930 = vst [vmem:[#allocation6 + $0xc0] sm:$0xff] %v7898
  %7931 = vst [vmem:[#allocation6 + $0xc8] sm:$0xff] %v7899
  %7932 = vst [vmem:[#allocation6 + $0xd0] sm:$0xff] %v7900
  %7933 = vst [vmem:[#allocation6 + $0xd8] sm:$0xff] %v7901
  %7934 = vst [vmem:[#allocation6 + $0xe0] sm:$0xff] %v7902
  %7935 = vst [vmem:[#allocation6 + $0xe8] sm:$0xff] %v7903
  %7936 = vst [vmem:[#allocation6 + $0xf0] sm:$0xff] %v7904
  %7937 = vst [vmem:[#allocation6 + $0xf8] sm:$0xff] %v7905
  %v7938 = vld [vmem:[#allocation6] sm:$0xff]
  %v7939 = vld [vmem:[#allocation6 + $0x80] sm:$0xff]
  %vm7940 = vcmask 15360
  %7941 = vst.msk [vmem:[#allocation7] sm:$0xff] %vm7940, %v7938
  %7942 = vst.msk [vmem:[#allocation7 + $0x8] sm:$0xff] %vm7940, %v7939
  %v7943 = vld [vmem:[#allocation6] sm:$0xff]
  %v7944 = vld [vmem:[#allocation6 + $0x80] sm:$0xff]
  %7947 = vrot.lane.b32.xlu0 %v7943, 120
  %v7948 = vpop.permute.xlu0 %7947
  %7949 = vrot.lane.b32.xlu0 %v7944, 120
  %v7950 = vpop.permute.xlu0 %7949
  %7953 = vst.msk [vmem:[#allocation7 + $0x10] sm:$0xff] %vm7940, %v7948
  %7954 = vst.msk [vmem:[#allocation7 + $0x18] sm:$0xff] %vm7940, %v7950
  %v7955 = vld [vmem:[#allocation6] sm:$0xff]
  %v7956 = vld [vmem:[#allocation6 + $0x80] sm:$0xff]
  %7959 = vrot.lane.b32.xlu0 %v7955, 112
  %v7960 = vpop.permute.xlu0 %7959
  %7961 = vrot.lane.b32.xlu0 %v7956, 112
  %v7962 = vpop.permute.xlu0 %7961
  %7965 = vst.msk [vmem:[#allocation7 + $0x20] sm:$0xff] %vm7940, %v7960
  %7966 = vst.msk [vmem:[#allocation7 + $0x28] sm:$0xff] %vm7940, %v7962
  %v7967 = vld [vmem:[#allocation6] sm:$0xff]
  %v7968 = vld [vmem:[#allocation6 + $0x80] sm:$0xff]
  %7971 = vrot.lane.b32.xlu0 %v7967, 104
  %v7972 = vpop.permute.xlu0 %7971
  %7973 = vrot.lane.b32.xlu0 %v7968, 104
  %v7974 = vpop.permute.xlu0 %7973
  %7977 = vst.msk [vmem:[#allocation7 + $0x30] sm:$0xff] %vm7940, %v7972
  %7978 = vst.msk [vmem:[#allocation7 + $0x38] sm:$0xff] %vm7940, %v7974
  %v7979 = vld [vmem:[#allocation6] sm:$0xff]
  %v7980 = vld [vmem:[#allocation6 + $0x80] sm:$0xff]
  %7983 = vrot.lane.b32.xlu0 %v7979, 96
  %v7984 = vpop.permute.xlu0 %7983
  %7985 = vrot.lane.b32.xlu0 %v7980, 96
  %v7986 = vpop.permute.xlu0 %7985
  %7989 = vst.msk [vmem:[#allocation7 + $0x40] sm:$0xff] %vm7940, %v7984
  %7990 = vst.msk [vmem:[#allocation7 + $0x48] sm:$0xff] %vm7940, %v7986
  %v7991 = vld [vmem:[#allocation6 + $0x10] sm:$0xff]
  %v7992 = vld [vmem:[#allocation6 + $0x90] sm:$0xff]
  %7993 = vst.msk [vmem:[#allocation7 + $0x50] sm:$0xff] %vm7940, %v7991
  %7994 = vst.msk [vmem:[#allocation7 + $0x58] sm:$0xff] %vm7940, %v7992
  %v7995 = vld [vmem:[#allocation6 + $0x10] sm:$0xff]
  %v7996 = vld [vmem:[#allocation6 + $0x90] sm:$0xff]
  %7999 = vrot.lane.b32.xlu0 %v7995, 120
  %v8000 = vpop.permute.xlu0 %7999
  %8001 = vrot.lane.b32.xlu0 %v7996, 120
  %v8002 = vpop.permute.xlu0 %8001
  %8005 = vst.msk [vmem:[#allocation7 + $0x60] sm:$0xff] %vm7940, %v8000
  %8006 = vst.msk [vmem:[#allocation7 + $0x68] sm:$0xff] %vm7940, %v8002
  %v8007 = vld [vmem:[#allocation6 + $0x10] sm:$0xff]
  %v8008 = vld [vmem:[#allocation6 + $0x90] sm:$0xff]
  %8011 = vrot.lane.b32.xlu0 %v8007, 112
  %v8012 = vpop.permute.xlu0 %8011
  %8013 = vrot.lane.b32.xlu0 %v8008, 112
  %v8014 = vpop.permute.xlu0 %8013
  %8017 = vst.msk [vmem:[#allocation7 + $0x70] sm:$0xff] %vm7940, %v8012
  %8018 = vst.msk [vmem:[#allocation7 + $0x78] sm:$0xff] %vm7940, %v8014
  %v8019 = vld [vmem:[#allocation6 + $0x10] sm:$0xff]
  %v8020 = vld [vmem:[#allocation6 + $0x90] sm:$0xff]
  %8023 = vrot.lane.b32.xlu0 %v8019, 104
  %v8024 = vpop.permute.xlu0 %8023
  %8025 = vrot.lane.b32.xlu0 %v8020, 104
  %v8026 = vpop.permute.xlu0 %8025
  %8029 = vst.msk [vmem:[#allocation7 + $0x80] sm:$0xff] %vm7940, %v8024
  %8030 = vst.msk [vmem:[#allocation7 + $0x88] sm:$0xff] %vm7940, %v8026
  %v8031 = vld [vmem:[#allocation6 + $0x10] sm:$0xff]
  %v8032 = vld [vmem:[#allocation6 + $0x90] sm:$0xff]
  %8035 = vrot.lane.b32.xlu0 %v8031, 96
  %v8036 = vpop.permute.xlu0 %8035
  %8037 = vrot.lane.b32.xlu0 %v8032, 96
  %v8038 = vpop.permute.xlu0 %8037
  %8041 = vst.msk [vmem:[#allocation7 + $0x90] sm:$0xff] %vm7940, %v8036
  %8042 = vst.msk [vmem:[#allocation7 + $0x98] sm:$0xff] %vm7940, %v8038
  %v8043 = vld [vmem:[#allocation6 + $0x20] sm:$0xff]
  %v8044 = vld [vmem:[#allocation6 + $0xa0] sm:$0xff]
  %8045 = vst.msk [vmem:[#allocation7 + $0xa0] sm:$0xff] %vm7940, %v8043
  %8046 = vst.msk [vmem:[#allocation7 + $0xa8] sm:$0xff] %vm7940, %v8044
  %v8047 = vld [vmem:[#allocation6 + $0x20] sm:$0xff]
  %v8048 = vld [vmem:[#allocation6 + $0xa0] sm:$0xff]
  %8051 = vrot.lane.b32.xlu0 %v8047, 120
  %v8052 = vpop.permute.xlu0 %8051
  %8053 = vrot.lane.b32.xlu0 %v8048, 120
  %v8054 = vpop.permute.xlu0 %8053
  %8057 = vst.msk [vmem:[#allocation7 + $0xb0] sm:$0xff] %vm7940, %v8052
  %8058 = vst.msk [vmem:[#allocation7 + $0xb8] sm:$0xff] %vm7940, %v8054
  %v8059 = vld [vmem:[#allocation6 + $0x20] sm:$0xff]
  %v8060 = vld [vmem:[#allocation6 + $0xa0] sm:$0xff]
  %8063 = vrot.lane.b32.xlu0 %v8059, 112
  %v8064 = vpop.permute.xlu0 %8063
  %8065 = vrot.lane.b32.xlu0 %v8060, 112
  %v8066 = vpop.permute.xlu0 %8065
  %8069 = vst.msk [vmem:[#allocation7 + $0xc0] sm:$0xff] %vm7940, %v8064
  %8070 = vst.msk [vmem:[#allocation7 + $0xc8] sm:$0xff] %vm7940, %v8066
  %v8071 = vld [vmem:[#allocation6 + $0x20] sm:$0xff]
  %v8072 = vld [vmem:[#allocation6 + $0xa0] sm:$0xff]
  %8075 = vrot.lane.b32.xlu0 %v8071, 104
  %v8076 = vpop.permute.xlu0 %8075
  %8077 = vrot.lane.b32.xlu0 %v8072, 104
  %v8078 = vpop.permute.xlu0 %8077
  %8081 = vst.msk [vmem:[#allocation7 + $0xd0] sm:$0xff] %vm7940, %v8076
  %8082 = vst.msk [vmem:[#allocation7 + $0xd8] sm:$0xff] %vm7940, %v8078
  %v8083 = vld [vmem:[#allocation6 + $0x20] sm:$0xff]
  %v8084 = vld [vmem:[#allocation6 + $0xa0] sm:$0xff]
  %8087 = vrot.lane.b32.xlu0 %v8083, 96
  %v8088 = vpop.permute.xlu0 %8087
  %8089 = vrot.lane.b32.xlu0 %v8084, 96
  %v8090 = vpop.permute.xlu0 %8089
  %8093 = vst.msk [vmem:[#allocation7 + $0xe0] sm:$0xff] %vm7940, %v8088
  %8094 = vst.msk [vmem:[#allocation7 + $0xe8] sm:$0xff] %vm7940, %v8090
  %v8095 = vld [vmem:[#allocation6 + $0x30] sm:$0xff]
  %v8096 = vld [vmem:[#allocation6 + $0xb0] sm:$0xff]
  %8097 = vst.msk [vmem:[#allocation7 + $0xf0] sm:$0xff] %vm7940, %v8095
  %8098 = vst.msk [vmem:[#allocation7 + $0xf8] sm:$0xff] %vm7940, %v8096
  %v8099 = vld [vmem:[#allocation6 + $0x30] sm:$0xff]
  %v8100 = vld [vmem:[#allocation6 + $0xb0] sm:$0xff]
  %8103 = vrot.lane.b32.xlu0 %v8099, 120
  %v8104 = vpop.permute.xlu0 %8103
  %8105 = vrot.lane.b32.xlu0 %v8100, 120
  %v8106 = vpop.permute.xlu0 %8105
  %8109 = vst.msk [vmem:[#allocation7 + $0x100] sm:$0xff] %vm7940, %v8104
  %8110 = vst.msk [vmem:[#allocation7 + $0x108] sm:$0xff] %vm7940, %v8106
  %v8111 = vld [vmem:[#allocation6 + $0x30] sm:$0xff]
  %v8112 = vld [vmem:[#allocation6 + $0xb0] sm:$0xff]
  %8115 = vrot.lane.b32.xlu0 %v8111, 112
  %v8116 = vpop.permute.xlu0 %8115
  %8117 = vrot.lane.b32.xlu0 %v8112, 112
  %v8118 = vpop.permute.xlu0 %8117
  %8121 = vst.msk [vmem:[#allocation7 + $0x110] sm:$0xff] %vm7940, %v8116
  %8122 = vst.msk [vmem:[#allocation7 + $0x118] sm:$0xff] %vm7940, %v8118
  %v8123 = vld [vmem:[#allocation6 + $0x30] sm:$0xff]
  %v8124 = vld [vmem:[#allocation6 + $0xb0] sm:$0xff]
  %8127 = vrot.lane.b32.xlu0 %v8123, 104
  %v8128 = vpop.permute.xlu0 %8127
  %8129 = vrot.lane.b32.xlu0 %v8124, 104
  %v8130 = vpop.permute.xlu0 %8129
  %8133 = vst.msk [vmem:[#allocation7 + $0x120] sm:$0xff] %vm7940, %v8128
  %8134 = vst.msk [vmem:[#allocation7 + $0x128] sm:$0xff] %vm7940, %v8130
  %v8135 = vld [vmem:[#allocation6 + $0x30] sm:$0xff]
  %v8136 = vld [vmem:[#allocation6 + $0xb0] sm:$0xff]
  %8139 = vrot.lane.b32.xlu0 %v8135, 96
  %v8140 = vpop.permute.xlu0 %8139
  %8141 = vrot.lane.b32.xlu0 %v8136, 96
  %v8142 = vpop.permute.xlu0 %8141
  %8145 = vst.msk [vmem:[#allocation7 + $0x130] sm:$0xff] %vm7940, %v8140
  %8146 = vst.msk [vmem:[#allocation7 + $0x138] sm:$0xff] %vm7940, %v8142
  %v8147 = vld [vmem:[#allocation6 + $0x40] sm:$0xff]
  %v8148 = vld [vmem:[#allocation6 + $0xc0] sm:$0xff]
  %8149 = vst.msk [vmem:[#allocation7 + $0x140] sm:$0xff] %vm7940, %v8147
  %8150 = vst.msk [vmem:[#allocation7 + $0x148] sm:$0xff] %vm7940, %v8148
  %v8151 = vld [vmem:[#allocation6 + $0x40] sm:$0xff]
  %v8152 = vld [vmem:[#allocation6 + $0xc0] sm:$0xff]
  %8155 = vrot.lane.b32.xlu0 %v8151, 120
  %v8156 = vpop.permute.xlu0 %8155
  %8157 = vrot.lane.b32.xlu0 %v8152, 120
  %v8158 = vpop.permute.xlu0 %8157
  %8161 = vst.msk [vmem:[#allocation7 + $0x150] sm:$0xff] %vm7940, %v8156
  %8162 = vst.msk [vmem:[#allocation7 + $0x158] sm:$0xff] %vm7940, %v8158
  %v8163 = vld [vmem:[#allocation6 + $0x40] sm:$0xff]
  %v8164 = vld [vmem:[#allocation6 + $0xc0] sm:$0xff]
  %8167 = vrot.lane.b32.xlu0 %v8163, 112
  %v8168 = vpop.permute.xlu0 %8167
  %8169 = vrot.lane.b32.xlu0 %v8164, 112
  %v8170 = vpop.permute.xlu0 %8169
  %8173 = vst.msk [vmem:[#allocation7 + $0x160] sm:$0xff] %vm7940, %v8168
  %8174 = vst.msk [vmem:[#allocation7 + $0x168] sm:$0xff] %vm7940, %v8170
  %v8175 = vld [vmem:[#allocation6 + $0x40] sm:$0xff]
  %v8176 = vld [vmem:[#allocation6 + $0xc0] sm:$0xff]
  %8179 = vrot.lane.b32.xlu0 %v8175, 104
  %v8180 = vpop.permute.xlu0 %8179
  %8181 = vrot.lane.b32.xlu0 %v8176, 104
  %v8182 = vpop.permute.xlu0 %8181
  %8185 = vst.msk [vmem:[#allocation7 + $0x170] sm:$0xff] %vm7940, %v8180
  %8186 = vst.msk [vmem:[#allocation7 + $0x178] sm:$0xff] %vm7940, %v8182
  %v8187 = vld [vmem:[#allocation6 + $0x40] sm:$0xff]
  %v8188 = vld [vmem:[#allocation6 + $0xc0] sm:$0xff]
  %8191 = vrot.lane.b32.xlu0 %v8187, 96
  %v8192 = vpop.permute.xlu0 %8191
  %8193 = vrot.lane.b32.xlu0 %v8188, 96
  %v8194 = vpop.permute.xlu0 %8193
  %8197 = vst.msk [vmem:[#allocation7 + $0x180] sm:$0xff] %vm7940, %v8192
  %8198 = vst.msk [vmem:[#allocation7 + $0x188] sm:$0xff] %vm7940, %v8194
  %v8199 = vld [vmem:[#allocation7] sm:$0xff]
  %v8200 = vld [vmem:[#allocation7 + $0x8] sm:$0xff]
  %v8201 = vld [vmem:[#allocation7 + $0x10] sm:$0xff]
  %v8202 = vld [vmem:[#allocation7 + $0x18] sm:$0xff]
  %v8203 = vld [vmem:[#allocation7 + $0x20] sm:$0xff]
  %v8204 = vld [vmem:[#allocation7 + $0x28] sm:$0xff]
  %v8205 = vld [vmem:[#allocation7 + $0x30] sm:$0xff]
  %v8206 = vld [vmem:[#allocation7 + $0x38] sm:$0xff]
  %v8207 = vld [vmem:[#allocation7 + $0x40] sm:$0xff]
  %v8208 = vld [vmem:[#allocation7 + $0x48] sm:$0xff]
  %v8209 = vld [vmem:[#allocation7 + $0x50] sm:$0xff]
  %v8210 = vld [vmem:[#allocation7 + $0x58] sm:$0xff]
  %v8211 = vld [vmem:[#allocation7 + $0x60] sm:$0xff]
  %v8212 = vld [vmem:[#allocation7 + $0x68] sm:$0xff]
  %v8213 = vld [vmem:[#allocation7 + $0x70] sm:$0xff]
  %v8214 = vld [vmem:[#allocation7 + $0x78] sm:$0xff]
  %v8215 = vld [vmem:[#allocation7 + $0x80] sm:$0xff]
  %v8216 = vld [vmem:[#allocation7 + $0x88] sm:$0xff]
  %v8217 = vld [vmem:[#allocation7 + $0x90] sm:$0xff]
  %v8218 = vld [vmem:[#allocation7 + $0x98] sm:$0xff]
  %v8219 = vld [vmem:[#allocation7 + $0xa0] sm:$0xff]
  %v8220 = vld [vmem:[#allocation7 + $0xa8] sm:$0xff]
  %v8221 = vld [vmem:[#allocation7 + $0xb0] sm:$0xff]
  %v8222 = vld [vmem:[#allocation7 + $0xb8] sm:$0xff]
  %v8223 = vld [vmem:[#allocation7 + $0xc0] sm:$0xff]
  %v8224 = vld [vmem:[#allocation7 + $0xc8] sm:$0xff]
  %v8225 = vld [vmem:[#allocation7 + $0xd0] sm:$0xff]
  %v8226 = vld [vmem:[#allocation7 + $0xd8] sm:$0xff]
  %v8227 = vld [vmem:[#allocation7 + $0xe0] sm:$0xff]
  %v8228 = vld [vmem:[#allocation7 + $0xe8] sm:$0xff]
  %v8229 = vld [vmem:[#allocation7 + $0xf0] sm:$0xff]
  %v8230 = vld [vmem:[#allocation7 + $0xf8] sm:$0xff]
  %v8231 = vld [vmem:[#allocation7 + $0x100] sm:$0xff]
  %v8232 = vld [vmem:[#allocation7 + $0x108] sm:$0xff]
  %v8233 = vld [vmem:[#allocation7 + $0x110] sm:$0xff]
  %v8234 = vld [vmem:[#allocation7 + $0x118] sm:$0xff]
  %v8235 = vld [vmem:[#allocation7 + $0x120] sm:$0xff]
  %v8236 = vld [vmem:[#allocation7 + $0x128] sm:$0xff]
  %v8237 = vld [vmem:[#allocation7 + $0x130] sm:$0xff]
  %v8238 = vld [vmem:[#allocation7 + $0x138] sm:$0xff]
  %v8239 = vld [vmem:[#allocation7 + $0x140] sm:$0xff]
  %v8240 = vld [vmem:[#allocation7 + $0x148] sm:$0xff]
  %v8241 = vld [vmem:[#allocation7 + $0x150] sm:$0xff]
  %v8242 = vld [vmem:[#allocation7 + $0x158] sm:$0xff]
  %v8243 = vld [vmem:[#allocation7 + $0x160] sm:$0xff]
  %v8244 = vld [vmem:[#allocation7 + $0x168] sm:$0xff]
  %v8245 = vld [vmem:[#allocation7 + $0x170] sm:$0xff]
  %v8246 = vld [vmem:[#allocation7 + $0x178] sm:$0xff]
  %v8247 = vld [vmem:[#allocation7 + $0x180] sm:$0xff]
  %v8248 = vld [vmem:[#allocation7 + $0x188] sm:$0xff]
  %v8249 = vld [vmem:[%s3] sm:$0xff]
  %v8250 = vld [vmem:[%s3 + $0x8] sm:$0xff]
  %v8251 = vld [vmem:[%s3 + $0x10] sm:$0xff]
  %v8252 = vld [vmem:[%s3 + $0x18] sm:$0xff]
  %v8253 = vld [vmem:[%s3 + $0x20] sm:$0xff]
  %v8254 = vld [vmem:[%s3 + $0x28] sm:$0xff]
  %v8255 = vld [vmem:[%s3 + $0x30] sm:$0xff]
  %v8256 = vld [vmem:[%s3 + $0x38] sm:$0xff]
  %v8257 = vld [vmem:[%s3 + $0x40] sm:$0xff]
  %v8258 = vld [vmem:[%s3 + $0x48] sm:$0xff]
  %v8259 = vld [vmem:[%s3 + $0x50] sm:$0xff]
  %v8260 = vld [vmem:[%s3 + $0x58] sm:$0xff]
  %v8261 = vld [vmem:[%s3 + $0x60] sm:$0xff]
  %v8262 = vld [vmem:[%s3 + $0x68] sm:$0xff]
  %v8263 = vld [vmem:[%s3 + $0x70] sm:$0xff]
  %v8264 = vld [vmem:[%s3 + $0x78] sm:$0xff]
  %v8265 = vld [vmem:[%s3 + $0x80] sm:$0xff]
  %v8266 = vld [vmem:[%s3 + $0x88] sm:$0xff]
  %v8267 = vld [vmem:[%s3 + $0x90] sm:$0xff]
  %v8268 = vld [vmem:[%s3 + $0x98] sm:$0xff]
  %v8269 = vld [vmem:[%s3 + $0xa0] sm:$0xff]
  %v8270 = vld [vmem:[%s3 + $0xa8] sm:$0xff]
  %v8271 = vld [vmem:[%s3 + $0xb0] sm:$0xff]
  %v8272 = vld [vmem:[%s3 + $0xb8] sm:$0xff]
  %v8273 = vld [vmem:[%s3 + $0xc0] sm:$0xff]
  %v8274 = vld [vmem:[%s3 + $0xc8] sm:$0xff]
  %v8275 = vld [vmem:[%s3 + $0xd0] sm:$0xff]
  %v8276 = vld [vmem:[%s3 + $0xd8] sm:$0xff]
  %v8277 = vld [vmem:[%s3 + $0xe0] sm:$0xff]
  %v8278 = vld [vmem:[%s3 + $0xe8] sm:$0xff]
  %v8279 = vld [vmem:[%s3 + $0xf0] sm:$0xff]
  %v8280 = vld [vmem:[%s3 + $0xf8] sm:$0xff]
  %v8281 = vld [vmem:[%s3 + $0x100] sm:$0xff]
  %v8282 = vld [vmem:[%s3 + $0x108] sm:$0xff]
  %v8283 = vld [vmem:[%s3 + $0x110] sm:$0xff]
  %v8284 = vld [vmem:[%s3 + $0x118] sm:$0xff]
  %v8285 = vld [vmem:[%s3 + $0x120] sm:$0xff]
  %v8286 = vld [vmem:[%s3 + $0x128] sm:$0xff]
  %v8287 = vld [vmem:[%s3 + $0x130] sm:$0xff]
  %v8288 = vld [vmem:[%s3 + $0x138] sm:$0xff]
  %v8289 = vld [vmem:[%s3 + $0x140] sm:$0xff]
  %v8290 = vld [vmem:[%s3 + $0x148] sm:$0xff]
  %v8291 = vld [vmem:[%s3 + $0x150] sm:$0xff]
  %v8292 = vld [vmem:[%s3 + $0x158] sm:$0xff]
  %v8293 = vld [vmem:[%s3 + $0x160] sm:$0xff]
  %v8294 = vld [vmem:[%s3 + $0x168] sm:$0xff]
  %v8295 = vld [vmem:[%s3 + $0x170] sm:$0xff]
  %v8296 = vld [vmem:[%s3 + $0x178] sm:$0xff]
  %v8297 = vld [vmem:[%s3 + $0x180] sm:$0xff]
  %v8298 = vld [vmem:[%s3 + $0x188] sm:$0xff]
  %v8299 = vld [vmem:[%s3 + $0x190] sm:$0xff]
  %v8300 = vld [vmem:[%s3 + $0x198] sm:$0xff]
  %v8301 = vld [vmem:[%s3 + $0x1a0] sm:$0xff]
  %v8302 = vld [vmem:[%s3 + $0x1a8] sm:$0xff]
  %v8303 = vld [vmem:[%s3 + $0x1b0] sm:$0xff]
  %v8304 = vld [vmem:[%s3 + $0x1b8] sm:$0xff]
  %v8305 = vld [vmem:[%s3 + $0x1c0] sm:$0xff]
  %v8306 = vld [vmem:[%s3 + $0x1c8] sm:$0xff]
  %v8307 = vld [vmem:[%s3 + $0x1d0] sm:$0xff]
  %v8308 = vld [vmem:[%s3 + $0x1d8] sm:$0xff]
  %v8309 = vld [vmem:[%s7] sm:$0xff]
  %v8310 = vld [vmem:[%s7 + $0x8] sm:$0xff]
  %v8311 = vld [vmem:[%s7 + $0x10] sm:$0xff]
  %v8312 = vld [vmem:[%s7 + $0x18] sm:$0xff]
  %v8313 = vld [vmem:[%s7 + $0x20] sm:$0xff]
  %v8314 = vld [vmem:[%s7 + $0x28] sm:$0xff]
  %v8315 = vld [vmem:[%s7 + $0x30] sm:$0xff]
  %v8316 = vld [vmem:[%s7 + $0x38] sm:$0xff]
  %v8317 = vld [vmem:[%s7 + $0x40] sm:$0xff]
  %v8318 = vld [vmem:[%s7 + $0x48] sm:$0xff]
  %v8319 = vld [vmem:[%s7 + $0x50] sm:$0xff]
  %v8320 = vld [vmem:[%s7 + $0x58] sm:$0xff]
  %v8321 = vld [vmem:[%s7 + $0x60] sm:$0xff]
  %v8322 = vld [vmem:[%s7 + $0x68] sm:$0xff]
  %v8323 = vld [vmem:[%s7 + $0x70] sm:$0xff]
  %8325 = vset.pattern.permute.xlu0 0
  %8326 = vperm.xlu0 %8325, %v8309
  %v8327 = vpop.permute.xlu0 %8326
  %8330 = vset.pattern.permute.xlu0 0
  %8331 = vperm.xlu0 %8330, %v8310
  %v8332 = vpop.permute.xlu0 %8331
  %8335 = vset.pattern.permute.xlu0 0
  %8336 = vperm.xlu0 %8335, %v8311
  %v8337 = vpop.permute.xlu0 %8336
  %8340 = vset.pattern.permute.xlu0 0
  %8341 = vperm.xlu0 %8340, %v8312
  %v8342 = vpop.permute.xlu0 %8341
  %8345 = vset.pattern.permute.xlu0 0
  %8346 = vperm.xlu0 %8345, %v8313
  %v8347 = vpop.permute.xlu0 %8346
  %8350 = vset.pattern.permute.xlu0 0
  %8351 = vperm.xlu0 %8350, %v8314
  %v8352 = vpop.permute.xlu0 %8351
  %8355 = vset.pattern.permute.xlu0 0
  %8356 = vperm.xlu0 %8355, %v8315
  %v8357 = vpop.permute.xlu0 %8356
  %8360 = vset.pattern.permute.xlu0 0
  %8361 = vperm.xlu0 %8360, %v8316
  %v8362 = vpop.permute.xlu0 %8361
  %8365 = vset.pattern.permute.xlu0 0
  %8366 = vperm.xlu0 %8365, %v8317
  %v8367 = vpop.permute.xlu0 %8366
  %8370 = vset.pattern.permute.xlu0 0
  %8371 = vperm.xlu0 %8370, %v8318
  %v8372 = vpop.permute.xlu0 %8371
  %8375 = vset.pattern.permute.xlu0 0
  %8376 = vperm.xlu0 %8375, %v8319
  %v8377 = vpop.permute.xlu0 %8376
  %8380 = vset.pattern.permute.xlu0 0
  %8381 = vperm.xlu0 %8380, %v8320
  %v8382 = vpop.permute.xlu0 %8381
  %8385 = vset.pattern.permute.xlu0 0
  %8386 = vperm.xlu0 %8385, %v8321
  %v8387 = vpop.permute.xlu0 %8386
  %8390 = vset.pattern.permute.xlu0 0
  %8391 = vperm.xlu0 %8390, %v8322
  %v8392 = vpop.permute.xlu0 %8391
  %8395 = vset.pattern.permute.xlu0 0
  %8396 = vperm.xlu0 %8395, %v8323
  %v8397 = vpop.permute.xlu0 %8396
  %vm8399 = vcmask 130048
  %v8401 = vsel %vm8399, %v8252, 0
  %v8404 = vsel %vm8399, %v8256, 0
  %v8407 = vsel %vm8399, %v8260, 0
  %v8410 = vsel %vm8399, %v8264, 0
  %v8413 = vsel %vm8399, %v8268, 0
  %v8416 = vsel %vm8399, %v8272, 0
  %v8419 = vsel %vm8399, %v8276, 0
  %v8422 = vsel %vm8399, %v8280, 0
  %v8425 = vsel %vm8399, %v8284, 0
  %v8428 = vsel %vm8399, %v8288, 0
  %v8431 = vsel %vm8399, %v8292, 0
  %v8434 = vsel %vm8399, %v8296, 0
  %v8437 = vsel %vm8399, %v8300, 0
  %v8440 = vsel %vm8399, %v8304, 0
  %v8443 = vsel %vm8399, %v8308, 0
  %8445 = vmatprep.subr.mxu0 0.0
  %8446 = vmatpush1.msra.mxu0 %v8199
  %8447 = vmatprep.subr.mxu0 0.0
  %8448 = vmatpush1.msra.mxu0 %v8200
  %8449 = vmatprep.subr.mxu0 0.0
  %8450 = vmatpush1.msra.mxu0 %v8201
  %8451 = vmatprep.subr.mxu0 0.0
  %8452 = vmatpush1.msra.mxu0 %v8202
  %8453 = vmatprep.subr.mxu0 0.0
  %8454 = vmatpush1.msra.mxu0 %v8203
  %8455 = vmatprep.subr.mxu0 0.0
  %8456 = vmatpush1.msra.mxu0 %v8204
  %8457 = vmatprep.subr.mxu0 0.0
  %8458 = vmatpush1.msra.mxu0 %v8205
  %8459 = vmatprep.subr.mxu0 0.0
  %8460 = vmatpush1.msra.mxu0 %v8206
  %8461 = vmatprep.subr.mxu0 0.0
  %8462 = vmatpush1.msra.mxu0 %v8207
  %8463 = vmatprep.subr.mxu0 0.0
  %8464 = vmatpush1.msra.mxu0 %v8208
  %8465 = vmatprep.subr.mxu0 0.0
  %8466 = vmatpush1.msra.mxu0 %v8209
  %8467 = vmatprep.subr.mxu0 0.0
  %8468 = vmatpush1.msra.mxu0 %v8210
  %8469 = vmatprep.subr.mxu0 0.0
  %8470 = vmatpush1.msra.mxu0 %v8211
  %8471 = vmatprep.subr.mxu0 0.0
  %8472 = vmatpush1.msra.mxu0 %v8212
  %8473 = vmatprep.subr.mxu0 0.0
  %8474 = vmatpush1.msra.mxu0 %v8213
  %8475 = vmatprep.subr.mxu0 0.0
  %8476 = vmatpush1.msra.mxu0 %v8214
  %8477 = vmatprep.subr.mxu0 0.0
  %8478 = vmatpush1.msra.mxu0 %v8215
  %8479 = vmatprep.subr.mxu0 0.0
  %8480 = vmatpush1.msra.mxu0 %v8216
  %8481 = vmatprep.subr.mxu0 0.0
  %8482 = vmatpush1.msra.mxu0 %v8217
  %8483 = vmatprep.subr.mxu0 0.0
  %8484 = vmatpush1.msra.mxu0 %v8218
  %8485 = vmatprep.subr.mxu0 0.0
  %8486 = vmatpush1.msra.mxu0 %v8219
  %8487 = vmatprep.subr.mxu0 0.0
  %8488 = vmatpush1.msra.mxu0 %v8220
  %8489 = vmatprep.subr.mxu0 0.0
  %8490 = vmatpush1.msra.mxu0 %v8221
  %8491 = vmatprep.subr.mxu0 0.0
  %8492 = vmatpush1.msra.mxu0 %v8222
  %8493 = vmatprep.subr.mxu0 0.0
  %8494 = vmatpush1.msra.mxu0 %v8223
  %8495 = vmatprep.subr.mxu0 0.0
  %8496 = vmatpush1.msra.mxu0 %v8224
  %8497 = vmatprep.subr.mxu0 0.0
  %8498 = vmatpush1.msra.mxu0 %v8225
  %8499 = vmatprep.subr.mxu0 0.0
  %8500 = vmatpush1.msra.mxu0 %v8226
  %8501 = vmatprep.subr.mxu0 0.0
  %8502 = vmatpush1.msra.mxu0 %v8227
  %8503 = vmatprep.subr.mxu0 0.0
  %8504 = vmatpush1.msra.mxu0 %v8228
  %8505 = vmatprep.subr.mxu0 0.0
  %8506 = vmatpush1.msra.mxu0 %v8229
  %8507 = vmatprep.subr.mxu0 0.0
  %8508 = vmatpush1.msra.mxu0 %v8230
  %8509 = vmatprep.mubr.f32.mxu0 %v8250
  %8510 = vmatmul.mubr.f32.gmra.mrb[0].mxu0 %v8249
  %v8511 = vpop.f32.mrb[0].mxu0
  %v8512 = vadd.f32 %v8327, %v8511
  %v8513 = vpop.f32.mrb[0].mxu0
  %8514 = vmatprep.mubr.f32.mxu0 %v8254
  %8515 = vmatmul.mubr.f32.gmra.mrb[0].mxu0 %v8253
  %v8516 = vpop.f32.mrb[0].mxu0
  %v8517 = vadd.f32 %v8332, %v8516
  %v8518 = vpop.f32.mrb[0].mxu0
  %8519 = vmatprep.mubr.f32.mxu0 %v8258
  %8520 = vmatmul.mubr.f32.gmra.mrb[0].mxu0 %v8257
  %v8521 = vpop.f32.mrb[0].mxu0
  %v8522 = vadd.f32 %v8337, %v8521
  %v8523 = vpop.f32.mrb[0].mxu0
  %8524 = vmatprep.mubr.f32.mxu0 %v8262
  %8525 = vmatmul.mubr.f32.gmra.mrb[0].mxu0 %v8261
  %v8526 = vpop.f32.mrb[0].mxu0
  %v8527 = vadd.f32 %v8342, %v8526
  %v8528 = vpop.f32.mrb[0].mxu0
  %8529 = vmatprep.mubr.f32.mxu0 %v8266
  %8530 = vmatmul.mubr.f32.gmra.mrb[0].mxu0 %v8265
  %v8531 = vpop.f32.mrb[0].mxu0
  %v8532 = vadd.f32 %v8347, %v8531
  %v8533 = vpop.f32.mrb[0].mxu0
  %8534 = vmatprep.mubr.f32.mxu0 %v8270
  %8535 = vmatmul.mubr.f32.gmra.mrb[0].mxu0 %v8269
  %v8536 = vpop.f32.mrb[0].mxu0
  %v8537 = vadd.f32 %v8352, %v8536
  %v8538 = vpop.f32.mrb[0].mxu0
  %8539 = vmatprep.mubr.f32.mxu0 %v8274
  %8540 = vmatmul.mubr.f32.gmra.mrb[0].mxu0 %v8273
  %v8541 = vpop.f32.mrb[0].mxu0
  %v8542 = vadd.f32 %v8357, %v8541
  %v8543 = vpop.f32.mrb[0].mxu0
  %8544 = vmatprep.mubr.f32.mxu0 %v8278
  %8545 = vmatmul.mubr.f32.gmra.mrb[0].mxu0 %v8277
  %v8546 = vpop.f32.mrb[0].mxu0
  %v8547 = vadd.f32 %v8362, %v8546
  %v8548 = vpop.f32.mrb[0].mxu0
  %8549 = vmatprep.mubr.f32.mxu0 %v8282
  %8550 = vmatmul.mubr.f32.gmra.mrb[0].mxu0 %v8281
  %v8551 = vpop.f32.mrb[0].mxu0
  %v8552 = vadd.f32 %v8367, %v8551
  %v8553 = vpop.f32.mrb[0].mxu0
  %8554 = vmatprep.mubr.f32.mxu0 %v8286
  %8555 = vmatmul.mubr.f32.gmra.mrb[0].mxu0 %v8285
  %v8556 = vpop.f32.mrb[0].mxu0
  %v8557 = vadd.f32 %v8372, %v8556
  %v8558 = vpop.f32.mrb[0].mxu0
  %8559 = vmatprep.mubr.f32.mxu0 %v8290
  %8560 = vmatmul.mubr.f32.gmra.mrb[0].mxu0 %v8289
  %v8561 = vpop.f32.mrb[0].mxu0
  %v8562 = vadd.f32 %v8377, %v8561
  %v8563 = vpop.f32.mrb[0].mxu0
  %8564 = vmatprep.mubr.f32.mxu0 %v8294
  %8565 = vmatmul.mubr.f32.gmra.mrb[0].mxu0 %v8293
  %v8566 = vpop.f32.mrb[0].mxu0
  %v8567 = vadd.f32 %v8382, %v8566
  %v8568 = vpop.f32.mrb[0].mxu0
  %8569 = vmatprep.mubr.f32.mxu0 %v8298
  %8570 = vmatmul.mubr.f32.gmra.mrb[0].mxu0 %v8297
  %v8571 = vpop.f32.mrb[0].mxu0
  %v8572 = vadd.f32 %v8387, %v8571
  %v8573 = vpop.f32.mrb[0].mxu0
  %8574 = vmatprep.mubr.f32.mxu0 %v8302
  %8575 = vmatmul.mubr.f32.gmra.mrb[0].mxu0 %v8301
  %v8576 = vpop.f32.mrb[0].mxu0
  %v8577 = vadd.f32 %v8392, %v8576
  %v8578 = vpop.f32.mrb[0].mxu0
  %8579 = vmatprep.mubr.f32.mxu0 %v8306
  %8580 = vmatmul.mubr.f32.gmra.mrb[0].mxu0 %v8305
  %v8581 = vpop.f32.mrb[0].mxu0
  %v8582 = vadd.f32 %v8397, %v8581
  %v8583 = vpop.f32.mrb[0].mxu0
  %8584 = vdwg.mxu0
  %8585 = vmatprep.subr.mxu0 0.0
  %8586 = vmatpush1.msra.mxu0 %v8231
  %8587 = vmatprep.subr.mxu0 0.0
  %8588 = vmatpush1.msra.mxu0 %v8232
  %8589 = vmatprep.subr.mxu0 0.0
  %8590 = vmatpush1.msra.mxu0 %v8233
  %8591 = vmatprep.subr.mxu0 0.0
  %8592 = vmatpush1.msra.mxu0 %v8234
  %8593 = vmatprep.subr.mxu0 0.0
  %8594 = vmatpush1.msra.mxu0 %v8235
  %8595 = vmatprep.subr.mxu0 0.0
  %8596 = vmatpush1.msra.mxu0 %v8236
  %8597 = vmatprep.subr.mxu0 0.0
  %8598 = vmatpush1.msra.mxu0 %v8237
  %8599 = vmatprep.subr.mxu0 0.0
  %8600 = vmatpush1.msra.mxu0 %v8238
  %8601 = vmatprep.subr.mxu0 0.0
  %8602 = vmatpush1.msra.mxu0 %v8239
  %8603 = vmatprep.subr.mxu0 0.0
  %8604 = vmatpush1.msra.mxu0 %v8240
  %8605 = vmatprep.subr.mxu0 0.0
  %8606 = vmatpush1.msra.mxu0 %v8241
  %8607 = vmatprep.subr.mxu0 0.0
  %8608 = vmatpush1.msra.mxu0 %v8242
  %8609 = vmatprep.subr.mxu0 0.0
  %8610 = vmatpush1.msra.mxu0 %v8243
  %8611 = vmatprep.subr.mxu0 0.0
  %8612 = vmatpush1.msra.mxu0 %v8244
  %8613 = vmatprep.subr.mxu0 0.0
  %8614 = vmatpush1.msra.mxu0 %v8245
  %8615 = vmatprep.subr.mxu0 0.0
  %8616 = vmatpush1.msra.mxu0 %v8246
  %8617 = vmatprep.subr.mxu0 0.0
  %8618 = vmatpush1.msra.mxu0 %v8247
  %8619 = vmatprep.subr.mxu0 0.0
  %8620 = vmatpush1.msra.mxu0 %v8248
  %8621 = vmatprep.subr.mxu0 0.0
  %8622 = vmatpush1.msra.mxu0 0.0
  %8623 = vmatprep.subr.mxu0 0.0
  %8624 = vmatpush1.msra.mxu0 0.0
  %8625 = vmatprep.subr.mxu0 0.0
  %8626 = vmatpush1.msra.mxu0 0.0
  %8627 = vmatprep.subr.mxu0 0.0
  %8628 = vmatpush1.msra.mxu0 0.0
  %8629 = vmatprep.subr.mxu0 0.0
  %8630 = vmatpush1.msra.mxu0 0.0
  %8631 = vmatprep.subr.mxu0 0.0
  %8632 = vmatpush1.msra.mxu0 0.0
  %8633 = vmatprep.subr.mxu0 0.0
  %8634 = vmatpush1.msra.mxu0 0.0
  %8635 = vmatprep.subr.mxu0 0.0
  %8636 = vmatpush1.msra.mxu0 0.0
  %8637 = vmatprep.subr.mxu0 0.0
  %8638 = vmatpush1.msra.mxu0 0.0
  %8639 = vmatprep.subr.mxu0 0.0
  %8640 = vmatpush1.msra.mxu0 0.0
  %8641 = vmatprep.subr.mxu0 0.0
  %8642 = vmatpush1.msra.mxu0 0.0
  %8643 = vmatprep.subr.mxu0 0.0
  %8644 = vmatpush1.msra.mxu0 0.0
  %8645 = vmatprep.subr.mxu0 0.0
  %8646 = vmatpush1.msra.mxu0 0.0
  %8647 = vmatprep.subr.mxu0 0.0
  %8648 = vmatpush1.msra.mxu0 0.0
  %8649 = vmatprep.mubr.f32.mxu0 %v8401
  %8650 = vmatmul.mubr.f32.gmra.mrb[0].mxu0 %v8251
  %v8651 = vpop.f32.mrb[0].mxu0
  %v8652 = vadd.f32 %v8512, %v8651
  %v8653 = vpop.f32.mrb[0].mxu0
  %8654 = vmatprep.mubr.f32.mxu0 %v8404
  %8655 = vmatmul.mubr.f32.gmra.mrb[0].mxu0 %v8255
  %v8656 = vpop.f32.mrb[0].mxu0
  %v8657 = vadd.f32 %v8517, %v8656
  %v8658 = vpop.f32.mrb[0].mxu0
  %8659 = vmatprep.mubr.f32.mxu0 %v8407
  %8660 = vmatmul.mubr.f32.gmra.mrb[0].mxu0 %v8259
  %v8661 = vpop.f32.mrb[0].mxu0
  %v8662 = vadd.f32 %v8522, %v8661
  %v8663 = vpop.f32.mrb[0].mxu0
  %8664 = vmatprep.mubr.f32.mxu0 %v8410
  %8665 = vmatmul.mubr.f32.gmra.mrb[0].mxu0 %v8263
  %v8666 = vpop.f32.mrb[0].mxu0
  %v8667 = vadd.f32 %v8527, %v8666
  %v8668 = vpop.f32.mrb[0].mxu0
  %8669 = vmatprep.mubr.f32.mxu0 %v8413
  %8670 = vmatmul.mubr.f32.gmra.mrb[0].mxu0 %v8267
  %v8671 = vpop.f32.mrb[0].mxu0
  %v8672 = vadd.f32 %v8532, %v8671
  %v8673 = vpop.f32.mrb[0].mxu0
  %8674 = vmatprep.mubr.f32.mxu0 %v8416
  %8675 = vmatmul.mubr.f32.gmra.mrb[0].mxu0 %v8271
  %v8676 = vpop.f32.mrb[0].mxu0
  %v8677 = vadd.f32 %v8537, %v8676
  %v8678 = vpop.f32.mrb[0].mxu0
  %8679 = vmatprep.mubr.f32.mxu0 %v8419
  %8680 = vmatmul.mubr.f32.gmra.mrb[0].mxu0 %v8275
  %v8681 = vpop.f32.mrb[0].mxu0
  %v8682 = vadd.f32 %v8542, %v8681
  %v8683 = vpop.f32.mrb[0].mxu0
  %8684 = vmatprep.mubr.f32.mxu0 %v8422
  %8685 = vmatmul.mubr.f32.gmra.mrb[0].mxu0 %v8279
  %v8686 = vpop.f32.mrb[0].mxu0
  %v8687 = vadd.f32 %v8547, %v8686
  %v8688 = vpop.f32.mrb[0].mxu0
  %8689 = vmatprep.mubr.f32.mxu0 %v8425
  %8690 = vmatmul.mubr.f32.gmra.mrb[0].mxu0 %v8283
  %v8691 = vpop.f32.mrb[0].mxu0
  %v8692 = vadd.f32 %v8552, %v8691
  %v8693 = vpop.f32.mrb[0].mxu0
  %8694 = vmatprep.mubr.f32.mxu0 %v8428
  %8695 = vmatmul.mubr.f32.gmra.mrb[0].mxu0 %v8287
  %v8696 = vpop.f32.mrb[0].mxu0
  %v8697 = vadd.f32 %v8557, %v8696
  %v8698 = vpop.f32.mrb[0].mxu0
  %8699 = vmatprep.mubr.f32.mxu0 %v8431
  %8700 = vmatmul.mubr.f32.gmra.mrb[0].mxu0 %v8291
  %v8701 = vpop.f32.mrb[0].mxu0
  %v8702 = vadd.f32 %v8562, %v8701
  %v8703 = vpop.f32.mrb[0].mxu0
  %8704 = vmatprep.mubr.f32.mxu0 %v8434
  %8705 = vmatmul.mubr.f32.gmra.mrb[0].mxu0 %v8295
  %v8706 = vpop.f32.mrb[0].mxu0
  %v8707 = vadd.f32 %v8567, %v8706
  %v8708 = vpop.f32.mrb[0].mxu0
  %8709 = vmatprep.mubr.f32.mxu0 %v8437
  %8710 = vmatmul.mubr.f32.gmra.mrb[0].mxu0 %v8299
  %v8711 = vpop.f32.mrb[0].mxu0
  %v8712 = vadd.f32 %v8572, %v8711
  %v8713 = vpop.f32.mrb[0].mxu0
  %8714 = vmatprep.mubr.f32.mxu0 %v8440
  %8715 = vmatmul.mubr.f32.gmra.mrb[0].mxu0 %v8303
  %v8716 = vpop.f32.mrb[0].mxu0
  %v8717 = vadd.f32 %v8577, %v8716
  %v8718 = vpop.f32.mrb[0].mxu0
  %8719 = vmatprep.mubr.f32.mxu0 %v8443
  %8720 = vmatmul.mubr.f32.gmra.mrb[0].mxu0 %v8307
  %v8721 = vpop.f32.mrb[0].mxu0
  %v8722 = vadd.f32 %v8582, %v8721
  %v8723 = vpop.f32.mrb[0].mxu0
  %8724 = vdwg.mxu0
  %v8725 = vmax.f32 %v8652, 0.0
  %v8726 = vmax.f32 %v8657, 0.0
  %v8727 = vmax.f32 %v8662, 0.0
  %v8728 = vmax.f32 %v8667, 0.0
  %v8729 = vmax.f32 %v8672, 0.0
  %v8730 = vmax.f32 %v8677, 0.0
  %v8731 = vmax.f32 %v8682, 0.0
  %v8732 = vmax.f32 %v8687, 0.0
  %v8733 = vmax.f32 %v8692, 0.0
  %v8734 = vmax.f32 %v8697, 0.0
  %v8735 = vmax.f32 %v8702, 0.0
  %v8736 = vmax.f32 %v8707, 0.0
  %v8737 = vmax.f32 %v8712, 0.0
  %v8738 = vmax.f32 %v8717, 0.0
  %v8739 = vmax.f32 %v8722, 0.0
  %v8740 = vld [vmem:[%s4] sm:$0xff]
  %v8741 = vld [vmem:[%s4 + $0x8] sm:$0xff]
  %v8742 = vld [vmem:[%s4 + $0x10] sm:$0xff]
  %v8743 = vld [vmem:[%s4 + $0x18] sm:$0xff]
  %v8744 = vld [vmem:[%s4 + $0x20] sm:$0xff]
  %v8745 = vld [vmem:[%s4 + $0x28] sm:$0xff]
  %v8746 = vld [vmem:[%s4 + $0x30] sm:$0xff]
  %v8747 = vld [vmem:[%s4 + $0x38] sm:$0xff]
  %v8748 = vld [vmem:[%s4 + $0x40] sm:$0xff]
  %v8749 = vld [vmem:[%s4 + $0x48] sm:$0xff]
  %v8750 = vld [vmem:[%s4 + $0x50] sm:$0xff]
  %v8751 = vld [vmem:[%s7 + $0x78] sm:$0xff]
  %v8752 = vld [vmem:[%s7 + $0x80] sm:$0xff]
  %v8753 = vld [vmem:[%s7 + $0x88] sm:$0xff]
  %v8754 = vld [vmem:[%s7 + $0x90] sm:$0xff]
  %v8755 = vld [vmem:[%s7 + $0x98] sm:$0xff]
  %v8756 = vld [vmem:[%s7 + $0xa0] sm:$0xff]
  %v8757 = vld [vmem:[%s7 + $0xa8] sm:$0xff]
  %v8758 = vld [vmem:[%s7 + $0xb0] sm:$0xff]
  %v8759 = vld [vmem:[%s7 + $0xb8] sm:$0xff]
  %v8760 = vld [vmem:[%s7 + $0xc0] sm:$0xff]
  %v8761 = vld [vmem:[%s7 + $0xc8] sm:$0xff]
  %8763 = vset.pattern.permute.xlu0 0
  %8764 = vperm.xlu0 %8763, %v8751
  %v8765 = vpop.permute.xlu0 %8764
  %8768 = vset.pattern.permute.xlu0 0
  %8769 = vperm.xlu0 %8768, %v8752
  %v8770 = vpop.permute.xlu0 %8769
  %8773 = vset.pattern.permute.xlu0 0
  %8774 = vperm.xlu0 %8773, %v8753
  %v8775 = vpop.permute.xlu0 %8774
  %8778 = vset.pattern.permute.xlu0 0
  %8779 = vperm.xlu0 %8778, %v8754
  %v8780 = vpop.permute.xlu0 %8779
  %8783 = vset.pattern.permute.xlu0 0
  %8784 = vperm.xlu0 %8783, %v8755
  %v8785 = vpop.permute.xlu0 %8784
  %8788 = vset.pattern.permute.xlu0 0
  %8789 = vperm.xlu0 %8788, %v8756
  %v8790 = vpop.permute.xlu0 %8789
  %8793 = vset.pattern.permute.xlu0 0
  %8794 = vperm.xlu0 %8793, %v8757
  %v8795 = vpop.permute.xlu0 %8794
  %8798 = vset.pattern.permute.xlu0 0
  %8799 = vperm.xlu0 %8798, %v8758
  %v8800 = vpop.permute.xlu0 %8799
  %8803 = vset.pattern.permute.xlu0 0
  %8804 = vperm.xlu0 %8803, %v8759
  %v8805 = vpop.permute.xlu0 %8804
  %8808 = vset.pattern.permute.xlu0 0
  %8809 = vperm.xlu0 %8808, %v8760
  %v8810 = vpop.permute.xlu0 %8809
  %8813 = vset.pattern.permute.xlu0 0
  %8814 = vperm.xlu0 %8813, %v8761
  %v8815 = vpop.permute.xlu0 %8814
  %v8818 = vsel %vm503, %v8740, 0
  %v8821 = vsel %vm503, %v8741, 0
  %v8824 = vsel %vm503, %v8742, 0
  %v8827 = vsel %vm503, %v8743, 0
  %v8830 = vsel %vm503, %v8744, 0
  %v8833 = vsel %vm503, %v8745, 0
  %v8836 = vsel %vm503, %v8746, 0
  %v8839 = vsel %vm503, %v8747, 0
  %v8842 = vsel %vm503, %v8748, 0
  %v8845 = vsel %vm503, %v8749, 0
  %v8848 = vsel %vm503, %v8750, 0
  %8850 = vmatprep.subr.mxu0 0.0
  %8851 = vmatpush1.msra.mxu0 %v8725
  %8852 = vmatprep.subr.mxu0 0.0
  %8853 = vmatpush1.msra.mxu0 %v8726
  %8854 = vmatprep.subr.mxu0 0.0
  %8855 = vmatpush1.msra.mxu0 %v8727
  %8856 = vmatprep.subr.mxu0 0.0
  %8857 = vmatpush1.msra.mxu0 %v8728
  %8858 = vmatprep.subr.mxu0 0.0
  %8859 = vmatpush1.msra.mxu0 %v8729
  %8860 = vmatprep.subr.mxu0 0.0
  %8861 = vmatpush1.msra.mxu0 %v8730
  %8862 = vmatprep.subr.mxu0 0.0
  %8863 = vmatpush1.msra.mxu0 %v8731
  %8864 = vmatprep.subr.mxu0 0.0
  %8865 = vmatpush1.msra.mxu0 %v8732
  %8866 = vmatprep.subr.mxu0 0.0
  %8867 = vmatpush1.msra.mxu0 %v8733
  %8868 = vmatprep.subr.mxu0 0.0
  %8869 = vmatpush1.msra.mxu0 %v8734
  %8870 = vmatprep.subr.mxu0 0.0
  %8871 = vmatpush1.msra.mxu0 %v8735
  %8872 = vmatprep.subr.mxu0 0.0
  %8873 = vmatpush1.msra.mxu0 %v8736
  %8874 = vmatprep.subr.mxu0 0.0
  %8875 = vmatpush1.msra.mxu0 %v8737
  %8876 = vmatprep.subr.mxu0 0.0
  %8877 = vmatpush1.msra.mxu0 %v8738
  %8878 = vmatprep.subr.mxu0 0.0
  %8879 = vmatpush1.msra.mxu0 %v8739
  %8880 = vmatprep.subr.mxu0 0.0
  %8881 = vmatpush1.msra.mxu0 0.0
  %8882 = vmatprep.subr.mxu0 0.0
  %8883 = vmatpush1.msra.mxu0 0.0
  %8884 = vmatprep.subr.mxu0 0.0
  %8885 = vmatpush1.msra.mxu0 0.0
  %8886 = vmatprep.subr.mxu0 0.0
  %8887 = vmatpush1.msra.mxu0 0.0
  %8888 = vmatprep.subr.mxu0 0.0
  %8889 = vmatpush1.msra.mxu0 0.0
  %8890 = vmatprep.subr.mxu0 0.0
  %8891 = vmatpush1.msra.mxu0 0.0
  %8892 = vmatprep.subr.mxu0 0.0
  %8893 = vmatpush1.msra.mxu0 0.0
  %8894 = vmatprep.subr.mxu0 0.0
  %8895 = vmatpush1.msra.mxu0 0.0
  %8896 = vmatprep.subr.mxu0 0.0
  %8897 = vmatpush1.msra.mxu0 0.0
  %8898 = vmatprep.subr.mxu0 0.0
  %8899 = vmatpush1.msra.mxu0 0.0
  %8900 = vmatprep.subr.mxu0 0.0
  %8901 = vmatpush1.msra.mxu0 0.0
  %8902 = vmatprep.subr.mxu0 0.0
  %8903 = vmatpush1.msra.mxu0 0.0
  %8904 = vmatprep.subr.mxu0 0.0
  %8905 = vmatpush1.msra.mxu0 0.0
  %8906 = vmatprep.subr.mxu0 0.0
  %8907 = vmatpush1.msra.mxu0 0.0
  %8908 = vmatprep.subr.mxu0 0.0
  %8909 = vmatpush1.msra.mxu0 0.0
  %8910 = vmatprep.subr.mxu0 0.0
  %8911 = vmatpush1.msra.mxu0 0.0
  %8912 = vmatprep.subr.mxu0 0.0
  %8913 = vmatpush1.msra.mxu0 0.0
  %8914 = vmatprep.mubr.f32.mxu0 0.0
  %8915 = vmatmul.mubr.f32.gmra.mrb[0].mxu0 %v8818
  %v8916 = vpop.f32.mrb[0].mxu0
  %v8917 = vadd.f32 %v8765, %v8916
  %v8918 = vpop.f32.mrb[0].mxu0
  %8919 = vmatprep.mubr.f32.mxu0 0.0
  %8920 = vmatmul.mubr.f32.gmra.mrb[0].mxu0 %v8821
  %v8921 = vpop.f32.mrb[0].mxu0
  %v8922 = vadd.f32 %v8770, %v8921
  %v8923 = vpop.f32.mrb[0].mxu0
  %8924 = vmatprep.mubr.f32.mxu0 0.0
  %8925 = vmatmul.mubr.f32.gmra.mrb[0].mxu0 %v8824
  %v8926 = vpop.f32.mrb[0].mxu0
  %v8927 = vadd.f32 %v8775, %v8926
  %v8928 = vpop.f32.mrb[0].mxu0
  %8929 = vmatprep.mubr.f32.mxu0 0.0
  %8930 = vmatmul.mubr.f32.gmra.mrb[0].mxu0 %v8827
  %v8931 = vpop.f32.mrb[0].mxu0
  %v8932 = vadd.f32 %v8780, %v8931
  %v8933 = vpop.f32.mrb[0].mxu0
  %8934 = vmatprep.mubr.f32.mxu0 0.0
  %8935 = vmatmul.mubr.f32.gmra.mrb[0].mxu0 %v8830
  %v8936 = vpop.f32.mrb[0].mxu0
  %v8937 = vadd.f32 %v8785, %v8936
  %v8938 = vpop.f32.mrb[0].mxu0
  %8939 = vmatprep.mubr.f32.mxu0 0.0
  %8940 = vmatmul.mubr.f32.gmra.mrb[0].mxu0 %v8833
  %v8941 = vpop.f32.mrb[0].mxu0
  %v8942 = vadd.f32 %v8790, %v8941
  %v8943 = vpop.f32.mrb[0].mxu0
  %8944 = vmatprep.mubr.f32.mxu0 0.0
  %8945 = vmatmul.mubr.f32.gmra.mrb[0].mxu0 %v8836
  %v8946 = vpop.f32.mrb[0].mxu0
  %v8947 = vadd.f32 %v8795, %v8946
  %v8948 = vpop.f32.mrb[0].mxu0
  %8949 = vmatprep.mubr.f32.mxu0 0.0
  %8950 = vmatmul.mubr.f32.gmra.mrb[0].mxu0 %v8839
  %v8951 = vpop.f32.mrb[0].mxu0
  %v8952 = vadd.f32 %v8800, %v8951
  %v8953 = vpop.f32.mrb[0].mxu0
  %8954 = vmatprep.mubr.f32.mxu0 0.0
  %8955 = vmatmul.mubr.f32.gmra.mrb[0].mxu0 %v8842
  %v8956 = vpop.f32.mrb[0].mxu0
  %v8957 = vadd.f32 %v8805, %v8956
  %v8958 = vpop.f32.mrb[0].mxu0
  %8959 = vmatprep.mubr.f32.mxu0 0.0
  %8960 = vmatmul.mubr.f32.gmra.mrb[0].mxu0 %v8845
  %v8961 = vpop.f32.mrb[0].mxu0
  %v8962 = vadd.f32 %v8810, %v8961
  %v8963 = vpop.f32.mrb[0].mxu0
  %8964 = vmatprep.mubr.f32.mxu0 0.0
  %8965 = vmatmul.mubr.f32.gmra.mrb[0].mxu0 %v8848
  %v8966 = vpop.f32.mrb[0].mxu0
  %v8967 = vadd.f32 %v8815, %v8966
  %v8968 = vpop.f32.mrb[0].mxu0
  %8969 = vdwg.mxu0
  %v8970 = vmax.f32 %v8917, 0.0
  %v8971 = vmax.f32 %v8922, 0.0
  %v8972 = vmax.f32 %v8927, 0.0
  %v8973 = vmax.f32 %v8932, 0.0
  %v8974 = vmax.f32 %v8937, 0.0
  %v8975 = vmax.f32 %v8942, 0.0
  %v8976 = vmax.f32 %v8947, 0.0
  %v8977 = vmax.f32 %v8952, 0.0
  %v8978 = vmax.f32 %v8957, 0.0
  %v8979 = vmax.f32 %v8962, 0.0
  %v8980 = vmax.f32 %v8967, 0.0
  %v8981 = vld [vmem:[%s5] sm:$0xff]
  %v8982 = vld [vmem:[%s5 + $0x8] sm:$0xff]
  %v8983 = vld [vmem:[%s5 + $0x10] sm:$0xff]
  %v8984 = vld [vmem:[%s5 + $0x18] sm:$0xff]
  %v8985 = vld [vmem:[%s7 + $0xd0] sm:$0xff]
  %v8986 = vld [vmem:[%s7 + $0xd8] sm:$0xff]
  %v8987 = vld [vmem:[%s7 + $0xe0] sm:$0xff]
  %v8988 = vld [vmem:[%s7 + $0xe8] sm:$0xff]
  %8990 = vset.pattern.permute.xlu0 0
  %8991 = vperm.xlu0 %8990, %v8985
  %v8992 = vpop.permute.xlu0 %8991
  %8995 = vset.pattern.permute.xlu0 0
  %8996 = vperm.xlu0 %8995, %v8986
  %v8997 = vpop.permute.xlu0 %8996
  %9000 = vset.pattern.permute.xlu0 0
  %9001 = vperm.xlu0 %9000, %v8987
  %v9002 = vpop.permute.xlu0 %9001
  %9005 = vset.pattern.permute.xlu0 0
  %9006 = vperm.xlu0 %9005, %v8988
  %v9007 = vpop.permute.xlu0 %9006
  %vm9009 = vcmask 719872
  %v9011 = vsel %vm9009, %v8981, 0
  %v9014 = vsel %vm9009, %v8982, 0
  %v9017 = vsel %vm9009, %v8983, 0
  %v9020 = vsel %vm9009, %v8984, 0
  %9022 = vmatprep.subr.mxu0 0.0
  %9023 = vmatpush1.msra.mxu0 %v8970
  %9024 = vmatprep.subr.mxu0 0.0
  %9025 = vmatpush1.msra.mxu0 %v8971
  %9026 = vmatprep.subr.mxu0 0.0
  %9027 = vmatpush1.msra.mxu0 %v8972
  %9028 = vmatprep.subr.mxu0 0.0
  %9029 = vmatpush1.msra.mxu0 %v8973
  %9030 = vmatprep.subr.mxu0 0.0
  %9031 = vmatpush1.msra.mxu0 %v8974
  %9032 = vmatprep.subr.mxu0 0.0
  %9033 = vmatpush1.msra.mxu0 %v8975
  %9034 = vmatprep.subr.mxu0 0.0
  %9035 = vmatpush1.msra.mxu0 %v8976
  %9036 = vmatprep.subr.mxu0 0.0
  %9037 = vmatpush1.msra.mxu0 %v8977
  %9038 = vmatprep.subr.mxu0 0.0
  %9039 = vmatpush1.msra.mxu0 %v8978
  %9040 = vmatprep.subr.mxu0 0.0
  %9041 = vmatpush1.msra.mxu0 %v8979
  %9042 = vmatprep.subr.mxu0 0.0
  %9043 = vmatpush1.msra.mxu0 %v8980
  %9044 = vmatprep.subr.mxu0 0.0
  %9045 = vmatpush1.msra.mxu0 0.0
  %9046 = vmatprep.subr.mxu0 0.0
  %9047 = vmatpush1.msra.mxu0 0.0
  %9048 = vmatprep.subr.mxu0 0.0
  %9049 = vmatpush1.msra.mxu0 0.0
  %9050 = vmatprep.subr.mxu0 0.0
  %9051 = vmatpush1.msra.mxu0 0.0
  %9052 = vmatprep.subr.mxu0 0.0
  %9053 = vmatpush1.msra.mxu0 0.0
  %9054 = vmatprep.subr.mxu0 0.0
  %9055 = vmatpush1.msra.mxu0 0.0
  %9056 = vmatprep.subr.mxu0 0.0
  %9057 = vmatpush1.msra.mxu0 0.0
  %9058 = vmatprep.subr.mxu0 0.0
  %9059 = vmatpush1.msra.mxu0 0.0
  %9060 = vmatprep.subr.mxu0 0.0
  %9061 = vmatpush1.msra.mxu0 0.0
  %9062 = vmatprep.subr.mxu0 0.0
  %9063 = vmatpush1.msra.mxu0 0.0
  %9064 = vmatprep.subr.mxu0 0.0
  %9065 = vmatpush1.msra.mxu0 0.0
  %9066 = vmatprep.subr.mxu0 0.0
  %9067 = vmatpush1.msra.mxu0 0.0
  %9068 = vmatprep.subr.mxu0 0.0
  %9069 = vmatpush1.msra.mxu0 0.0
  %9070 = vmatprep.subr.mxu0 0.0
  %9071 = vmatpush1.msra.mxu0 0.0
  %9072 = vmatprep.subr.mxu0 0.0
  %9073 = vmatpush1.msra.mxu0 0.0
  %9074 = vmatprep.subr.mxu0 0.0
  %9075 = vmatpush1.msra.mxu0 0.0
  %9076 = vmatprep.subr.mxu0 0.0
  %9077 = vmatpush1.msra.mxu0 0.0
  %9078 = vmatprep.subr.mxu0 0.0
  %9079 = vmatpush1.msra.mxu0 0.0
  %9080 = vmatprep.subr.mxu0 0.0
  %9081 = vmatpush1.msra.mxu0 0.0
  %9082 = vmatprep.subr.mxu0 0.0
  %9083 = vmatpush1.msra.mxu0 0.0
  %9084 = vmatprep.subr.mxu0 0.0
  %9085 = vmatpush1.msra.mxu0 0.0
  %9086 = vmatprep.mubr.f32.mxu0 0.0
  %9087 = vmatmul.mubr.f32.gmra.mrb[0].mxu0 %v9011
  %v9088 = vpop.f32.mrb[0].mxu0
  %v9089 = vadd.f32 %v8992, %v9088
  %v9090 = vpop.f32.mrb[0].mxu0
  %9091 = vmatprep.mubr.f32.mxu0 0.0
  %9092 = vmatmul.mubr.f32.gmra.mrb[0].mxu0 %v9014
  %v9093 = vpop.f32.mrb[0].mxu0
  %v9094 = vadd.f32 %v8997, %v9093
  %v9095 = vpop.f32.mrb[0].mxu0
  %9096 = vmatprep.mubr.f32.mxu0 0.0
  %9097 = vmatmul.mubr.f32.gmra.mrb[0].mxu0 %v9017
  %v9098 = vpop.f32.mrb[0].mxu0
  %v9099 = vadd.f32 %v9002, %v9098
  %v9100 = vpop.f32.mrb[0].mxu0
  %9101 = vmatprep.mubr.f32.mxu0 0.0
  %9102 = vmatmul.mubr.f32.gmra.mrb[0].mxu0 %v9020
  %v9103 = vpop.f32.mrb[0].mxu0
  %v9104 = vadd.f32 %v9007, %v9103
  %v9105 = vpop.f32.mrb[0].mxu0
  %9106 = vdwg.mxu0
  %v9107 = vmax.f32 %v9089, 0.0
  %v9108 = vmax.f32 %v9094, 0.0
  %v9109 = vmax.f32 %v9099, 0.0
  %v9110 = vmax.f32 %v9104, 0.0
  %v9111 = vld [vmem:[%s6] sm:$0xff]
  %v9112 = vld [vmem:[%s6 + $0x8] sm:$0xff]
  %v9113 = vld [vmem:[%s7 + $0xf0] sm:$0xff]
  %v9114 = vld [vmem:[%s7 + $0xf8] sm:$0xff]
  %9116 = vset.pattern.permute.xlu0 0
  %9117 = vperm.xlu0 %9116, %v9113
  %v9118 = vpop.permute.xlu0 %9117
  %9121 = vset.pattern.permute.xlu0 0
  %9122 = vperm.xlu0 %9121, %v9114
  %v9123 = vpop.permute.xlu0 %9122
  %vm9125 = vcmask 261120
  %v9127 = vsel %vm9125, %v9111, 0
  %v9130 = vsel %vm9125, %v9112, 0
  %9132 = vmatprep.subr.mxu0 0.0
  %9133 = vmatpush1.msra.mxu0 %v9107
  %9134 = vmatprep.subr.mxu0 0.0
  %9135 = vmatpush1.msra.mxu0 %v9108
  %9136 = vmatprep.subr.mxu0 0.0
  %9137 = vmatpush1.msra.mxu0 %v9109
  %9138 = vmatprep.subr.mxu0 0.0
  %9139 = vmatpush1.msra.mxu0 %v9110
  %9140 = vmatprep.subr.mxu0 0.0
  %9141 = vmatpush1.msra.mxu0 0.0
  %9142 = vmatprep.subr.mxu0 0.0
  %9143 = vmatpush1.msra.mxu0 0.0
  %9144 = vmatprep.subr.mxu0 0.0
  %9145 = vmatpush1.msra.mxu0 0.0
  %9146 = vmatprep.subr.mxu0 0.0
  %9147 = vmatpush1.msra.mxu0 0.0
  %9148 = vmatprep.subr.mxu0 0.0
  %9149 = vmatpush1.msra.mxu0 0.0
  %9150 = vmatprep.subr.mxu0 0.0
  %9151 = vmatpush1.msra.mxu0 0.0
  %9152 = vmatprep.subr.mxu0 0.0
  %9153 = vmatpush1.msra.mxu0 0.0
  %9154 = vmatprep.subr.mxu0 0.0
  %9155 = vmatpush1.msra.mxu0 0.0
  %9156 = vmatprep.subr.mxu0 0.0
  %9157 = vmatpush1.msra.mxu0 0.0
  %9158 = vmatprep.subr.mxu0 0.0
  %9159 = vmatpush1.msra.mxu0 0.0
  %9160 = vmatprep.subr.mxu0 0.0
  %9161 = vmatpush1.msra.mxu0 0.0
  %9162 = vmatprep.subr.mxu0 0.0
  %9163 = vmatpush1.msra.mxu0 0.0
  %9164 = vmatprep.subr.mxu0 0.0
  %9165 = vmatpush1.msra.mxu0 0.0
  %9166 = vmatprep.subr.mxu0 0.0
  %9167 = vmatpush1.msra.mxu0 0.0
  %9168 = vmatprep.subr.mxu0 0.0
  %9169 = vmatpush1.msra.mxu0 0.0
  %9170 = vmatprep.subr.mxu0 0.0
  %9171 = vmatpush1.msra.mxu0 0.0
  %9172 = vmatprep.subr.mxu0 0.0
  %9173 = vmatpush1.msra.mxu0 0.0
  %9174 = vmatprep.subr.mxu0 0.0
  %9175 = vmatpush1.msra.mxu0 0.0
  %9176 = vmatprep.subr.mxu0 0.0
  %9177 = vmatpush1.msra.mxu0 0.0
  %9178 = vmatprep.subr.mxu0 0.0
  %9179 = vmatpush1.msra.mxu0 0.0
  %9180 = vmatprep.subr.mxu0 0.0
  %9181 = vmatpush1.msra.mxu0 0.0
  %9182 = vmatprep.subr.mxu0 0.0
  %9183 = vmatpush1.msra.mxu0 0.0
  %9184 = vmatprep.subr.mxu0 0.0
  %9185 = vmatpush1.msra.mxu0 0.0
  %9186 = vmatprep.subr.mxu0 0.0
  %9187 = vmatpush1.msra.mxu0 0.0
  %9188 = vmatprep.subr.mxu0 0.0
  %9189 = vmatpush1.msra.mxu0 0.0
  %9190 = vmatprep.subr.mxu0 0.0
  %9191 = vmatpush1.msra.mxu0 0.0
  %9192 = vmatprep.subr.mxu0 0.0
  %9193 = vmatpush1.msra.mxu0 0.0
  %9194 = vmatprep.subr.mxu0 0.0
  %9195 = vmatpush1.msra.mxu0 0.0
  %9196 = vmatprep.mubr.f32.mxu0 0.0
  %9197 = vmatmul.mubr.f32.gmra.mrb[0].mxu0 %v9127
  %v9198 = vpop.f32.mrb[0].mxu0
  %v9199 = vadd.f32 %v9118, %v9198
  %v9200 = vpop.f32.mrb[0].mxu0
  %9201 = vmatprep.mubr.f32.mxu0 0.0
  %9202 = vmatmul.mubr.f32.gmra.mrb[0].mxu0 %v9130
  %v9203 = vpop.f32.mrb[0].mxu0
  %v9204 = vadd.f32 %v9123, %v9203
  %v9205 = vpop.f32.mrb[0].mxu0
  %9206 = vdwg.mxu0
  %9207 = vst.msk [vmem:[%s8] sm:$0xff] %vm7940, %v9199
  %9208 = vst.msk [vmem:[%s8 + $0x8] sm:$0xff] %vm7940, %v9204
  // Predicated region
  $region34: #{net_forward.1} parent=0 // pred_check
    _
  $region35: #{net_forward.1} parent=0 // pred_check_branch
    %9210 = sbr.rel (0) target = $region37
  $region36: #{net_forward.1} parent=0 // pred_region
    _
  $region37: #{net_forward.1} parent=0 // pred_fallthru
    _
  // Predicated region
  $region38: #{net_forward.1} parent=0 // pred_check
    _
  $region39: #{net_forward.1} parent=0 // pred_check_branch
    %9212 = sbr.rel (0) target = $region41
  $region40: #{net_forward.1} parent=0 // pred_region
    _
  $region41: #{net_forward.1} parent=0 // pred_fallthru
    _

</llo_original>
